<compile_context>
chip_gen: v6e
topology: v6e:2x2x1
jax: 0.10.0
libtpu: 0.0.40
codegen_flags: <defaults>
</compile_context>

<pallas_src>
import functools

import jax
import jax.numpy as jnp
from jax.experimental import pallas as pl
from jax.experimental.pallas import tpu as pltpu

H = 768          # model hidden size (hard-coded 768 in the attention head)
A = 512          # attention hidden size
C = 3            # regressor output size (Linear(768, 3))


def attention_pooling_kernel(x_ref, w1_ref, b1_ref, w2b_ref, b2_ref,
                             ctx_ref, m_ref, l_ref, acc_ref, *, seq_len):
    s_idx = pl.program_id(1)

    # ---- init online-softmax state at the start of each batch block ----
    @pl.when(s_idx == 0)
    def _():
        m_ref[...] = jnp.full_like(m_ref, -jnp.inf)
        l_ref[...] = jnp.zeros_like(l_ref)
        acc_ref[...] = jnp.zeros_like(acc_ref)

    x = x_ref[...]                                        # (B_t, S_t, H) f32
    B_t, S_t, Hd = x.shape
    A_ = w1_ref.shape[1]

    # ---- attention MLP on the MXU: tanh(x @ W1 + b1) ----
    # (optionally bf16 operands for the big matmul on v6e/v7x; w1 dtype decides)
    xf = x.reshape(B_t * S_t, Hd)                         # merge leading dims
    h = jnp.tanh(
        jnp.dot(xf.astype(w1_ref.dtype), w1_ref[...],
                preferred_element_type=jnp.float32)
        + b1_ref[...]                                     # (1, A) broadcast
    )                                                     # (tokens, A) f32
    h3 = h.reshape(B_t, S_t, A_)

    # ---- scores as an MXU contraction against the broadcast w2 "query" ----
    # w2b: (B_t, 1, A);  s: (B_t, 1, S_t)   (b2 is a scalar from SMEM)
    s = jnp.einsum('bqa,bsa->bqs', w2b_ref[...], h3,
                   preferred_element_type=jnp.float32) + b2_ref[0, 0]

    # mask seq positions beyond the true length (ragged last tile -> -inf)
    col = jax.lax.broadcasted_iota(jnp.int32, s.shape, 2) + s_idx * S_t
    s = jnp.where(col < seq_len, s, -jnp.inf)

    # ---- online softmax accumulation over the sequence grid axis ----
    m_prev = m_ref[...]                                   # (B_t, 1, 1)
    m_new = jnp.maximum(m_prev, jnp.max(s, axis=-1, keepdims=True))
    alpha = jnp.exp(m_prev - m_new)
    p = jnp.exp(s - m_new)                                # (B_t, 1, S_t)
    l_ref[...] = alpha * l_ref[...] + jnp.sum(p, axis=-1, keepdims=True)
    acc_ref[...] = alpha * acc_ref[...] + jnp.einsum(
        'bqs,bsh->bqh', p, x, preferred_element_type=jnp.float32)  # (B_t,1,H)
    m_ref[...] = m_new

    # ---- finalize: normalize once and emit the lane-dense (B_t, 768) ctx ----
    @pl.when(s_idx == pl.num_programs(1) - 1)
    def _():
        # approx=True would move this to the EUP, at ~1e-4 relative error.
        inv_l = pl.reciprocal(l_ref[...], approx=False)
        ctx_ref[...] = (acc_ref[...] * inv_l).reshape(B_t, Hd).astype(ctx_ref.dtype)


def _pick_tile(n, target, align):
    """Largest divisor of n that is <= target and a multiple of `align`; else full n."""
    if n <= target:
        return n
    for t in range(min(target, n), 0, -1):
        if n % t == 0 and t % align == 0:
            return t
    return n


def attention_pooling(last_hidden_state, attention_mask, params, *,
                      block_b=8, block_s=512, matmul_dtype=jnp.float32):
    """last_hidden_state: (B, S, 768) f32.  attention_mask unused (matches reference)."""
    del attention_mask   # reference forward ignores it (pad tokens are softmaxed)
    B, S, Hd = last_hidden_state.shape
    assert Hd == H, f"attention head is hard-coded for hidden=768, got {Hd}"

    w1, b1, w2, b2, w3, b3 = (params["w1"], params["b1"], params["w2"],
                              params["b2"], params["w3"], params["b3"])

    # Tile sizes: batch tile aligned to 8 (output sublane rule), seq tile aligned
    # to 8; both exact divisors so no ragged tiles (mask in-kernel is defensive).
    B_t = _pick_tile(B, block_b, 8)
    S_t = _pick_tile(S, block_s, 8)

    # Pre-broadcast the Linear(512,1) weight row to a (B_t, 1, 512) "query"
    # so the score contraction is a plain batched MXU matmul in-kernel.
    w2b = jnp.broadcast_to(jnp.reshape(w2, (1, 1, A)), (B_t, 1, A)).astype(jnp.float32)
    w1_k = w1.astype(matmul_dtype)      # bf16 here ~2x MXU rate on v6e/v7x
    b2_k = jnp.reshape(b2, (1, 1)).astype(jnp.float32)

    kernel = functools.partial(attention_pooling_kernel, seq_len=S)

    ctx = pl.pallas_call(
        kernel,
        out_shape=jax.ShapeDtypeStruct((B, Hd), jnp.float32),
        grid=(B // B_t, S // S_t),
        in_specs=[
            pl.BlockSpec((B_t, S_t, Hd), lambda b, s: (b, s, 0)),   # x tile (streamed)
            pl.BlockSpec((Hd, A),        lambda b, s: (0, 0)),      # W1 (resident)
            pl.BlockSpec((1, A),         lambda b, s: (0, 0)),      # b1 (resident)
            pl.BlockSpec((B_t, 1, A),    lambda b, s: (0, 0, 0)),   # w2 "query" (resident)
            pl.BlockSpec(memory_space=pltpu.SMEM),                  # b2 scalar
        ],
        out_specs=pl.BlockSpec((B_t, Hd), lambda b, s: (b, 0)),     # lane-dense ctx
        scratch_shapes=[
            pltpu.VMEM((B_t, 1, 1), jnp.float32),   # running max m
            pltpu.VMEM((B_t, 1, 1), jnp.float32),   # running sum l
            pltpu.VMEM((B_t, 1, Hd), jnp.float32),  # rescaled ctx accumulator
        ],
        compiler_params=pltpu.CompilerParams(
            dimension_semantics=("parallel", "arbitrary"),
            vmem_limit_bytes=32 * 1024 * 1024),
    )(last_hidden_state, w1_k, b1, w2b, b2_k)

    # Tiny (768, 3) regressor + bias stays in XLA: a 3-wide kernel output would
    # force masked partial stores and the N=3 matmul wastes the MXU anyway.
    return ctx @ w3 + b3


def reference_jnp(x, params):
    h = jnp.tanh(x @ params["w1"] + params["b1"][0])
    scores = jnp.einsum("bsa,a->bs", h, params["w2"][0]) + params["b2"][0, 0]
    w = jax.nn.softmax(scores, axis=1)
    ctx = jnp.sum(w[:, :, None] * x, axis=1)
    return ctx @ params["w3"] + params["b3"][0]


if __name__ == "__main__":
    key = jax.random.PRNGKey(0)
    kx, k1, k2, k3, k4, k5, k6 = jax.random.split(key, 7)

    B, S = 4, 256
    x = jax.random.normal(kx, (B, S, H), dtype=jnp.float32)
    attention_mask = jnp.ones((B, S), dtype=jnp.int32)   # unused, matches reference API

    params = {
        "w1": jax.random.normal(k1, (H, A), dtype=jnp.float32) * 0.02,
        "b1": jax.random.normal(k2, (1, A), dtype=jnp.float32) * 0.02,
        "w2": jax.random.normal(k3, (1, A), dtype=jnp.float32) * 0.02,
        "b2": jax.random.normal(k4, (1, 1), dtype=jnp.float32) * 0.02,
        "w3": jax.random.normal(k5, (H, C), dtype=jnp.float32) * 0.02,
        "b3": jax.random.normal(k6, (1, C), dtype=jnp.float32) * 0.02,
    }

    # block_s=128 so the demo exercises init / update / finalize across 2 seq steps.
    out = jax.block_until_ready(
        attention_pooling(x, attention_mask, params, block_s=128))
    ref = reference_jnp(x, params)

    assert out.shape == (B, C), out.shape
    assert jnp.allclose(out, ref, atol=1e-3, rtol=1e-3), (out, ref)
    print("KERNEL_OK")
</pallas_src>

<mosaic_0001>
module attributes {stable_mosaic.version = 11 : i64} {
  func.func @attention_pooling_kernel(%arg0: i32, %arg1: i32, %arg2: memref<4x128x768xf32, #tpu.memory_space<vmem>>, %arg3: memref<768x512xf32, #tpu.memory_space<vmem>>, %arg4: memref<1x512xf32, #tpu.memory_space<vmem>>, %arg5: memref<4x1x512xf32, #tpu.memory_space<vmem>>, %arg6: memref<1x1xf32, #tpu.memory_space<smem>>, %arg7: memref<4x768xf32, #tpu.memory_space<vmem>>, %arg8: memref<4x1x1xf32, #tpu.memory_space<vmem>>, %arg9: memref<4x1x1xf32, #tpu.memory_space<vmem>>, %arg10: memref<4x1x768xf32, #tpu.memory_space<vmem>>) attributes {dimension_semantics = [#tpu.dimension_semantics<parallel>, #tpu.dimension_semantics<arbitrary>], iteration_bounds = array<i64: 1, 2>, scalar_prefetch = 0 : i64, scratch_operands = 3 : i64, tpu.core_type = #tpu.core_type<tc>, window_params = [{transform_indices = @transform_0, window_bounds = array<i64: 4, 128, 768>}, {pipeline_mode = #tpu.pipeline_mode<synchronous>, transform_indices = @transform_1, window_bounds = array<i64: 768, 512>}, {pipeline_mode = #tpu.pipeline_mode<synchronous>, transform_indices = @transform_2, window_bounds = array<i64: 1, 512>}, {pipeline_mode = #tpu.pipeline_mode<synchronous>, transform_indices = @transform_3, window_bounds = array<i64: 4, 1, 512>}, {transform_indices = @transform_4, window_bounds = array<i64: 1, 1>}, {transform_indices = @transform_5, window_bounds = array<i64: 4, 768>}]} {
    %c0_i32 = arith.constant 0 : i32
    %0 = arith.cmpi eq, %arg1, %c0_i32 : i32
    %1 = arith.extui %0 : i1 to i32
    %c0_i32_0 = arith.constant 0 : i32
    %2 = arith.cmpi ne, %1, %c0_i32_0 : i32
    scf.if %2 {
      %cst_36 = arith.constant 0xFF800000 : f32
      %50 = vector.broadcast %cst_36 : f32 to vector<4x1x1xf32>
      %c0_37 = arith.constant 0 : index
      %c0_38 = arith.constant 0 : index
      %c0_39 = arith.constant 0 : index
      %51 = vector.load %arg8[%c0_37, %c0_38, %c0_39] : memref<4x1x1xf32, #tpu.memory_space<vmem>>, vector<4x1x1xf32>
      tpu.vector_store %arg8[%c0_37, %c0_38, %c0_39], %50 {strides = array<i32>} : memref<4x1x1xf32, #tpu.memory_space<vmem>>, vector<4x1x1xf32>,
      %cst_40 = arith.constant 0.000000e+00 : f32
      %52 = vector.broadcast %cst_40 : f32 to vector<4x1x1xf32>
      %c0_41 = arith.constant 0 : index
      %c0_42 = arith.constant 0 : index
      %c0_43 = arith.constant 0 : index
      %53 = vector.load %arg9[%c0_41, %c0_42, %c0_43] : memref<4x1x1xf32, #tpu.memory_space<vmem>>, vector<4x1x1xf32>
      tpu.vector_store %arg9[%c0_41, %c0_42, %c0_43], %52 {strides = array<i32>} : memref<4x1x1xf32, #tpu.memory_space<vmem>>, vector<4x1x1xf32>,
      %cst_44 = arith.constant 0.000000e+00 : f32
      %54 = vector.broadcast %cst_44 : f32 to vector<4x1x768xf32>
      %c0_45 = arith.constant 0 : index
      %c0_46 = arith.constant 0 : index
      %c0_47 = arith.constant 0 : index
      %55 = vector.load %arg10[%c0_45, %c0_46, %c0_47] : memref<4x1x768xf32, #tpu.memory_space<vmem>>, vector<4x1x768xf32>
      tpu.vector_store %arg10[%c0_45, %c0_46, %c0_47], %54 {strides = array<i32>} : memref<4x1x768xf32, #tpu.memory_space<vmem>>, vector<4x1x768xf32>,
    } else {
    }
    %c0 = arith.constant 0 : index
    %c0_1 = arith.constant 0 : index
    %c0_2 = arith.constant 0 : index
    %3 = vector.load %arg2[%c0, %c0_1, %c0_2] : memref<4x128x768xf32, #tpu.memory_space<vmem>>, vector<4x128x768xf32>
    %4 = vector.shape_cast %3 : vector<4x128x768xf32> to vector<512x768xf32>
    %c0_3 = arith.constant 0 : index
    %c0_4 = arith.constant 0 : index
    %5 = vector.load %arg3[%c0_3, %c0_4] : memref<768x512xf32, #tpu.memory_space<vmem>>, vector<768x512xf32>
    %cst = arith.constant dense<0.000000e+00> : vector<512x512xf32>
    %6 = tpu.matmul %4, %5, %cst {dimension_numbers = #tpu.dot_dimension_numbers<[1], [0], [0], [1], [0, 0, 1, 1], [], []>} : vector<512x768xf32>, vector<768x512xf32>, vector<512x512xf32> -> vector<512x512xf32>
    %c0_5 = arith.constant 0 : index
    %c0_6 = arith.constant 0 : index
    %7 = vector.load %arg4[%c0_5, %c0_6] : memref<1x512xf32, #tpu.memory_space<vmem>>, vector<1x512xf32>
    %8 = vector.broadcast %7 : vector<1x512xf32> to vector<512x512xf32>
    %9 = arith.addf %6, %8 : vector<512x512xf32>
    %10 = math.tanh %9 : vector<512x512xf32>
    %11 = vector.shape_cast %10 : vector<512x512xf32> to vector<4x128x512xf32>
    %c0_7 = arith.constant 0 : index
    %c0_8 = arith.constant 0 : index
    %c0_9 = arith.constant 0 : index
    %12 = vector.load %arg5[%c0_7, %c0_8, %c0_9] : memref<4x1x512xf32, #tpu.memory_space<vmem>>, vector<4x1x512xf32>
    "tpu.trace_start"() <{level = 10 : i32, message = "bqa,bsa->bqs"}> : () -> ()
    %cst_10 = arith.constant dense<0.000000e+00> : vector<4x1x128xf32>
    %13 = tpu.matmul %12, %11, %cst_10 {dimension_numbers = #tpu.dot_dimension_numbers<[2], [2], [1], [1], [0, 0, 0, 1, 1, 1], [0], [0]>} : vector<4x1x512xf32>, vector<4x128x512xf32>, vector<4x1x128xf32> -> vector<4x1x128xf32>
    "tpu.trace_stop"() : () -> ()
    %c0_11 = arith.constant 0 : index
    %c0_12 = arith.constant 0 : index
    %14 = memref.load %arg6[%c0_11, %c0_12] : memref<1x1xf32, #tpu.memory_space<smem>>
    %15 = vector.broadcast %14 : f32 to vector<4x1x128xf32>
    %16 = arith.addf %13, %15 : vector<4x1x128xf32>
    %17 = tpu.iota {dimensions = array<i32: 2>} : vector<4x1x128xi32>
    %c128_i32 = arith.constant 128 : i32
    %18 = arith.muli %arg1, %c128_i32 : i32
    %19 = vector.broadcast %18 : i32 to vector<4x1x128xi32>
    %20 = arith.addi %17, %19 : vector<4x1x128xi32>
    %c256_i32 = arith.constant 256 : i32
    %21 = vector.broadcast %c256_i32 : i32 to vector<4x1x128xi32>
    %22 = arith.cmpi slt, %20, %21 : vector<4x1x128xi32>
    %cst_13 = arith.constant 0xFF800000 : f32
    %23 = vector.broadcast %cst_13 : f32 to vector<4x1x128xf32>
    %24 = arith.select %22, %16, %23 : vector<4x1x128xi1>, vector<4x1x128xf32>
    %c0_14 = arith.constant 0 : index
    %c0_15 = arith.constant 0 : index
    %c0_16 = arith.constant 0 : index
    %25 = vector.load %arg8[%c0_14, %c0_15, %c0_16] : memref<4x1x1xf32, #tpu.memory_space<vmem>>, vector<4x1x1xf32>
    %cst_17 = arith.constant dense<0xFF800000> : vector<4x1xf32>
    %26 = vector.multi_reduction <maximumf>, %24, %cst_17 [2] : vector<4x1x128xf32> to vector<4x1xf32>
    %27 = vector.shape_cast %26 : vector<4x1xf32> to vector<4x1x1xf32>
    %28 = arith.maximumf %25, %27 : vector<4x1x1xf32>
    %29 = arith.subf %25, %28 : vector<4x1x1xf32>
    %30 = math.exp %29 : vector<4x1x1xf32>
    %31 = vector.broadcast %28 : vector<4x1x1xf32> to vector<4x1x128xf32>
    %32 = arith.subf %24, %31 : vector<4x1x128xf32>
    %33 = math.exp %32 : vector<4x1x128xf32>
    %c0_18 = arith.constant 0 : index
    %c0_19 = arith.constant 0 : index
    %c0_20 = arith.constant 0 : index
    %34 = vector.load %arg9[%c0_18, %c0_19, %c0_20] : memref<4x1x1xf32, #tpu.memory_space<vmem>>, vector<4x1x1xf32>
    %35 = arith.mulf %30, %34 : vector<4x1x1xf32>
    %cst_21 = arith.constant dense<0.000000e+00> : vector<4x1xf32>
    %36 = vector.multi_reduction <add>, %33, %cst_21 [2] : vector<4x1x128xf32> to vector<4x1xf32>
    %37 = vector.shape_cast %36 : vector<4x1xf32> to vector<4x1x1xf32>
    %38 = arith.addf %35, %37 : vector<4x1x1xf32>
    %c0_22 = arith.constant 0 : index
    %c0_23 = arith.constant 0 : index
    %c0_24 = arith.constant 0 : index
    %39 = vector.load %arg9[%c0_22, %c0_23, %c0_24] : memref<4x1x1xf32, #tpu.memory_space<vmem>>, vector<4x1x1xf32>
    tpu.vector_store %arg9[%c0_22, %c0_23, %c0_24], %38 {strides = array<i32>} : memref<4x1x1xf32, #tpu.memory_space<vmem>>, vector<4x1x1xf32>,
    %c0_25 = arith.constant 0 : index
    %c0_26 = arith.constant 0 : index
    %c0_27 = arith.constant 0 : index
    %40 = vector.load %arg10[%c0_25, %c0_26, %c0_27] : memref<4x1x768xf32, #tpu.memory_space<vmem>>, vector<4x1x768xf32>
    %41 = vector.broadcast %30 : vector<4x1x1xf32> to vector<4x1x768xf32>
    %42 = arith.mulf %41, %40 : vector<4x1x768xf32>
    "tpu.trace_start"() <{level = 10 : i32, message = "bqs,bsh->bqh"}> : () -> ()
    %cst_28 = arith.constant dense<0.000000e+00> : vector<4x1x768xf32>
    %43 = tpu.matmul %33, %3, %cst_28 {dimension_numbers = #tpu.dot_dimension_numbers<[2], [1], [1], [2], [0, 0, 0, 1, 1, 2], [0], [0]>} : vector<4x1x128xf32>, vector<4x128x768xf32>, vector<4x1x768xf32> -> vector<4x1x768xf32>
    "tpu.trace_stop"() : () -> ()
    %44 = arith.addf %42, %43 : vector<4x1x768xf32>
    %c0_29 = arith.constant 0 : index
    %c0_30 = arith.constant 0 : index
    %c0_31 = arith.constant 0 : index
    %45 = vector.load %arg10[%c0_29, %c0_30, %c0_31] : memref<4x1x768xf32, #tpu.memory_space<vmem>>, vector<4x1x768xf32>
    tpu.vector_store %arg10[%c0_29, %c0_30, %c0_31], %44 {strides = array<i32>} : memref<4x1x768xf32, #tpu.memory_space<vmem>>, vector<4x1x768xf32>,
    %c0_32 = arith.constant 0 : index
    %c0_33 = arith.constant 0 : index
    %c0_34 = arith.constant 0 : index
    %46 = vector.load %arg8[%c0_32, %c0_33, %c0_34] : memref<4x1x1xf32, #tpu.memory_space<vmem>>, vector<4x1x1xf32>
    tpu.vector_store %arg8[%c0_32, %c0_33, %c0_34], %28 {strides = array<i32>} : memref<4x1x1xf32, #tpu.memory_space<vmem>>, vector<4x1x1xf32>,
    %c1_i32 = arith.constant 1 : i32
    %47 = arith.cmpi eq, %arg1, %c1_i32 : i32
    %48 = arith.extui %47 : i1 to i32
    %c0_i32_35 = arith.constant 0 : i32
    %49 = arith.cmpi ne, %48, %c0_i32_35 : i32
    scf.if %49 {
      %c0_36 = arith.constant 0 : index
      %c0_37 = arith.constant 0 : index
      %c0_38 = arith.constant 0 : index
      %50 = vector.load %arg9[%c0_36, %c0_37, %c0_38] : memref<4x1x1xf32, #tpu.memory_space<vmem>>, vector<4x1x1xf32>
      %51 = tpu.reciprocal %50 : vector<4x1x1xf32> -> vector<4x1x1xf32>
      %c0_39 = arith.constant 0 : index
      %c0_40 = arith.constant 0 : index
      %c0_41 = arith.constant 0 : index
      %52 = vector.load %arg10[%c0_39, %c0_40, %c0_41] : memref<4x1x768xf32, #tpu.memory_space<vmem>>, vector<4x1x768xf32>
      %53 = vector.broadcast %51 : vector<4x1x1xf32> to vector<4x1x768xf32>
      %54 = arith.mulf %52, %53 : vector<4x1x768xf32>
      %55 = vector.shape_cast %54 : vector<4x1x768xf32> to vector<4x768xf32>
      %c0_42 = arith.constant 0 : index
      %c0_43 = arith.constant 0 : index
      %56 = vector.load %arg7[%c0_42, %c0_43] : memref<4x768xf32, #tpu.memory_space<vmem>>, vector<4x768xf32>
      tpu.vector_store %arg7[%c0_42, %c0_43], %55 {strides = array<i32>} : memref<4x768xf32, #tpu.memory_space<vmem>>, vector<4x768xf32>,
    } else {
    }
    return
  }
  func.func @transform_0(%arg0: i32, %arg1: i32) -> (i32, i32, i32) {
    %c0_i32 = arith.constant 0 : i32
    %c0_i32_0 = arith.constant 0 : i32
    return %arg0, %arg1, %c0_i32 : i32, i32, i32
  }
  func.func @transform_1(%arg0: i32, %arg1: i32) -> (i32, i32) {
    %c0_i32 = arith.constant 0 : i32
    %c0_i32_0 = arith.constant 0 : i32
    %c0_i32_1 = arith.constant 0 : i32
    return %c0_i32, %c0_i32_0 : i32, i32
  }
  func.func @transform_2(%arg0: i32, %arg1: i32) -> (i32, i32) {
    %c0_i32 = arith.constant 0 : i32
    %c0_i32_0 = arith.constant 0 : i32
    %c0_i32_1 = arith.constant 0 : i32
    return %c0_i32, %c0_i32_0 : i32, i32
  }
  func.func @transform_3(%arg0: i32, %arg1: i32) -> (i32, i32, i32) {
    %c0_i32 = arith.constant 0 : i32
    %c0_i32_0 = arith.constant 0 : i32
    %c0_i32_1 = arith.constant 0 : i32
    %c0_i32_2 = arith.constant 0 : i32
    return %c0_i32, %c0_i32_0, %c0_i32_1 : i32, i32, i32
  }
  func.func @transform_4(%arg0: i32, %arg1: i32) -> (i32, i32) {
    %c0_i32 = arith.constant 0 : i32
    %c0_i32_0 = arith.constant 0 : i32
    %c0_i32_1 = arith.constant 0 : i32
    return %c0_i32, %c0_i32_0 : i32, i32
  }
  func.func @transform_5(%arg0: i32, %arg1: i32) -> (i32, i32) {
    %c0_i32 = arith.constant 0 : i32
    %c0_i32_0 = arith.constant 0 : i32
    return %arg0, %c0_i32 : i32, i32
  }
}

</mosaic_0001>

<llo_original>
// kernel: tpu_custom_call.1
$region0: #{tpu_custom_call.1}
  #allocation0 [shape = 'u32[]', space=smem, size = 0x4, offset = 0x4, fixed_abs, tag = 'smem constant byte address 0x4 - core index']
  #allocation1 [shape = 'u32[144,128]{1,0:T(1,128)}', space=vmem, size = 0x12000, scoped, tag = 'internal scratch']
  #allocation2 [shape = 'f32[4,1,1]{2,1,0:T(1,128)}', space=vmem, size = 0x800, scoped, tag = 'scratch operand']
  #allocation3 [shape = 'f32[4,1,1]{2,1,0:T(1,128)}', space=vmem, size = 0x800, scoped, tag = 'scratch operand']
  #allocation4 [shape = 'f32[4,1,768]{2,1,0:T(1,128)}', space=vmem, size = 0x3000, scoped, tag = 'scratch operand']
  #allocation5 [shape = 'f32[1,1]{1,0:T(1,128)S(6)}', space=smem, size = 0x200, scoped, tag = 'scoped memory for tpu_custom_call.1']
  #allocation15 [shape = 's32[]', space=sflag, size = 0x4, offset = 0, fixed_abs, tag = 'sflag constant byte address 0x0 - dummy sync flag']
  %s0 = inlined_call_operand.hbm [shape: f32[4,256,768], index: 0, kind: input, shape index: {}]
  %s1 = inlined_call_operand.hbm [shape: f32[768,512], index: 1, kind: input, shape index: {}]
  %s2 = inlined_call_operand.hbm [shape: f32[1,512], index: 2, kind: input, shape index: {}]
  %s3 = inlined_call_operand.hbm [shape: f32[4,1,512], index: 3, kind: input, shape index: {}]
  %s4 = inlined_call_operand.<no memory space> [shape: f32[1,1], index: 4, kind: input, shape index: {}]
  %s5 = inlined_call_operand.hbm [shape: f32[4,768], index: 5, kind: output, shape index: {}]
  %s6 = sld [smem:[#allocation0]]
  $region77: #{tpu_custom_call.1} parent=0
    _
  %s8 = ssub.s32 1, %s6
  %s9 = scalar_select 0, %s8, %s6
  %10 = sst [smem:[#allocation5]] %s4
  $region1: #{tpu_custom_call.1} parent=0
    #allocation6 [shape = 'u8[3145728]{0}', space=vmem, size = 0x300000, scoped, tag = 'input window, operand 0']
    #allocation7 [shape = 's32[2]{0}', space=sflag, size = 0x8, scoped, tag = 'scoped memory for tpu_custom_call.1']
    #allocation8 [shape = 's32[2]{0}', space=sflag, size = 0x8, scoped, tag = 'scoped memory for tpu_custom_call.1']
    #allocation9 [shape = 'u8[1572864]{0}', space=vmem, size = 0x180000, scoped, tag = 'input window, operand 1, single buffered']
    #allocation10 [shape = 's32[1]{0}', space=sflag, size = 0x4, scoped, tag = 'scoped memory for tpu_custom_call.1']
    #allocation11 [shape = 'u8[2048]{0}', space=vmem, size = 0x800, scoped, tag = 'input window, operand 2, single buffered']
    #allocation12 [shape = 'u8[8192]{0}', space=vmem, size = 0x2000, scoped, tag = 'input window, operand 3, single buffered']
    #allocation13 [shape = 's32[1]{0}', space=sflag, size = 0x4, scoped, tag = 'scoped memory for tpu_custom_call.1']
    #allocation14 [shape = 'u8[12288]{0}', space=vmem, size = 0x3000, scoped, tag = 'output window, operand 0, single buffered']
    %11 = vsyncpa [#allocation7], 0
    %s12 = scalar_lea.sflag [#allocation7], 1
    %13 = vsyncpa %s12, 0
    %14 = vsyncpa [#allocation10], 0
    %15 = vsyncpa [#allocation13], 0
    %16 = vsyncpa [#allocation8], 0
    loop: start=0, step=1, limit=4
    $region2: #{tpu_custom_call.1} parent=1 // loop_pre_header
      _
    $region3: #{tpu_custom_call.1} parent=1 // loop_header
      %s18 = sphi 0, %s22
      %p19 = scmp.ge.s32.totalorder %s18, 4
      %s25 = sphi 0, %s37
      %s26 = sphi 0, %s33
      %s27 = sphi 0, %s25
      %s28 = sphi 0, %s26
      %s29 = sphi 0, %s27
      %s30 = sphi 0, %s28
      %s42 = sphi 0, %s44
      %s45 = sphi 0, %s42
      %s46 = sphi 0, %s45
      %s62 = sphi 0, %s46
      %s66 = sphi 0, %s66
      %s68 = sphi 0, %s66
      %s69 = sphi 0, %s68
      %s83 = sphi 0, %s69
      %s87 = sphi 0, %s87
      %s89 = sphi 0, %s87
      %s90 = sphi 0, %s89
      %s104 = sphi 0, %s90
      %s108 = sphi 0, %s108
      %s110 = sphi 0, %s108
      %s111 = sphi 0, %s110
      %s125 = sphi 0, %s111
      %s129 = sphi 0, %s129
      %s131 = sphi 0, %s129
      %s132 = sphi 0, %s131
      %s146 = sphi 0, %s132
      %s152 = sphi 0, %s154
      %s155 = sphi 0, %s152
      %s156 = sphi 0, %s155
      %s172 = sphi 0, %s156
    $region4: #{tpu_custom_call.1} parent=1 // loop_header_branch
      %21 = sbr.rel (%p19) target = $region8
    $region5: #{tpu_custom_call.1} parent=1 // loop_body
      %s23 = ssub.s32 %s18, 1
      %s24 = ssub.s32 %s18, 2
      %s31 = sadd.s32 1, %s26
      %p32 = scmp.ge.s32.totalorder %s31, 2
      %s33 = scalar_select %p32, 0, %s31
      %s34 = sadd.s32 1, %s25
      %s35 = scalar_select %p32, %s34, %s25
      %p36 = scmp.ge.s32.totalorder %s35, 1
      %s37 = scalar_select %p36, 0, %s35
      %s38 = ssub.s32 %s25, %s37
      %s39 = ssub.s32 %s26, %s33
      %s40 = sor.u32 %s38, %s39
      %p41 = scmp.eq.s32.totalorder %s40, 0
      %s43 = sadd.s32 %s42, 1
      %s44 = scalar_select %p41, %s42, %s43
      %p47 = pneg %p41
      %p48 = scmp.eq.s32.totalorder %s18, 1
      %p49 = por %p47, %p48
      %p50 = scmp.ne.s32.totalorder %s42, %s45
      %p51 = scmp.eq.s32.totalorder %s18, 0
      %p52 = por %p50, %p51
      %p53 = scmp.ne.s32.totalorder %s42, %s45
      %p54 = scmp.eq.s32.totalorder %s23, 1
      %p55 = por %p53, %p54
      %p56 = scmp.ne.s32.totalorder %s45, %s46
      %p57 = scmp.eq.s32.totalorder %s23, 0
      %p58 = por %p56, %p57
      %p59 = scmp.ne.s32.totalorder %s45, %s46
      %p60 = scmp.eq.s32.totalorder %s24, 1
      %p61 = por %p59, %p60
      %p63 = scmp.ne.s32.totalorder %s46, %s62
      %p64 = scmp.eq.s32.totalorder %s24, 0
      %p65 = por %p63, %p64
      %s67 = sadd.s32 %s66, 1
      %p70 = scmp.eq.s32.totalorder %s18, 1
      %p71 = scmp.ne.s32.totalorder %s66, %s68
      %p72 = scmp.eq.s32.totalorder %s18, 0
      %p73 = por %p71, %p72
      %p74 = scmp.ne.s32.totalorder %s66, %s68
      %p75 = scmp.eq.s32.totalorder %s23, 1
      %p76 = por %p74, %p75
      %p77 = scmp.ne.s32.totalorder %s68, %s69
      %p78 = scmp.eq.s32.totalorder %s23, 0
      %p79 = por %p77, %p78
      %p80 = scmp.ne.s32.totalorder %s68, %s69
      %p81 = scmp.eq.s32.totalorder %s24, 1
      %p82 = por %p80, %p81
      %p84 = scmp.ne.s32.totalorder %s69, %s83
      %p85 = scmp.eq.s32.totalorder %s24, 0
      %p86 = por %p84, %p85
      %s88 = sadd.s32 %s87, 1
      %p91 = scmp.eq.s32.totalorder %s18, 1
      %p92 = scmp.ne.s32.totalorder %s87, %s89
      %p93 = scmp.eq.s32.totalorder %s18, 0
      %p94 = por %p92, %p93
      %p95 = scmp.ne.s32.totalorder %s87, %s89
      %p96 = scmp.eq.s32.totalorder %s23, 1
      %p97 = por %p95, %p96
      %p98 = scmp.ne.s32.totalorder %s89, %s90
      %p99 = scmp.eq.s32.totalorder %s23, 0
      %p100 = por %p98, %p99
      %p101 = scmp.ne.s32.totalorder %s89, %s90
      %p102 = scmp.eq.s32.totalorder %s24, 1
      %p103 = por %p101, %p102
      %p105 = scmp.ne.s32.totalorder %s90, %s104
      %p106 = scmp.eq.s32.totalorder %s24, 0
      %p107 = por %p105, %p106
      %s109 = sadd.s32 %s108, 1
      %p112 = scmp.eq.s32.totalorder %s18, 1
      %p113 = scmp.ne.s32.totalorder %s108, %s110
      %p114 = scmp.eq.s32.totalorder %s18, 0
      %p115 = por %p113, %p114
      %p116 = scmp.ne.s32.totalorder %s108, %s110
      %p117 = scmp.eq.s32.totalorder %s23, 1
      %p118 = por %p116, %p117
      %p119 = scmp.ne.s32.totalorder %s110, %s111
      %p120 = scmp.eq.s32.totalorder %s23, 0
      %p121 = por %p119, %p120
      %p122 = scmp.ne.s32.totalorder %s110, %s111
      %p123 = scmp.eq.s32.totalorder %s24, 1
      %p124 = por %p122, %p123
      %p126 = scmp.ne.s32.totalorder %s111, %s125
      %p127 = scmp.eq.s32.totalorder %s24, 0
      %p128 = por %p126, %p127
      %s130 = sadd.s32 %s129, 1
      %p133 = scmp.eq.s32.totalorder %s18, 1
      %p134 = scmp.ne.s32.totalorder %s129, %s131
      %p135 = scmp.eq.s32.totalorder %s18, 0
      %p136 = por %p134, %p135
      %p137 = scmp.ne.s32.totalorder %s129, %s131
      %p138 = scmp.eq.s32.totalorder %s23, 1
      %p139 = por %p137, %p138
      %p140 = scmp.ne.s32.totalorder %s131, %s132
      %p141 = scmp.eq.s32.totalorder %s23, 0
      %p142 = por %p140, %p141
      %p143 = scmp.ne.s32.totalorder %s131, %s132
      %p144 = scmp.eq.s32.totalorder %s24, 1
      %p145 = por %p143, %p144
      %p147 = scmp.ne.s32.totalorder %s132, %s146
      %p148 = scmp.eq.s32.totalorder %s24, 0
      %p149 = por %p147, %p148
      %s150 = ssub.s32 %s25, %s37
      %p151 = scmp.eq.s32.totalorder %s150, 0
      %s153 = sadd.s32 %s152, 1
      %s154 = scalar_select %p151, %s152, %s153
      %p157 = pneg %p151
      %p158 = scmp.eq.s32.totalorder %s18, 1
      %p159 = por %p157, %p158
      %p160 = scmp.ne.s32.totalorder %s152, %s155
      %p161 = scmp.eq.s32.totalorder %s18, 0
      %p162 = por %p160, %p161
      %p163 = scmp.ne.s32.totalorder %s152, %s155
      %p164 = scmp.eq.s32.totalorder %s23, 1
      %p165 = por %p163, %p164
      %p166 = scmp.ne.s32.totalorder %s155, %s156
      %p167 = scmp.eq.s32.totalorder %s23, 0
      %p168 = por %p166, %p167
      %p169 = scmp.ne.s32.totalorder %s155, %s156
      %p170 = scmp.eq.s32.totalorder %s24, 1
      %p171 = por %p169, %p170
      %p173 = scmp.ne.s32.totalorder %s156, %s172
      %p174 = scmp.eq.s32.totalorder %s24, 0
      %p175 = por %p173, %p174
      %p176 = scmp.le.s32.totalorder 1, %s18
      %p177 = scmp.lt.s32.totalorder %s18, 3
      %p178 = pnand %p176, %p177
      %p179 = pneg %p178
      // Predicated region
      $region9: #{tpu_custom_call.1} parent=5 // pred_check
        _
      $region10: #{tpu_custom_call.1} parent=5 // pred_check_branch
        %181 = sbr.rel (%p178) target = $region12
      $region11: #{tpu_custom_call.1} parent=5 // pred_region
        %s182 = ssub.s32 %s18, 1
        // Predicated region
        $region13: #{tpu_custom_call.1} parent=11 // pred_check
          %p183 = pneg %p79
        $region14: #{tpu_custom_call.1} parent=11 // pred_check_branch
          %185 = sbr.rel (%p183) target = $region16
        $region15: #{tpu_custom_call.1} parent=11 // pred_region
          %s187 = ssub.s32 49152, 49152
          %188 = vsyncadd [#allocation10], %s187
          %s189 = sshll.u32 [#allocation9], 4
          %s190 = int_to_ptr.vmem [resolvable:$true] %s189
          %195 = dma.hbm_to_vmem [thread:$0]  %s1, 49152, %s190, [#allocation10], 512, 512, 32
        $region16: #{tpu_custom_call.1} parent=11 // pred_fallthru
          _
        // Predicated region
        $region17: #{tpu_custom_call.1} parent=11 // pred_check
          %p196 = pneg %p100
        $region18: #{tpu_custom_call.1} parent=11 // pred_check_branch
          %198 = sbr.rel (%p196) target = $region20
        $region19: #{tpu_custom_call.1} parent=11 // pred_region
          %s200 = ssub.s32 64, 64
          %201 = vsyncadd [#allocation10], %s200
          %s203 = sshll.u32 [#allocation11], 4
          %s204 = int_to_ptr.vmem [resolvable:$true] %s203
          %206 = dma.hbm_to_vmem [thread:$0]  %s2, 64, %s204, [#allocation10]
        $region20: #{tpu_custom_call.1} parent=11 // pred_fallthru
          _
        // Predicated region
        $region21: #{tpu_custom_call.1} parent=11 // pred_check
          %p207 = pneg %p121
        $region22: #{tpu_custom_call.1} parent=11 // pred_check_branch
          %209 = sbr.rel (%p207) target = $region24
        $region23: #{tpu_custom_call.1} parent=11 // pred_region
          %s211 = ssub.s32 256, 256
          %212 = vsyncadd [#allocation13], %s211
          %s213 = sshll.u32 [#allocation12], 4
          %s214 = int_to_ptr.vmem [resolvable:$true] %s213
          %219 = dma.hbm_to_vmem [thread:$0]  %s3, 256, %s214, [#allocation13], 64, 64, 4
        $region24: #{tpu_custom_call.1} parent=11 // pred_fallthru
          _
        // Predicated region
        $region25: #{tpu_custom_call.1} parent=11 // pred_check
          %p220 = pneg %p142
        $region26: #{tpu_custom_call.1} parent=11 // pred_check_branch
          %222 = sbr.rel (%p220) target = $region28
        $region27: #{tpu_custom_call.1} parent=11 // pred_region
          _
        $region28: #{tpu_custom_call.1} parent=11 // pred_fallthru
          _
      $region12: #{tpu_custom_call.1} parent=5 // pred_fallthru
        _
      %p223 = scmp.lt.s32.totalorder %s18, 2
      // Predicated region
      $region29: #{tpu_custom_call.1} parent=5 // pred_check
        %p224 = pneg %p223
      $region30: #{tpu_custom_call.1} parent=5 // pred_check_branch
        %226 = sbr.rel (%p224) target = $region32
      $region31: #{tpu_custom_call.1} parent=5 // pred_region
        // Predicated region
        $region33: #{tpu_custom_call.1} parent=31 // pred_check
          %p227 = pneg %p52
        $region34: #{tpu_custom_call.1} parent=31 // pred_check_branch
          %229 = sbr.rel (%p227) target = $region36
        $region35: #{tpu_custom_call.1} parent=31 // pred_region
          #allocation16 [shape = 'u32[6]{0}', space=smem, size = 0x18, scoped, tag = 'DMA stride descriptor']
          %s230 = sand.u32 %s42, 1
          %s231 = scalar_lea.sflag [#allocation7], %s230
          %s232 = sand.u32 %s42, 1
          %s233 = smul.addr %s232, 3072
          %s234 = scalar_lea.vmem [#allocation6], %s233
          %s235 = smul.u32 4, %s25
          %s236 = smul.u32 16, %s26
          %s238 = ssub.s32 49152, 49152
          %239 = vsyncadd %s231, %s238
          %s240 = smul.addr %s236, 6
          %s241 = smul.addr %s235, 192
          %s242 = sadd.s32 %s240, %s241
          %s243 = smul.addr %s242, 128
          %s244 = scalar_lea.hbm %s0, %s243
          %s246 = sshll.u32 1, 14
          %s247 = sxor.u32 4294967295, %s246
          %s249 = sld [smem:[#allocation0]]
          %s250 = sadd.s32 2, %s249
          %s252 = sshll.u32 7, 26
          %s253 = sxor.u32 4294967295, %s252
          %s254 = sand.u32 0, %s253
          %s255 = sshll.u32 %s250, 26
          %s256 = sor.u32 %s254, %s255
          %s257 = sshll.u32 %s234, 4
          %s258 = int_to_ptr.vmem [resolvable:$true] %s257
          %264 = sst [smem:[#allocation16]] 24576
          %s265 = scalar_lea.smem [#allocation16], 1
          %266 = sst [smem:[%s265]] 12288
          %s267 = scalar_lea.smem [#allocation16], 2
          %268 = sst [smem:[%s267]] 16
          %s269 = scalar_lea.smem [#allocation16], 3
          %270 = sst [smem:[%s269]] 768
          %s271 = scalar_lea.smem [#allocation16], 4
          %272 = sst [smem:[%s271]] 768
          %s273 = scalar_lea.smem [#allocation16], 5
          %274 = sst [smem:[%s273]] 48
          %276 = dma.general %s244, 49152, %s258, %s231, 131072, [#allocation16], %s256, 0
        $region36: #{tpu_custom_call.1} parent=31 // pred_fallthru
          _
      $region32: #{tpu_custom_call.1} parent=5 // pred_fallthru
        _
      %p277 = scmp.le.s32.totalorder 1, %s18
      %p278 = scmp.lt.s32.totalorder %s18, 3
      %p279 = pnand %p277, %p278
      %p280 = pneg %p279
      // Predicated region
      $region37: #{tpu_custom_call.1} parent=5 // pred_check
        _
      $region38: #{tpu_custom_call.1} parent=5 // pred_check_branch
        %282 = sbr.rel (%p279) target = $region40
      $region39: #{tpu_custom_call.1} parent=5 // pred_region
        %s283 = ssub.s32 %s18, 1
        %s284 = sand.u32 %s45, 1
        %s285 = scalar_lea.sflag [#allocation7], %s284
        %s286 = sand.u32 %s45, 1
        %s287 = smul.addr %s286, 3072
        %s288 = scalar_lea.vmem [#allocation6], %s287
        // Predicated region
        $region41: #{tpu_custom_call.1} parent=39 // pred_check
          %p289 = pneg %p58
        $region42: #{tpu_custom_call.1} parent=39 // pred_check_branch
          %291 = sbr.rel (%p289) target = $region44
        $region43: #{tpu_custom_call.1} parent=39 // pred_region
          %292 = dma.done %s285, 49152
        $region44: #{tpu_custom_call.1} parent=39 // pred_fallthru
          _
        // Predicated region
        $region45: #{tpu_custom_call.1} parent=39 // pred_check
          %p293 = pneg %p79
        $region46: #{tpu_custom_call.1} parent=39 // pred_check_branch
          %295 = sbr.rel (%p293) target = $region48
        $region47: #{tpu_custom_call.1} parent=39 // pred_region
          %296 = dma.done [#allocation10], 49152
        $region48: #{tpu_custom_call.1} parent=39 // pred_fallthru
          _
        // Predicated region
        $region49: #{tpu_custom_call.1} parent=39 // pred_check
          %p297 = pneg %p100
        $region50: #{tpu_custom_call.1} parent=39 // pred_check_branch
          %299 = sbr.rel (%p297) target = $region52
        $region51: #{tpu_custom_call.1} parent=39 // pred_region
          %300 = dma.done [#allocation10], 64
        $region52: #{tpu_custom_call.1} parent=39 // pred_fallthru
          _
        // Predicated region
        $region53: #{tpu_custom_call.1} parent=39 // pred_check
          %p301 = pneg %p121
        $region54: #{tpu_custom_call.1} parent=39 // pred_check_branch
          %303 = sbr.rel (%p301) target = $region56
        $region55: #{tpu_custom_call.1} parent=39 // pred_region
          %304 = dma.done [#allocation13], 256
        $region56: #{tpu_custom_call.1} parent=39 // pred_fallthru
          _
        %s305 = sand.u32 %s45, 1
        %s306 = scalar_lea.sflag [#allocation7], %s305
        %s307 = sand.u32 %s45, 1
        %s308 = smul.addr %s307, 3072
        %s309 = scalar_lea.vmem [#allocation6], %s308
        %p310 = pneg %p58
        %p311 = pneg %p55
        %p312 = pneg %p79
        %p313 = pneg %p76
        %p314 = pneg %p100
        %p315 = pneg %p97
        %p316 = pneg %p121
        %p317 = pneg %p118
        %p318 = pneg %p142
        %p319 = pneg %p139
        %p320 = pneg %p168
        %p321 = pneg %p165
        %s322 = smul.u32 4, %s27
        %s323 = smul.u32 16, %s28
        %p324 = scmp.eq.s32.totalorder %s28, 0
        // Predicated region
        $region57: #{tpu_custom_call.1} parent=39 // pred_check
          %p325 = pneg %p324
        $region58: #{tpu_custom_call.1} parent=39 // pred_check_branch
          %327 = sbr.rel (%p325) target = $region60
        $region59: #{tpu_custom_call.1} parent=39 // pred_region
          %vm328 = vcmask 0
          %329 = vst.msk [vmem:[#allocation2] sm:$0x1] %vm328, -inf
          %330 = vst.msk [vmem:[#allocation2 + $0x1] sm:$0x1] %vm328, -inf
          %331 = vst.msk [vmem:[#allocation2 + $0x2] sm:$0x1] %vm328, -inf
          %332 = vst.msk [vmem:[#allocation2 + $0x3] sm:$0x1] %vm328, -inf
          %333 = vst.msk [vmem:[#allocation3] sm:$0x1] %vm328, 0.0
          %334 = vst.msk [vmem:[#allocation3 + $0x1] sm:$0x1] %vm328, 0.0
          %335 = vst.msk [vmem:[#allocation3 + $0x2] sm:$0x1] %vm328, 0.0
          %336 = vst.msk [vmem:[#allocation3 + $0x3] sm:$0x1] %vm328, 0.0
          %v337 = vlaneseq
          %vm338 = vcmp.ge.s32.totalorder %v337, 0
          %vm339 = vcmp.lt.s32.totalorder %v337, 768
          %vm340 = vmand %vm338, %vm339
          %341 = vst.msk [vmem:[#allocation4] sm:$0x3f] %vm340, 0.0
          %342 = vst.msk [vmem:[#allocation4 + $0x6] sm:$0x3f] %vm340, 0.0
          %343 = vst.msk [vmem:[#allocation4 + $0xc] sm:$0x3f] %vm340, 0.0
          %344 = vst.msk [vmem:[#allocation4 + $0x12] sm:$0x3f] %vm340, 0.0
        $region60: #{tpu_custom_call.1} parent=39 // pred_fallthru
          _
        %v345 = vld [vmem:[%s288] sm:$0xff]
        %v346 = vld [vmem:[%s288 + $0x8] sm:$0xff]
        %v347 = vld [vmem:[%s288 + $0x10] sm:$0xff]
        %v348 = vld [vmem:[%s288 + $0x18] sm:$0xff]
        %v349 = vld [vmem:[%s288 + $0x20] sm:$0xff]
        %v350 = vld [vmem:[%s288 + $0x28] sm:$0xff]
        %v351 = vld [vmem:[%s288 + $0x30] sm:$0xff]
        %v352 = vld [vmem:[%s288 + $0x38] sm:$0xff]
        %v353 = vld [vmem:[%s288 + $0x40] sm:$0xff]
        %v354 = vld [vmem:[%s288 + $0x48] sm:$0xff]
        %v355 = vld [vmem:[%s288 + $0x50] sm:$0xff]
        %v356 = vld [vmem:[%s288 + $0x58] sm:$0xff]
        %v357 = vld [vmem:[%s288 + $0x60] sm:$0xff]
        %v358 = vld [vmem:[%s288 + $0x68] sm:$0xff]
        %v359 = vld [vmem:[%s288 + $0x70] sm:$0xff]
        %v360 = vld [vmem:[%s288 + $0x78] sm:$0xff]
        %v361 = vld [vmem:[%s288 + $0x80] sm:$0xff]
        %v362 = vld [vmem:[%s288 + $0x88] sm:$0xff]
        %v363 = vld [vmem:[%s288 + $0x90] sm:$0xff]
        %v364 = vld [vmem:[%s288 + $0x98] sm:$0xff]
        %v365 = vld [vmem:[%s288 + $0xa0] sm:$0xff]
        %v366 = vld [vmem:[%s288 + $0xa8] sm:$0xff]
        %v367 = vld [vmem:[%s288 + $0xb0] sm:$0xff]
        %v368 = vld [vmem:[%s288 + $0xb8] sm:$0xff]
        %v369 = vld [vmem:[%s288 + $0xc0] sm:$0xff]
        %v370 = vld [vmem:[%s288 + $0xc8] sm:$0xff]
        %v371 = vld [vmem:[%s288 + $0xd0] sm:$0xff]
        %v372 = vld [vmem:[%s288 + $0xd8] sm:$0xff]
        %v373 = vld [vmem:[%s288 + $0xe0] sm:$0xff]
        %v374 = vld [vmem:[%s288 + $0xe8] sm:$0xff]
        %v375 = vld [vmem:[%s288 + $0xf0] sm:$0xff]
        %v376 = vld [vmem:[%s288 + $0xf8] sm:$0xff]
        %v377 = vld [vmem:[%s288 + $0x100] sm:$0xff]
        %v378 = vld [vmem:[%s288 + $0x108] sm:$0xff]
        %v379 = vld [vmem:[%s288 + $0x110] sm:$0xff]
        %v380 = vld [vmem:[%s288 + $0x118] sm:$0xff]
        %v381 = vld [vmem:[%s288 + $0x120] sm:$0xff]
        %v382 = vld [vmem:[%s288 + $0x128] sm:$0xff]
        %v383 = vld [vmem:[%s288 + $0x130] sm:$0xff]
        %v384 = vld [vmem:[%s288 + $0x138] sm:$0xff]
        %v385 = vld [vmem:[%s288 + $0x140] sm:$0xff]
        %v386 = vld [vmem:[%s288 + $0x148] sm:$0xff]
        %v387 = vld [vmem:[%s288 + $0x150] sm:$0xff]
        %v388 = vld [vmem:[%s288 + $0x158] sm:$0xff]
        %v389 = vld [vmem:[%s288 + $0x160] sm:$0xff]
        %v390 = vld [vmem:[%s288 + $0x168] sm:$0xff]
        %v391 = vld [vmem:[%s288 + $0x170] sm:$0xff]
        %v392 = vld [vmem:[%s288 + $0x178] sm:$0xff]
        %v393 = vld [vmem:[%s288 + $0x180] sm:$0xff]
        %v394 = vld [vmem:[%s288 + $0x188] sm:$0xff]
        %v395 = vld [vmem:[%s288 + $0x190] sm:$0xff]
        %v396 = vld [vmem:[%s288 + $0x198] sm:$0xff]
        %v397 = vld [vmem:[%s288 + $0x1a0] sm:$0xff]
        %v398 = vld [vmem:[%s288 + $0x1a8] sm:$0xff]
        %v399 = vld [vmem:[%s288 + $0x1b0] sm:$0xff]
        %v400 = vld [vmem:[%s288 + $0x1b8] sm:$0xff]
        %v401 = vld [vmem:[%s288 + $0x1c0] sm:$0xff]
        %v402 = vld [vmem:[%s288 + $0x1c8] sm:$0xff]
        %v403 = vld [vmem:[%s288 + $0x1d0] sm:$0xff]
        %v404 = vld [vmem:[%s288 + $0x1d8] sm:$0xff]
        %v405 = vld [vmem:[%s288 + $0x1e0] sm:$0xff]
        %v406 = vld [vmem:[%s288 + $0x1e8] sm:$0xff]
        %v407 = vld [vmem:[%s288 + $0x1f0] sm:$0xff]
        %v408 = vld [vmem:[%s288 + $0x1f8] sm:$0xff]
        %v409 = vld [vmem:[%s288 + $0x200] sm:$0xff]
        %v410 = vld [vmem:[%s288 + $0x208] sm:$0xff]
        %v411 = vld [vmem:[%s288 + $0x210] sm:$0xff]
        %v412 = vld [vmem:[%s288 + $0x218] sm:$0xff]
        %v413 = vld [vmem:[%s288 + $0x220] sm:$0xff]
        %v414 = vld [vmem:[%s288 + $0x228] sm:$0xff]
        %v415 = vld [vmem:[%s288 + $0x230] sm:$0xff]
        %v416 = vld [vmem:[%s288 + $0x238] sm:$0xff]
        %v417 = vld [vmem:[%s288 + $0x240] sm:$0xff]
        %v418 = vld [vmem:[%s288 + $0x248] sm:$0xff]
        %v419 = vld [vmem:[%s288 + $0x250] sm:$0xff]
        %v420 = vld [vmem:[%s288 + $0x258] sm:$0xff]
        %v421 = vld [vmem:[%s288 + $0x260] sm:$0xff]
        %v422 = vld [vmem:[%s288 + $0x268] sm:$0xff]
        %v423 = vld [vmem:[%s288 + $0x270] sm:$0xff]
        %v424 = vld [vmem:[%s288 + $0x278] sm:$0xff]
        %v425 = vld [vmem:[%s288 + $0x280] sm:$0xff]
        %v426 = vld [vmem:[%s288 + $0x288] sm:$0xff]
        %v427 = vld [vmem:[%s288 + $0x290] sm:$0xff]
        %v428 = vld [vmem:[%s288 + $0x298] sm:$0xff]
        %v429 = vld [vmem:[%s288 + $0x2a0] sm:$0xff]
        %v430 = vld [vmem:[%s288 + $0x2a8] sm:$0xff]
        %v431 = vld [vmem:[%s288 + $0x2b0] sm:$0xff]
        %v432 = vld [vmem:[%s288 + $0x2b8] sm:$0xff]
        %v433 = vld [vmem:[%s288 + $0x2c0] sm:$0xff]
        %v434 = vld [vmem:[%s288 + $0x2c8] sm:$0xff]
        %v435 = vld [vmem:[%s288 + $0x2d0] sm:$0xff]
        %v436 = vld [vmem:[%s288 + $0x2d8] sm:$0xff]
        %v437 = vld [vmem:[%s288 + $0x2e0] sm:$0xff]
        %v438 = vld [vmem:[%s288 + $0x2e8] sm:$0xff]
        %v439 = vld [vmem:[%s288 + $0x2f0] sm:$0xff]
        %v440 = vld [vmem:[%s288 + $0x2f8] sm:$0xff]
        %v441 = vld [vmem:[%s288 + $0x300] sm:$0xff]
        %v442 = vld [vmem:[%s288 + $0x308] sm:$0xff]
        %v443 = vld [vmem:[%s288 + $0x310] sm:$0xff]
        %v444 = vld [vmem:[%s288 + $0x318] sm:$0xff]
        %v445 = vld [vmem:[%s288 + $0x320] sm:$0xff]
        %v446 = vld [vmem:[%s288 + $0x328] sm:$0xff]
        %v447 = vld [vmem:[%s288 + $0x330] sm:$0xff]
        %v448 = vld [vmem:[%s288 + $0x338] sm:$0xff]
        %v449 = vld [vmem:[%s288 + $0x340] sm:$0xff]
        %v450 = vld [vmem:[%s288 + $0x348] sm:$0xff]
        %v451 = vld [vmem:[%s288 + $0x350] sm:$0xff]
        %v452 = vld [vmem:[%s288 + $0x358] sm:$0xff]
        %v453 = vld [vmem:[%s288 + $0x360] sm:$0xff]
        %v454 = vld [vmem:[%s288 + $0x368] sm:$0xff]
        %v455 = vld [vmem:[%s288 + $0x370] sm:$0xff]
        %v456 = vld [vmem:[%s288 + $0x378] sm:$0xff]
        %v457 = vld [vmem:[%s288 + $0x380] sm:$0xff]
        %v458 = vld [vmem:[%s288 + $0x388] sm:$0xff]
        %v459 = vld [vmem:[%s288 + $0x390] sm:$0xff]
        %v460 = vld [vmem:[%s288 + $0x398] sm:$0xff]
        %v461 = vld [vmem:[%s288 + $0x3a0] sm:$0xff]
        %v462 = vld [vmem:[%s288 + $0x3a8] sm:$0xff]
        %v463 = vld [vmem:[%s288 + $0x3b0] sm:$0xff]
        %v464 = vld [vmem:[%s288 + $0x3b8] sm:$0xff]
        %v465 = vld [vmem:[%s288 + $0x3c0] sm:$0xff]
        %v466 = vld [vmem:[%s288 + $0x3c8] sm:$0xff]
        %v467 = vld [vmem:[%s288 + $0x3d0] sm:$0xff]
        %v468 = vld [vmem:[%s288 + $0x3d8] sm:$0xff]
        %v469 = vld [vmem:[%s288 + $0x3e0] sm:$0xff]
        %v470 = vld [vmem:[%s288 + $0x3e8] sm:$0xff]
        %v471 = vld [vmem:[%s288 + $0x3f0] sm:$0xff]
        %v472 = vld [vmem:[%s288 + $0x3f8] sm:$0xff]
        %v473 = vld [vmem:[%s288 + $0x400] sm:$0xff]
        %v474 = vld [vmem:[%s288 + $0x408] sm:$0xff]
        %v475 = vld [vmem:[%s288 + $0x410] sm:$0xff]
        %v476 = vld [vmem:[%s288 + $0x418] sm:$0xff]
        %v477 = vld [vmem:[%s288 + $0x420] sm:$0xff]
        %v478 = vld [vmem:[%s288 + $0x428] sm:$0xff]
        %v479 = vld [vmem:[%s288 + $0x430] sm:$0xff]
        %v480 = vld [vmem:[%s288 + $0x438] sm:$0xff]
        %v481 = vld [vmem:[%s288 + $0x440] sm:$0xff]
        %v482 = vld [vmem:[%s288 + $0x448] sm:$0xff]
        %v483 = vld [vmem:[%s288 + $0x450] sm:$0xff]
        %v484 = vld [vmem:[%s288 + $0x458] sm:$0xff]
        %v485 = vld [vmem:[%s288 + $0x460] sm:$0xff]
        %v486 = vld [vmem:[%s288 + $0x468] sm:$0xff]
        %v487 = vld [vmem:[%s288 + $0x470] sm:$0xff]
        %v488 = vld [vmem:[%s288 + $0x478] sm:$0xff]
        %v489 = vld [vmem:[%s288 + $0x480] sm:$0xff]
        %v490 = vld [vmem:[%s288 + $0x488] sm:$0xff]
        %v491 = vld [vmem:[%s288 + $0x490] sm:$0xff]
        %v492 = vld [vmem:[%s288 + $0x498] sm:$0xff]
        %v493 = vld [vmem:[%s288 + $0x4a0] sm:$0xff]
        %v494 = vld [vmem:[%s288 + $0x4a8] sm:$0xff]
        %v495 = vld [vmem:[%s288 + $0x4b0] sm:$0xff]
        %v496 = vld [vmem:[%s288 + $0x4b8] sm:$0xff]
        %v497 = vld [vmem:[%s288 + $0x4c0] sm:$0xff]
        %v498 = vld [vmem:[%s288 + $0x4c8] sm:$0xff]
        %v499 = vld [vmem:[%s288 + $0x4d0] sm:$0xff]
        %v500 = vld [vmem:[%s288 + $0x4d8] sm:$0xff]
        %v501 = vld [vmem:[%s288 + $0x4e0] sm:$0xff]
        %v502 = vld [vmem:[%s288 + $0x4e8] sm:$0xff]
        %v503 = vld [vmem:[%s288 + $0x4f0] sm:$0xff]
        %v504 = vld [vmem:[%s288 + $0x4f8] sm:$0xff]
        %v505 = vld [vmem:[%s288 + $0x500] sm:$0xff]
        %v506 = vld [vmem:[%s288 + $0x508] sm:$0xff]
        %v507 = vld [vmem:[%s288 + $0x510] sm:$0xff]
        %v508 = vld [vmem:[%s288 + $0x518] sm:$0xff]
        %v509 = vld [vmem:[%s288 + $0x520] sm:$0xff]
        %v510 = vld [vmem:[%s288 + $0x528] sm:$0xff]
        %v511 = vld [vmem:[%s288 + $0x530] sm:$0xff]
        %v512 = vld [vmem:[%s288 + $0x538] sm:$0xff]
        %v513 = vld [vmem:[%s288 + $0x540] sm:$0xff]
        %v514 = vld [vmem:[%s288 + $0x548] sm:$0xff]
        %v515 = vld [vmem:[%s288 + $0x550] sm:$0xff]
        %v516 = vld [vmem:[%s288 + $0x558] sm:$0xff]
        %v517 = vld [vmem:[%s288 + $0x560] sm:$0xff]
        %v518 = vld [vmem:[%s288 + $0x568] sm:$0xff]
        %v519 = vld [vmem:[%s288 + $0x570] sm:$0xff]
        %v520 = vld [vmem:[%s288 + $0x578] sm:$0xff]
        %v521 = vld [vmem:[%s288 + $0x580] sm:$0xff]
        %v522 = vld [vmem:[%s288 + $0x588] sm:$0xff]
        %v523 = vld [vmem:[%s288 + $0x590] sm:$0xff]
        %v524 = vld [vmem:[%s288 + $0x598] sm:$0xff]
        %v525 = vld [vmem:[%s288 + $0x5a0] sm:$0xff]
        %v526 = vld [vmem:[%s288 + $0x5a8] sm:$0xff]
        %v527 = vld [vmem:[%s288 + $0x5b0] sm:$0xff]
        %v528 = vld [vmem:[%s288 + $0x5b8] sm:$0xff]
        %v529 = vld [vmem:[%s288 + $0x5c0] sm:$0xff]
        %v530 = vld [vmem:[%s288 + $0x5c8] sm:$0xff]
        %v531 = vld [vmem:[%s288 + $0x5d0] sm:$0xff]
        %v532 = vld [vmem:[%s288 + $0x5d8] sm:$0xff]
        %v533 = vld [vmem:[%s288 + $0x5e0] sm:$0xff]
        %v534 = vld [vmem:[%s288 + $0x5e8] sm:$0xff]
        %v535 = vld [vmem:[%s288 + $0x5f0] sm:$0xff]
        %v536 = vld [vmem:[%s288 + $0x5f8] sm:$0xff]
        %v537 = vld [vmem:[%s288 + $0x600] sm:$0xff]
        %v538 = vld [vmem:[%s288 + $0x608] sm:$0xff]
        %v539 = vld [vmem:[%s288 + $0x610] sm:$0xff]
        %v540 = vld [vmem:[%s288 + $0x618] sm:$0xff]
        %v541 = vld [vmem:[%s288 + $0x620] sm:$0xff]
        %v542 = vld [vmem:[%s288 + $0x628] sm:$0xff]
        %v543 = vld [vmem:[%s288 + $0x630] sm:$0xff]
        %v544 = vld [vmem:[%s288 + $0x638] sm:$0xff]
        %v545 = vld [vmem:[%s288 + $0x640] sm:$0xff]
        %v546 = vld [vmem:[%s288 + $0x648] sm:$0xff]
        %v547 = vld [vmem:[%s288 + $0x650] sm:$0xff]
        %v548 = vld [vmem:[%s288 + $0x658] sm:$0xff]
        %v549 = vld [vmem:[%s288 + $0x660] sm:$0xff]
        %v550 = vld [vmem:[%s288 + $0x668] sm:$0xff]
        %v551 = vld [vmem:[%s288 + $0x670] sm:$0xff]
        %v552 = vld [vmem:[%s288 + $0x678] sm:$0xff]
        %v553 = vld [vmem:[%s288 + $0x680] sm:$0xff]
        %v554 = vld [vmem:[%s288 + $0x688] sm:$0xff]
        %v555 = vld [vmem:[%s288 + $0x690] sm:$0xff]
        %v556 = vld [vmem:[%s288 + $0x698] sm:$0xff]
        %v557 = vld [vmem:[%s288 + $0x6a0] sm:$0xff]
        %v558 = vld [vmem:[%s288 + $0x6a8] sm:$0xff]
        %v559 = vld [vmem:[%s288 + $0x6b0] sm:$0xff]
        %v560 = vld [vmem:[%s288 + $0x6b8] sm:$0xff]
        %v561 = vld [vmem:[%s288 + $0x6c0] sm:$0xff]
        %v562 = vld [vmem:[%s288 + $0x6c8] sm:$0xff]
        %v563 = vld [vmem:[%s288 + $0x6d0] sm:$0xff]
        %v564 = vld [vmem:[%s288 + $0x6d8] sm:$0xff]
        %v565 = vld [vmem:[%s288 + $0x6e0] sm:$0xff]
        %v566 = vld [vmem:[%s288 + $0x6e8] sm:$0xff]
        %v567 = vld [vmem:[%s288 + $0x6f0] sm:$0xff]
        %v568 = vld [vmem:[%s288 + $0x6f8] sm:$0xff]
        %v569 = vld [vmem:[%s288 + $0x700] sm:$0xff]
        %v570 = vld [vmem:[%s288 + $0x708] sm:$0xff]
        %v571 = vld [vmem:[%s288 + $0x710] sm:$0xff]
        %v572 = vld [vmem:[%s288 + $0x718] sm:$0xff]
        %v573 = vld [vmem:[%s288 + $0x720] sm:$0xff]
        %v574 = vld [vmem:[%s288 + $0x728] sm:$0xff]
        %v575 = vld [vmem:[%s288 + $0x730] sm:$0xff]
        %v576 = vld [vmem:[%s288 + $0x738] sm:$0xff]
        %v577 = vld [vmem:[%s288 + $0x740] sm:$0xff]
        %v578 = vld [vmem:[%s288 + $0x748] sm:$0xff]
        %v579 = vld [vmem:[%s288 + $0x750] sm:$0xff]
        %v580 = vld [vmem:[%s288 + $0x758] sm:$0xff]
        %v581 = vld [vmem:[%s288 + $0x760] sm:$0xff]
        %v582 = vld [vmem:[%s288 + $0x768] sm:$0xff]
        %v583 = vld [vmem:[%s288 + $0x770] sm:$0xff]
        %v584 = vld [vmem:[%s288 + $0x778] sm:$0xff]
        %v585 = vld [vmem:[%s288 + $0x780] sm:$0xff]
        %v586 = vld [vmem:[%s288 + $0x788] sm:$0xff]
        %v587 = vld [vmem:[%s288 + $0x790] sm:$0xff]
        %v588 = vld [vmem:[%s288 + $0x798] sm:$0xff]
        %v589 = vld [vmem:[%s288 + $0x7a0] sm:$0xff]
        %v590 = vld [vmem:[%s288 + $0x7a8] sm:$0xff]
        %v591 = vld [vmem:[%s288 + $0x7b0] sm:$0xff]
        %v592 = vld [vmem:[%s288 + $0x7b8] sm:$0xff]
        %v593 = vld [vmem:[%s288 + $0x7c0] sm:$0xff]
        %v594 = vld [vmem:[%s288 + $0x7c8] sm:$0xff]
        %v595 = vld [vmem:[%s288 + $0x7d0] sm:$0xff]
        %v596 = vld [vmem:[%s288 + $0x7d8] sm:$0xff]
        %v597 = vld [vmem:[%s288 + $0x7e0] sm:$0xff]
        %v598 = vld [vmem:[%s288 + $0x7e8] sm:$0xff]
        %v599 = vld [vmem:[%s288 + $0x7f0] sm:$0xff]
        %v600 = vld [vmem:[%s288 + $0x7f8] sm:$0xff]
        %v601 = vld [vmem:[%s288 + $0x800] sm:$0xff]
        %v602 = vld [vmem:[%s288 + $0x808] sm:$0xff]
        %v603 = vld [vmem:[%s288 + $0x810] sm:$0xff]
        %v604 = vld [vmem:[%s288 + $0x818] sm:$0xff]
        %v605 = vld [vmem:[%s288 + $0x820] sm:$0xff]
        %v606 = vld [vmem:[%s288 + $0x828] sm:$0xff]
        %v607 = vld [vmem:[%s288 + $0x830] sm:$0xff]
        %v608 = vld [vmem:[%s288 + $0x838] sm:$0xff]
        %v609 = vld [vmem:[%s288 + $0x840] sm:$0xff]
        %v610 = vld [vmem:[%s288 + $0x848] sm:$0xff]
        %v611 = vld [vmem:[%s288 + $0x850] sm:$0xff]
        %v612 = vld [vmem:[%s288 + $0x858] sm:$0xff]
        %v613 = vld [vmem:[%s288 + $0x860] sm:$0xff]
        %v614 = vld [vmem:[%s288 + $0x868] sm:$0xff]
        %v615 = vld [vmem:[%s288 + $0x870] sm:$0xff]
        %v616 = vld [vmem:[%s288 + $0x878] sm:$0xff]
        %v617 = vld [vmem:[%s288 + $0x880] sm:$0xff]
        %v618 = vld [vmem:[%s288 + $0x888] sm:$0xff]
        %v619 = vld [vmem:[%s288 + $0x890] sm:$0xff]
        %v620 = vld [vmem:[%s288 + $0x898] sm:$0xff]
        %v621 = vld [vmem:[%s288 + $0x8a0] sm:$0xff]
        %v622 = vld [vmem:[%s288 + $0x8a8] sm:$0xff]
        %v623 = vld [vmem:[%s288 + $0x8b0] sm:$0xff]
        %v624 = vld [vmem:[%s288 + $0x8b8] sm:$0xff]
        %v625 = vld [vmem:[%s288 + $0x8c0] sm:$0xff]
        %v626 = vld [vmem:[%s288 + $0x8c8] sm:$0xff]
        %v627 = vld [vmem:[%s288 + $0x8d0] sm:$0xff]
        %v628 = vld [vmem:[%s288 + $0x8d8] sm:$0xff]
        %v629 = vld [vmem:[%s288 + $0x8e0] sm:$0xff]
        %v630 = vld [vmem:[%s288 + $0x8e8] sm:$0xff]
        %v631 = vld [vmem:[%s288 + $0x8f0] sm:$0xff]
        %v632 = vld [vmem:[%s288 + $0x8f8] sm:$0xff]
        %v633 = vld [vmem:[%s288 + $0x900] sm:$0xff]
        %v634 = vld [vmem:[%s288 + $0x908] sm:$0xff]
        %v635 = vld [vmem:[%s288 + $0x910] sm:$0xff]
        %v636 = vld [vmem:[%s288 + $0x918] sm:$0xff]
        %v637 = vld [vmem:[%s288 + $0x920] sm:$0xff]
        %v638 = vld [vmem:[%s288 + $0x928] sm:$0xff]
        %v639 = vld [vmem:[%s288 + $0x930] sm:$0xff]
        %v640 = vld [vmem:[%s288 + $0x938] sm:$0xff]
        %v641 = vld [vmem:[%s288 + $0x940] sm:$0xff]
        %v642 = vld [vmem:[%s288 + $0x948] sm:$0xff]
        %v643 = vld [vmem:[%s288 + $0x950] sm:$0xff]
        %v644 = vld [vmem:[%s288 + $0x958] sm:$0xff]
        %v645 = vld [vmem:[%s288 + $0x960] sm:$0xff]
        %v646 = vld [vmem:[%s288 + $0x968] sm:$0xff]
        %v647 = vld [vmem:[%s288 + $0x970] sm:$0xff]
        %v648 = vld [vmem:[%s288 + $0x978] sm:$0xff]
        %v649 = vld [vmem:[%s288 + $0x980] sm:$0xff]
        %v650 = vld [vmem:[%s288 + $0x988] sm:$0xff]
        %v651 = vld [vmem:[%s288 + $0x990] sm:$0xff]
        %v652 = vld [vmem:[%s288 + $0x998] sm:$0xff]
        %v653 = vld [vmem:[%s288 + $0x9a0] sm:$0xff]
        %v654 = vld [vmem:[%s288 + $0x9a8] sm:$0xff]
        %v655 = vld [vmem:[%s288 + $0x9b0] sm:$0xff]
        %v656 = vld [vmem:[%s288 + $0x9b8] sm:$0xff]
        %v657 = vld [vmem:[%s288 + $0x9c0] sm:$0xff]
        %v658 = vld [vmem:[%s288 + $0x9c8] sm:$0xff]
        %v659 = vld [vmem:[%s288 + $0x9d0] sm:$0xff]
        %v660 = vld [vmem:[%s288 + $0x9d8] sm:$0xff]
        %v661 = vld [vmem:[%s288 + $0x9e0] sm:$0xff]
        %v662 = vld [vmem:[%s288 + $0x9e8] sm:$0xff]
        %v663 = vld [vmem:[%s288 + $0x9f0] sm:$0xff]
        %v664 = vld [vmem:[%s288 + $0x9f8] sm:$0xff]
        %v665 = vld [vmem:[%s288 + $0xa00] sm:$0xff]
        %v666 = vld [vmem:[%s288 + $0xa08] sm:$0xff]
        %v667 = vld [vmem:[%s288 + $0xa10] sm:$0xff]
        %v668 = vld [vmem:[%s288 + $0xa18] sm:$0xff]
        %v669 = vld [vmem:[%s288 + $0xa20] sm:$0xff]
        %v670 = vld [vmem:[%s288 + $0xa28] sm:$0xff]
        %v671 = vld [vmem:[%s288 + $0xa30] sm:$0xff]
        %v672 = vld [vmem:[%s288 + $0xa38] sm:$0xff]
        %v673 = vld [vmem:[%s288 + $0xa40] sm:$0xff]
        %v674 = vld [vmem:[%s288 + $0xa48] sm:$0xff]
        %v675 = vld [vmem:[%s288 + $0xa50] sm:$0xff]
        %v676 = vld [vmem:[%s288 + $0xa58] sm:$0xff]
        %v677 = vld [vmem:[%s288 + $0xa60] sm:$0xff]
        %v678 = vld [vmem:[%s288 + $0xa68] sm:$0xff]
        %v679 = vld [vmem:[%s288 + $0xa70] sm:$0xff]
        %v680 = vld [vmem:[%s288 + $0xa78] sm:$0xff]
        %v681 = vld [vmem:[%s288 + $0xa80] sm:$0xff]
        %v682 = vld [vmem:[%s288 + $0xa88] sm:$0xff]
        %v683 = vld [vmem:[%s288 + $0xa90] sm:$0xff]
        %v684 = vld [vmem:[%s288 + $0xa98] sm:$0xff]
        %v685 = vld [vmem:[%s288 + $0xaa0] sm:$0xff]
        %v686 = vld [vmem:[%s288 + $0xaa8] sm:$0xff]
        %v687 = vld [vmem:[%s288 + $0xab0] sm:$0xff]
        %v688 = vld [vmem:[%s288 + $0xab8] sm:$0xff]
        %v689 = vld [vmem:[%s288 + $0xac0] sm:$0xff]
        %v690 = vld [vmem:[%s288 + $0xac8] sm:$0xff]
        %v691 = vld [vmem:[%s288 + $0xad0] sm:$0xff]
        %v692 = vld [vmem:[%s288 + $0xad8] sm:$0xff]
        %v693 = vld [vmem:[%s288 + $0xae0] sm:$0xff]
        %v694 = vld [vmem:[%s288 + $0xae8] sm:$0xff]
        %v695 = vld [vmem:[%s288 + $0xaf0] sm:$0xff]
        %v696 = vld [vmem:[%s288 + $0xaf8] sm:$0xff]
        %v697 = vld [vmem:[%s288 + $0xb00] sm:$0xff]
        %v698 = vld [vmem:[%s288 + $0xb08] sm:$0xff]
        %v699 = vld [vmem:[%s288 + $0xb10] sm:$0xff]
        %v700 = vld [vmem:[%s288 + $0xb18] sm:$0xff]
        %v701 = vld [vmem:[%s288 + $0xb20] sm:$0xff]
        %v702 = vld [vmem:[%s288 + $0xb28] sm:$0xff]
        %v703 = vld [vmem:[%s288 + $0xb30] sm:$0xff]
        %v704 = vld [vmem:[%s288 + $0xb38] sm:$0xff]
        %v705 = vld [vmem:[%s288 + $0xb40] sm:$0xff]
        %v706 = vld [vmem:[%s288 + $0xb48] sm:$0xff]
        %v707 = vld [vmem:[%s288 + $0xb50] sm:$0xff]
        %v708 = vld [vmem:[%s288 + $0xb58] sm:$0xff]
        %v709 = vld [vmem:[%s288 + $0xb60] sm:$0xff]
        %v710 = vld [vmem:[%s288 + $0xb68] sm:$0xff]
        %v711 = vld [vmem:[%s288 + $0xb70] sm:$0xff]
        %v712 = vld [vmem:[%s288 + $0xb78] sm:$0xff]
        %v713 = vld [vmem:[%s288 + $0xb80] sm:$0xff]
        %v714 = vld [vmem:[%s288 + $0xb88] sm:$0xff]
        %v715 = vld [vmem:[%s288 + $0xb90] sm:$0xff]
        %v716 = vld [vmem:[%s288 + $0xb98] sm:$0xff]
        %v717 = vld [vmem:[%s288 + $0xba0] sm:$0xff]
        %v718 = vld [vmem:[%s288 + $0xba8] sm:$0xff]
        %v719 = vld [vmem:[%s288 + $0xbb0] sm:$0xff]
        %v720 = vld [vmem:[%s288 + $0xbb8] sm:$0xff]
        %v721 = vld [vmem:[%s288 + $0xbc0] sm:$0xff]
        %v722 = vld [vmem:[%s288 + $0xbc8] sm:$0xff]
        %v723 = vld [vmem:[%s288 + $0xbd0] sm:$0xff]
        %v724 = vld [vmem:[%s288 + $0xbd8] sm:$0xff]
        %v725 = vld [vmem:[%s288 + $0xbe0] sm:$0xff]
        %v726 = vld [vmem:[%s288 + $0xbe8] sm:$0xff]
        %v727 = vld [vmem:[%s288 + $0xbf0] sm:$0xff]
        %v728 = vld [vmem:[%s288 + $0xbf8] sm:$0xff]
        %v729 = vld [vmem:[#allocation9] sm:$0xff]
        %v730 = vld [vmem:[#allocation9 + $0x8] sm:$0xff]
        %v731 = vld [vmem:[#allocation9 + $0x10] sm:$0xff]
        %v732 = vld [vmem:[#allocation9 + $0x18] sm:$0xff]
        %v733 = vld [vmem:[#allocation9 + $0x20] sm:$0xff]
        %v734 = vld [vmem:[#allocation9 + $0x28] sm:$0xff]
        %v735 = vld [vmem:[#allocation9 + $0x30] sm:$0xff]
        %v736 = vld [vmem:[#allocation9 + $0x38] sm:$0xff]
        %v737 = vld [vmem:[#allocation9 + $0x40] sm:$0xff]
        %v738 = vld [vmem:[#allocation9 + $0x48] sm:$0xff]
        %v739 = vld [vmem:[#allocation9 + $0x50] sm:$0xff]
        %v740 = vld [vmem:[#allocation9 + $0x58] sm:$0xff]
        %v741 = vld [vmem:[#allocation9 + $0x60] sm:$0xff]
        %v742 = vld [vmem:[#allocation9 + $0x68] sm:$0xff]
        %v743 = vld [vmem:[#allocation9 + $0x70] sm:$0xff]
        %v744 = vld [vmem:[#allocation9 + $0x78] sm:$0xff]
        %v745 = vld [vmem:[#allocation9 + $0x80] sm:$0xff]
        %v746 = vld [vmem:[#allocation9 + $0x88] sm:$0xff]
        %v747 = vld [vmem:[#allocation9 + $0x90] sm:$0xff]
        %v748 = vld [vmem:[#allocation9 + $0x98] sm:$0xff]
        %v749 = vld [vmem:[#allocation9 + $0xa0] sm:$0xff]
        %v750 = vld [vmem:[#allocation9 + $0xa8] sm:$0xff]
        %v751 = vld [vmem:[#allocation9 + $0xb0] sm:$0xff]
        %v752 = vld [vmem:[#allocation9 + $0xb8] sm:$0xff]
        %v753 = vld [vmem:[#allocation9 + $0xc0] sm:$0xff]
        %v754 = vld [vmem:[#allocation9 + $0xc8] sm:$0xff]
        %v755 = vld [vmem:[#allocation9 + $0xd0] sm:$0xff]
        %v756 = vld [vmem:[#allocation9 + $0xd8] sm:$0xff]
        %v757 = vld [vmem:[#allocation9 + $0xe0] sm:$0xff]
        %v758 = vld [vmem:[#allocation9 + $0xe8] sm:$0xff]
        %v759 = vld [vmem:[#allocation9 + $0xf0] sm:$0xff]
        %v760 = vld [vmem:[#allocation9 + $0xf8] sm:$0xff]
        %v761 = vld [vmem:[#allocation9 + $0x100] sm:$0xff]
        %v762 = vld [vmem:[#allocation9 + $0x108] sm:$0xff]
        %v763 = vld [vmem:[#allocation9 + $0x110] sm:$0xff]
        %v764 = vld [vmem:[#allocation9 + $0x118] sm:$0xff]
        %v765 = vld [vmem:[#allocation9 + $0x120] sm:$0xff]
        %v766 = vld [vmem:[#allocation9 + $0x128] sm:$0xff]
        %v767 = vld [vmem:[#allocation9 + $0x130] sm:$0xff]
        %v768 = vld [vmem:[#allocation9 + $0x138] sm:$0xff]
        %v769 = vld [vmem:[#allocation9 + $0x140] sm:$0xff]
        %v770 = vld [vmem:[#allocation9 + $0x148] sm:$0xff]
        %v771 = vld [vmem:[#allocation9 + $0x150] sm:$0xff]
        %v772 = vld [vmem:[#allocation9 + $0x158] sm:$0xff]
        %v773 = vld [vmem:[#allocation9 + $0x160] sm:$0xff]
        %v774 = vld [vmem:[#allocation9 + $0x168] sm:$0xff]
        %v775 = vld [vmem:[#allocation9 + $0x170] sm:$0xff]
        %v776 = vld [vmem:[#allocation9 + $0x178] sm:$0xff]
        %v777 = vld [vmem:[#allocation9 + $0x180] sm:$0xff]
        %v778 = vld [vmem:[#allocation9 + $0x188] sm:$0xff]
        %v779 = vld [vmem:[#allocation9 + $0x190] sm:$0xff]
        %v780 = vld [vmem:[#allocation9 + $0x198] sm:$0xff]
        %v781 = vld [vmem:[#allocation9 + $0x1a0] sm:$0xff]
        %v782 = vld [vmem:[#allocation9 + $0x1a8] sm:$0xff]
        %v783 = vld [vmem:[#allocation9 + $0x1b0] sm:$0xff]
        %v784 = vld [vmem:[#allocation9 + $0x1b8] sm:$0xff]
        %v785 = vld [vmem:[#allocation9 + $0x1c0] sm:$0xff]
        %v786 = vld [vmem:[#allocation9 + $0x1c8] sm:$0xff]
        %v787 = vld [vmem:[#allocation9 + $0x1d0] sm:$0xff]
        %v788 = vld [vmem:[#allocation9 + $0x1d8] sm:$0xff]
        %v789 = vld [vmem:[#allocation9 + $0x1e0] sm:$0xff]
        %v790 = vld [vmem:[#allocation9 + $0x1e8] sm:$0xff]
        %v791 = vld [vmem:[#allocation9 + $0x1f0] sm:$0xff]
        %v792 = vld [vmem:[#allocation9 + $0x1f8] sm:$0xff]
        %v793 = vld [vmem:[#allocation9 + $0x200] sm:$0xff]
        %v794 = vld [vmem:[#allocation9 + $0x208] sm:$0xff]
        %v795 = vld [vmem:[#allocation9 + $0x210] sm:$0xff]
        %v796 = vld [vmem:[#allocation9 + $0x218] sm:$0xff]
        %v797 = vld [vmem:[#allocation9 + $0x220] sm:$0xff]
        %v798 = vld [vmem:[#allocation9 + $0x228] sm:$0xff]
        %v799 = vld [vmem:[#allocation9 + $0x230] sm:$0xff]
        %v800 = vld [vmem:[#allocation9 + $0x238] sm:$0xff]
        %v801 = vld [vmem:[#allocation9 + $0x240] sm:$0xff]
        %v802 = vld [vmem:[#allocation9 + $0x248] sm:$0xff]
        %v803 = vld [vmem:[#allocation9 + $0x250] sm:$0xff]
        %v804 = vld [vmem:[#allocation9 + $0x258] sm:$0xff]
        %v805 = vld [vmem:[#allocation9 + $0x260] sm:$0xff]
        %v806 = vld [vmem:[#allocation9 + $0x268] sm:$0xff]
        %v807 = vld [vmem:[#allocation9 + $0x270] sm:$0xff]
        %v808 = vld [vmem:[#allocation9 + $0x278] sm:$0xff]
        %v809 = vld [vmem:[#allocation9 + $0x280] sm:$0xff]
        %v810 = vld [vmem:[#allocation9 + $0x288] sm:$0xff]
        %v811 = vld [vmem:[#allocation9 + $0x290] sm:$0xff]
        %v812 = vld [vmem:[#allocation9 + $0x298] sm:$0xff]
        %v813 = vld [vmem:[#allocation9 + $0x2a0] sm:$0xff]
        %v814 = vld [vmem:[#allocation9 + $0x2a8] sm:$0xff]
        %v815 = vld [vmem:[#allocation9 + $0x2b0] sm:$0xff]
        %v816 = vld [vmem:[#allocation9 + $0x2b8] sm:$0xff]
        %v817 = vld [vmem:[#allocation9 + $0x2c0] sm:$0xff]
        %v818 = vld [vmem:[#allocation9 + $0x2c8] sm:$0xff]
        %v819 = vld [vmem:[#allocation9 + $0x2d0] sm:$0xff]
        %v820 = vld [vmem:[#allocation9 + $0x2d8] sm:$0xff]
        %v821 = vld [vmem:[#allocation9 + $0x2e0] sm:$0xff]
        %v822 = vld [vmem:[#allocation9 + $0x2e8] sm:$0xff]
        %v823 = vld [vmem:[#allocation9 + $0x2f0] sm:$0xff]
        %v824 = vld [vmem:[#allocation9 + $0x2f8] sm:$0xff]
        %v825 = vld [vmem:[#allocation9 + $0x300] sm:$0xff]
        %v826 = vld [vmem:[#allocation9 + $0x308] sm:$0xff]
        %v827 = vld [vmem:[#allocation9 + $0x310] sm:$0xff]
        %v828 = vld [vmem:[#allocation9 + $0x318] sm:$0xff]
        %v829 = vld [vmem:[#allocation9 + $0x320] sm:$0xff]
        %v830 = vld [vmem:[#allocation9 + $0x328] sm:$0xff]
        %v831 = vld [vmem:[#allocation9 + $0x330] sm:$0xff]
        %v832 = vld [vmem:[#allocation9 + $0x338] sm:$0xff]
        %v833 = vld [vmem:[#allocation9 + $0x340] sm:$0xff]
        %v834 = vld [vmem:[#allocation9 + $0x348] sm:$0xff]
        %v835 = vld [vmem:[#allocation9 + $0x350] sm:$0xff]
        %v836 = vld [vmem:[#allocation9 + $0x358] sm:$0xff]
        %v837 = vld [vmem:[#allocation9 + $0x360] sm:$0xff]
        %v838 = vld [vmem:[#allocation9 + $0x368] sm:$0xff]
        %v839 = vld [vmem:[#allocation9 + $0x370] sm:$0xff]
        %v840 = vld [vmem:[#allocation9 + $0x378] sm:$0xff]
        %v841 = vld [vmem:[#allocation9 + $0x380] sm:$0xff]
        %v842 = vld [vmem:[#allocation9 + $0x388] sm:$0xff]
        %v843 = vld [vmem:[#allocation9 + $0x390] sm:$0xff]
        %v844 = vld [vmem:[#allocation9 + $0x398] sm:$0xff]
        %v845 = vld [vmem:[#allocation9 + $0x3a0] sm:$0xff]
        %v846 = vld [vmem:[#allocation9 + $0x3a8] sm:$0xff]
        %v847 = vld [vmem:[#allocation9 + $0x3b0] sm:$0xff]
        %v848 = vld [vmem:[#allocation9 + $0x3b8] sm:$0xff]
        %v849 = vld [vmem:[#allocation9 + $0x3c0] sm:$0xff]
        %v850 = vld [vmem:[#allocation9 + $0x3c8] sm:$0xff]
        %v851 = vld [vmem:[#allocation9 + $0x3d0] sm:$0xff]
        %v852 = vld [vmem:[#allocation9 + $0x3d8] sm:$0xff]
        %v853 = vld [vmem:[#allocation9 + $0x3e0] sm:$0xff]
        %v854 = vld [vmem:[#allocation9 + $0x3e8] sm:$0xff]
        %v855 = vld [vmem:[#allocation9 + $0x3f0] sm:$0xff]
        %v856 = vld [vmem:[#allocation9 + $0x3f8] sm:$0xff]
        %v857 = vld [vmem:[#allocation9 + $0x400] sm:$0xff]
        %v858 = vld [vmem:[#allocation9 + $0x408] sm:$0xff]
        %v859 = vld [vmem:[#allocation9 + $0x410] sm:$0xff]
        %v860 = vld [vmem:[#allocation9 + $0x418] sm:$0xff]
        %v861 = vld [vmem:[#allocation9 + $0x420] sm:$0xff]
        %v862 = vld [vmem:[#allocation9 + $0x428] sm:$0xff]
        %v863 = vld [vmem:[#allocation9 + $0x430] sm:$0xff]
        %v864 = vld [vmem:[#allocation9 + $0x438] sm:$0xff]
        %v865 = vld [vmem:[#allocation9 + $0x440] sm:$0xff]
        %v866 = vld [vmem:[#allocation9 + $0x448] sm:$0xff]
        %v867 = vld [vmem:[#allocation9 + $0x450] sm:$0xff]
        %v868 = vld [vmem:[#allocation9 + $0x458] sm:$0xff]
        %v869 = vld [vmem:[#allocation9 + $0x460] sm:$0xff]
        %v870 = vld [vmem:[#allocation9 + $0x468] sm:$0xff]
        %v871 = vld [vmem:[#allocation9 + $0x470] sm:$0xff]
        %v872 = vld [vmem:[#allocation9 + $0x478] sm:$0xff]
        %v873 = vld [vmem:[#allocation9 + $0x480] sm:$0xff]
        %v874 = vld [vmem:[#allocation9 + $0x488] sm:$0xff]
        %v875 = vld [vmem:[#allocation9 + $0x490] sm:$0xff]
        %v876 = vld [vmem:[#allocation9 + $0x498] sm:$0xff]
        %v877 = vld [vmem:[#allocation9 + $0x4a0] sm:$0xff]
        %v878 = vld [vmem:[#allocation9 + $0x4a8] sm:$0xff]
        %v879 = vld [vmem:[#allocation9 + $0x4b0] sm:$0xff]
        %v880 = vld [vmem:[#allocation9 + $0x4b8] sm:$0xff]
        %v881 = vld [vmem:[#allocation9 + $0x4c0] sm:$0xff]
        %v882 = vld [vmem:[#allocation9 + $0x4c8] sm:$0xff]
        %v883 = vld [vmem:[#allocation9 + $0x4d0] sm:$0xff]
        %v884 = vld [vmem:[#allocation9 + $0x4d8] sm:$0xff]
        %v885 = vld [vmem:[#allocation9 + $0x4e0] sm:$0xff]
        %v886 = vld [vmem:[#allocation9 + $0x4e8] sm:$0xff]
        %v887 = vld [vmem:[#allocation9 + $0x4f0] sm:$0xff]
        %v888 = vld [vmem:[#allocation9 + $0x4f8] sm:$0xff]
        %v889 = vld [vmem:[#allocation9 + $0x500] sm:$0xff]
        %v890 = vld [vmem:[#allocation9 + $0x508] sm:$0xff]
        %v891 = vld [vmem:[#allocation9 + $0x510] sm:$0xff]
        %v892 = vld [vmem:[#allocation9 + $0x518] sm:$0xff]
        %v893 = vld [vmem:[#allocation9 + $0x520] sm:$0xff]
        %v894 = vld [vmem:[#allocation9 + $0x528] sm:$0xff]
        %v895 = vld [vmem:[#allocation9 + $0x530] sm:$0xff]
        %v896 = vld [vmem:[#allocation9 + $0x538] sm:$0xff]
        %v897 = vld [vmem:[#allocation9 + $0x540] sm:$0xff]
        %v898 = vld [vmem:[#allocation9 + $0x548] sm:$0xff]
        %v899 = vld [vmem:[#allocation9 + $0x550] sm:$0xff]
        %v900 = vld [vmem:[#allocation9 + $0x558] sm:$0xff]
        %v901 = vld [vmem:[#allocation9 + $0x560] sm:$0xff]
        %v902 = vld [vmem:[#allocation9 + $0x568] sm:$0xff]
        %v903 = vld [vmem:[#allocation9 + $0x570] sm:$0xff]
        %v904 = vld [vmem:[#allocation9 + $0x578] sm:$0xff]
        %v905 = vld [vmem:[#allocation9 + $0x580] sm:$0xff]
        %v906 = vld [vmem:[#allocation9 + $0x588] sm:$0xff]
        %v907 = vld [vmem:[#allocation9 + $0x590] sm:$0xff]
        %v908 = vld [vmem:[#allocation9 + $0x598] sm:$0xff]
        %v909 = vld [vmem:[#allocation9 + $0x5a0] sm:$0xff]
        %v910 = vld [vmem:[#allocation9 + $0x5a8] sm:$0xff]
        %v911 = vld [vmem:[#allocation9 + $0x5b0] sm:$0xff]
        %v912 = vld [vmem:[#allocation9 + $0x5b8] sm:$0xff]
        %v913 = vld [vmem:[#allocation9 + $0x5c0] sm:$0xff]
        %v914 = vld [vmem:[#allocation9 + $0x5c8] sm:$0xff]
        %v915 = vld [vmem:[#allocation9 + $0x5d0] sm:$0xff]
        %v916 = vld [vmem:[#allocation9 + $0x5d8] sm:$0xff]
        %v917 = vld [vmem:[#allocation9 + $0x5e0] sm:$0xff]
        %v918 = vld [vmem:[#allocation9 + $0x5e8] sm:$0xff]
        %v919 = vld [vmem:[#allocation9 + $0x5f0] sm:$0xff]
        %v920 = vld [vmem:[#allocation9 + $0x5f8] sm:$0xff]
        %v921 = vld [vmem:[#allocation9 + $0x600] sm:$0xff]
        %v922 = vld [vmem:[#allocation9 + $0x608] sm:$0xff]
        %v923 = vld [vmem:[#allocation9 + $0x610] sm:$0xff]
        %v924 = vld [vmem:[#allocation9 + $0x618] sm:$0xff]
        %v925 = vld [vmem:[#allocation9 + $0x620] sm:$0xff]
        %v926 = vld [vmem:[#allocation9 + $0x628] sm:$0xff]
        %v927 = vld [vmem:[#allocation9 + $0x630] sm:$0xff]
        %v928 = vld [vmem:[#allocation9 + $0x638] sm:$0xff]
        %v929 = vld [vmem:[#allocation9 + $0x640] sm:$0xff]
        %v930 = vld [vmem:[#allocation9 + $0x648] sm:$0xff]
        %v931 = vld [vmem:[#allocation9 + $0x650] sm:$0xff]
        %v932 = vld [vmem:[#allocation9 + $0x658] sm:$0xff]
        %v933 = vld [vmem:[#allocation9 + $0x660] sm:$0xff]
        %v934 = vld [vmem:[#allocation9 + $0x668] sm:$0xff]
        %v935 = vld [vmem:[#allocation9 + $0x670] sm:$0xff]
        %v936 = vld [vmem:[#allocation9 + $0x678] sm:$0xff]
        %v937 = vld [vmem:[#allocation9 + $0x680] sm:$0xff]
        %v938 = vld [vmem:[#allocation9 + $0x688] sm:$0xff]
        %v939 = vld [vmem:[#allocation9 + $0x690] sm:$0xff]
        %v940 = vld [vmem:[#allocation9 + $0x698] sm:$0xff]
        %v941 = vld [vmem:[#allocation9 + $0x6a0] sm:$0xff]
        %v942 = vld [vmem:[#allocation9 + $0x6a8] sm:$0xff]
        %v943 = vld [vmem:[#allocation9 + $0x6b0] sm:$0xff]
        %v944 = vld [vmem:[#allocation9 + $0x6b8] sm:$0xff]
        %v945 = vld [vmem:[#allocation9 + $0x6c0] sm:$0xff]
        %v946 = vld [vmem:[#allocation9 + $0x6c8] sm:$0xff]
        %v947 = vld [vmem:[#allocation9 + $0x6d0] sm:$0xff]
        %v948 = vld [vmem:[#allocation9 + $0x6d8] sm:$0xff]
        %v949 = vld [vmem:[#allocation9 + $0x6e0] sm:$0xff]
        %v950 = vld [vmem:[#allocation9 + $0x6e8] sm:$0xff]
        %v951 = vld [vmem:[#allocation9 + $0x6f0] sm:$0xff]
        %v952 = vld [vmem:[#allocation9 + $0x6f8] sm:$0xff]
        %v953 = vld [vmem:[#allocation9 + $0x700] sm:$0xff]
        %v954 = vld [vmem:[#allocation9 + $0x708] sm:$0xff]
        %v955 = vld [vmem:[#allocation9 + $0x710] sm:$0xff]
        %v956 = vld [vmem:[#allocation9 + $0x718] sm:$0xff]
        %v957 = vld [vmem:[#allocation9 + $0x720] sm:$0xff]
        %v958 = vld [vmem:[#allocation9 + $0x728] sm:$0xff]
        %v959 = vld [vmem:[#allocation9 + $0x730] sm:$0xff]
        %v960 = vld [vmem:[#allocation9 + $0x738] sm:$0xff]
        %v961 = vld [vmem:[#allocation9 + $0x740] sm:$0xff]
        %v962 = vld [vmem:[#allocation9 + $0x748] sm:$0xff]
        %v963 = vld [vmem:[#allocation9 + $0x750] sm:$0xff]
        %v964 = vld [vmem:[#allocation9 + $0x758] sm:$0xff]
        %v965 = vld [vmem:[#allocation9 + $0x760] sm:$0xff]
        %v966 = vld [vmem:[#allocation9 + $0x768] sm:$0xff]
        %v967 = vld [vmem:[#allocation9 + $0x770] sm:$0xff]
        %v968 = vld [vmem:[#allocation9 + $0x778] sm:$0xff]
        %v969 = vld [vmem:[#allocation9 + $0x780] sm:$0xff]
        %v970 = vld [vmem:[#allocation9 + $0x788] sm:$0xff]
        %v971 = vld [vmem:[#allocation9 + $0x790] sm:$0xff]
        %v972 = vld [vmem:[#allocation9 + $0x798] sm:$0xff]
        %v973 = vld [vmem:[#allocation9 + $0x7a0] sm:$0xff]
        %v974 = vld [vmem:[#allocation9 + $0x7a8] sm:$0xff]
        %v975 = vld [vmem:[#allocation9 + $0x7b0] sm:$0xff]
        %v976 = vld [vmem:[#allocation9 + $0x7b8] sm:$0xff]
        %v977 = vld [vmem:[#allocation9 + $0x7c0] sm:$0xff]
        %v978 = vld [vmem:[#allocation9 + $0x7c8] sm:$0xff]
        %v979 = vld [vmem:[#allocation9 + $0x7d0] sm:$0xff]
        %v980 = vld [vmem:[#allocation9 + $0x7d8] sm:$0xff]
        %v981 = vld [vmem:[#allocation9 + $0x7e0] sm:$0xff]
        %v982 = vld [vmem:[#allocation9 + $0x7e8] sm:$0xff]
        %v983 = vld [vmem:[#allocation9 + $0x7f0] sm:$0xff]
        %v984 = vld [vmem:[#allocation9 + $0x7f8] sm:$0xff]
        %v985 = vld [vmem:[#allocation9 + $0x800] sm:$0xff]
        %v986 = vld [vmem:[#allocation9 + $0x808] sm:$0xff]
        %v987 = vld [vmem:[#allocation9 + $0x810] sm:$0xff]
        %v988 = vld [vmem:[#allocation9 + $0x818] sm:$0xff]
        %v989 = vld [vmem:[#allocation9 + $0x820] sm:$0xff]
        %v990 = vld [vmem:[#allocation9 + $0x828] sm:$0xff]
        %v991 = vld [vmem:[#allocation9 + $0x830] sm:$0xff]
        %v992 = vld [vmem:[#allocation9 + $0x838] sm:$0xff]
        %v993 = vld [vmem:[#allocation9 + $0x840] sm:$0xff]
        %v994 = vld [vmem:[#allocation9 + $0x848] sm:$0xff]
        %v995 = vld [vmem:[#allocation9 + $0x850] sm:$0xff]
        %v996 = vld [vmem:[#allocation9 + $0x858] sm:$0xff]
        %v997 = vld [vmem:[#allocation9 + $0x860] sm:$0xff]
        %v998 = vld [vmem:[#allocation9 + $0x868] sm:$0xff]
        %v999 = vld [vmem:[#allocation9 + $0x870] sm:$0xff]
        %v1000 = vld [vmem:[#allocation9 + $0x878] sm:$0xff]
        %v1001 = vld [vmem:[#allocation9 + $0x880] sm:$0xff]
        %v1002 = vld [vmem:[#allocation9 + $0x888] sm:$0xff]
        %v1003 = vld [vmem:[#allocation9 + $0x890] sm:$0xff]
        %v1004 = vld [vmem:[#allocation9 + $0x898] sm:$0xff]
        %v1005 = vld [vmem:[#allocation9 + $0x8a0] sm:$0xff]
        %v1006 = vld [vmem:[#allocation9 + $0x8a8] sm:$0xff]
        %v1007 = vld [vmem:[#allocation9 + $0x8b0] sm:$0xff]
        %v1008 = vld [vmem:[#allocation9 + $0x8b8] sm:$0xff]
        %v1009 = vld [vmem:[#allocation9 + $0x8c0] sm:$0xff]
        %v1010 = vld [vmem:[#allocation9 + $0x8c8] sm:$0xff]
        %v1011 = vld [vmem:[#allocation9 + $0x8d0] sm:$0xff]
        %v1012 = vld [vmem:[#allocation9 + $0x8d8] sm:$0xff]
        %v1013 = vld [vmem:[#allocation9 + $0x8e0] sm:$0xff]
        %v1014 = vld [vmem:[#allocation9 + $0x8e8] sm:$0xff]
        %v1015 = vld [vmem:[#allocation9 + $0x8f0] sm:$0xff]
        %v1016 = vld [vmem:[#allocation9 + $0x8f8] sm:$0xff]
        %v1017 = vld [vmem:[#allocation9 + $0x900] sm:$0xff]
        %v1018 = vld [vmem:[#allocation9 + $0x908] sm:$0xff]
        %v1019 = vld [vmem:[#allocation9 + $0x910] sm:$0xff]
        %v1020 = vld [vmem:[#allocation9 + $0x918] sm:$0xff]
        %v1021 = vld [vmem:[#allocation9 + $0x920] sm:$0xff]
        %v1022 = vld [vmem:[#allocation9 + $0x928] sm:$0xff]
        %v1023 = vld [vmem:[#allocation9 + $0x930] sm:$0xff]
        %v1024 = vld [vmem:[#allocation9 + $0x938] sm:$0xff]
        %v1025 = vld [vmem:[#allocation9 + $0x940] sm:$0xff]
        %v1026 = vld [vmem:[#allocation9 + $0x948] sm:$0xff]
        %v1027 = vld [vmem:[#allocation9 + $0x950] sm:$0xff]
        %v1028 = vld [vmem:[#allocation9 + $0x958] sm:$0xff]
        %v1029 = vld [vmem:[#allocation9 + $0x960] sm:$0xff]
        %v1030 = vld [vmem:[#allocation9 + $0x968] sm:$0xff]
        %v1031 = vld [vmem:[#allocation9 + $0x970] sm:$0xff]
        %v1032 = vld [vmem:[#allocation9 + $0x978] sm:$0xff]
        %v1033 = vld [vmem:[#allocation9 + $0x980] sm:$0xff]
        %v1034 = vld [vmem:[#allocation9 + $0x988] sm:$0xff]
        %v1035 = vld [vmem:[#allocation9 + $0x990] sm:$0xff]
        %v1036 = vld [vmem:[#allocation9 + $0x998] sm:$0xff]
        %v1037 = vld [vmem:[#allocation9 + $0x9a0] sm:$0xff]
        %v1038 = vld [vmem:[#allocation9 + $0x9a8] sm:$0xff]
        %v1039 = vld [vmem:[#allocation9 + $0x9b0] sm:$0xff]
        %v1040 = vld [vmem:[#allocation9 + $0x9b8] sm:$0xff]
        %v1041 = vld [vmem:[#allocation9 + $0x9c0] sm:$0xff]
        %v1042 = vld [vmem:[#allocation9 + $0x9c8] sm:$0xff]
        %v1043 = vld [vmem:[#allocation9 + $0x9d0] sm:$0xff]
        %v1044 = vld [vmem:[#allocation9 + $0x9d8] sm:$0xff]
        %v1045 = vld [vmem:[#allocation9 + $0x9e0] sm:$0xff]
        %v1046 = vld [vmem:[#allocation9 + $0x9e8] sm:$0xff]
        %v1047 = vld [vmem:[#allocation9 + $0x9f0] sm:$0xff]
        %v1048 = vld [vmem:[#allocation9 + $0x9f8] sm:$0xff]
        %v1049 = vld [vmem:[#allocation9 + $0xa00] sm:$0xff]
        %v1050 = vld [vmem:[#allocation9 + $0xa08] sm:$0xff]
        %v1051 = vld [vmem:[#allocation9 + $0xa10] sm:$0xff]
        %v1052 = vld [vmem:[#allocation9 + $0xa18] sm:$0xff]
        %v1053 = vld [vmem:[#allocation9 + $0xa20] sm:$0xff]
        %v1054 = vld [vmem:[#allocation9 + $0xa28] sm:$0xff]
        %v1055 = vld [vmem:[#allocation9 + $0xa30] sm:$0xff]
        %v1056 = vld [vmem:[#allocation9 + $0xa38] sm:$0xff]
        %v1057 = vld [vmem:[#allocation9 + $0xa40] sm:$0xff]
        %v1058 = vld [vmem:[#allocation9 + $0xa48] sm:$0xff]
        %v1059 = vld [vmem:[#allocation9 + $0xa50] sm:$0xff]
        %v1060 = vld [vmem:[#allocation9 + $0xa58] sm:$0xff]
        %v1061 = vld [vmem:[#allocation9 + $0xa60] sm:$0xff]
        %v1062 = vld [vmem:[#allocation9 + $0xa68] sm:$0xff]
        %v1063 = vld [vmem:[#allocation9 + $0xa70] sm:$0xff]
        %v1064 = vld [vmem:[#allocation9 + $0xa78] sm:$0xff]
        %v1065 = vld [vmem:[#allocation9 + $0xa80] sm:$0xff]
        %v1066 = vld [vmem:[#allocation9 + $0xa88] sm:$0xff]
        %v1067 = vld [vmem:[#allocation9 + $0xa90] sm:$0xff]
        %v1068 = vld [vmem:[#allocation9 + $0xa98] sm:$0xff]
        %v1069 = vld [vmem:[#allocation9 + $0xaa0] sm:$0xff]
        %v1070 = vld [vmem:[#allocation9 + $0xaa8] sm:$0xff]
        %v1071 = vld [vmem:[#allocation9 + $0xab0] sm:$0xff]
        %v1072 = vld [vmem:[#allocation9 + $0xab8] sm:$0xff]
        %v1073 = vld [vmem:[#allocation9 + $0xac0] sm:$0xff]
        %v1074 = vld [vmem:[#allocation9 + $0xac8] sm:$0xff]
        %v1075 = vld [vmem:[#allocation9 + $0xad0] sm:$0xff]
        %v1076 = vld [vmem:[#allocation9 + $0xad8] sm:$0xff]
        %v1077 = vld [vmem:[#allocation9 + $0xae0] sm:$0xff]
        %v1078 = vld [vmem:[#allocation9 + $0xae8] sm:$0xff]
        %v1079 = vld [vmem:[#allocation9 + $0xaf0] sm:$0xff]
        %v1080 = vld [vmem:[#allocation9 + $0xaf8] sm:$0xff]
        %v1081 = vld [vmem:[#allocation9 + $0xb00] sm:$0xff]
        %v1082 = vld [vmem:[#allocation9 + $0xb08] sm:$0xff]
        %v1083 = vld [vmem:[#allocation9 + $0xb10] sm:$0xff]
        %v1084 = vld [vmem:[#allocation9 + $0xb18] sm:$0xff]
        %v1085 = vld [vmem:[#allocation9 + $0xb20] sm:$0xff]
        %v1086 = vld [vmem:[#allocation9 + $0xb28] sm:$0xff]
        %v1087 = vld [vmem:[#allocation9 + $0xb30] sm:$0xff]
        %v1088 = vld [vmem:[#allocation9 + $0xb38] sm:$0xff]
        %v1089 = vld [vmem:[#allocation9 + $0xb40] sm:$0xff]
        %v1090 = vld [vmem:[#allocation9 + $0xb48] sm:$0xff]
        %v1091 = vld [vmem:[#allocation9 + $0xb50] sm:$0xff]
        %v1092 = vld [vmem:[#allocation9 + $0xb58] sm:$0xff]
        %v1093 = vld [vmem:[#allocation9 + $0xb60] sm:$0xff]
        %v1094 = vld [vmem:[#allocation9 + $0xb68] sm:$0xff]
        %v1095 = vld [vmem:[#allocation9 + $0xb70] sm:$0xff]
        %v1096 = vld [vmem:[#allocation9 + $0xb78] sm:$0xff]
        %v1097 = vld [vmem:[#allocation9 + $0xb80] sm:$0xff]
        %v1098 = vld [vmem:[#allocation9 + $0xb88] sm:$0xff]
        %v1099 = vld [vmem:[#allocation9 + $0xb90] sm:$0xff]
        %v1100 = vld [vmem:[#allocation9 + $0xb98] sm:$0xff]
        %v1101 = vld [vmem:[#allocation9 + $0xba0] sm:$0xff]
        %v1102 = vld [vmem:[#allocation9 + $0xba8] sm:$0xff]
        %v1103 = vld [vmem:[#allocation9 + $0xbb0] sm:$0xff]
        %v1104 = vld [vmem:[#allocation9 + $0xbb8] sm:$0xff]
        %v1105 = vld [vmem:[#allocation9 + $0xbc0] sm:$0xff]
        %v1106 = vld [vmem:[#allocation9 + $0xbc8] sm:$0xff]
        %v1107 = vld [vmem:[#allocation9 + $0xbd0] sm:$0xff]
        %v1108 = vld [vmem:[#allocation9 + $0xbd8] sm:$0xff]
        %v1109 = vld [vmem:[#allocation9 + $0xbe0] sm:$0xff]
        %v1110 = vld [vmem:[#allocation9 + $0xbe8] sm:$0xff]
        %v1111 = vld [vmem:[#allocation9 + $0xbf0] sm:$0xff]
        %v1112 = vld [vmem:[#allocation9 + $0xbf8] sm:$0xff]
        %v1113 = vld [vmem:[#allocation11] sm:$0xf]
        %v1115 = vlaneseq
        %v1116 = vshrl.u32 %v1115, 7
        %v1117 = vsub.s32 0, %v1116
        %v1118 = vrot.slane %v1113, %v1117
        %v1119 = vlaneseq
        %v1120 = vshrl.u32 %v1119, 7
        %v1121 = vsub.s32 1, %v1120
        %v1122 = vrot.slane %v1113, %v1121
        %v1123 = vlaneseq
        %v1124 = vshrl.u32 %v1123, 7
        %v1125 = vsub.s32 2, %v1124
        %v1126 = vrot.slane %v1113, %v1125
        %v1127 = vlaneseq
        %v1128 = vshrl.u32 %v1127, 7
        %v1129 = vsub.s32 3, %v1128
        %v1130 = vrot.slane %v1113, %v1129
        %1135 = vmatprep.subr.mxu0 %v790
        %1136 = vmatpush1.msra.mxu0 %v789
        %1137 = vmatprep.subr.mxu0 %v786
        %1138 = vmatpush1.msra.mxu0 %v785
        %1139 = vmatprep.subr.mxu0 %v782
        %1140 = vmatpush1.msra.mxu0 %v781
        %1141 = vmatprep.subr.mxu0 %v778
        %1142 = vmatpush1.msra.mxu0 %v777
        %1143 = vmatprep.subr.mxu0 %v774
        %1144 = vmatpush1.msra.mxu0 %v773
        %1145 = vmatprep.subr.mxu0 %v770
        %1146 = vmatpush1.msra.mxu0 %v769
        %1147 = vmatprep.subr.mxu0 %v766
        %1148 = vmatpush1.msra.mxu0 %v765
        %1149 = vmatprep.subr.mxu0 %v762
        %1150 = vmatpush1.msra.mxu0 %v761
        %1151 = vmatprep.subr.mxu0 %v758
        %1152 = vmatpush1.msra.mxu0 %v757
        %1153 = vmatprep.subr.mxu0 %v754
        %1154 = vmatpush1.msra.mxu0 %v753
        %1155 = vmatprep.subr.mxu0 %v750
        %1156 = vmatpush1.msra.mxu0 %v749
        %1157 = vmatprep.subr.mxu0 %v746
        %1158 = vmatpush1.msra.mxu0 %v745
        %1159 = vmatprep.subr.mxu0 %v742
        %1160 = vmatpush1.msra.mxu0 %v741
        %1161 = vmatprep.subr.mxu0 %v738
        %1162 = vmatpush1.msra.mxu0 %v737
        %1163 = vmatprep.subr.mxu0 %v734
        %1164 = vmatpush1.msra.mxu0 %v733
        %1165 = vmatprep.subr.mxu0 %v730
        %1166 = vmatpush1.msra.mxu0 %v729
        %1167 = vmatprep.subr.mxu0 %v854
        %1168 = vmatpush2.msra.mxu0 %v853
        %1169 = vmatprep.subr.mxu0 %v850
        %1170 = vmatpush2.msra.mxu0 %v849
        %1171 = vmatprep.subr.mxu0 %v846
        %1172 = vmatpush2.msra.mxu0 %v845
        %1173 = vmatprep.subr.mxu0 %v842
        %1174 = vmatpush2.msra.mxu0 %v841
        %1175 = vmatprep.subr.mxu0 %v838
        %1176 = vmatpush2.msra.mxu0 %v837
        %1177 = vmatprep.subr.mxu0 %v834
        %1178 = vmatpush2.msra.mxu0 %v833
        %1179 = vmatprep.subr.mxu0 %v830
        %1180 = vmatpush2.msra.mxu0 %v829
        %1181 = vmatprep.subr.mxu0 %v826
        %1182 = vmatpush2.msra.mxu0 %v825
        %1183 = vmatprep.subr.mxu0 %v822
        %1184 = vmatpush2.msra.mxu0 %v821
        %1185 = vmatprep.subr.mxu0 %v818
        %1186 = vmatpush2.msra.mxu0 %v817
        %1187 = vmatprep.subr.mxu0 %v814
        %1188 = vmatpush2.msra.mxu0 %v813
        %1189 = vmatprep.subr.mxu0 %v810
        %1190 = vmatpush2.msra.mxu0 %v809
        %1191 = vmatprep.subr.mxu0 %v806
        %1192 = vmatpush2.msra.mxu0 %v805
        %1193 = vmatprep.subr.mxu0 %v802
        %1194 = vmatpush2.msra.mxu0 %v801
        %1195 = vmatprep.subr.mxu0 %v798
        %1196 = vmatpush2.msra.mxu0 %v797
        %1197 = vmatprep.subr.mxu0 %v794
        %1198 = vmatpush2.msra.mxu0 %v793
        %1199 = vmatprep.mubr.f32.mxu0 %v346
        %1200 = vmatmul.mubr.f32.gmra.mxu0 %v345
        %v1201 = vpop.f32.mrf.mxu0
        %v1202 = vadd.f32 %v1118, %v1201
        %v1203 = vpop.f32.mrf.mxu0
        %v1204 = vadd.f32 %v1122, %v1203
        %1205 = vmatprep.mubr.f32.mxu0 %v352
        %1206 = vmatmul.mubr.f32.gmra.mxu0 %v351
        %v1207 = vpop.f32.mrf.mxu0
        %v1208 = vadd.f32 %v1118, %v1207
        %v1209 = vpop.f32.mrf.mxu0
        %v1210 = vadd.f32 %v1122, %v1209
        %1211 = vmatprep.mubr.f32.mxu0 %v358
        %1212 = vmatmul.mubr.f32.gmra.mxu0 %v357
        %v1213 = vpop.f32.mrf.mxu0
        %v1214 = vadd.f32 %v1118, %v1213
        %v1215 = vpop.f32.mrf.mxu0
        %v1216 = vadd.f32 %v1122, %v1215
        %1217 = vmatprep.mubr.f32.mxu0 %v364
        %1218 = vmatmul.mubr.f32.gmra.mxu0 %v363
        %v1219 = vpop.f32.mrf.mxu0
        %v1220 = vadd.f32 %v1118, %v1219
        %v1221 = vpop.f32.mrf.mxu0
        %v1222 = vadd.f32 %v1122, %v1221
        %1223 = vmatprep.mubr.f32.mxu0 %v370
        %1224 = vmatmul.mubr.f32.gmra.mxu0 %v369
        %v1225 = vpop.f32.mrf.mxu0
        %v1226 = vadd.f32 %v1118, %v1225
        %v1227 = vpop.f32.mrf.mxu0
        %v1228 = vadd.f32 %v1122, %v1227
        %1229 = vmatprep.mubr.f32.mxu0 %v376
        %1230 = vmatmul.mubr.f32.gmra.mxu0 %v375
        %v1231 = vpop.f32.mrf.mxu0
        %v1232 = vadd.f32 %v1118, %v1231
        %v1233 = vpop.f32.mrf.mxu0
        %v1234 = vadd.f32 %v1122, %v1233
        %1235 = vmatprep.mubr.f32.mxu0 %v382
        %1236 = vmatmul.mubr.f32.gmra.mxu0 %v381
        %v1237 = vpop.f32.mrf.mxu0
        %v1238 = vadd.f32 %v1118, %v1237
        %v1239 = vpop.f32.mrf.mxu0
        %v1240 = vadd.f32 %v1122, %v1239
        %1241 = vmatprep.mubr.f32.mxu0 %v388
        %1242 = vmatmul.mubr.f32.gmra.mxu0 %v387
        %v1243 = vpop.f32.mrf.mxu0
        %v1244 = vadd.f32 %v1118, %v1243
        %v1245 = vpop.f32.mrf.mxu0
        %v1246 = vadd.f32 %v1122, %v1245
        %1247 = vmatprep.mubr.f32.mxu0 %v394
        %1248 = vmatmul.mubr.f32.gmra.mxu0 %v393
        %v1249 = vpop.f32.mrf.mxu0
        %v1250 = vadd.f32 %v1118, %v1249
        %v1251 = vpop.f32.mrf.mxu0
        %v1252 = vadd.f32 %v1122, %v1251
        %1253 = vmatprep.mubr.f32.mxu0 %v400
        %1254 = vmatmul.mubr.f32.gmra.mxu0 %v399
        %v1255 = vpop.f32.mrf.mxu0
        %v1256 = vadd.f32 %v1118, %v1255
        %v1257 = vpop.f32.mrf.mxu0
        %v1258 = vadd.f32 %v1122, %v1257
        %1259 = vmatprep.mubr.f32.mxu0 %v406
        %1260 = vmatmul.mubr.f32.gmra.mxu0 %v405
        %v1261 = vpop.f32.mrf.mxu0
        %v1262 = vadd.f32 %v1118, %v1261
        %v1263 = vpop.f32.mrf.mxu0
        %v1264 = vadd.f32 %v1122, %v1263
        %1265 = vmatprep.mubr.f32.mxu0 %v412
        %1266 = vmatmul.mubr.f32.gmra.mxu0 %v411
        %v1267 = vpop.f32.mrf.mxu0
        %v1268 = vadd.f32 %v1118, %v1267
        %v1269 = vpop.f32.mrf.mxu0
        %v1270 = vadd.f32 %v1122, %v1269
        %1271 = vmatprep.mubr.f32.mxu0 %v418
        %1272 = vmatmul.mubr.f32.gmra.mxu0 %v417
        %v1273 = vpop.f32.mrf.mxu0
        %v1274 = vadd.f32 %v1118, %v1273
        %v1275 = vpop.f32.mrf.mxu0
        %v1276 = vadd.f32 %v1122, %v1275
        %1277 = vmatprep.mubr.f32.mxu0 %v424
        %1278 = vmatmul.mubr.f32.gmra.mxu0 %v423
        %v1279 = vpop.f32.mrf.mxu0
        %v1280 = vadd.f32 %v1118, %v1279
        %v1281 = vpop.f32.mrf.mxu0
        %v1282 = vadd.f32 %v1122, %v1281
        %1283 = vmatprep.mubr.f32.mxu0 %v430
        %1284 = vmatmul.mubr.f32.gmra.mxu0 %v429
        %v1285 = vpop.f32.mrf.mxu0
        %v1286 = vadd.f32 %v1118, %v1285
        %v1287 = vpop.f32.mrf.mxu0
        %v1288 = vadd.f32 %v1122, %v1287
        %1289 = vmatprep.mubr.f32.mxu0 %v436
        %1290 = vmatmul.mubr.f32.gmra.mxu0 %v435
        %v1291 = vpop.f32.mrf.mxu0
        %v1292 = vadd.f32 %v1118, %v1291
        %v1293 = vpop.f32.mrf.mxu0
        %v1294 = vadd.f32 %v1122, %v1293
        %1295 = vmatprep.mubr.f32.mxu0 %v442
        %1296 = vmatmul.mubr.f32.gmra.mxu0 %v441
        %v1297 = vpop.f32.mrf.mxu0
        %v1298 = vadd.f32 %v1118, %v1297
        %v1299 = vpop.f32.mrf.mxu0
        %v1300 = vadd.f32 %v1122, %v1299
        %1301 = vmatprep.mubr.f32.mxu0 %v448
        %1302 = vmatmul.mubr.f32.gmra.mxu0 %v447
        %v1303 = vpop.f32.mrf.mxu0
        %v1304 = vadd.f32 %v1118, %v1303
        %v1305 = vpop.f32.mrf.mxu0
        %v1306 = vadd.f32 %v1122, %v1305
        %1307 = vmatprep.mubr.f32.mxu0 %v454
        %1308 = vmatmul.mubr.f32.gmra.mxu0 %v453
        %v1309 = vpop.f32.mrf.mxu0
        %v1310 = vadd.f32 %v1118, %v1309
        %v1311 = vpop.f32.mrf.mxu0
        %v1312 = vadd.f32 %v1122, %v1311
        %1313 = vmatprep.mubr.f32.mxu0 %v460
        %1314 = vmatmul.mubr.f32.gmra.mxu0 %v459
        %v1315 = vpop.f32.mrf.mxu0
        %v1316 = vadd.f32 %v1118, %v1315
        %v1317 = vpop.f32.mrf.mxu0
        %v1318 = vadd.f32 %v1122, %v1317
        %1319 = vmatprep.mubr.f32.mxu0 %v466
        %1320 = vmatmul.mubr.f32.gmra.mxu0 %v465
        %v1321 = vpop.f32.mrf.mxu0
        %v1322 = vadd.f32 %v1118, %v1321
        %v1323 = vpop.f32.mrf.mxu0
        %v1324 = vadd.f32 %v1122, %v1323
        %1325 = vmatprep.mubr.f32.mxu0 %v472
        %1326 = vmatmul.mubr.f32.gmra.mxu0 %v471
        %v1327 = vpop.f32.mrf.mxu0
        %v1328 = vadd.f32 %v1118, %v1327
        %v1329 = vpop.f32.mrf.mxu0
        %v1330 = vadd.f32 %v1122, %v1329
        %1331 = vmatprep.mubr.f32.mxu0 %v478
        %1332 = vmatmul.mubr.f32.gmra.mxu0 %v477
        %v1333 = vpop.f32.mrf.mxu0
        %v1334 = vadd.f32 %v1118, %v1333
        %v1335 = vpop.f32.mrf.mxu0
        %v1336 = vadd.f32 %v1122, %v1335
        %1337 = vmatprep.mubr.f32.mxu0 %v484
        %1338 = vmatmul.mubr.f32.gmra.mxu0 %v483
        %v1339 = vpop.f32.mrf.mxu0
        %v1340 = vadd.f32 %v1118, %v1339
        %v1341 = vpop.f32.mrf.mxu0
        %v1342 = vadd.f32 %v1122, %v1341
        %1343 = vmatprep.mubr.f32.mxu0 %v490
        %1344 = vmatmul.mubr.f32.gmra.mxu0 %v489
        %v1345 = vpop.f32.mrf.mxu0
        %v1346 = vadd.f32 %v1118, %v1345
        %v1347 = vpop.f32.mrf.mxu0
        %v1348 = vadd.f32 %v1122, %v1347
        %1349 = vmatprep.mubr.f32.mxu0 %v496
        %1350 = vmatmul.mubr.f32.gmra.mxu0 %v495
        %v1351 = vpop.f32.mrf.mxu0
        %v1352 = vadd.f32 %v1118, %v1351
        %v1353 = vpop.f32.mrf.mxu0
        %v1354 = vadd.f32 %v1122, %v1353
        %1355 = vmatprep.mubr.f32.mxu0 %v502
        %1356 = vmatmul.mubr.f32.gmra.mxu0 %v501
        %v1357 = vpop.f32.mrf.mxu0
        %v1358 = vadd.f32 %v1118, %v1357
        %v1359 = vpop.f32.mrf.mxu0
        %v1360 = vadd.f32 %v1122, %v1359
        %1361 = vmatprep.mubr.f32.mxu0 %v508
        %1362 = vmatmul.mubr.f32.gmra.mxu0 %v507
        %v1363 = vpop.f32.mrf.mxu0
        %v1364 = vadd.f32 %v1118, %v1363
        %v1365 = vpop.f32.mrf.mxu0
        %v1366 = vadd.f32 %v1122, %v1365
        %1367 = vmatprep.mubr.f32.mxu0 %v514
        %1368 = vmatmul.mubr.f32.gmra.mxu0 %v513
        %v1369 = vpop.f32.mrf.mxu0
        %v1370 = vadd.f32 %v1118, %v1369
        %v1371 = vpop.f32.mrf.mxu0
        %v1372 = vadd.f32 %v1122, %v1371
        %1373 = vmatprep.mubr.f32.mxu0 %v520
        %1374 = vmatmul.mubr.f32.gmra.mxu0 %v519
        %v1375 = vpop.f32.mrf.mxu0
        %v1376 = vadd.f32 %v1118, %v1375
        %v1377 = vpop.f32.mrf.mxu0
        %v1378 = vadd.f32 %v1122, %v1377
        %1379 = vmatprep.mubr.f32.mxu0 %v526
        %1380 = vmatmul.mubr.f32.gmra.mxu0 %v525
        %v1381 = vpop.f32.mrf.mxu0
        %v1382 = vadd.f32 %v1118, %v1381
        %v1383 = vpop.f32.mrf.mxu0
        %v1384 = vadd.f32 %v1122, %v1383
        %1385 = vmatprep.mubr.f32.mxu0 %v532
        %1386 = vmatmul.mubr.f32.gmra.mxu0 %v531
        %v1387 = vpop.f32.mrf.mxu0
        %v1388 = vadd.f32 %v1118, %v1387
        %v1389 = vpop.f32.mrf.mxu0
        %v1390 = vadd.f32 %v1122, %v1389
        %1391 = vmatprep.mubr.f32.mxu0 %v538
        %1392 = vmatmul.mubr.f32.gmra.mxu0 %v537
        %v1393 = vpop.f32.mrf.mxu0
        %v1394 = vadd.f32 %v1118, %v1393
        %v1395 = vpop.f32.mrf.mxu0
        %v1396 = vadd.f32 %v1122, %v1395
        %1397 = vmatprep.mubr.f32.mxu0 %v544
        %1398 = vmatmul.mubr.f32.gmra.mxu0 %v543
        %v1399 = vpop.f32.mrf.mxu0
        %v1400 = vadd.f32 %v1118, %v1399
        %v1401 = vpop.f32.mrf.mxu0
        %v1402 = vadd.f32 %v1122, %v1401
        %1403 = vmatprep.mubr.f32.mxu0 %v550
        %1404 = vmatmul.mubr.f32.gmra.mxu0 %v549
        %v1405 = vpop.f32.mrf.mxu0
        %v1406 = vadd.f32 %v1118, %v1405
        %v1407 = vpop.f32.mrf.mxu0
        %v1408 = vadd.f32 %v1122, %v1407
        %1409 = vmatprep.mubr.f32.mxu0 %v556
        %1410 = vmatmul.mubr.f32.gmra.mxu0 %v555
        %v1411 = vpop.f32.mrf.mxu0
        %v1412 = vadd.f32 %v1118, %v1411
        %v1413 = vpop.f32.mrf.mxu0
        %v1414 = vadd.f32 %v1122, %v1413
        %1415 = vmatprep.mubr.f32.mxu0 %v562
        %1416 = vmatmul.mubr.f32.gmra.mxu0 %v561
        %v1417 = vpop.f32.mrf.mxu0
        %v1418 = vadd.f32 %v1118, %v1417
        %v1419 = vpop.f32.mrf.mxu0
        %v1420 = vadd.f32 %v1122, %v1419
        %1421 = vmatprep.mubr.f32.mxu0 %v568
        %1422 = vmatmul.mubr.f32.gmra.mxu0 %v567
        %v1423 = vpop.f32.mrf.mxu0
        %v1424 = vadd.f32 %v1118, %v1423
        %v1425 = vpop.f32.mrf.mxu0
        %v1426 = vadd.f32 %v1122, %v1425
        %1427 = vmatprep.mubr.f32.mxu0 %v574
        %1428 = vmatmul.mubr.f32.gmra.mxu0 %v573
        %v1429 = vpop.f32.mrf.mxu0
        %v1430 = vadd.f32 %v1118, %v1429
        %v1431 = vpop.f32.mrf.mxu0
        %v1432 = vadd.f32 %v1122, %v1431
        %1433 = vmatprep.mubr.f32.mxu0 %v580
        %1434 = vmatmul.mubr.f32.gmra.mxu0 %v579
        %v1435 = vpop.f32.mrf.mxu0
        %v1436 = vadd.f32 %v1118, %v1435
        %v1437 = vpop.f32.mrf.mxu0
        %v1438 = vadd.f32 %v1122, %v1437
        %1439 = vmatprep.mubr.f32.mxu0 %v586
        %1440 = vmatmul.mubr.f32.gmra.mxu0 %v585
        %v1441 = vpop.f32.mrf.mxu0
        %v1442 = vadd.f32 %v1118, %v1441
        %v1443 = vpop.f32.mrf.mxu0
        %v1444 = vadd.f32 %v1122, %v1443
        %1445 = vmatprep.mubr.f32.mxu0 %v592
        %1446 = vmatmul.mubr.f32.gmra.mxu0 %v591
        %v1447 = vpop.f32.mrf.mxu0
        %v1448 = vadd.f32 %v1118, %v1447
        %v1449 = vpop.f32.mrf.mxu0
        %v1450 = vadd.f32 %v1122, %v1449
        %1451 = vmatprep.mubr.f32.mxu0 %v598
        %1452 = vmatmul.mubr.f32.gmra.mxu0 %v597
        %v1453 = vpop.f32.mrf.mxu0
        %v1454 = vadd.f32 %v1118, %v1453
        %v1455 = vpop.f32.mrf.mxu0
        %v1456 = vadd.f32 %v1122, %v1455
        %1457 = vmatprep.mubr.f32.mxu0 %v604
        %1458 = vmatmul.mubr.f32.gmra.mxu0 %v603
        %v1459 = vpop.f32.mrf.mxu0
        %v1460 = vadd.f32 %v1118, %v1459
        %v1461 = vpop.f32.mrf.mxu0
        %v1462 = vadd.f32 %v1122, %v1461
        %1463 = vmatprep.mubr.f32.mxu0 %v610
        %1464 = vmatmul.mubr.f32.gmra.mxu0 %v609
        %v1465 = vpop.f32.mrf.mxu0
        %v1466 = vadd.f32 %v1118, %v1465
        %v1467 = vpop.f32.mrf.mxu0
        %v1468 = vadd.f32 %v1122, %v1467
        %1469 = vmatprep.mubr.f32.mxu0 %v616
        %1470 = vmatmul.mubr.f32.gmra.mxu0 %v615
        %v1471 = vpop.f32.mrf.mxu0
        %v1472 = vadd.f32 %v1118, %v1471
        %v1473 = vpop.f32.mrf.mxu0
        %v1474 = vadd.f32 %v1122, %v1473
        %1475 = vmatprep.mubr.f32.mxu0 %v622
        %1476 = vmatmul.mubr.f32.gmra.mxu0 %v621
        %v1477 = vpop.f32.mrf.mxu0
        %v1478 = vadd.f32 %v1118, %v1477
        %v1479 = vpop.f32.mrf.mxu0
        %v1480 = vadd.f32 %v1122, %v1479
        %1481 = vmatprep.mubr.f32.mxu0 %v628
        %1482 = vmatmul.mubr.f32.gmra.mxu0 %v627
        %v1483 = vpop.f32.mrf.mxu0
        %v1484 = vadd.f32 %v1118, %v1483
        %v1485 = vpop.f32.mrf.mxu0
        %v1486 = vadd.f32 %v1122, %v1485
        %1487 = vmatprep.mubr.f32.mxu0 %v634
        %1488 = vmatmul.mubr.f32.gmra.mxu0 %v633
        %v1489 = vpop.f32.mrf.mxu0
        %v1490 = vadd.f32 %v1118, %v1489
        %v1491 = vpop.f32.mrf.mxu0
        %v1492 = vadd.f32 %v1122, %v1491
        %1493 = vmatprep.mubr.f32.mxu0 %v640
        %1494 = vmatmul.mubr.f32.gmra.mxu0 %v639
        %v1495 = vpop.f32.mrf.mxu0
        %v1496 = vadd.f32 %v1118, %v1495
        %v1497 = vpop.f32.mrf.mxu0
        %v1498 = vadd.f32 %v1122, %v1497
        %1499 = vmatprep.mubr.f32.mxu0 %v646
        %1500 = vmatmul.mubr.f32.gmra.mxu0 %v645
        %v1501 = vpop.f32.mrf.mxu0
        %v1502 = vadd.f32 %v1118, %v1501
        %v1503 = vpop.f32.mrf.mxu0
        %v1504 = vadd.f32 %v1122, %v1503
        %1505 = vmatprep.mubr.f32.mxu0 %v652
        %1506 = vmatmul.mubr.f32.gmra.mxu0 %v651
        %v1507 = vpop.f32.mrf.mxu0
        %v1508 = vadd.f32 %v1118, %v1507
        %v1509 = vpop.f32.mrf.mxu0
        %v1510 = vadd.f32 %v1122, %v1509
        %1511 = vmatprep.mubr.f32.mxu0 %v658
        %1512 = vmatmul.mubr.f32.gmra.mxu0 %v657
        %v1513 = vpop.f32.mrf.mxu0
        %v1514 = vadd.f32 %v1118, %v1513
        %v1515 = vpop.f32.mrf.mxu0
        %v1516 = vadd.f32 %v1122, %v1515
        %1517 = vmatprep.mubr.f32.mxu0 %v664
        %1518 = vmatmul.mubr.f32.gmra.mxu0 %v663
        %v1519 = vpop.f32.mrf.mxu0
        %v1520 = vadd.f32 %v1118, %v1519
        %v1521 = vpop.f32.mrf.mxu0
        %v1522 = vadd.f32 %v1122, %v1521
        %1523 = vmatprep.mubr.f32.mxu0 %v670
        %1524 = vmatmul.mubr.f32.gmra.mxu0 %v669
        %v1525 = vpop.f32.mrf.mxu0
        %v1526 = vadd.f32 %v1118, %v1525
        %v1527 = vpop.f32.mrf.mxu0
        %v1528 = vadd.f32 %v1122, %v1527
        %1529 = vmatprep.mubr.f32.mxu0 %v676
        %1530 = vmatmul.mubr.f32.gmra.mxu0 %v675
        %v1531 = vpop.f32.mrf.mxu0
        %v1532 = vadd.f32 %v1118, %v1531
        %v1533 = vpop.f32.mrf.mxu0
        %v1534 = vadd.f32 %v1122, %v1533
        %1535 = vmatprep.mubr.f32.mxu0 %v682
        %1536 = vmatmul.mubr.f32.gmra.mxu0 %v681
        %v1537 = vpop.f32.mrf.mxu0
        %v1538 = vadd.f32 %v1118, %v1537
        %v1539 = vpop.f32.mrf.mxu0
        %v1540 = vadd.f32 %v1122, %v1539
        %1541 = vmatprep.mubr.f32.mxu0 %v688
        %1542 = vmatmul.mubr.f32.gmra.mxu0 %v687
        %v1543 = vpop.f32.mrf.mxu0
        %v1544 = vadd.f32 %v1118, %v1543
        %v1545 = vpop.f32.mrf.mxu0
        %v1546 = vadd.f32 %v1122, %v1545
        %1547 = vmatprep.mubr.f32.mxu0 %v694
        %1548 = vmatmul.mubr.f32.gmra.mxu0 %v693
        %v1549 = vpop.f32.mrf.mxu0
        %v1550 = vadd.f32 %v1118, %v1549
        %v1551 = vpop.f32.mrf.mxu0
        %v1552 = vadd.f32 %v1122, %v1551
        %1553 = vmatprep.mubr.f32.mxu0 %v700
        %1554 = vmatmul.mubr.f32.gmra.mxu0 %v699
        %v1555 = vpop.f32.mrf.mxu0
        %v1556 = vadd.f32 %v1118, %v1555
        %v1557 = vpop.f32.mrf.mxu0
        %v1558 = vadd.f32 %v1122, %v1557
        %1559 = vmatprep.mubr.f32.mxu0 %v706
        %1560 = vmatmul.mubr.f32.gmra.mxu0 %v705
        %v1561 = vpop.f32.mrf.mxu0
        %v1562 = vadd.f32 %v1118, %v1561
        %v1563 = vpop.f32.mrf.mxu0
        %v1564 = vadd.f32 %v1122, %v1563
        %1565 = vmatprep.mubr.f32.mxu0 %v712
        %1566 = vmatmul.mubr.f32.gmra.mxu0 %v711
        %v1567 = vpop.f32.mrf.mxu0
        %v1568 = vadd.f32 %v1118, %v1567
        %v1569 = vpop.f32.mrf.mxu0
        %v1570 = vadd.f32 %v1122, %v1569
        %1571 = vmatprep.mubr.f32.mxu0 %v718
        %1572 = vmatmul.mubr.f32.gmra.mxu0 %v717
        %v1573 = vpop.f32.mrf.mxu0
        %v1574 = vadd.f32 %v1118, %v1573
        %v1575 = vpop.f32.mrf.mxu0
        %v1576 = vadd.f32 %v1122, %v1575
        %1577 = vmatprep.mubr.f32.mxu0 %v724
        %1578 = vmatmul.mubr.f32.gmra.mxu0 %v723
        %v1579 = vpop.f32.mrf.mxu0
        %v1580 = vadd.f32 %v1118, %v1579
        %v1581 = vpop.f32.mrf.mxu0
        %v1582 = vadd.f32 %v1122, %v1581
        %1583 = vdwg.mxu0
        %1584 = vmatprep.subr.mxu0 %v918
        %1585 = vmatpush1.msra.mxu0 %v917
        %1586 = vmatprep.subr.mxu0 %v914
        %1587 = vmatpush1.msra.mxu0 %v913
        %1588 = vmatprep.subr.mxu0 %v910
        %1589 = vmatpush1.msra.mxu0 %v909
        %1590 = vmatprep.subr.mxu0 %v906
        %1591 = vmatpush1.msra.mxu0 %v905
        %1592 = vmatprep.subr.mxu0 %v902
        %1593 = vmatpush1.msra.mxu0 %v901
        %1594 = vmatprep.subr.mxu0 %v898
        %1595 = vmatpush1.msra.mxu0 %v897
        %1596 = vmatprep.subr.mxu0 %v894
        %1597 = vmatpush1.msra.mxu0 %v893
        %1598 = vmatprep.subr.mxu0 %v890
        %1599 = vmatpush1.msra.mxu0 %v889
        %1600 = vmatprep.subr.mxu0 %v886
        %1601 = vmatpush1.msra.mxu0 %v885
        %1602 = vmatprep.subr.mxu0 %v882
        %1603 = vmatpush1.msra.mxu0 %v881
        %1604 = vmatprep.subr.mxu0 %v878
        %1605 = vmatpush1.msra.mxu0 %v877
        %1606 = vmatprep.subr.mxu0 %v874
        %1607 = vmatpush1.msra.mxu0 %v873
        %1608 = vmatprep.subr.mxu0 %v870
        %1609 = vmatpush1.msra.mxu0 %v869
        %1610 = vmatprep.subr.mxu0 %v866
        %1611 = vmatpush1.msra.mxu0 %v865
        %1612 = vmatprep.subr.mxu0 %v862
        %1613 = vmatpush1.msra.mxu0 %v861
        %1614 = vmatprep.subr.mxu0 %v858
        %1615 = vmatpush1.msra.mxu0 %v857
        %1616 = vmatprep.subr.mxu0 %v982
        %1617 = vmatpush2.msra.mxu0 %v981
        %1618 = vmatprep.subr.mxu0 %v978
        %1619 = vmatpush2.msra.mxu0 %v977
        %1620 = vmatprep.subr.mxu0 %v974
        %1621 = vmatpush2.msra.mxu0 %v973
        %1622 = vmatprep.subr.mxu0 %v970
        %1623 = vmatpush2.msra.mxu0 %v969
        %1624 = vmatprep.subr.mxu0 %v966
        %1625 = vmatpush2.msra.mxu0 %v965
        %1626 = vmatprep.subr.mxu0 %v962
        %1627 = vmatpush2.msra.mxu0 %v961
        %1628 = vmatprep.subr.mxu0 %v958
        %1629 = vmatpush2.msra.mxu0 %v957
        %1630 = vmatprep.subr.mxu0 %v954
        %1631 = vmatpush2.msra.mxu0 %v953
        %1632 = vmatprep.subr.mxu0 %v950
        %1633 = vmatpush2.msra.mxu0 %v949
        %1634 = vmatprep.subr.mxu0 %v946
        %1635 = vmatpush2.msra.mxu0 %v945
        %1636 = vmatprep.subr.mxu0 %v942
        %1637 = vmatpush2.msra.mxu0 %v941
        %1638 = vmatprep.subr.mxu0 %v938
        %1639 = vmatpush2.msra.mxu0 %v937
        %1640 = vmatprep.subr.mxu0 %v934
        %1641 = vmatpush2.msra.mxu0 %v933
        %1642 = vmatprep.subr.mxu0 %v930
        %1643 = vmatpush2.msra.mxu0 %v929
        %1644 = vmatprep.subr.mxu0 %v926
        %1645 = vmatpush2.msra.mxu0 %v925
        %1646 = vmatprep.subr.mxu0 %v922
        %1647 = vmatpush2.msra.mxu0 %v921
        %1648 = vmatprep.mubr.f32.mxu0 %v348
        %1649 = vmatmul.mubr.f32.gmra.mxu0 %v347
        %v1650 = vpop.f32.mrf.mxu0
        %v1651 = vadd.f32 %v1202, %v1650
        %v1652 = vpop.f32.mrf.mxu0
        %v1653 = vadd.f32 %v1204, %v1652
        %1654 = vmatprep.mubr.f32.mxu0 %v354
        %1655 = vmatmul.mubr.f32.gmra.mxu0 %v353
        %v1656 = vpop.f32.mrf.mxu0
        %v1657 = vadd.f32 %v1208, %v1656
        %v1658 = vpop.f32.mrf.mxu0
        %v1659 = vadd.f32 %v1210, %v1658
        %1660 = vmatprep.mubr.f32.mxu0 %v360
        %1661 = vmatmul.mubr.f32.gmra.mxu0 %v359
        %v1662 = vpop.f32.mrf.mxu0
        %v1663 = vadd.f32 %v1214, %v1662
        %v1664 = vpop.f32.mrf.mxu0
        %v1665 = vadd.f32 %v1216, %v1664
        %1666 = vmatprep.mubr.f32.mxu0 %v366
        %1667 = vmatmul.mubr.f32.gmra.mxu0 %v365
        %v1668 = vpop.f32.mrf.mxu0
        %v1669 = vadd.f32 %v1220, %v1668
        %v1670 = vpop.f32.mrf.mxu0
        %v1671 = vadd.f32 %v1222, %v1670
        %1672 = vmatprep.mubr.f32.mxu0 %v372
        %1673 = vmatmul.mubr.f32.gmra.mxu0 %v371
        %v1674 = vpop.f32.mrf.mxu0
        %v1675 = vadd.f32 %v1226, %v1674
        %v1676 = vpop.f32.mrf.mxu0
        %v1677 = vadd.f32 %v1228, %v1676
        %1678 = vmatprep.mubr.f32.mxu0 %v378
        %1679 = vmatmul.mubr.f32.gmra.mxu0 %v377
        %v1680 = vpop.f32.mrf.mxu0
        %v1681 = vadd.f32 %v1232, %v1680
        %v1682 = vpop.f32.mrf.mxu0
        %v1683 = vadd.f32 %v1234, %v1682
        %1684 = vmatprep.mubr.f32.mxu0 %v384
        %1685 = vmatmul.mubr.f32.gmra.mxu0 %v383
        %v1686 = vpop.f32.mrf.mxu0
        %v1687 = vadd.f32 %v1238, %v1686
        %v1688 = vpop.f32.mrf.mxu0
        %v1689 = vadd.f32 %v1240, %v1688
        %1690 = vmatprep.mubr.f32.mxu0 %v390
        %1691 = vmatmul.mubr.f32.gmra.mxu0 %v389
        %v1692 = vpop.f32.mrf.mxu0
        %v1693 = vadd.f32 %v1244, %v1692
        %v1694 = vpop.f32.mrf.mxu0
        %v1695 = vadd.f32 %v1246, %v1694
        %1696 = vmatprep.mubr.f32.mxu0 %v396
        %1697 = vmatmul.mubr.f32.gmra.mxu0 %v395
        %v1698 = vpop.f32.mrf.mxu0
        %v1699 = vadd.f32 %v1250, %v1698
        %v1700 = vpop.f32.mrf.mxu0
        %v1701 = vadd.f32 %v1252, %v1700
        %1702 = vmatprep.mubr.f32.mxu0 %v402
        %1703 = vmatmul.mubr.f32.gmra.mxu0 %v401
        %v1704 = vpop.f32.mrf.mxu0
        %v1705 = vadd.f32 %v1256, %v1704
        %v1706 = vpop.f32.mrf.mxu0
        %v1707 = vadd.f32 %v1258, %v1706
        %1708 = vmatprep.mubr.f32.mxu0 %v408
        %1709 = vmatmul.mubr.f32.gmra.mxu0 %v407
        %v1710 = vpop.f32.mrf.mxu0
        %v1711 = vadd.f32 %v1262, %v1710
        %v1712 = vpop.f32.mrf.mxu0
        %v1713 = vadd.f32 %v1264, %v1712
        %1714 = vmatprep.mubr.f32.mxu0 %v414
        %1715 = vmatmul.mubr.f32.gmra.mxu0 %v413
        %v1716 = vpop.f32.mrf.mxu0
        %v1717 = vadd.f32 %v1268, %v1716
        %v1718 = vpop.f32.mrf.mxu0
        %v1719 = vadd.f32 %v1270, %v1718
        %1720 = vmatprep.mubr.f32.mxu0 %v420
        %1721 = vmatmul.mubr.f32.gmra.mxu0 %v419
        %v1722 = vpop.f32.mrf.mxu0
        %v1723 = vadd.f32 %v1274, %v1722
        %v1724 = vpop.f32.mrf.mxu0
        %v1725 = vadd.f32 %v1276, %v1724
        %1726 = vmatprep.mubr.f32.mxu0 %v426
        %1727 = vmatmul.mubr.f32.gmra.mxu0 %v425
        %v1728 = vpop.f32.mrf.mxu0
        %v1729 = vadd.f32 %v1280, %v1728
        %v1730 = vpop.f32.mrf.mxu0
        %v1731 = vadd.f32 %v1282, %v1730
        %1732 = vmatprep.mubr.f32.mxu0 %v432
        %1733 = vmatmul.mubr.f32.gmra.mxu0 %v431
        %v1734 = vpop.f32.mrf.mxu0
        %v1735 = vadd.f32 %v1286, %v1734
        %v1736 = vpop.f32.mrf.mxu0
        %v1737 = vadd.f32 %v1288, %v1736
        %1738 = vmatprep.mubr.f32.mxu0 %v438
        %1739 = vmatmul.mubr.f32.gmra.mxu0 %v437
        %v1740 = vpop.f32.mrf.mxu0
        %v1741 = vadd.f32 %v1292, %v1740
        %v1742 = vpop.f32.mrf.mxu0
        %v1743 = vadd.f32 %v1294, %v1742
        %1744 = vmatprep.mubr.f32.mxu0 %v444
        %1745 = vmatmul.mubr.f32.gmra.mxu0 %v443
        %v1746 = vpop.f32.mrf.mxu0
        %v1747 = vadd.f32 %v1298, %v1746
        %v1748 = vpop.f32.mrf.mxu0
        %v1749 = vadd.f32 %v1300, %v1748
        %1750 = vmatprep.mubr.f32.mxu0 %v450
        %1751 = vmatmul.mubr.f32.gmra.mxu0 %v449
        %v1752 = vpop.f32.mrf.mxu0
        %v1753 = vadd.f32 %v1304, %v1752
        %v1754 = vpop.f32.mrf.mxu0
        %v1755 = vadd.f32 %v1306, %v1754
        %1756 = vmatprep.mubr.f32.mxu0 %v456
        %1757 = vmatmul.mubr.f32.gmra.mxu0 %v455
        %v1758 = vpop.f32.mrf.mxu0
        %v1759 = vadd.f32 %v1310, %v1758
        %v1760 = vpop.f32.mrf.mxu0
        %v1761 = vadd.f32 %v1312, %v1760
        %1762 = vmatprep.mubr.f32.mxu0 %v462
        %1763 = vmatmul.mubr.f32.gmra.mxu0 %v461
        %v1764 = vpop.f32.mrf.mxu0
        %v1765 = vadd.f32 %v1316, %v1764
        %v1766 = vpop.f32.mrf.mxu0
        %v1767 = vadd.f32 %v1318, %v1766
        %1768 = vmatprep.mubr.f32.mxu0 %v468
        %1769 = vmatmul.mubr.f32.gmra.mxu0 %v467
        %v1770 = vpop.f32.mrf.mxu0
        %v1771 = vadd.f32 %v1322, %v1770
        %v1772 = vpop.f32.mrf.mxu0
        %v1773 = vadd.f32 %v1324, %v1772
        %1774 = vmatprep.mubr.f32.mxu0 %v474
        %1775 = vmatmul.mubr.f32.gmra.mxu0 %v473
        %v1776 = vpop.f32.mrf.mxu0
        %v1777 = vadd.f32 %v1328, %v1776
        %v1778 = vpop.f32.mrf.mxu0
        %v1779 = vadd.f32 %v1330, %v1778
        %1780 = vmatprep.mubr.f32.mxu0 %v480
        %1781 = vmatmul.mubr.f32.gmra.mxu0 %v479
        %v1782 = vpop.f32.mrf.mxu0
        %v1783 = vadd.f32 %v1334, %v1782
        %v1784 = vpop.f32.mrf.mxu0
        %v1785 = vadd.f32 %v1336, %v1784
        %1786 = vmatprep.mubr.f32.mxu0 %v486
        %1787 = vmatmul.mubr.f32.gmra.mxu0 %v485
        %v1788 = vpop.f32.mrf.mxu0
        %v1789 = vadd.f32 %v1340, %v1788
        %v1790 = vpop.f32.mrf.mxu0
        %v1791 = vadd.f32 %v1342, %v1790
        %1792 = vmatprep.mubr.f32.mxu0 %v492
        %1793 = vmatmul.mubr.f32.gmra.mxu0 %v491
        %v1794 = vpop.f32.mrf.mxu0
        %v1795 = vadd.f32 %v1346, %v1794
        %v1796 = vpop.f32.mrf.mxu0
        %v1797 = vadd.f32 %v1348, %v1796
        %1798 = vmatprep.mubr.f32.mxu0 %v498
        %1799 = vmatmul.mubr.f32.gmra.mxu0 %v497
        %v1800 = vpop.f32.mrf.mxu0
        %v1801 = vadd.f32 %v1352, %v1800
        %v1802 = vpop.f32.mrf.mxu0
        %v1803 = vadd.f32 %v1354, %v1802
        %1804 = vmatprep.mubr.f32.mxu0 %v504
        %1805 = vmatmul.mubr.f32.gmra.mxu0 %v503
        %v1806 = vpop.f32.mrf.mxu0
        %v1807 = vadd.f32 %v1358, %v1806
        %v1808 = vpop.f32.mrf.mxu0
        %v1809 = vadd.f32 %v1360, %v1808
        %1810 = vmatprep.mubr.f32.mxu0 %v510
        %1811 = vmatmul.mubr.f32.gmra.mxu0 %v509
        %v1812 = vpop.f32.mrf.mxu0
        %v1813 = vadd.f32 %v1364, %v1812
        %v1814 = vpop.f32.mrf.mxu0
        %v1815 = vadd.f32 %v1366, %v1814
        %1816 = vmatprep.mubr.f32.mxu0 %v516
        %1817 = vmatmul.mubr.f32.gmra.mxu0 %v515
        %v1818 = vpop.f32.mrf.mxu0
        %v1819 = vadd.f32 %v1370, %v1818
        %v1820 = vpop.f32.mrf.mxu0
        %v1821 = vadd.f32 %v1372, %v1820
        %1822 = vmatprep.mubr.f32.mxu0 %v522
        %1823 = vmatmul.mubr.f32.gmra.mxu0 %v521
        %v1824 = vpop.f32.mrf.mxu0
        %v1825 = vadd.f32 %v1376, %v1824
        %v1826 = vpop.f32.mrf.mxu0
        %v1827 = vadd.f32 %v1378, %v1826
        %1828 = vmatprep.mubr.f32.mxu0 %v528
        %1829 = vmatmul.mubr.f32.gmra.mxu0 %v527
        %v1830 = vpop.f32.mrf.mxu0
        %v1831 = vadd.f32 %v1382, %v1830
        %v1832 = vpop.f32.mrf.mxu0
        %v1833 = vadd.f32 %v1384, %v1832
        %1834 = vmatprep.mubr.f32.mxu0 %v534
        %1835 = vmatmul.mubr.f32.gmra.mxu0 %v533
        %v1836 = vpop.f32.mrf.mxu0
        %v1837 = vadd.f32 %v1388, %v1836
        %v1838 = vpop.f32.mrf.mxu0
        %v1839 = vadd.f32 %v1390, %v1838
        %1840 = vmatprep.mubr.f32.mxu0 %v540
        %1841 = vmatmul.mubr.f32.gmra.mxu0 %v539
        %v1842 = vpop.f32.mrf.mxu0
        %v1843 = vadd.f32 %v1394, %v1842
        %v1844 = vpop.f32.mrf.mxu0
        %v1845 = vadd.f32 %v1396, %v1844
        %1846 = vmatprep.mubr.f32.mxu0 %v546
        %1847 = vmatmul.mubr.f32.gmra.mxu0 %v545
        %v1848 = vpop.f32.mrf.mxu0
        %v1849 = vadd.f32 %v1400, %v1848
        %v1850 = vpop.f32.mrf.mxu0
        %v1851 = vadd.f32 %v1402, %v1850
        %1852 = vmatprep.mubr.f32.mxu0 %v552
        %1853 = vmatmul.mubr.f32.gmra.mxu0 %v551
        %v1854 = vpop.f32.mrf.mxu0
        %v1855 = vadd.f32 %v1406, %v1854
        %v1856 = vpop.f32.mrf.mxu0
        %v1857 = vadd.f32 %v1408, %v1856
        %1858 = vmatprep.mubr.f32.mxu0 %v558
        %1859 = vmatmul.mubr.f32.gmra.mxu0 %v557
        %v1860 = vpop.f32.mrf.mxu0
        %v1861 = vadd.f32 %v1412, %v1860
        %v1862 = vpop.f32.mrf.mxu0
        %v1863 = vadd.f32 %v1414, %v1862
        %1864 = vmatprep.mubr.f32.mxu0 %v564
        %1865 = vmatmul.mubr.f32.gmra.mxu0 %v563
        %v1866 = vpop.f32.mrf.mxu0
        %v1867 = vadd.f32 %v1418, %v1866
        %v1868 = vpop.f32.mrf.mxu0
        %v1869 = vadd.f32 %v1420, %v1868
        %1870 = vmatprep.mubr.f32.mxu0 %v570
        %1871 = vmatmul.mubr.f32.gmra.mxu0 %v569
        %v1872 = vpop.f32.mrf.mxu0
        %v1873 = vadd.f32 %v1424, %v1872
        %v1874 = vpop.f32.mrf.mxu0
        %v1875 = vadd.f32 %v1426, %v1874
        %1876 = vmatprep.mubr.f32.mxu0 %v576
        %1877 = vmatmul.mubr.f32.gmra.mxu0 %v575
        %v1878 = vpop.f32.mrf.mxu0
        %v1879 = vadd.f32 %v1430, %v1878
        %v1880 = vpop.f32.mrf.mxu0
        %v1881 = vadd.f32 %v1432, %v1880
        %1882 = vmatprep.mubr.f32.mxu0 %v582
        %1883 = vmatmul.mubr.f32.gmra.mxu0 %v581
        %v1884 = vpop.f32.mrf.mxu0
        %v1885 = vadd.f32 %v1436, %v1884
        %v1886 = vpop.f32.mrf.mxu0
        %v1887 = vadd.f32 %v1438, %v1886
        %1888 = vmatprep.mubr.f32.mxu0 %v588
        %1889 = vmatmul.mubr.f32.gmra.mxu0 %v587
        %v1890 = vpop.f32.mrf.mxu0
        %v1891 = vadd.f32 %v1442, %v1890
        %v1892 = vpop.f32.mrf.mxu0
        %v1893 = vadd.f32 %v1444, %v1892
        %1894 = vmatprep.mubr.f32.mxu0 %v594
        %1895 = vmatmul.mubr.f32.gmra.mxu0 %v593
        %v1896 = vpop.f32.mrf.mxu0
        %v1897 = vadd.f32 %v1448, %v1896
        %v1898 = vpop.f32.mrf.mxu0
        %v1899 = vadd.f32 %v1450, %v1898
        %1900 = vmatprep.mubr.f32.mxu0 %v600
        %1901 = vmatmul.mubr.f32.gmra.mxu0 %v599
        %v1902 = vpop.f32.mrf.mxu0
        %v1903 = vadd.f32 %v1454, %v1902
        %v1904 = vpop.f32.mrf.mxu0
        %v1905 = vadd.f32 %v1456, %v1904
        %1906 = vmatprep.mubr.f32.mxu0 %v606
        %1907 = vmatmul.mubr.f32.gmra.mxu0 %v605
        %v1908 = vpop.f32.mrf.mxu0
        %v1909 = vadd.f32 %v1460, %v1908
        %v1910 = vpop.f32.mrf.mxu0
        %v1911 = vadd.f32 %v1462, %v1910
        %1912 = vmatprep.mubr.f32.mxu0 %v612
        %1913 = vmatmul.mubr.f32.gmra.mxu0 %v611
        %v1914 = vpop.f32.mrf.mxu0
        %v1915 = vadd.f32 %v1466, %v1914
        %v1916 = vpop.f32.mrf.mxu0
        %v1917 = vadd.f32 %v1468, %v1916
        %1918 = vmatprep.mubr.f32.mxu0 %v618
        %1919 = vmatmul.mubr.f32.gmra.mxu0 %v617
        %v1920 = vpop.f32.mrf.mxu0
        %v1921 = vadd.f32 %v1472, %v1920
        %v1922 = vpop.f32.mrf.mxu0
        %v1923 = vadd.f32 %v1474, %v1922
        %1924 = vmatprep.mubr.f32.mxu0 %v624
        %1925 = vmatmul.mubr.f32.gmra.mxu0 %v623
        %v1926 = vpop.f32.mrf.mxu0
        %v1927 = vadd.f32 %v1478, %v1926
        %v1928 = vpop.f32.mrf.mxu0
        %v1929 = vadd.f32 %v1480, %v1928
        %1930 = vmatprep.mubr.f32.mxu0 %v630
        %1931 = vmatmul.mubr.f32.gmra.mxu0 %v629
        %v1932 = vpop.f32.mrf.mxu0
        %v1933 = vadd.f32 %v1484, %v1932
        %v1934 = vpop.f32.mrf.mxu0
        %v1935 = vadd.f32 %v1486, %v1934
        %1936 = vmatprep.mubr.f32.mxu0 %v636
        %1937 = vmatmul.mubr.f32.gmra.mxu0 %v635
        %v1938 = vpop.f32.mrf.mxu0
        %v1939 = vadd.f32 %v1490, %v1938
        %v1940 = vpop.f32.mrf.mxu0
        %v1941 = vadd.f32 %v1492, %v1940
        %1942 = vmatprep.mubr.f32.mxu0 %v642
        %1943 = vmatmul.mubr.f32.gmra.mxu0 %v641
        %v1944 = vpop.f32.mrf.mxu0
        %v1945 = vadd.f32 %v1496, %v1944
        %v1946 = vpop.f32.mrf.mxu0
        %v1947 = vadd.f32 %v1498, %v1946
        %1948 = vmatprep.mubr.f32.mxu0 %v648
        %1949 = vmatmul.mubr.f32.gmra.mxu0 %v647
        %v1950 = vpop.f32.mrf.mxu0
        %v1951 = vadd.f32 %v1502, %v1950
        %v1952 = vpop.f32.mrf.mxu0
        %v1953 = vadd.f32 %v1504, %v1952
        %1954 = vmatprep.mubr.f32.mxu0 %v654
        %1955 = vmatmul.mubr.f32.gmra.mxu0 %v653
        %v1956 = vpop.f32.mrf.mxu0
        %v1957 = vadd.f32 %v1508, %v1956
        %v1958 = vpop.f32.mrf.mxu0
        %v1959 = vadd.f32 %v1510, %v1958
        %1960 = vmatprep.mubr.f32.mxu0 %v660
        %1961 = vmatmul.mubr.f32.gmra.mxu0 %v659
        %v1962 = vpop.f32.mrf.mxu0
        %v1963 = vadd.f32 %v1514, %v1962
        %v1964 = vpop.f32.mrf.mxu0
        %v1965 = vadd.f32 %v1516, %v1964
        %1966 = vmatprep.mubr.f32.mxu0 %v666
        %1967 = vmatmul.mubr.f32.gmra.mxu0 %v665
        %v1968 = vpop.f32.mrf.mxu0
        %v1969 = vadd.f32 %v1520, %v1968
        %v1970 = vpop.f32.mrf.mxu0
        %v1971 = vadd.f32 %v1522, %v1970
        %1972 = vmatprep.mubr.f32.mxu0 %v672
        %1973 = vmatmul.mubr.f32.gmra.mxu0 %v671
        %v1974 = vpop.f32.mrf.mxu0
        %v1975 = vadd.f32 %v1526, %v1974
        %v1976 = vpop.f32.mrf.mxu0
        %v1977 = vadd.f32 %v1528, %v1976
        %1978 = vmatprep.mubr.f32.mxu0 %v678
        %1979 = vmatmul.mubr.f32.gmra.mxu0 %v677
        %v1980 = vpop.f32.mrf.mxu0
        %v1981 = vadd.f32 %v1532, %v1980
        %v1982 = vpop.f32.mrf.mxu0
        %v1983 = vadd.f32 %v1534, %v1982
        %1984 = vmatprep.mubr.f32.mxu0 %v684
        %1985 = vmatmul.mubr.f32.gmra.mxu0 %v683
        %v1986 = vpop.f32.mrf.mxu0
        %v1987 = vadd.f32 %v1538, %v1986
        %v1988 = vpop.f32.mrf.mxu0
        %v1989 = vadd.f32 %v1540, %v1988
        %1990 = vmatprep.mubr.f32.mxu0 %v690
        %1991 = vmatmul.mubr.f32.gmra.mxu0 %v689
        %v1992 = vpop.f32.mrf.mxu0
        %v1993 = vadd.f32 %v1544, %v1992
        %v1994 = vpop.f32.mrf.mxu0
        %v1995 = vadd.f32 %v1546, %v1994
        %1996 = vmatprep.mubr.f32.mxu0 %v696
        %1997 = vmatmul.mubr.f32.gmra.mxu0 %v695
        %v1998 = vpop.f32.mrf.mxu0
        %v1999 = vadd.f32 %v1550, %v1998
        %v2000 = vpop.f32.mrf.mxu0
        %v2001 = vadd.f32 %v1552, %v2000
        %2002 = vmatprep.mubr.f32.mxu0 %v702
        %2003 = vmatmul.mubr.f32.gmra.mxu0 %v701
        %v2004 = vpop.f32.mrf.mxu0
        %v2005 = vadd.f32 %v1556, %v2004
        %v2006 = vpop.f32.mrf.mxu0
        %v2007 = vadd.f32 %v1558, %v2006
        %2008 = vmatprep.mubr.f32.mxu0 %v708
        %2009 = vmatmul.mubr.f32.gmra.mxu0 %v707
        %v2010 = vpop.f32.mrf.mxu0
        %v2011 = vadd.f32 %v1562, %v2010
        %v2012 = vpop.f32.mrf.mxu0
        %v2013 = vadd.f32 %v1564, %v2012
        %2014 = vmatprep.mubr.f32.mxu0 %v714
        %2015 = vmatmul.mubr.f32.gmra.mxu0 %v713
        %v2016 = vpop.f32.mrf.mxu0
        %v2017 = vadd.f32 %v1568, %v2016
        %v2018 = vpop.f32.mrf.mxu0
        %v2019 = vadd.f32 %v1570, %v2018
        %2020 = vmatprep.mubr.f32.mxu0 %v720
        %2021 = vmatmul.mubr.f32.gmra.mxu0 %v719
        %v2022 = vpop.f32.mrf.mxu0
        %v2023 = vadd.f32 %v1574, %v2022
        %v2024 = vpop.f32.mrf.mxu0
        %v2025 = vadd.f32 %v1576, %v2024
        %2026 = vmatprep.mubr.f32.mxu0 %v726
        %2027 = vmatmul.mubr.f32.gmra.mxu0 %v725
        %v2028 = vpop.f32.mrf.mxu0
        %v2029 = vadd.f32 %v1580, %v2028
        %v2030 = vpop.f32.mrf.mxu0
        %v2031 = vadd.f32 %v1582, %v2030
        %2032 = vdwg.mxu0
        %2033 = vmatprep.subr.mxu0 %v1046
        %2034 = vmatpush1.msra.mxu0 %v1045
        %2035 = vmatprep.subr.mxu0 %v1042
        %2036 = vmatpush1.msra.mxu0 %v1041
        %2037 = vmatprep.subr.mxu0 %v1038
        %2038 = vmatpush1.msra.mxu0 %v1037
        %2039 = vmatprep.subr.mxu0 %v1034
        %2040 = vmatpush1.msra.mxu0 %v1033
        %2041 = vmatprep.subr.mxu0 %v1030
        %2042 = vmatpush1.msra.mxu0 %v1029
        %2043 = vmatprep.subr.mxu0 %v1026
        %2044 = vmatpush1.msra.mxu0 %v1025
        %2045 = vmatprep.subr.mxu0 %v1022
        %2046 = vmatpush1.msra.mxu0 %v1021
        %2047 = vmatprep.subr.mxu0 %v1018
        %2048 = vmatpush1.msra.mxu0 %v1017
        %2049 = vmatprep.subr.mxu0 %v1014
        %2050 = vmatpush1.msra.mxu0 %v1013
        %2051 = vmatprep.subr.mxu0 %v1010
        %2052 = vmatpush1.msra.mxu0 %v1009
        %2053 = vmatprep.subr.mxu0 %v1006
        %2054 = vmatpush1.msra.mxu0 %v1005
        %2055 = vmatprep.subr.mxu0 %v1002
        %2056 = vmatpush1.msra.mxu0 %v1001
        %2057 = vmatprep.subr.mxu0 %v998
        %2058 = vmatpush1.msra.mxu0 %v997
        %2059 = vmatprep.subr.mxu0 %v994
        %2060 = vmatpush1.msra.mxu0 %v993
        %2061 = vmatprep.subr.mxu0 %v990
        %2062 = vmatpush1.msra.mxu0 %v989
        %2063 = vmatprep.subr.mxu0 %v986
        %2064 = vmatpush1.msra.mxu0 %v985
        %2065 = vmatprep.subr.mxu0 %v1110
        %2066 = vmatpush2.msra.mxu0 %v1109
        %2067 = vmatprep.subr.mxu0 %v1106
        %2068 = vmatpush2.msra.mxu0 %v1105
        %2069 = vmatprep.subr.mxu0 %v1102
        %2070 = vmatpush2.msra.mxu0 %v1101
        %2071 = vmatprep.subr.mxu0 %v1098
        %2072 = vmatpush2.msra.mxu0 %v1097
        %2073 = vmatprep.subr.mxu0 %v1094
        %2074 = vmatpush2.msra.mxu0 %v1093
        %2075 = vmatprep.subr.mxu0 %v1090
        %2076 = vmatpush2.msra.mxu0 %v1089
        %2077 = vmatprep.subr.mxu0 %v1086
        %2078 = vmatpush2.msra.mxu0 %v1085
        %2079 = vmatprep.subr.mxu0 %v1082
        %2080 = vmatpush2.msra.mxu0 %v1081
        %2081 = vmatprep.subr.mxu0 %v1078
        %2082 = vmatpush2.msra.mxu0 %v1077
        %2083 = vmatprep.subr.mxu0 %v1074
        %2084 = vmatpush2.msra.mxu0 %v1073
        %2085 = vmatprep.subr.mxu0 %v1070
        %2086 = vmatpush2.msra.mxu0 %v1069
        %2087 = vmatprep.subr.mxu0 %v1066
        %2088 = vmatpush2.msra.mxu0 %v1065
        %2089 = vmatprep.subr.mxu0 %v1062
        %2090 = vmatpush2.msra.mxu0 %v1061
        %2091 = vmatprep.subr.mxu0 %v1058
        %2092 = vmatpush2.msra.mxu0 %v1057
        %2093 = vmatprep.subr.mxu0 %v1054
        %2094 = vmatpush2.msra.mxu0 %v1053
        %2095 = vmatprep.subr.mxu0 %v1050
        %2096 = vmatpush2.msra.mxu0 %v1049
        %2097 = vmatprep.mubr.f32.mxu0 %v350
        %2098 = vmatmul.mubr.f32.gmra.mxu0 %v349
        %v2099 = vpop.f32.mrf.mxu0
        %v2100 = vadd.f32 %v1651, %v2099
        %v2101 = vpop.f32.mrf.mxu0
        %v2102 = vadd.f32 %v1653, %v2101
        %2103 = vmatprep.mubr.f32.mxu0 %v356
        %2104 = vmatmul.mubr.f32.gmra.mxu0 %v355
        %v2105 = vpop.f32.mrf.mxu0
        %v2106 = vadd.f32 %v1657, %v2105
        %v2107 = vpop.f32.mrf.mxu0
        %v2108 = vadd.f32 %v1659, %v2107
        %2109 = vmatprep.mubr.f32.mxu0 %v362
        %2110 = vmatmul.mubr.f32.gmra.mxu0 %v361
        %v2111 = vpop.f32.mrf.mxu0
        %v2112 = vadd.f32 %v1663, %v2111
        %v2113 = vpop.f32.mrf.mxu0
        %v2114 = vadd.f32 %v1665, %v2113
        %2115 = vmatprep.mubr.f32.mxu0 %v368
        %2116 = vmatmul.mubr.f32.gmra.mxu0 %v367
        %v2117 = vpop.f32.mrf.mxu0
        %v2118 = vadd.f32 %v1669, %v2117
        %v2119 = vpop.f32.mrf.mxu0
        %v2120 = vadd.f32 %v1671, %v2119
        %2121 = vmatprep.mubr.f32.mxu0 %v374
        %2122 = vmatmul.mubr.f32.gmra.mxu0 %v373
        %v2123 = vpop.f32.mrf.mxu0
        %v2124 = vadd.f32 %v1675, %v2123
        %v2125 = vpop.f32.mrf.mxu0
        %v2126 = vadd.f32 %v1677, %v2125
        %2127 = vmatprep.mubr.f32.mxu0 %v380
        %2128 = vmatmul.mubr.f32.gmra.mxu0 %v379
        %v2129 = vpop.f32.mrf.mxu0
        %v2130 = vadd.f32 %v1681, %v2129
        %v2131 = vpop.f32.mrf.mxu0
        %v2132 = vadd.f32 %v1683, %v2131
        %2133 = vmatprep.mubr.f32.mxu0 %v386
        %2134 = vmatmul.mubr.f32.gmra.mxu0 %v385
        %v2135 = vpop.f32.mrf.mxu0
        %v2136 = vadd.f32 %v1687, %v2135
        %v2137 = vpop.f32.mrf.mxu0
        %v2138 = vadd.f32 %v1689, %v2137
        %2139 = vmatprep.mubr.f32.mxu0 %v392
        %2140 = vmatmul.mubr.f32.gmra.mxu0 %v391
        %v2141 = vpop.f32.mrf.mxu0
        %v2142 = vadd.f32 %v1693, %v2141
        %v2143 = vpop.f32.mrf.mxu0
        %v2144 = vadd.f32 %v1695, %v2143
        %2145 = vmatprep.mubr.f32.mxu0 %v398
        %2146 = vmatmul.mubr.f32.gmra.mxu0 %v397
        %v2147 = vpop.f32.mrf.mxu0
        %v2148 = vadd.f32 %v1699, %v2147
        %v2149 = vpop.f32.mrf.mxu0
        %v2150 = vadd.f32 %v1701, %v2149
        %2151 = vmatprep.mubr.f32.mxu0 %v404
        %2152 = vmatmul.mubr.f32.gmra.mxu0 %v403
        %v2153 = vpop.f32.mrf.mxu0
        %v2154 = vadd.f32 %v1705, %v2153
        %v2155 = vpop.f32.mrf.mxu0
        %v2156 = vadd.f32 %v1707, %v2155
        %2157 = vmatprep.mubr.f32.mxu0 %v410
        %2158 = vmatmul.mubr.f32.gmra.mxu0 %v409
        %v2159 = vpop.f32.mrf.mxu0
        %v2160 = vadd.f32 %v1711, %v2159
        %v2161 = vpop.f32.mrf.mxu0
        %v2162 = vadd.f32 %v1713, %v2161
        %2163 = vmatprep.mubr.f32.mxu0 %v416
        %2164 = vmatmul.mubr.f32.gmra.mxu0 %v415
        %v2165 = vpop.f32.mrf.mxu0
        %v2166 = vadd.f32 %v1717, %v2165
        %v2167 = vpop.f32.mrf.mxu0
        %v2168 = vadd.f32 %v1719, %v2167
        %2169 = vmatprep.mubr.f32.mxu0 %v422
        %2170 = vmatmul.mubr.f32.gmra.mxu0 %v421
        %v2171 = vpop.f32.mrf.mxu0
        %v2172 = vadd.f32 %v1723, %v2171
        %v2173 = vpop.f32.mrf.mxu0
        %v2174 = vadd.f32 %v1725, %v2173
        %2175 = vmatprep.mubr.f32.mxu0 %v428
        %2176 = vmatmul.mubr.f32.gmra.mxu0 %v427
        %v2177 = vpop.f32.mrf.mxu0
        %v2178 = vadd.f32 %v1729, %v2177
        %v2179 = vpop.f32.mrf.mxu0
        %v2180 = vadd.f32 %v1731, %v2179
        %2181 = vmatprep.mubr.f32.mxu0 %v434
        %2182 = vmatmul.mubr.f32.gmra.mxu0 %v433
        %v2183 = vpop.f32.mrf.mxu0
        %v2184 = vadd.f32 %v1735, %v2183
        %v2185 = vpop.f32.mrf.mxu0
        %v2186 = vadd.f32 %v1737, %v2185
        %2187 = vmatprep.mubr.f32.mxu0 %v440
        %2188 = vmatmul.mubr.f32.gmra.mxu0 %v439
        %v2189 = vpop.f32.mrf.mxu0
        %v2190 = vadd.f32 %v1741, %v2189
        %v2191 = vpop.f32.mrf.mxu0
        %v2192 = vadd.f32 %v1743, %v2191
        %2193 = vmatprep.mubr.f32.mxu0 %v446
        %2194 = vmatmul.mubr.f32.gmra.mxu0 %v445
        %v2195 = vpop.f32.mrf.mxu0
        %v2196 = vadd.f32 %v1747, %v2195
        %v2197 = vpop.f32.mrf.mxu0
        %v2198 = vadd.f32 %v1749, %v2197
        %2199 = vmatprep.mubr.f32.mxu0 %v452
        %2200 = vmatmul.mubr.f32.gmra.mxu0 %v451
        %v2201 = vpop.f32.mrf.mxu0
        %v2202 = vadd.f32 %v1753, %v2201
        %v2203 = vpop.f32.mrf.mxu0
        %v2204 = vadd.f32 %v1755, %v2203
        %2205 = vmatprep.mubr.f32.mxu0 %v458
        %2206 = vmatmul.mubr.f32.gmra.mxu0 %v457
        %v2207 = vpop.f32.mrf.mxu0
        %v2208 = vadd.f32 %v1759, %v2207
        %v2209 = vpop.f32.mrf.mxu0
        %v2210 = vadd.f32 %v1761, %v2209
        %2211 = vmatprep.mubr.f32.mxu0 %v464
        %2212 = vmatmul.mubr.f32.gmra.mxu0 %v463
        %v2213 = vpop.f32.mrf.mxu0
        %v2214 = vadd.f32 %v1765, %v2213
        %v2215 = vpop.f32.mrf.mxu0
        %v2216 = vadd.f32 %v1767, %v2215
        %2217 = vmatprep.mubr.f32.mxu0 %v470
        %2218 = vmatmul.mubr.f32.gmra.mxu0 %v469
        %v2219 = vpop.f32.mrf.mxu0
        %v2220 = vadd.f32 %v1771, %v2219
        %v2221 = vpop.f32.mrf.mxu0
        %v2222 = vadd.f32 %v1773, %v2221
        %2223 = vmatprep.mubr.f32.mxu0 %v476
        %2224 = vmatmul.mubr.f32.gmra.mxu0 %v475
        %v2225 = vpop.f32.mrf.mxu0
        %v2226 = vadd.f32 %v1777, %v2225
        %v2227 = vpop.f32.mrf.mxu0
        %v2228 = vadd.f32 %v1779, %v2227
        %2229 = vmatprep.mubr.f32.mxu0 %v482
        %2230 = vmatmul.mubr.f32.gmra.mxu0 %v481
        %v2231 = vpop.f32.mrf.mxu0
        %v2232 = vadd.f32 %v1783, %v2231
        %v2233 = vpop.f32.mrf.mxu0
        %v2234 = vadd.f32 %v1785, %v2233
        %2235 = vmatprep.mubr.f32.mxu0 %v488
        %2236 = vmatmul.mubr.f32.gmra.mxu0 %v487
        %v2237 = vpop.f32.mrf.mxu0
        %v2238 = vadd.f32 %v1789, %v2237
        %v2239 = vpop.f32.mrf.mxu0
        %v2240 = vadd.f32 %v1791, %v2239
        %2241 = vmatprep.mubr.f32.mxu0 %v494
        %2242 = vmatmul.mubr.f32.gmra.mxu0 %v493
        %v2243 = vpop.f32.mrf.mxu0
        %v2244 = vadd.f32 %v1795, %v2243
        %v2245 = vpop.f32.mrf.mxu0
        %v2246 = vadd.f32 %v1797, %v2245
        %2247 = vmatprep.mubr.f32.mxu0 %v500
        %2248 = vmatmul.mubr.f32.gmra.mxu0 %v499
        %v2249 = vpop.f32.mrf.mxu0
        %v2250 = vadd.f32 %v1801, %v2249
        %v2251 = vpop.f32.mrf.mxu0
        %v2252 = vadd.f32 %v1803, %v2251
        %2253 = vmatprep.mubr.f32.mxu0 %v506
        %2254 = vmatmul.mubr.f32.gmra.mxu0 %v505
        %v2255 = vpop.f32.mrf.mxu0
        %v2256 = vadd.f32 %v1807, %v2255
        %v2257 = vpop.f32.mrf.mxu0
        %v2258 = vadd.f32 %v1809, %v2257
        %2259 = vmatprep.mubr.f32.mxu0 %v512
        %2260 = vmatmul.mubr.f32.gmra.mxu0 %v511
        %v2261 = vpop.f32.mrf.mxu0
        %v2262 = vadd.f32 %v1813, %v2261
        %v2263 = vpop.f32.mrf.mxu0
        %v2264 = vadd.f32 %v1815, %v2263
        %2265 = vmatprep.mubr.f32.mxu0 %v518
        %2266 = vmatmul.mubr.f32.gmra.mxu0 %v517
        %v2267 = vpop.f32.mrf.mxu0
        %v2268 = vadd.f32 %v1819, %v2267
        %v2269 = vpop.f32.mrf.mxu0
        %v2270 = vadd.f32 %v1821, %v2269
        %2271 = vmatprep.mubr.f32.mxu0 %v524
        %2272 = vmatmul.mubr.f32.gmra.mxu0 %v523
        %v2273 = vpop.f32.mrf.mxu0
        %v2274 = vadd.f32 %v1825, %v2273
        %v2275 = vpop.f32.mrf.mxu0
        %v2276 = vadd.f32 %v1827, %v2275
        %2277 = vmatprep.mubr.f32.mxu0 %v530
        %2278 = vmatmul.mubr.f32.gmra.mxu0 %v529
        %v2279 = vpop.f32.mrf.mxu0
        %v2280 = vadd.f32 %v1831, %v2279
        %v2281 = vpop.f32.mrf.mxu0
        %v2282 = vadd.f32 %v1833, %v2281
        %2283 = vmatprep.mubr.f32.mxu0 %v536
        %2284 = vmatmul.mubr.f32.gmra.mxu0 %v535
        %v2285 = vpop.f32.mrf.mxu0
        %v2286 = vadd.f32 %v1837, %v2285
        %v2287 = vpop.f32.mrf.mxu0
        %v2288 = vadd.f32 %v1839, %v2287
        %2289 = vmatprep.mubr.f32.mxu0 %v542
        %2290 = vmatmul.mubr.f32.gmra.mxu0 %v541
        %v2291 = vpop.f32.mrf.mxu0
        %v2292 = vadd.f32 %v1843, %v2291
        %v2293 = vpop.f32.mrf.mxu0
        %v2294 = vadd.f32 %v1845, %v2293
        %2295 = vmatprep.mubr.f32.mxu0 %v548
        %2296 = vmatmul.mubr.f32.gmra.mxu0 %v547
        %v2297 = vpop.f32.mrf.mxu0
        %v2298 = vadd.f32 %v1849, %v2297
        %v2299 = vpop.f32.mrf.mxu0
        %v2300 = vadd.f32 %v1851, %v2299
        %2301 = vmatprep.mubr.f32.mxu0 %v554
        %2302 = vmatmul.mubr.f32.gmra.mxu0 %v553
        %v2303 = vpop.f32.mrf.mxu0
        %v2304 = vadd.f32 %v1855, %v2303
        %v2305 = vpop.f32.mrf.mxu0
        %v2306 = vadd.f32 %v1857, %v2305
        %2307 = vmatprep.mubr.f32.mxu0 %v560
        %2308 = vmatmul.mubr.f32.gmra.mxu0 %v559
        %v2309 = vpop.f32.mrf.mxu0
        %v2310 = vadd.f32 %v1861, %v2309
        %v2311 = vpop.f32.mrf.mxu0
        %v2312 = vadd.f32 %v1863, %v2311
        %2313 = vmatprep.mubr.f32.mxu0 %v566
        %2314 = vmatmul.mubr.f32.gmra.mxu0 %v565
        %v2315 = vpop.f32.mrf.mxu0
        %v2316 = vadd.f32 %v1867, %v2315
        %v2317 = vpop.f32.mrf.mxu0
        %v2318 = vadd.f32 %v1869, %v2317
        %2319 = vmatprep.mubr.f32.mxu0 %v572
        %2320 = vmatmul.mubr.f32.gmra.mxu0 %v571
        %v2321 = vpop.f32.mrf.mxu0
        %v2322 = vadd.f32 %v1873, %v2321
        %v2323 = vpop.f32.mrf.mxu0
        %v2324 = vadd.f32 %v1875, %v2323
        %2325 = vmatprep.mubr.f32.mxu0 %v578
        %2326 = vmatmul.mubr.f32.gmra.mxu0 %v577
        %v2327 = vpop.f32.mrf.mxu0
        %v2328 = vadd.f32 %v1879, %v2327
        %v2329 = vpop.f32.mrf.mxu0
        %v2330 = vadd.f32 %v1881, %v2329
        %2331 = vmatprep.mubr.f32.mxu0 %v584
        %2332 = vmatmul.mubr.f32.gmra.mxu0 %v583
        %v2333 = vpop.f32.mrf.mxu0
        %v2334 = vadd.f32 %v1885, %v2333
        %v2335 = vpop.f32.mrf.mxu0
        %v2336 = vadd.f32 %v1887, %v2335
        %2337 = vmatprep.mubr.f32.mxu0 %v590
        %2338 = vmatmul.mubr.f32.gmra.mxu0 %v589
        %v2339 = vpop.f32.mrf.mxu0
        %v2340 = vadd.f32 %v1891, %v2339
        %v2341 = vpop.f32.mrf.mxu0
        %v2342 = vadd.f32 %v1893, %v2341
        %2343 = vmatprep.mubr.f32.mxu0 %v596
        %2344 = vmatmul.mubr.f32.gmra.mxu0 %v595
        %v2345 = vpop.f32.mrf.mxu0
        %v2346 = vadd.f32 %v1897, %v2345
        %v2347 = vpop.f32.mrf.mxu0
        %v2348 = vadd.f32 %v1899, %v2347
        %2349 = vmatprep.mubr.f32.mxu0 %v602
        %2350 = vmatmul.mubr.f32.gmra.mxu0 %v601
        %v2351 = vpop.f32.mrf.mxu0
        %v2352 = vadd.f32 %v1903, %v2351
        %v2353 = vpop.f32.mrf.mxu0
        %v2354 = vadd.f32 %v1905, %v2353
        %2355 = vmatprep.mubr.f32.mxu0 %v608
        %2356 = vmatmul.mubr.f32.gmra.mxu0 %v607
        %v2357 = vpop.f32.mrf.mxu0
        %v2358 = vadd.f32 %v1909, %v2357
        %v2359 = vpop.f32.mrf.mxu0
        %v2360 = vadd.f32 %v1911, %v2359
        %2361 = vmatprep.mubr.f32.mxu0 %v614
        %2362 = vmatmul.mubr.f32.gmra.mxu0 %v613
        %v2363 = vpop.f32.mrf.mxu0
        %v2364 = vadd.f32 %v1915, %v2363
        %v2365 = vpop.f32.mrf.mxu0
        %v2366 = vadd.f32 %v1917, %v2365
        %2367 = vmatprep.mubr.f32.mxu0 %v620
        %2368 = vmatmul.mubr.f32.gmra.mxu0 %v619
        %v2369 = vpop.f32.mrf.mxu0
        %v2370 = vadd.f32 %v1921, %v2369
        %v2371 = vpop.f32.mrf.mxu0
        %v2372 = vadd.f32 %v1923, %v2371
        %2373 = vmatprep.mubr.f32.mxu0 %v626
        %2374 = vmatmul.mubr.f32.gmra.mxu0 %v625
        %v2375 = vpop.f32.mrf.mxu0
        %v2376 = vadd.f32 %v1927, %v2375
        %v2377 = vpop.f32.mrf.mxu0
        %v2378 = vadd.f32 %v1929, %v2377
        %2379 = vmatprep.mubr.f32.mxu0 %v632
        %2380 = vmatmul.mubr.f32.gmra.mxu0 %v631
        %v2381 = vpop.f32.mrf.mxu0
        %v2382 = vadd.f32 %v1933, %v2381
        %v2383 = vpop.f32.mrf.mxu0
        %v2384 = vadd.f32 %v1935, %v2383
        %2385 = vmatprep.mubr.f32.mxu0 %v638
        %2386 = vmatmul.mubr.f32.gmra.mxu0 %v637
        %v2387 = vpop.f32.mrf.mxu0
        %v2388 = vadd.f32 %v1939, %v2387
        %v2389 = vpop.f32.mrf.mxu0
        %v2390 = vadd.f32 %v1941, %v2389
        %2391 = vmatprep.mubr.f32.mxu0 %v644
        %2392 = vmatmul.mubr.f32.gmra.mxu0 %v643
        %v2393 = vpop.f32.mrf.mxu0
        %v2394 = vadd.f32 %v1945, %v2393
        %v2395 = vpop.f32.mrf.mxu0
        %v2396 = vadd.f32 %v1947, %v2395
        %2397 = vmatprep.mubr.f32.mxu0 %v650
        %2398 = vmatmul.mubr.f32.gmra.mxu0 %v649
        %v2399 = vpop.f32.mrf.mxu0
        %v2400 = vadd.f32 %v1951, %v2399
        %v2401 = vpop.f32.mrf.mxu0
        %v2402 = vadd.f32 %v1953, %v2401
        %2403 = vmatprep.mubr.f32.mxu0 %v656
        %2404 = vmatmul.mubr.f32.gmra.mxu0 %v655
        %v2405 = vpop.f32.mrf.mxu0
        %v2406 = vadd.f32 %v1957, %v2405
        %v2407 = vpop.f32.mrf.mxu0
        %v2408 = vadd.f32 %v1959, %v2407
        %2409 = vmatprep.mubr.f32.mxu0 %v662
        %2410 = vmatmul.mubr.f32.gmra.mxu0 %v661
        %v2411 = vpop.f32.mrf.mxu0
        %v2412 = vadd.f32 %v1963, %v2411
        %v2413 = vpop.f32.mrf.mxu0
        %v2414 = vadd.f32 %v1965, %v2413
        %2415 = vmatprep.mubr.f32.mxu0 %v668
        %2416 = vmatmul.mubr.f32.gmra.mxu0 %v667
        %v2417 = vpop.f32.mrf.mxu0
        %v2418 = vadd.f32 %v1969, %v2417
        %v2419 = vpop.f32.mrf.mxu0
        %v2420 = vadd.f32 %v1971, %v2419
        %2421 = vmatprep.mubr.f32.mxu0 %v674
        %2422 = vmatmul.mubr.f32.gmra.mxu0 %v673
        %v2423 = vpop.f32.mrf.mxu0
        %v2424 = vadd.f32 %v1975, %v2423
        %v2425 = vpop.f32.mrf.mxu0
        %v2426 = vadd.f32 %v1977, %v2425
        %2427 = vmatprep.mubr.f32.mxu0 %v680
        %2428 = vmatmul.mubr.f32.gmra.mxu0 %v679
        %v2429 = vpop.f32.mrf.mxu0
        %v2430 = vadd.f32 %v1981, %v2429
        %v2431 = vpop.f32.mrf.mxu0
        %v2432 = vadd.f32 %v1983, %v2431
        %2433 = vmatprep.mubr.f32.mxu0 %v686
        %2434 = vmatmul.mubr.f32.gmra.mxu0 %v685
        %v2435 = vpop.f32.mrf.mxu0
        %v2436 = vadd.f32 %v1987, %v2435
        %v2437 = vpop.f32.mrf.mxu0
        %v2438 = vadd.f32 %v1989, %v2437
        %2439 = vmatprep.mubr.f32.mxu0 %v692
        %2440 = vmatmul.mubr.f32.gmra.mxu0 %v691
        %v2441 = vpop.f32.mrf.mxu0
        %v2442 = vadd.f32 %v1993, %v2441
        %v2443 = vpop.f32.mrf.mxu0
        %v2444 = vadd.f32 %v1995, %v2443
        %2445 = vmatprep.mubr.f32.mxu0 %v698
        %2446 = vmatmul.mubr.f32.gmra.mxu0 %v697
        %v2447 = vpop.f32.mrf.mxu0
        %v2448 = vadd.f32 %v1999, %v2447
        %v2449 = vpop.f32.mrf.mxu0
        %v2450 = vadd.f32 %v2001, %v2449
        %2451 = vmatprep.mubr.f32.mxu0 %v704
        %2452 = vmatmul.mubr.f32.gmra.mxu0 %v703
        %v2453 = vpop.f32.mrf.mxu0
        %v2454 = vadd.f32 %v2005, %v2453
        %v2455 = vpop.f32.mrf.mxu0
        %v2456 = vadd.f32 %v2007, %v2455
        %2457 = vmatprep.mubr.f32.mxu0 %v710
        %2458 = vmatmul.mubr.f32.gmra.mxu0 %v709
        %v2459 = vpop.f32.mrf.mxu0
        %v2460 = vadd.f32 %v2011, %v2459
        %v2461 = vpop.f32.mrf.mxu0
        %v2462 = vadd.f32 %v2013, %v2461
        %2463 = vmatprep.mubr.f32.mxu0 %v716
        %2464 = vmatmul.mubr.f32.gmra.mxu0 %v715
        %v2465 = vpop.f32.mrf.mxu0
        %v2466 = vadd.f32 %v2017, %v2465
        %v2467 = vpop.f32.mrf.mxu0
        %v2468 = vadd.f32 %v2019, %v2467
        %2469 = vmatprep.mubr.f32.mxu0 %v722
        %2470 = vmatmul.mubr.f32.gmra.mxu0 %v721
        %v2471 = vpop.f32.mrf.mxu0
        %v2472 = vadd.f32 %v2023, %v2471
        %v2473 = vpop.f32.mrf.mxu0
        %v2474 = vadd.f32 %v2025, %v2473
        %2475 = vmatprep.mubr.f32.mxu0 %v728
        %2476 = vmatmul.mubr.f32.gmra.mxu0 %v727
        %v2477 = vpop.f32.mrf.mxu0
        %v2478 = vadd.f32 %v2029, %v2477
        %v2479 = vpop.f32.mrf.mxu0
        %v2480 = vadd.f32 %v2031, %v2479
        %2481 = vdwg.mxu0
        %2482 = vmatprep.subr.mxu0 %v792
        %2483 = vmatpush1.msra.mxu0 %v791
        %2484 = vmatprep.subr.mxu0 %v788
        %2485 = vmatpush1.msra.mxu0 %v787
        %2486 = vmatprep.subr.mxu0 %v784
        %2487 = vmatpush1.msra.mxu0 %v783
        %2488 = vmatprep.subr.mxu0 %v780
        %2489 = vmatpush1.msra.mxu0 %v779
        %2490 = vmatprep.subr.mxu0 %v776
        %2491 = vmatpush1.msra.mxu0 %v775
        %2492 = vmatprep.subr.mxu0 %v772
        %2493 = vmatpush1.msra.mxu0 %v771
        %2494 = vmatprep.subr.mxu0 %v768
        %2495 = vmatpush1.msra.mxu0 %v767
        %2496 = vmatprep.subr.mxu0 %v764
        %2497 = vmatpush1.msra.mxu0 %v763
        %2498 = vmatprep.subr.mxu0 %v760
        %2499 = vmatpush1.msra.mxu0 %v759
        %2500 = vmatprep.subr.mxu0 %v756
        %2501 = vmatpush1.msra.mxu0 %v755
        %2502 = vmatprep.subr.mxu0 %v752
        %2503 = vmatpush1.msra.mxu0 %v751
        %2504 = vmatprep.subr.mxu0 %v748
        %2505 = vmatpush1.msra.mxu0 %v747
        %2506 = vmatprep.subr.mxu0 %v744
        %2507 = vmatpush1.msra.mxu0 %v743
        %2508 = vmatprep.subr.mxu0 %v740
        %2509 = vmatpush1.msra.mxu0 %v739
        %2510 = vmatprep.subr.mxu0 %v736
        %2511 = vmatpush1.msra.mxu0 %v735
        %2512 = vmatprep.subr.mxu0 %v732
        %2513 = vmatpush1.msra.mxu0 %v731
        %2514 = vmatprep.subr.mxu0 %v856
        %2515 = vmatpush2.msra.mxu0 %v855
        %2516 = vmatprep.subr.mxu0 %v852
        %2517 = vmatpush2.msra.mxu0 %v851
        %2518 = vmatprep.subr.mxu0 %v848
        %2519 = vmatpush2.msra.mxu0 %v847
        %2520 = vmatprep.subr.mxu0 %v844
        %2521 = vmatpush2.msra.mxu0 %v843
        %2522 = vmatprep.subr.mxu0 %v840
        %2523 = vmatpush2.msra.mxu0 %v839
        %2524 = vmatprep.subr.mxu0 %v836
        %2525 = vmatpush2.msra.mxu0 %v835
        %2526 = vmatprep.subr.mxu0 %v832
        %2527 = vmatpush2.msra.mxu0 %v831
        %2528 = vmatprep.subr.mxu0 %v828
        %2529 = vmatpush2.msra.mxu0 %v827
        %2530 = vmatprep.subr.mxu0 %v824
        %2531 = vmatpush2.msra.mxu0 %v823
        %2532 = vmatprep.subr.mxu0 %v820
        %2533 = vmatpush2.msra.mxu0 %v819
        %2534 = vmatprep.subr.mxu0 %v816
        %2535 = vmatpush2.msra.mxu0 %v815
        %2536 = vmatprep.subr.mxu0 %v812
        %2537 = vmatpush2.msra.mxu0 %v811
        %2538 = vmatprep.subr.mxu0 %v808
        %2539 = vmatpush2.msra.mxu0 %v807
        %2540 = vmatprep.subr.mxu0 %v804
        %2541 = vmatpush2.msra.mxu0 %v803
        %2542 = vmatprep.subr.mxu0 %v800
        %2543 = vmatpush2.msra.mxu0 %v799
        %2544 = vmatprep.subr.mxu0 %v796
        %2545 = vmatpush2.msra.mxu0 %v795
        %2546 = vmatprep.mubr.f32.mxu0 %v346
        %2547 = vmatmul.mubr.f32.gmra.mxu0 %v345
        %v2548 = vpop.f32.mrf.mxu0
        %v2549 = vadd.f32 %v1126, %v2548
        %v2550 = vpop.f32.mrf.mxu0
        %v2551 = vadd.f32 %v1130, %v2550
        %2552 = vmatprep.mubr.f32.mxu0 %v352
        %2553 = vmatmul.mubr.f32.gmra.mxu0 %v351
        %v2554 = vpop.f32.mrf.mxu0
        %v2555 = vadd.f32 %v1126, %v2554
        %v2556 = vpop.f32.mrf.mxu0
        %v2557 = vadd.f32 %v1130, %v2556
        %2558 = vmatprep.mubr.f32.mxu0 %v358
        %2559 = vmatmul.mubr.f32.gmra.mxu0 %v357
        %v2560 = vpop.f32.mrf.mxu0
        %v2561 = vadd.f32 %v1126, %v2560
        %v2562 = vpop.f32.mrf.mxu0
        %v2563 = vadd.f32 %v1130, %v2562
        %2564 = vmatprep.mubr.f32.mxu0 %v364
        %2565 = vmatmul.mubr.f32.gmra.mxu0 %v363
        %v2566 = vpop.f32.mrf.mxu0
        %v2567 = vadd.f32 %v1126, %v2566
        %v2568 = vpop.f32.mrf.mxu0
        %v2569 = vadd.f32 %v1130, %v2568
        %2570 = vmatprep.mubr.f32.mxu0 %v370
        %2571 = vmatmul.mubr.f32.gmra.mxu0 %v369
        %v2572 = vpop.f32.mrf.mxu0
        %v2573 = vadd.f32 %v1126, %v2572
        %v2574 = vpop.f32.mrf.mxu0
        %v2575 = vadd.f32 %v1130, %v2574
        %2576 = vmatprep.mubr.f32.mxu0 %v376
        %2577 = vmatmul.mubr.f32.gmra.mxu0 %v375
        %v2578 = vpop.f32.mrf.mxu0
        %v2579 = vadd.f32 %v1126, %v2578
        %v2580 = vpop.f32.mrf.mxu0
        %v2581 = vadd.f32 %v1130, %v2580
        %2582 = vmatprep.mubr.f32.mxu0 %v382
        %2583 = vmatmul.mubr.f32.gmra.mxu0 %v381
        %v2584 = vpop.f32.mrf.mxu0
        %v2585 = vadd.f32 %v1126, %v2584
        %v2586 = vpop.f32.mrf.mxu0
        %v2587 = vadd.f32 %v1130, %v2586
        %2588 = vmatprep.mubr.f32.mxu0 %v388
        %2589 = vmatmul.mubr.f32.gmra.mxu0 %v387
        %v2590 = vpop.f32.mrf.mxu0
        %v2591 = vadd.f32 %v1126, %v2590
        %v2592 = vpop.f32.mrf.mxu0
        %v2593 = vadd.f32 %v1130, %v2592
        %2594 = vmatprep.mubr.f32.mxu0 %v394
        %2595 = vmatmul.mubr.f32.gmra.mxu0 %v393
        %v2596 = vpop.f32.mrf.mxu0
        %v2597 = vadd.f32 %v1126, %v2596
        %v2598 = vpop.f32.mrf.mxu0
        %v2599 = vadd.f32 %v1130, %v2598
        %2600 = vmatprep.mubr.f32.mxu0 %v400
        %2601 = vmatmul.mubr.f32.gmra.mxu0 %v399
        %v2602 = vpop.f32.mrf.mxu0
        %v2603 = vadd.f32 %v1126, %v2602
        %v2604 = vpop.f32.mrf.mxu0
        %v2605 = vadd.f32 %v1130, %v2604
        %2606 = vmatprep.mubr.f32.mxu0 %v406
        %2607 = vmatmul.mubr.f32.gmra.mxu0 %v405
        %v2608 = vpop.f32.mrf.mxu0
        %v2609 = vadd.f32 %v1126, %v2608
        %v2610 = vpop.f32.mrf.mxu0
        %v2611 = vadd.f32 %v1130, %v2610
        %2612 = vmatprep.mubr.f32.mxu0 %v412
        %2613 = vmatmul.mubr.f32.gmra.mxu0 %v411
        %v2614 = vpop.f32.mrf.mxu0
        %v2615 = vadd.f32 %v1126, %v2614
        %v2616 = vpop.f32.mrf.mxu0
        %v2617 = vadd.f32 %v1130, %v2616
        %2618 = vmatprep.mubr.f32.mxu0 %v418
        %2619 = vmatmul.mubr.f32.gmra.mxu0 %v417
        %v2620 = vpop.f32.mrf.mxu0
        %v2621 = vadd.f32 %v1126, %v2620
        %v2622 = vpop.f32.mrf.mxu0
        %v2623 = vadd.f32 %v1130, %v2622
        %2624 = vmatprep.mubr.f32.mxu0 %v424
        %2625 = vmatmul.mubr.f32.gmra.mxu0 %v423
        %v2626 = vpop.f32.mrf.mxu0
        %v2627 = vadd.f32 %v1126, %v2626
        %v2628 = vpop.f32.mrf.mxu0
        %v2629 = vadd.f32 %v1130, %v2628
        %2630 = vmatprep.mubr.f32.mxu0 %v430
        %2631 = vmatmul.mubr.f32.gmra.mxu0 %v429
        %v2632 = vpop.f32.mrf.mxu0
        %v2633 = vadd.f32 %v1126, %v2632
        %v2634 = vpop.f32.mrf.mxu0
        %v2635 = vadd.f32 %v1130, %v2634
        %2636 = vmatprep.mubr.f32.mxu0 %v436
        %2637 = vmatmul.mubr.f32.gmra.mxu0 %v435
        %v2638 = vpop.f32.mrf.mxu0
        %v2639 = vadd.f32 %v1126, %v2638
        %v2640 = vpop.f32.mrf.mxu0
        %v2641 = vadd.f32 %v1130, %v2640
        %2642 = vmatprep.mubr.f32.mxu0 %v442
        %2643 = vmatmul.mubr.f32.gmra.mxu0 %v441
        %v2644 = vpop.f32.mrf.mxu0
        %v2645 = vadd.f32 %v1126, %v2644
        %v2646 = vpop.f32.mrf.mxu0
        %v2647 = vadd.f32 %v1130, %v2646
        %2648 = vmatprep.mubr.f32.mxu0 %v448
        %2649 = vmatmul.mubr.f32.gmra.mxu0 %v447
        %v2650 = vpop.f32.mrf.mxu0
        %v2651 = vadd.f32 %v1126, %v2650
        %v2652 = vpop.f32.mrf.mxu0
        %v2653 = vadd.f32 %v1130, %v2652
        %2654 = vmatprep.mubr.f32.mxu0 %v454
        %2655 = vmatmul.mubr.f32.gmra.mxu0 %v453
        %v2656 = vpop.f32.mrf.mxu0
        %v2657 = vadd.f32 %v1126, %v2656
        %v2658 = vpop.f32.mrf.mxu0
        %v2659 = vadd.f32 %v1130, %v2658
        %2660 = vmatprep.mubr.f32.mxu0 %v460
        %2661 = vmatmul.mubr.f32.gmra.mxu0 %v459
        %v2662 = vpop.f32.mrf.mxu0
        %v2663 = vadd.f32 %v1126, %v2662
        %v2664 = vpop.f32.mrf.mxu0
        %v2665 = vadd.f32 %v1130, %v2664
        %2666 = vmatprep.mubr.f32.mxu0 %v466
        %2667 = vmatmul.mubr.f32.gmra.mxu0 %v465
        %v2668 = vpop.f32.mrf.mxu0
        %v2669 = vadd.f32 %v1126, %v2668
        %v2670 = vpop.f32.mrf.mxu0
        %v2671 = vadd.f32 %v1130, %v2670
        %2672 = vmatprep.mubr.f32.mxu0 %v472
        %2673 = vmatmul.mubr.f32.gmra.mxu0 %v471
        %v2674 = vpop.f32.mrf.mxu0
        %v2675 = vadd.f32 %v1126, %v2674
        %v2676 = vpop.f32.mrf.mxu0
        %v2677 = vadd.f32 %v1130, %v2676
        %2678 = vmatprep.mubr.f32.mxu0 %v478
        %2679 = vmatmul.mubr.f32.gmra.mxu0 %v477
        %v2680 = vpop.f32.mrf.mxu0
        %v2681 = vadd.f32 %v1126, %v2680
        %v2682 = vpop.f32.mrf.mxu0
        %v2683 = vadd.f32 %v1130, %v2682
        %2684 = vmatprep.mubr.f32.mxu0 %v484
        %2685 = vmatmul.mubr.f32.gmra.mxu0 %v483
        %v2686 = vpop.f32.mrf.mxu0
        %v2687 = vadd.f32 %v1126, %v2686
        %v2688 = vpop.f32.mrf.mxu0
        %v2689 = vadd.f32 %v1130, %v2688
        %2690 = vmatprep.mubr.f32.mxu0 %v490
        %2691 = vmatmul.mubr.f32.gmra.mxu0 %v489
        %v2692 = vpop.f32.mrf.mxu0
        %v2693 = vadd.f32 %v1126, %v2692
        %v2694 = vpop.f32.mrf.mxu0
        %v2695 = vadd.f32 %v1130, %v2694
        %2696 = vmatprep.mubr.f32.mxu0 %v496
        %2697 = vmatmul.mubr.f32.gmra.mxu0 %v495
        %v2698 = vpop.f32.mrf.mxu0
        %v2699 = vadd.f32 %v1126, %v2698
        %v2700 = vpop.f32.mrf.mxu0
        %v2701 = vadd.f32 %v1130, %v2700
        %2702 = vmatprep.mubr.f32.mxu0 %v502
        %2703 = vmatmul.mubr.f32.gmra.mxu0 %v501
        %v2704 = vpop.f32.mrf.mxu0
        %v2705 = vadd.f32 %v1126, %v2704
        %v2706 = vpop.f32.mrf.mxu0
        %v2707 = vadd.f32 %v1130, %v2706
        %2708 = vmatprep.mubr.f32.mxu0 %v508
        %2709 = vmatmul.mubr.f32.gmra.mxu0 %v507
        %v2710 = vpop.f32.mrf.mxu0
        %v2711 = vadd.f32 %v1126, %v2710
        %v2712 = vpop.f32.mrf.mxu0
        %v2713 = vadd.f32 %v1130, %v2712
        %2714 = vmatprep.mubr.f32.mxu0 %v514
        %2715 = vmatmul.mubr.f32.gmra.mxu0 %v513
        %v2716 = vpop.f32.mrf.mxu0
        %v2717 = vadd.f32 %v1126, %v2716
        %v2718 = vpop.f32.mrf.mxu0
        %v2719 = vadd.f32 %v1130, %v2718
        %2720 = vmatprep.mubr.f32.mxu0 %v520
        %2721 = vmatmul.mubr.f32.gmra.mxu0 %v519
        %v2722 = vpop.f32.mrf.mxu0
        %v2723 = vadd.f32 %v1126, %v2722
        %v2724 = vpop.f32.mrf.mxu0
        %v2725 = vadd.f32 %v1130, %v2724
        %2726 = vmatprep.mubr.f32.mxu0 %v526
        %2727 = vmatmul.mubr.f32.gmra.mxu0 %v525
        %v2728 = vpop.f32.mrf.mxu0
        %v2729 = vadd.f32 %v1126, %v2728
        %v2730 = vpop.f32.mrf.mxu0
        %v2731 = vadd.f32 %v1130, %v2730
        %2732 = vmatprep.mubr.f32.mxu0 %v532
        %2733 = vmatmul.mubr.f32.gmra.mxu0 %v531
        %v2734 = vpop.f32.mrf.mxu0
        %v2735 = vadd.f32 %v1126, %v2734
        %v2736 = vpop.f32.mrf.mxu0
        %v2737 = vadd.f32 %v1130, %v2736
        %2738 = vmatprep.mubr.f32.mxu0 %v538
        %2739 = vmatmul.mubr.f32.gmra.mxu0 %v537
        %v2740 = vpop.f32.mrf.mxu0
        %v2741 = vadd.f32 %v1126, %v2740
        %v2742 = vpop.f32.mrf.mxu0
        %v2743 = vadd.f32 %v1130, %v2742
        %2744 = vmatprep.mubr.f32.mxu0 %v544
        %2745 = vmatmul.mubr.f32.gmra.mxu0 %v543
        %v2746 = vpop.f32.mrf.mxu0
        %v2747 = vadd.f32 %v1126, %v2746
        %v2748 = vpop.f32.mrf.mxu0
        %v2749 = vadd.f32 %v1130, %v2748
        %2750 = vmatprep.mubr.f32.mxu0 %v550
        %2751 = vmatmul.mubr.f32.gmra.mxu0 %v549
        %v2752 = vpop.f32.mrf.mxu0
        %v2753 = vadd.f32 %v1126, %v2752
        %v2754 = vpop.f32.mrf.mxu0
        %v2755 = vadd.f32 %v1130, %v2754
        %2756 = vmatprep.mubr.f32.mxu0 %v556
        %2757 = vmatmul.mubr.f32.gmra.mxu0 %v555
        %v2758 = vpop.f32.mrf.mxu0
        %v2759 = vadd.f32 %v1126, %v2758
        %v2760 = vpop.f32.mrf.mxu0
        %v2761 = vadd.f32 %v1130, %v2760
        %2762 = vmatprep.mubr.f32.mxu0 %v562
        %2763 = vmatmul.mubr.f32.gmra.mxu0 %v561
        %v2764 = vpop.f32.mrf.mxu0
        %v2765 = vadd.f32 %v1126, %v2764
        %v2766 = vpop.f32.mrf.mxu0
        %v2767 = vadd.f32 %v1130, %v2766
        %2768 = vmatprep.mubr.f32.mxu0 %v568
        %2769 = vmatmul.mubr.f32.gmra.mxu0 %v567
        %v2770 = vpop.f32.mrf.mxu0
        %v2771 = vadd.f32 %v1126, %v2770
        %v2772 = vpop.f32.mrf.mxu0
        %v2773 = vadd.f32 %v1130, %v2772
        %2774 = vmatprep.mubr.f32.mxu0 %v574
        %2775 = vmatmul.mubr.f32.gmra.mxu0 %v573
        %v2776 = vpop.f32.mrf.mxu0
        %v2777 = vadd.f32 %v1126, %v2776
        %v2778 = vpop.f32.mrf.mxu0
        %v2779 = vadd.f32 %v1130, %v2778
        %2780 = vmatprep.mubr.f32.mxu0 %v580
        %2781 = vmatmul.mubr.f32.gmra.mxu0 %v579
        %v2782 = vpop.f32.mrf.mxu0
        %v2783 = vadd.f32 %v1126, %v2782
        %v2784 = vpop.f32.mrf.mxu0
        %v2785 = vadd.f32 %v1130, %v2784
        %2786 = vmatprep.mubr.f32.mxu0 %v586
        %2787 = vmatmul.mubr.f32.gmra.mxu0 %v585
        %v2788 = vpop.f32.mrf.mxu0
        %v2789 = vadd.f32 %v1126, %v2788
        %v2790 = vpop.f32.mrf.mxu0
        %v2791 = vadd.f32 %v1130, %v2790
        %2792 = vmatprep.mubr.f32.mxu0 %v592
        %2793 = vmatmul.mubr.f32.gmra.mxu0 %v591
        %v2794 = vpop.f32.mrf.mxu0
        %v2795 = vadd.f32 %v1126, %v2794
        %v2796 = vpop.f32.mrf.mxu0
        %v2797 = vadd.f32 %v1130, %v2796
        %2798 = vmatprep.mubr.f32.mxu0 %v598
        %2799 = vmatmul.mubr.f32.gmra.mxu0 %v597
        %v2800 = vpop.f32.mrf.mxu0
        %v2801 = vadd.f32 %v1126, %v2800
        %v2802 = vpop.f32.mrf.mxu0
        %v2803 = vadd.f32 %v1130, %v2802
        %2804 = vmatprep.mubr.f32.mxu0 %v604
        %2805 = vmatmul.mubr.f32.gmra.mxu0 %v603
        %v2806 = vpop.f32.mrf.mxu0
        %v2807 = vadd.f32 %v1126, %v2806
        %v2808 = vpop.f32.mrf.mxu0
        %v2809 = vadd.f32 %v1130, %v2808
        %2810 = vmatprep.mubr.f32.mxu0 %v610
        %2811 = vmatmul.mubr.f32.gmra.mxu0 %v609
        %v2812 = vpop.f32.mrf.mxu0
        %v2813 = vadd.f32 %v1126, %v2812
        %v2814 = vpop.f32.mrf.mxu0
        %v2815 = vadd.f32 %v1130, %v2814
        %2816 = vmatprep.mubr.f32.mxu0 %v616
        %2817 = vmatmul.mubr.f32.gmra.mxu0 %v615
        %v2818 = vpop.f32.mrf.mxu0
        %v2819 = vadd.f32 %v1126, %v2818
        %v2820 = vpop.f32.mrf.mxu0
        %v2821 = vadd.f32 %v1130, %v2820
        %2822 = vmatprep.mubr.f32.mxu0 %v622
        %2823 = vmatmul.mubr.f32.gmra.mxu0 %v621
        %v2824 = vpop.f32.mrf.mxu0
        %v2825 = vadd.f32 %v1126, %v2824
        %v2826 = vpop.f32.mrf.mxu0
        %v2827 = vadd.f32 %v1130, %v2826
        %2828 = vmatprep.mubr.f32.mxu0 %v628
        %2829 = vmatmul.mubr.f32.gmra.mxu0 %v627
        %v2830 = vpop.f32.mrf.mxu0
        %v2831 = vadd.f32 %v1126, %v2830
        %v2832 = vpop.f32.mrf.mxu0
        %v2833 = vadd.f32 %v1130, %v2832
        %2834 = vmatprep.mubr.f32.mxu0 %v634
        %2835 = vmatmul.mubr.f32.gmra.mxu0 %v633
        %v2836 = vpop.f32.mrf.mxu0
        %v2837 = vadd.f32 %v1126, %v2836
        %v2838 = vpop.f32.mrf.mxu0
        %v2839 = vadd.f32 %v1130, %v2838
        %2840 = vmatprep.mubr.f32.mxu0 %v640
        %2841 = vmatmul.mubr.f32.gmra.mxu0 %v639
        %v2842 = vpop.f32.mrf.mxu0
        %v2843 = vadd.f32 %v1126, %v2842
        %v2844 = vpop.f32.mrf.mxu0
        %v2845 = vadd.f32 %v1130, %v2844
        %2846 = vmatprep.mubr.f32.mxu0 %v646
        %2847 = vmatmul.mubr.f32.gmra.mxu0 %v645
        %v2848 = vpop.f32.mrf.mxu0
        %v2849 = vadd.f32 %v1126, %v2848
        %v2850 = vpop.f32.mrf.mxu0
        %v2851 = vadd.f32 %v1130, %v2850
        %2852 = vmatprep.mubr.f32.mxu0 %v652
        %2853 = vmatmul.mubr.f32.gmra.mxu0 %v651
        %v2854 = vpop.f32.mrf.mxu0
        %v2855 = vadd.f32 %v1126, %v2854
        %v2856 = vpop.f32.mrf.mxu0
        %v2857 = vadd.f32 %v1130, %v2856
        %2858 = vmatprep.mubr.f32.mxu0 %v658
        %2859 = vmatmul.mubr.f32.gmra.mxu0 %v657
        %v2860 = vpop.f32.mrf.mxu0
        %v2861 = vadd.f32 %v1126, %v2860
        %v2862 = vpop.f32.mrf.mxu0
        %v2863 = vadd.f32 %v1130, %v2862
        %2864 = vmatprep.mubr.f32.mxu0 %v664
        %2865 = vmatmul.mubr.f32.gmra.mxu0 %v663
        %v2866 = vpop.f32.mrf.mxu0
        %v2867 = vadd.f32 %v1126, %v2866
        %v2868 = vpop.f32.mrf.mxu0
        %v2869 = vadd.f32 %v1130, %v2868
        %2870 = vmatprep.mubr.f32.mxu0 %v670
        %2871 = vmatmul.mubr.f32.gmra.mxu0 %v669
        %v2872 = vpop.f32.mrf.mxu0
        %v2873 = vadd.f32 %v1126, %v2872
        %v2874 = vpop.f32.mrf.mxu0
        %v2875 = vadd.f32 %v1130, %v2874
        %2876 = vmatprep.mubr.f32.mxu0 %v676
        %2877 = vmatmul.mubr.f32.gmra.mxu0 %v675
        %v2878 = vpop.f32.mrf.mxu0
        %v2879 = vadd.f32 %v1126, %v2878
        %v2880 = vpop.f32.mrf.mxu0
        %v2881 = vadd.f32 %v1130, %v2880
        %2882 = vmatprep.mubr.f32.mxu0 %v682
        %2883 = vmatmul.mubr.f32.gmra.mxu0 %v681
        %v2884 = vpop.f32.mrf.mxu0
        %v2885 = vadd.f32 %v1126, %v2884
        %v2886 = vpop.f32.mrf.mxu0
        %v2887 = vadd.f32 %v1130, %v2886
        %2888 = vmatprep.mubr.f32.mxu0 %v688
        %2889 = vmatmul.mubr.f32.gmra.mxu0 %v687
        %v2890 = vpop.f32.mrf.mxu0
        %v2891 = vadd.f32 %v1126, %v2890
        %v2892 = vpop.f32.mrf.mxu0
        %v2893 = vadd.f32 %v1130, %v2892
        %2894 = vmatprep.mubr.f32.mxu0 %v694
        %2895 = vmatmul.mubr.f32.gmra.mxu0 %v693
        %v2896 = vpop.f32.mrf.mxu0
        %v2897 = vadd.f32 %v1126, %v2896
        %v2898 = vpop.f32.mrf.mxu0
        %v2899 = vadd.f32 %v1130, %v2898
        %2900 = vmatprep.mubr.f32.mxu0 %v700
        %2901 = vmatmul.mubr.f32.gmra.mxu0 %v699
        %v2902 = vpop.f32.mrf.mxu0
        %v2903 = vadd.f32 %v1126, %v2902
        %v2904 = vpop.f32.mrf.mxu0
        %v2905 = vadd.f32 %v1130, %v2904
        %2906 = vmatprep.mubr.f32.mxu0 %v706
        %2907 = vmatmul.mubr.f32.gmra.mxu0 %v705
        %v2908 = vpop.f32.mrf.mxu0
        %v2909 = vadd.f32 %v1126, %v2908
        %v2910 = vpop.f32.mrf.mxu0
        %v2911 = vadd.f32 %v1130, %v2910
        %2912 = vmatprep.mubr.f32.mxu0 %v712
        %2913 = vmatmul.mubr.f32.gmra.mxu0 %v711
        %v2914 = vpop.f32.mrf.mxu0
        %v2915 = vadd.f32 %v1126, %v2914
        %v2916 = vpop.f32.mrf.mxu0
        %v2917 = vadd.f32 %v1130, %v2916
        %2918 = vmatprep.mubr.f32.mxu0 %v718
        %2919 = vmatmul.mubr.f32.gmra.mxu0 %v717
        %v2920 = vpop.f32.mrf.mxu0
        %v2921 = vadd.f32 %v1126, %v2920
        %v2922 = vpop.f32.mrf.mxu0
        %v2923 = vadd.f32 %v1130, %v2922
        %2924 = vmatprep.mubr.f32.mxu0 %v724
        %2925 = vmatmul.mubr.f32.gmra.mxu0 %v723
        %v2926 = vpop.f32.mrf.mxu0
        %v2927 = vadd.f32 %v1126, %v2926
        %v2928 = vpop.f32.mrf.mxu0
        %v2929 = vadd.f32 %v1130, %v2928
        %2930 = vdwg.mxu0
        %2931 = vmatprep.subr.mxu0 %v920
        %2932 = vmatpush1.msra.mxu0 %v919
        %2933 = vmatprep.subr.mxu0 %v916
        %2934 = vmatpush1.msra.mxu0 %v915
        %2935 = vmatprep.subr.mxu0 %v912
        %2936 = vmatpush1.msra.mxu0 %v911
        %2937 = vmatprep.subr.mxu0 %v908
        %2938 = vmatpush1.msra.mxu0 %v907
        %2939 = vmatprep.subr.mxu0 %v904
        %2940 = vmatpush1.msra.mxu0 %v903
        %2941 = vmatprep.subr.mxu0 %v900
        %2942 = vmatpush1.msra.mxu0 %v899
        %2943 = vmatprep.subr.mxu0 %v896
        %2944 = vmatpush1.msra.mxu0 %v895
        %2945 = vmatprep.subr.mxu0 %v892
        %2946 = vmatpush1.msra.mxu0 %v891
        %2947 = vmatprep.subr.mxu0 %v888
        %2948 = vmatpush1.msra.mxu0 %v887
        %2949 = vmatprep.subr.mxu0 %v884
        %2950 = vmatpush1.msra.mxu0 %v883
        %2951 = vmatprep.subr.mxu0 %v880
        %2952 = vmatpush1.msra.mxu0 %v879
        %2953 = vmatprep.subr.mxu0 %v876
        %2954 = vmatpush1.msra.mxu0 %v875
        %2955 = vmatprep.subr.mxu0 %v872
        %2956 = vmatpush1.msra.mxu0 %v871
        %2957 = vmatprep.subr.mxu0 %v868
        %2958 = vmatpush1.msra.mxu0 %v867
        %2959 = vmatprep.subr.mxu0 %v864
        %2960 = vmatpush1.msra.mxu0 %v863
        %2961 = vmatprep.subr.mxu0 %v860
        %2962 = vmatpush1.msra.mxu0 %v859
        %2963 = vmatprep.subr.mxu0 %v984
        %2964 = vmatpush2.msra.mxu0 %v983
        %2965 = vmatprep.subr.mxu0 %v980
        %2966 = vmatpush2.msra.mxu0 %v979
        %2967 = vmatprep.subr.mxu0 %v976
        %2968 = vmatpush2.msra.mxu0 %v975
        %2969 = vmatprep.subr.mxu0 %v972
        %2970 = vmatpush2.msra.mxu0 %v971
        %2971 = vmatprep.subr.mxu0 %v968
        %2972 = vmatpush2.msra.mxu0 %v967
        %2973 = vmatprep.subr.mxu0 %v964
        %2974 = vmatpush2.msra.mxu0 %v963
        %2975 = vmatprep.subr.mxu0 %v960
        %2976 = vmatpush2.msra.mxu0 %v959
        %2977 = vmatprep.subr.mxu0 %v956
        %2978 = vmatpush2.msra.mxu0 %v955
        %2979 = vmatprep.subr.mxu0 %v952
        %2980 = vmatpush2.msra.mxu0 %v951
        %2981 = vmatprep.subr.mxu0 %v948
        %2982 = vmatpush2.msra.mxu0 %v947
        %2983 = vmatprep.subr.mxu0 %v944
        %2984 = vmatpush2.msra.mxu0 %v943
        %2985 = vmatprep.subr.mxu0 %v940
        %2986 = vmatpush2.msra.mxu0 %v939
        %2987 = vmatprep.subr.mxu0 %v936
        %2988 = vmatpush2.msra.mxu0 %v935
        %2989 = vmatprep.subr.mxu0 %v932
        %2990 = vmatpush2.msra.mxu0 %v931
        %2991 = vmatprep.subr.mxu0 %v928
        %2992 = vmatpush2.msra.mxu0 %v927
        %2993 = vmatprep.subr.mxu0 %v924
        %2994 = vmatpush2.msra.mxu0 %v923
        %2995 = vmatprep.mubr.f32.mxu0 %v348
        %2996 = vmatmul.mubr.f32.gmra.mxu0 %v347
        %v2997 = vpop.f32.mrf.mxu0
        %v2998 = vadd.f32 %v2549, %v2997
        %v2999 = vpop.f32.mrf.mxu0
        %v3000 = vadd.f32 %v2551, %v2999
        %3001 = vmatprep.mubr.f32.mxu0 %v354
        %3002 = vmatmul.mubr.f32.gmra.mxu0 %v353
        %v3003 = vpop.f32.mrf.mxu0
        %v3004 = vadd.f32 %v2555, %v3003
        %v3005 = vpop.f32.mrf.mxu0
        %v3006 = vadd.f32 %v2557, %v3005
        %3007 = vmatprep.mubr.f32.mxu0 %v360
        %3008 = vmatmul.mubr.f32.gmra.mxu0 %v359
        %v3009 = vpop.f32.mrf.mxu0
        %v3010 = vadd.f32 %v2561, %v3009
        %v3011 = vpop.f32.mrf.mxu0
        %v3012 = vadd.f32 %v2563, %v3011
        %3013 = vmatprep.mubr.f32.mxu0 %v366
        %3014 = vmatmul.mubr.f32.gmra.mxu0 %v365
        %v3015 = vpop.f32.mrf.mxu0
        %v3016 = vadd.f32 %v2567, %v3015
        %v3017 = vpop.f32.mrf.mxu0
        %v3018 = vadd.f32 %v2569, %v3017
        %3019 = vmatprep.mubr.f32.mxu0 %v372
        %3020 = vmatmul.mubr.f32.gmra.mxu0 %v371
        %v3021 = vpop.f32.mrf.mxu0
        %v3022 = vadd.f32 %v2573, %v3021
        %v3023 = vpop.f32.mrf.mxu0
        %v3024 = vadd.f32 %v2575, %v3023
        %3025 = vmatprep.mubr.f32.mxu0 %v378
        %3026 = vmatmul.mubr.f32.gmra.mxu0 %v377
        %v3027 = vpop.f32.mrf.mxu0
        %v3028 = vadd.f32 %v2579, %v3027
        %v3029 = vpop.f32.mrf.mxu0
        %v3030 = vadd.f32 %v2581, %v3029
        %3031 = vmatprep.mubr.f32.mxu0 %v384
        %3032 = vmatmul.mubr.f32.gmra.mxu0 %v383
        %v3033 = vpop.f32.mrf.mxu0
        %v3034 = vadd.f32 %v2585, %v3033
        %v3035 = vpop.f32.mrf.mxu0
        %v3036 = vadd.f32 %v2587, %v3035
        %3037 = vmatprep.mubr.f32.mxu0 %v390
        %3038 = vmatmul.mubr.f32.gmra.mxu0 %v389
        %v3039 = vpop.f32.mrf.mxu0
        %v3040 = vadd.f32 %v2591, %v3039
        %v3041 = vpop.f32.mrf.mxu0
        %v3042 = vadd.f32 %v2593, %v3041
        %3043 = vmatprep.mubr.f32.mxu0 %v396
        %3044 = vmatmul.mubr.f32.gmra.mxu0 %v395
        %v3045 = vpop.f32.mrf.mxu0
        %v3046 = vadd.f32 %v2597, %v3045
        %v3047 = vpop.f32.mrf.mxu0
        %v3048 = vadd.f32 %v2599, %v3047
        %3049 = vmatprep.mubr.f32.mxu0 %v402
        %3050 = vmatmul.mubr.f32.gmra.mxu0 %v401
        %v3051 = vpop.f32.mrf.mxu0
        %v3052 = vadd.f32 %v2603, %v3051
        %v3053 = vpop.f32.mrf.mxu0
        %v3054 = vadd.f32 %v2605, %v3053
        %3055 = vmatprep.mubr.f32.mxu0 %v408
        %3056 = vmatmul.mubr.f32.gmra.mxu0 %v407
        %v3057 = vpop.f32.mrf.mxu0
        %v3058 = vadd.f32 %v2609, %v3057
        %v3059 = vpop.f32.mrf.mxu0
        %v3060 = vadd.f32 %v2611, %v3059
        %3061 = vmatprep.mubr.f32.mxu0 %v414
        %3062 = vmatmul.mubr.f32.gmra.mxu0 %v413
        %v3063 = vpop.f32.mrf.mxu0
        %v3064 = vadd.f32 %v2615, %v3063
        %v3065 = vpop.f32.mrf.mxu0
        %v3066 = vadd.f32 %v2617, %v3065
        %3067 = vmatprep.mubr.f32.mxu0 %v420
        %3068 = vmatmul.mubr.f32.gmra.mxu0 %v419
        %v3069 = vpop.f32.mrf.mxu0
        %v3070 = vadd.f32 %v2621, %v3069
        %v3071 = vpop.f32.mrf.mxu0
        %v3072 = vadd.f32 %v2623, %v3071
        %3073 = vmatprep.mubr.f32.mxu0 %v426
        %3074 = vmatmul.mubr.f32.gmra.mxu0 %v425
        %v3075 = vpop.f32.mrf.mxu0
        %v3076 = vadd.f32 %v2627, %v3075
        %v3077 = vpop.f32.mrf.mxu0
        %v3078 = vadd.f32 %v2629, %v3077
        %3079 = vmatprep.mubr.f32.mxu0 %v432
        %3080 = vmatmul.mubr.f32.gmra.mxu0 %v431
        %v3081 = vpop.f32.mrf.mxu0
        %v3082 = vadd.f32 %v2633, %v3081
        %v3083 = vpop.f32.mrf.mxu0
        %v3084 = vadd.f32 %v2635, %v3083
        %3085 = vmatprep.mubr.f32.mxu0 %v438
        %3086 = vmatmul.mubr.f32.gmra.mxu0 %v437
        %v3087 = vpop.f32.mrf.mxu0
        %v3088 = vadd.f32 %v2639, %v3087
        %v3089 = vpop.f32.mrf.mxu0
        %v3090 = vadd.f32 %v2641, %v3089
        %3091 = vmatprep.mubr.f32.mxu0 %v444
        %3092 = vmatmul.mubr.f32.gmra.mxu0 %v443
        %v3093 = vpop.f32.mrf.mxu0
        %v3094 = vadd.f32 %v2645, %v3093
        %v3095 = vpop.f32.mrf.mxu0
        %v3096 = vadd.f32 %v2647, %v3095
        %3097 = vmatprep.mubr.f32.mxu0 %v450
        %3098 = vmatmul.mubr.f32.gmra.mxu0 %v449
        %v3099 = vpop.f32.mrf.mxu0
        %v3100 = vadd.f32 %v2651, %v3099
        %v3101 = vpop.f32.mrf.mxu0
        %v3102 = vadd.f32 %v2653, %v3101
        %3103 = vmatprep.mubr.f32.mxu0 %v456
        %3104 = vmatmul.mubr.f32.gmra.mxu0 %v455
        %v3105 = vpop.f32.mrf.mxu0
        %v3106 = vadd.f32 %v2657, %v3105
        %v3107 = vpop.f32.mrf.mxu0
        %v3108 = vadd.f32 %v2659, %v3107
        %3109 = vmatprep.mubr.f32.mxu0 %v462
        %3110 = vmatmul.mubr.f32.gmra.mxu0 %v461
        %v3111 = vpop.f32.mrf.mxu0
        %v3112 = vadd.f32 %v2663, %v3111
        %v3113 = vpop.f32.mrf.mxu0
        %v3114 = vadd.f32 %v2665, %v3113
        %3115 = vmatprep.mubr.f32.mxu0 %v468
        %3116 = vmatmul.mubr.f32.gmra.mxu0 %v467
        %v3117 = vpop.f32.mrf.mxu0
        %v3118 = vadd.f32 %v2669, %v3117
        %v3119 = vpop.f32.mrf.mxu0
        %v3120 = vadd.f32 %v2671, %v3119
        %3121 = vmatprep.mubr.f32.mxu0 %v474
        %3122 = vmatmul.mubr.f32.gmra.mxu0 %v473
        %v3123 = vpop.f32.mrf.mxu0
        %v3124 = vadd.f32 %v2675, %v3123
        %v3125 = vpop.f32.mrf.mxu0
        %v3126 = vadd.f32 %v2677, %v3125
        %3127 = vmatprep.mubr.f32.mxu0 %v480
        %3128 = vmatmul.mubr.f32.gmra.mxu0 %v479
        %v3129 = vpop.f32.mrf.mxu0
        %v3130 = vadd.f32 %v2681, %v3129
        %v3131 = vpop.f32.mrf.mxu0
        %v3132 = vadd.f32 %v2683, %v3131
        %3133 = vmatprep.mubr.f32.mxu0 %v486
        %3134 = vmatmul.mubr.f32.gmra.mxu0 %v485
        %v3135 = vpop.f32.mrf.mxu0
        %v3136 = vadd.f32 %v2687, %v3135
        %v3137 = vpop.f32.mrf.mxu0
        %v3138 = vadd.f32 %v2689, %v3137
        %3139 = vmatprep.mubr.f32.mxu0 %v492
        %3140 = vmatmul.mubr.f32.gmra.mxu0 %v491
        %v3141 = vpop.f32.mrf.mxu0
        %v3142 = vadd.f32 %v2693, %v3141
        %v3143 = vpop.f32.mrf.mxu0
        %v3144 = vadd.f32 %v2695, %v3143
        %3145 = vmatprep.mubr.f32.mxu0 %v498
        %3146 = vmatmul.mubr.f32.gmra.mxu0 %v497
        %v3147 = vpop.f32.mrf.mxu0
        %v3148 = vadd.f32 %v2699, %v3147
        %v3149 = vpop.f32.mrf.mxu0
        %v3150 = vadd.f32 %v2701, %v3149
        %3151 = vmatprep.mubr.f32.mxu0 %v504
        %3152 = vmatmul.mubr.f32.gmra.mxu0 %v503
        %v3153 = vpop.f32.mrf.mxu0
        %v3154 = vadd.f32 %v2705, %v3153
        %v3155 = vpop.f32.mrf.mxu0
        %v3156 = vadd.f32 %v2707, %v3155
        %3157 = vmatprep.mubr.f32.mxu0 %v510
        %3158 = vmatmul.mubr.f32.gmra.mxu0 %v509
        %v3159 = vpop.f32.mrf.mxu0
        %v3160 = vadd.f32 %v2711, %v3159
        %v3161 = vpop.f32.mrf.mxu0
        %v3162 = vadd.f32 %v2713, %v3161
        %3163 = vmatprep.mubr.f32.mxu0 %v516
        %3164 = vmatmul.mubr.f32.gmra.mxu0 %v515
        %v3165 = vpop.f32.mrf.mxu0
        %v3166 = vadd.f32 %v2717, %v3165
        %v3167 = vpop.f32.mrf.mxu0
        %v3168 = vadd.f32 %v2719, %v3167
        %3169 = vmatprep.mubr.f32.mxu0 %v522
        %3170 = vmatmul.mubr.f32.gmra.mxu0 %v521
        %v3171 = vpop.f32.mrf.mxu0
        %v3172 = vadd.f32 %v2723, %v3171
        %v3173 = vpop.f32.mrf.mxu0
        %v3174 = vadd.f32 %v2725, %v3173
        %3175 = vmatprep.mubr.f32.mxu0 %v528
        %3176 = vmatmul.mubr.f32.gmra.mxu0 %v527
        %v3177 = vpop.f32.mrf.mxu0
        %v3178 = vadd.f32 %v2729, %v3177
        %v3179 = vpop.f32.mrf.mxu0
        %v3180 = vadd.f32 %v2731, %v3179
        %3181 = vmatprep.mubr.f32.mxu0 %v534
        %3182 = vmatmul.mubr.f32.gmra.mxu0 %v533
        %v3183 = vpop.f32.mrf.mxu0
        %v3184 = vadd.f32 %v2735, %v3183
        %v3185 = vpop.f32.mrf.mxu0
        %v3186 = vadd.f32 %v2737, %v3185
        %3187 = vmatprep.mubr.f32.mxu0 %v540
        %3188 = vmatmul.mubr.f32.gmra.mxu0 %v539
        %v3189 = vpop.f32.mrf.mxu0
        %v3190 = vadd.f32 %v2741, %v3189
        %v3191 = vpop.f32.mrf.mxu0
        %v3192 = vadd.f32 %v2743, %v3191
        %3193 = vmatprep.mubr.f32.mxu0 %v546
        %3194 = vmatmul.mubr.f32.gmra.mxu0 %v545
        %v3195 = vpop.f32.mrf.mxu0
        %v3196 = vadd.f32 %v2747, %v3195
        %v3197 = vpop.f32.mrf.mxu0
        %v3198 = vadd.f32 %v2749, %v3197
        %3199 = vmatprep.mubr.f32.mxu0 %v552
        %3200 = vmatmul.mubr.f32.gmra.mxu0 %v551
        %v3201 = vpop.f32.mrf.mxu0
        %v3202 = vadd.f32 %v2753, %v3201
        %v3203 = vpop.f32.mrf.mxu0
        %v3204 = vadd.f32 %v2755, %v3203
        %3205 = vmatprep.mubr.f32.mxu0 %v558
        %3206 = vmatmul.mubr.f32.gmra.mxu0 %v557
        %v3207 = vpop.f32.mrf.mxu0
        %v3208 = vadd.f32 %v2759, %v3207
        %v3209 = vpop.f32.mrf.mxu0
        %v3210 = vadd.f32 %v2761, %v3209
        %3211 = vmatprep.mubr.f32.mxu0 %v564
        %3212 = vmatmul.mubr.f32.gmra.mxu0 %v563
        %v3213 = vpop.f32.mrf.mxu0
        %v3214 = vadd.f32 %v2765, %v3213
        %v3215 = vpop.f32.mrf.mxu0
        %v3216 = vadd.f32 %v2767, %v3215
        %3217 = vmatprep.mubr.f32.mxu0 %v570
        %3218 = vmatmul.mubr.f32.gmra.mxu0 %v569
        %v3219 = vpop.f32.mrf.mxu0
        %v3220 = vadd.f32 %v2771, %v3219
        %v3221 = vpop.f32.mrf.mxu0
        %v3222 = vadd.f32 %v2773, %v3221
        %3223 = vmatprep.mubr.f32.mxu0 %v576
        %3224 = vmatmul.mubr.f32.gmra.mxu0 %v575
        %v3225 = vpop.f32.mrf.mxu0
        %v3226 = vadd.f32 %v2777, %v3225
        %v3227 = vpop.f32.mrf.mxu0
        %v3228 = vadd.f32 %v2779, %v3227
        %3229 = vmatprep.mubr.f32.mxu0 %v582
        %3230 = vmatmul.mubr.f32.gmra.mxu0 %v581
        %v3231 = vpop.f32.mrf.mxu0
        %v3232 = vadd.f32 %v2783, %v3231
        %v3233 = vpop.f32.mrf.mxu0
        %v3234 = vadd.f32 %v2785, %v3233
        %3235 = vmatprep.mubr.f32.mxu0 %v588
        %3236 = vmatmul.mubr.f32.gmra.mxu0 %v587
        %v3237 = vpop.f32.mrf.mxu0
        %v3238 = vadd.f32 %v2789, %v3237
        %v3239 = vpop.f32.mrf.mxu0
        %v3240 = vadd.f32 %v2791, %v3239
        %3241 = vmatprep.mubr.f32.mxu0 %v594
        %3242 = vmatmul.mubr.f32.gmra.mxu0 %v593
        %v3243 = vpop.f32.mrf.mxu0
        %v3244 = vadd.f32 %v2795, %v3243
        %v3245 = vpop.f32.mrf.mxu0
        %v3246 = vadd.f32 %v2797, %v3245
        %3247 = vmatprep.mubr.f32.mxu0 %v600
        %3248 = vmatmul.mubr.f32.gmra.mxu0 %v599
        %v3249 = vpop.f32.mrf.mxu0
        %v3250 = vadd.f32 %v2801, %v3249
        %v3251 = vpop.f32.mrf.mxu0
        %v3252 = vadd.f32 %v2803, %v3251
        %3253 = vmatprep.mubr.f32.mxu0 %v606
        %3254 = vmatmul.mubr.f32.gmra.mxu0 %v605
        %v3255 = vpop.f32.mrf.mxu0
        %v3256 = vadd.f32 %v2807, %v3255
        %v3257 = vpop.f32.mrf.mxu0
        %v3258 = vadd.f32 %v2809, %v3257
        %3259 = vmatprep.mubr.f32.mxu0 %v612
        %3260 = vmatmul.mubr.f32.gmra.mxu0 %v611
        %v3261 = vpop.f32.mrf.mxu0
        %v3262 = vadd.f32 %v2813, %v3261
        %v3263 = vpop.f32.mrf.mxu0
        %v3264 = vadd.f32 %v2815, %v3263
        %3265 = vmatprep.mubr.f32.mxu0 %v618
        %3266 = vmatmul.mubr.f32.gmra.mxu0 %v617
        %v3267 = vpop.f32.mrf.mxu0
        %v3268 = vadd.f32 %v2819, %v3267
        %v3269 = vpop.f32.mrf.mxu0
        %v3270 = vadd.f32 %v2821, %v3269
        %3271 = vmatprep.mubr.f32.mxu0 %v624
        %3272 = vmatmul.mubr.f32.gmra.mxu0 %v623
        %v3273 = vpop.f32.mrf.mxu0
        %v3274 = vadd.f32 %v2825, %v3273
        %v3275 = vpop.f32.mrf.mxu0
        %v3276 = vadd.f32 %v2827, %v3275
        %3277 = vmatprep.mubr.f32.mxu0 %v630
        %3278 = vmatmul.mubr.f32.gmra.mxu0 %v629
        %v3279 = vpop.f32.mrf.mxu0
        %v3280 = vadd.f32 %v2831, %v3279
        %v3281 = vpop.f32.mrf.mxu0
        %v3282 = vadd.f32 %v2833, %v3281
        %3283 = vmatprep.mubr.f32.mxu0 %v636
        %3284 = vmatmul.mubr.f32.gmra.mxu0 %v635
        %v3285 = vpop.f32.mrf.mxu0
        %v3286 = vadd.f32 %v2837, %v3285
        %v3287 = vpop.f32.mrf.mxu0
        %v3288 = vadd.f32 %v2839, %v3287
        %3289 = vmatprep.mubr.f32.mxu0 %v642
        %3290 = vmatmul.mubr.f32.gmra.mxu0 %v641
        %v3291 = vpop.f32.mrf.mxu0
        %v3292 = vadd.f32 %v2843, %v3291
        %v3293 = vpop.f32.mrf.mxu0
        %v3294 = vadd.f32 %v2845, %v3293
        %3295 = vmatprep.mubr.f32.mxu0 %v648
        %3296 = vmatmul.mubr.f32.gmra.mxu0 %v647
        %v3297 = vpop.f32.mrf.mxu0
        %v3298 = vadd.f32 %v2849, %v3297
        %v3299 = vpop.f32.mrf.mxu0
        %v3300 = vadd.f32 %v2851, %v3299
        %3301 = vmatprep.mubr.f32.mxu0 %v654
        %3302 = vmatmul.mubr.f32.gmra.mxu0 %v653
        %v3303 = vpop.f32.mrf.mxu0
        %v3304 = vadd.f32 %v2855, %v3303
        %v3305 = vpop.f32.mrf.mxu0
        %v3306 = vadd.f32 %v2857, %v3305
        %3307 = vmatprep.mubr.f32.mxu0 %v660
        %3308 = vmatmul.mubr.f32.gmra.mxu0 %v659
        %v3309 = vpop.f32.mrf.mxu0
        %v3310 = vadd.f32 %v2861, %v3309
        %v3311 = vpop.f32.mrf.mxu0
        %v3312 = vadd.f32 %v2863, %v3311
        %3313 = vmatprep.mubr.f32.mxu0 %v666
        %3314 = vmatmul.mubr.f32.gmra.mxu0 %v665
        %v3315 = vpop.f32.mrf.mxu0
        %v3316 = vadd.f32 %v2867, %v3315
        %v3317 = vpop.f32.mrf.mxu0
        %v3318 = vadd.f32 %v2869, %v3317
        %3319 = vmatprep.mubr.f32.mxu0 %v672
        %3320 = vmatmul.mubr.f32.gmra.mxu0 %v671
        %v3321 = vpop.f32.mrf.mxu0
        %v3322 = vadd.f32 %v2873, %v3321
        %v3323 = vpop.f32.mrf.mxu0
        %v3324 = vadd.f32 %v2875, %v3323
        %3325 = vmatprep.mubr.f32.mxu0 %v678
        %3326 = vmatmul.mubr.f32.gmra.mxu0 %v677
        %v3327 = vpop.f32.mrf.mxu0
        %v3328 = vadd.f32 %v2879, %v3327
        %v3329 = vpop.f32.mrf.mxu0
        %v3330 = vadd.f32 %v2881, %v3329
        %3331 = vmatprep.mubr.f32.mxu0 %v684
        %3332 = vmatmul.mubr.f32.gmra.mxu0 %v683
        %v3333 = vpop.f32.mrf.mxu0
        %v3334 = vadd.f32 %v2885, %v3333
        %v3335 = vpop.f32.mrf.mxu0
        %v3336 = vadd.f32 %v2887, %v3335
        %3337 = vmatprep.mubr.f32.mxu0 %v690
        %3338 = vmatmul.mubr.f32.gmra.mxu0 %v689
        %v3339 = vpop.f32.mrf.mxu0
        %v3340 = vadd.f32 %v2891, %v3339
        %v3341 = vpop.f32.mrf.mxu0
        %v3342 = vadd.f32 %v2893, %v3341
        %3343 = vmatprep.mubr.f32.mxu0 %v696
        %3344 = vmatmul.mubr.f32.gmra.mxu0 %v695
        %v3345 = vpop.f32.mrf.mxu0
        %v3346 = vadd.f32 %v2897, %v3345
        %v3347 = vpop.f32.mrf.mxu0
        %v3348 = vadd.f32 %v2899, %v3347
        %3349 = vmatprep.mubr.f32.mxu0 %v702
        %3350 = vmatmul.mubr.f32.gmra.mxu0 %v701
        %v3351 = vpop.f32.mrf.mxu0
        %v3352 = vadd.f32 %v2903, %v3351
        %v3353 = vpop.f32.mrf.mxu0
        %v3354 = vadd.f32 %v2905, %v3353
        %3355 = vmatprep.mubr.f32.mxu0 %v708
        %3356 = vmatmul.mubr.f32.gmra.mxu0 %v707
        %v3357 = vpop.f32.mrf.mxu0
        %v3358 = vadd.f32 %v2909, %v3357
        %v3359 = vpop.f32.mrf.mxu0
        %v3360 = vadd.f32 %v2911, %v3359
        %3361 = vmatprep.mubr.f32.mxu0 %v714
        %3362 = vmatmul.mubr.f32.gmra.mxu0 %v713
        %v3363 = vpop.f32.mrf.mxu0
        %v3364 = vadd.f32 %v2915, %v3363
        %v3365 = vpop.f32.mrf.mxu0
        %v3366 = vadd.f32 %v2917, %v3365
        %3367 = vmatprep.mubr.f32.mxu0 %v720
        %3368 = vmatmul.mubr.f32.gmra.mxu0 %v719
        %v3369 = vpop.f32.mrf.mxu0
        %v3370 = vadd.f32 %v2921, %v3369
        %v3371 = vpop.f32.mrf.mxu0
        %v3372 = vadd.f32 %v2923, %v3371
        %3373 = vmatprep.mubr.f32.mxu0 %v726
        %3374 = vmatmul.mubr.f32.gmra.mxu0 %v725
        %v3375 = vpop.f32.mrf.mxu0
        %v3376 = vadd.f32 %v2927, %v3375
        %v3377 = vpop.f32.mrf.mxu0
        %v3378 = vadd.f32 %v2929, %v3377
        %3379 = vdwg.mxu0
        %3380 = vmatprep.subr.mxu0 %v1048
        %3381 = vmatpush1.msra.mxu0 %v1047
        %3382 = vmatprep.subr.mxu0 %v1044
        %3383 = vmatpush1.msra.mxu0 %v1043
        %3384 = vmatprep.subr.mxu0 %v1040
        %3385 = vmatpush1.msra.mxu0 %v1039
        %3386 = vmatprep.subr.mxu0 %v1036
        %3387 = vmatpush1.msra.mxu0 %v1035
        %3388 = vmatprep.subr.mxu0 %v1032
        %3389 = vmatpush1.msra.mxu0 %v1031
        %3390 = vmatprep.subr.mxu0 %v1028
        %3391 = vmatpush1.msra.mxu0 %v1027
        %3392 = vmatprep.subr.mxu0 %v1024
        %3393 = vmatpush1.msra.mxu0 %v1023
        %3394 = vmatprep.subr.mxu0 %v1020
        %3395 = vmatpush1.msra.mxu0 %v1019
        %3396 = vmatprep.subr.mxu0 %v1016
        %3397 = vmatpush1.msra.mxu0 %v1015
        %3398 = vmatprep.subr.mxu0 %v1012
        %3399 = vmatpush1.msra.mxu0 %v1011
        %3400 = vmatprep.subr.mxu0 %v1008
        %3401 = vmatpush1.msra.mxu0 %v1007
        %3402 = vmatprep.subr.mxu0 %v1004
        %3403 = vmatpush1.msra.mxu0 %v1003
        %3404 = vmatprep.subr.mxu0 %v1000
        %3405 = vmatpush1.msra.mxu0 %v999
        %3406 = vmatprep.subr.mxu0 %v996
        %3407 = vmatpush1.msra.mxu0 %v995
        %3408 = vmatprep.subr.mxu0 %v992
        %3409 = vmatpush1.msra.mxu0 %v991
        %3410 = vmatprep.subr.mxu0 %v988
        %3411 = vmatpush1.msra.mxu0 %v987
        %3412 = vmatprep.subr.mxu0 %v1112
        %3413 = vmatpush2.msra.mxu0 %v1111
        %3414 = vmatprep.subr.mxu0 %v1108
        %3415 = vmatpush2.msra.mxu0 %v1107
        %3416 = vmatprep.subr.mxu0 %v1104
        %3417 = vmatpush2.msra.mxu0 %v1103
        %3418 = vmatprep.subr.mxu0 %v1100
        %3419 = vmatpush2.msra.mxu0 %v1099
        %3420 = vmatprep.subr.mxu0 %v1096
        %3421 = vmatpush2.msra.mxu0 %v1095
        %3422 = vmatprep.subr.mxu0 %v1092
        %3423 = vmatpush2.msra.mxu0 %v1091
        %3424 = vmatprep.subr.mxu0 %v1088
        %3425 = vmatpush2.msra.mxu0 %v1087
        %3426 = vmatprep.subr.mxu0 %v1084
        %3427 = vmatpush2.msra.mxu0 %v1083
        %3428 = vmatprep.subr.mxu0 %v1080
        %3429 = vmatpush2.msra.mxu0 %v1079
        %3430 = vmatprep.subr.mxu0 %v1076
        %3431 = vmatpush2.msra.mxu0 %v1075
        %3432 = vmatprep.subr.mxu0 %v1072
        %3433 = vmatpush2.msra.mxu0 %v1071
        %3434 = vmatprep.subr.mxu0 %v1068
        %3435 = vmatpush2.msra.mxu0 %v1067
        %3436 = vmatprep.subr.mxu0 %v1064
        %3437 = vmatpush2.msra.mxu0 %v1063
        %3438 = vmatprep.subr.mxu0 %v1060
        %3439 = vmatpush2.msra.mxu0 %v1059
        %3440 = vmatprep.subr.mxu0 %v1056
        %3441 = vmatpush2.msra.mxu0 %v1055
        %3442 = vmatprep.subr.mxu0 %v1052
        %3443 = vmatpush2.msra.mxu0 %v1051
        %3444 = vmatprep.mubr.f32.mxu0 %v350
        %3445 = vmatmul.mubr.f32.gmra.mxu0 %v349
        %v3446 = vpop.f32.mrf.mxu0
        %v3447 = vadd.f32 %v2998, %v3446
        %v3448 = vpop.f32.mrf.mxu0
        %v3449 = vadd.f32 %v3000, %v3448
        %3450 = vmatprep.mubr.f32.mxu0 %v356
        %3451 = vmatmul.mubr.f32.gmra.mxu0 %v355
        %v3452 = vpop.f32.mrf.mxu0
        %v3453 = vadd.f32 %v3004, %v3452
        %v3454 = vpop.f32.mrf.mxu0
        %v3455 = vadd.f32 %v3006, %v3454
        %3456 = vmatprep.mubr.f32.mxu0 %v362
        %3457 = vmatmul.mubr.f32.gmra.mxu0 %v361
        %v3458 = vpop.f32.mrf.mxu0
        %v3459 = vadd.f32 %v3010, %v3458
        %v3460 = vpop.f32.mrf.mxu0
        %v3461 = vadd.f32 %v3012, %v3460
        %3462 = vmatprep.mubr.f32.mxu0 %v368
        %3463 = vmatmul.mubr.f32.gmra.mxu0 %v367
        %v3464 = vpop.f32.mrf.mxu0
        %v3465 = vadd.f32 %v3016, %v3464
        %v3466 = vpop.f32.mrf.mxu0
        %v3467 = vadd.f32 %v3018, %v3466
        %3468 = vmatprep.mubr.f32.mxu0 %v374
        %3469 = vmatmul.mubr.f32.gmra.mxu0 %v373
        %v3470 = vpop.f32.mrf.mxu0
        %v3471 = vadd.f32 %v3022, %v3470
        %v3472 = vpop.f32.mrf.mxu0
        %v3473 = vadd.f32 %v3024, %v3472
        %3474 = vmatprep.mubr.f32.mxu0 %v380
        %3475 = vmatmul.mubr.f32.gmra.mxu0 %v379
        %v3476 = vpop.f32.mrf.mxu0
        %v3477 = vadd.f32 %v3028, %v3476
        %v3478 = vpop.f32.mrf.mxu0
        %v3479 = vadd.f32 %v3030, %v3478
        %3480 = vmatprep.mubr.f32.mxu0 %v386
        %3481 = vmatmul.mubr.f32.gmra.mxu0 %v385
        %v3482 = vpop.f32.mrf.mxu0
        %v3483 = vadd.f32 %v3034, %v3482
        %v3484 = vpop.f32.mrf.mxu0
        %v3485 = vadd.f32 %v3036, %v3484
        %3486 = vmatprep.mubr.f32.mxu0 %v392
        %3487 = vmatmul.mubr.f32.gmra.mxu0 %v391
        %v3488 = vpop.f32.mrf.mxu0
        %v3489 = vadd.f32 %v3040, %v3488
        %v3490 = vpop.f32.mrf.mxu0
        %v3491 = vadd.f32 %v3042, %v3490
        %3492 = vmatprep.mubr.f32.mxu0 %v398
        %3493 = vmatmul.mubr.f32.gmra.mxu0 %v397
        %v3494 = vpop.f32.mrf.mxu0
        %v3495 = vadd.f32 %v3046, %v3494
        %v3496 = vpop.f32.mrf.mxu0
        %v3497 = vadd.f32 %v3048, %v3496
        %3498 = vmatprep.mubr.f32.mxu0 %v404
        %3499 = vmatmul.mubr.f32.gmra.mxu0 %v403
        %v3500 = vpop.f32.mrf.mxu0
        %v3501 = vadd.f32 %v3052, %v3500
        %v3502 = vpop.f32.mrf.mxu0
        %v3503 = vadd.f32 %v3054, %v3502
        %3504 = vmatprep.mubr.f32.mxu0 %v410
        %3505 = vmatmul.mubr.f32.gmra.mxu0 %v409
        %v3506 = vpop.f32.mrf.mxu0
        %v3507 = vadd.f32 %v3058, %v3506
        %v3508 = vpop.f32.mrf.mxu0
        %v3509 = vadd.f32 %v3060, %v3508
        %3510 = vmatprep.mubr.f32.mxu0 %v416
        %3511 = vmatmul.mubr.f32.gmra.mxu0 %v415
        %v3512 = vpop.f32.mrf.mxu0
        %v3513 = vadd.f32 %v3064, %v3512
        %v3514 = vpop.f32.mrf.mxu0
        %v3515 = vadd.f32 %v3066, %v3514
        %3516 = vmatprep.mubr.f32.mxu0 %v422
        %3517 = vmatmul.mubr.f32.gmra.mxu0 %v421
        %v3518 = vpop.f32.mrf.mxu0
        %v3519 = vadd.f32 %v3070, %v3518
        %v3520 = vpop.f32.mrf.mxu0
        %v3521 = vadd.f32 %v3072, %v3520
        %3522 = vmatprep.mubr.f32.mxu0 %v428
        %3523 = vmatmul.mubr.f32.gmra.mxu0 %v427
        %v3524 = vpop.f32.mrf.mxu0
        %v3525 = vadd.f32 %v3076, %v3524
        %v3526 = vpop.f32.mrf.mxu0
        %v3527 = vadd.f32 %v3078, %v3526
        %3528 = vmatprep.mubr.f32.mxu0 %v434
        %3529 = vmatmul.mubr.f32.gmra.mxu0 %v433
        %v3530 = vpop.f32.mrf.mxu0
        %v3531 = vadd.f32 %v3082, %v3530
        %v3532 = vpop.f32.mrf.mxu0
        %v3533 = vadd.f32 %v3084, %v3532
        %3534 = vmatprep.mubr.f32.mxu0 %v440
        %3535 = vmatmul.mubr.f32.gmra.mxu0 %v439
        %v3536 = vpop.f32.mrf.mxu0
        %v3537 = vadd.f32 %v3088, %v3536
        %v3538 = vpop.f32.mrf.mxu0
        %v3539 = vadd.f32 %v3090, %v3538
        %3540 = vmatprep.mubr.f32.mxu0 %v446
        %3541 = vmatmul.mubr.f32.gmra.mxu0 %v445
        %v3542 = vpop.f32.mrf.mxu0
        %v3543 = vadd.f32 %v3094, %v3542
        %v3544 = vpop.f32.mrf.mxu0
        %v3545 = vadd.f32 %v3096, %v3544
        %3546 = vmatprep.mubr.f32.mxu0 %v452
        %3547 = vmatmul.mubr.f32.gmra.mxu0 %v451
        %v3548 = vpop.f32.mrf.mxu0
        %v3549 = vadd.f32 %v3100, %v3548
        %v3550 = vpop.f32.mrf.mxu0
        %v3551 = vadd.f32 %v3102, %v3550
        %3552 = vmatprep.mubr.f32.mxu0 %v458
        %3553 = vmatmul.mubr.f32.gmra.mxu0 %v457
        %v3554 = vpop.f32.mrf.mxu0
        %v3555 = vadd.f32 %v3106, %v3554
        %v3556 = vpop.f32.mrf.mxu0
        %v3557 = vadd.f32 %v3108, %v3556
        %3558 = vmatprep.mubr.f32.mxu0 %v464
        %3559 = vmatmul.mubr.f32.gmra.mxu0 %v463
        %v3560 = vpop.f32.mrf.mxu0
        %v3561 = vadd.f32 %v3112, %v3560
        %v3562 = vpop.f32.mrf.mxu0
        %v3563 = vadd.f32 %v3114, %v3562
        %3564 = vmatprep.mubr.f32.mxu0 %v470
        %3565 = vmatmul.mubr.f32.gmra.mxu0 %v469
        %v3566 = vpop.f32.mrf.mxu0
        %v3567 = vadd.f32 %v3118, %v3566
        %v3568 = vpop.f32.mrf.mxu0
        %v3569 = vadd.f32 %v3120, %v3568
        %3570 = vmatprep.mubr.f32.mxu0 %v476
        %3571 = vmatmul.mubr.f32.gmra.mxu0 %v475
        %v3572 = vpop.f32.mrf.mxu0
        %v3573 = vadd.f32 %v3124, %v3572
        %v3574 = vpop.f32.mrf.mxu0
        %v3575 = vadd.f32 %v3126, %v3574
        %3576 = vmatprep.mubr.f32.mxu0 %v482
        %3577 = vmatmul.mubr.f32.gmra.mxu0 %v481
        %v3578 = vpop.f32.mrf.mxu0
        %v3579 = vadd.f32 %v3130, %v3578
        %v3580 = vpop.f32.mrf.mxu0
        %v3581 = vadd.f32 %v3132, %v3580
        %3582 = vmatprep.mubr.f32.mxu0 %v488
        %3583 = vmatmul.mubr.f32.gmra.mxu0 %v487
        %v3584 = vpop.f32.mrf.mxu0
        %v3585 = vadd.f32 %v3136, %v3584
        %v3586 = vpop.f32.mrf.mxu0
        %v3587 = vadd.f32 %v3138, %v3586
        %3588 = vmatprep.mubr.f32.mxu0 %v494
        %3589 = vmatmul.mubr.f32.gmra.mxu0 %v493
        %v3590 = vpop.f32.mrf.mxu0
        %v3591 = vadd.f32 %v3142, %v3590
        %v3592 = vpop.f32.mrf.mxu0
        %v3593 = vadd.f32 %v3144, %v3592
        %3594 = vmatprep.mubr.f32.mxu0 %v500
        %3595 = vmatmul.mubr.f32.gmra.mxu0 %v499
        %v3596 = vpop.f32.mrf.mxu0
        %v3597 = vadd.f32 %v3148, %v3596
        %v3598 = vpop.f32.mrf.mxu0
        %v3599 = vadd.f32 %v3150, %v3598
        %3600 = vmatprep.mubr.f32.mxu0 %v506
        %3601 = vmatmul.mubr.f32.gmra.mxu0 %v505
        %v3602 = vpop.f32.mrf.mxu0
        %v3603 = vadd.f32 %v3154, %v3602
        %v3604 = vpop.f32.mrf.mxu0
        %v3605 = vadd.f32 %v3156, %v3604
        %3606 = vmatprep.mubr.f32.mxu0 %v512
        %3607 = vmatmul.mubr.f32.gmra.mxu0 %v511
        %v3608 = vpop.f32.mrf.mxu0
        %v3609 = vadd.f32 %v3160, %v3608
        %v3610 = vpop.f32.mrf.mxu0
        %v3611 = vadd.f32 %v3162, %v3610
        %3612 = vmatprep.mubr.f32.mxu0 %v518
        %3613 = vmatmul.mubr.f32.gmra.mxu0 %v517
        %v3614 = vpop.f32.mrf.mxu0
        %v3615 = vadd.f32 %v3166, %v3614
        %v3616 = vpop.f32.mrf.mxu0
        %v3617 = vadd.f32 %v3168, %v3616
        %3618 = vmatprep.mubr.f32.mxu0 %v524
        %3619 = vmatmul.mubr.f32.gmra.mxu0 %v523
        %v3620 = vpop.f32.mrf.mxu0
        %v3621 = vadd.f32 %v3172, %v3620
        %v3622 = vpop.f32.mrf.mxu0
        %v3623 = vadd.f32 %v3174, %v3622
        %3624 = vmatprep.mubr.f32.mxu0 %v530
        %3625 = vmatmul.mubr.f32.gmra.mxu0 %v529
        %v3626 = vpop.f32.mrf.mxu0
        %v3627 = vadd.f32 %v3178, %v3626
        %v3628 = vpop.f32.mrf.mxu0
        %v3629 = vadd.f32 %v3180, %v3628
        %3630 = vmatprep.mubr.f32.mxu0 %v536
        %3631 = vmatmul.mubr.f32.gmra.mxu0 %v535
        %v3632 = vpop.f32.mrf.mxu0
        %v3633 = vadd.f32 %v3184, %v3632
        %v3634 = vpop.f32.mrf.mxu0
        %v3635 = vadd.f32 %v3186, %v3634
        %3636 = vmatprep.mubr.f32.mxu0 %v542
        %3637 = vmatmul.mubr.f32.gmra.mxu0 %v541
        %v3638 = vpop.f32.mrf.mxu0
        %v3639 = vadd.f32 %v3190, %v3638
        %v3640 = vpop.f32.mrf.mxu0
        %v3641 = vadd.f32 %v3192, %v3640
        %3642 = vmatprep.mubr.f32.mxu0 %v548
        %3643 = vmatmul.mubr.f32.gmra.mxu0 %v547
        %v3644 = vpop.f32.mrf.mxu0
        %v3645 = vadd.f32 %v3196, %v3644
        %v3646 = vpop.f32.mrf.mxu0
        %v3647 = vadd.f32 %v3198, %v3646
        %3648 = vmatprep.mubr.f32.mxu0 %v554
        %3649 = vmatmul.mubr.f32.gmra.mxu0 %v553
        %v3650 = vpop.f32.mrf.mxu0
        %v3651 = vadd.f32 %v3202, %v3650
        %v3652 = vpop.f32.mrf.mxu0
        %v3653 = vadd.f32 %v3204, %v3652
        %3654 = vmatprep.mubr.f32.mxu0 %v560
        %3655 = vmatmul.mubr.f32.gmra.mxu0 %v559
        %v3656 = vpop.f32.mrf.mxu0
        %v3657 = vadd.f32 %v3208, %v3656
        %v3658 = vpop.f32.mrf.mxu0
        %v3659 = vadd.f32 %v3210, %v3658
        %3660 = vmatprep.mubr.f32.mxu0 %v566
        %3661 = vmatmul.mubr.f32.gmra.mxu0 %v565
        %v3662 = vpop.f32.mrf.mxu0
        %v3663 = vadd.f32 %v3214, %v3662
        %v3664 = vpop.f32.mrf.mxu0
        %v3665 = vadd.f32 %v3216, %v3664
        %3666 = vmatprep.mubr.f32.mxu0 %v572
        %3667 = vmatmul.mubr.f32.gmra.mxu0 %v571
        %v3668 = vpop.f32.mrf.mxu0
        %v3669 = vadd.f32 %v3220, %v3668
        %v3670 = vpop.f32.mrf.mxu0
        %v3671 = vadd.f32 %v3222, %v3670
        %3672 = vmatprep.mubr.f32.mxu0 %v578
        %3673 = vmatmul.mubr.f32.gmra.mxu0 %v577
        %v3674 = vpop.f32.mrf.mxu0
        %v3675 = vadd.f32 %v3226, %v3674
        %v3676 = vpop.f32.mrf.mxu0
        %v3677 = vadd.f32 %v3228, %v3676
        %3678 = vmatprep.mubr.f32.mxu0 %v584
        %3679 = vmatmul.mubr.f32.gmra.mxu0 %v583
        %v3680 = vpop.f32.mrf.mxu0
        %v3681 = vadd.f32 %v3232, %v3680
        %v3682 = vpop.f32.mrf.mxu0
        %v3683 = vadd.f32 %v3234, %v3682
        %3684 = vmatprep.mubr.f32.mxu0 %v590
        %3685 = vmatmul.mubr.f32.gmra.mxu0 %v589
        %v3686 = vpop.f32.mrf.mxu0
        %v3687 = vadd.f32 %v3238, %v3686
        %v3688 = vpop.f32.mrf.mxu0
        %v3689 = vadd.f32 %v3240, %v3688
        %3690 = vmatprep.mubr.f32.mxu0 %v596
        %3691 = vmatmul.mubr.f32.gmra.mxu0 %v595
        %v3692 = vpop.f32.mrf.mxu0
        %v3693 = vadd.f32 %v3244, %v3692
        %v3694 = vpop.f32.mrf.mxu0
        %v3695 = vadd.f32 %v3246, %v3694
        %3696 = vmatprep.mubr.f32.mxu0 %v602
        %3697 = vmatmul.mubr.f32.gmra.mxu0 %v601
        %v3698 = vpop.f32.mrf.mxu0
        %v3699 = vadd.f32 %v3250, %v3698
        %v3700 = vpop.f32.mrf.mxu0
        %v3701 = vadd.f32 %v3252, %v3700
        %3702 = vmatprep.mubr.f32.mxu0 %v608
        %3703 = vmatmul.mubr.f32.gmra.mxu0 %v607
        %v3704 = vpop.f32.mrf.mxu0
        %v3705 = vadd.f32 %v3256, %v3704
        %v3706 = vpop.f32.mrf.mxu0
        %v3707 = vadd.f32 %v3258, %v3706
        %3708 = vmatprep.mubr.f32.mxu0 %v614
        %3709 = vmatmul.mubr.f32.gmra.mxu0 %v613
        %v3710 = vpop.f32.mrf.mxu0
        %v3711 = vadd.f32 %v3262, %v3710
        %v3712 = vpop.f32.mrf.mxu0
        %v3713 = vadd.f32 %v3264, %v3712
        %3714 = vmatprep.mubr.f32.mxu0 %v620
        %3715 = vmatmul.mubr.f32.gmra.mxu0 %v619
        %v3716 = vpop.f32.mrf.mxu0
        %v3717 = vadd.f32 %v3268, %v3716
        %v3718 = vpop.f32.mrf.mxu0
        %v3719 = vadd.f32 %v3270, %v3718
        %3720 = vmatprep.mubr.f32.mxu0 %v626
        %3721 = vmatmul.mubr.f32.gmra.mxu0 %v625
        %v3722 = vpop.f32.mrf.mxu0
        %v3723 = vadd.f32 %v3274, %v3722
        %v3724 = vpop.f32.mrf.mxu0
        %v3725 = vadd.f32 %v3276, %v3724
        %3726 = vmatprep.mubr.f32.mxu0 %v632
        %3727 = vmatmul.mubr.f32.gmra.mxu0 %v631
        %v3728 = vpop.f32.mrf.mxu0
        %v3729 = vadd.f32 %v3280, %v3728
        %v3730 = vpop.f32.mrf.mxu0
        %v3731 = vadd.f32 %v3282, %v3730
        %3732 = vmatprep.mubr.f32.mxu0 %v638
        %3733 = vmatmul.mubr.f32.gmra.mxu0 %v637
        %v3734 = vpop.f32.mrf.mxu0
        %v3735 = vadd.f32 %v3286, %v3734
        %v3736 = vpop.f32.mrf.mxu0
        %v3737 = vadd.f32 %v3288, %v3736
        %3738 = vmatprep.mubr.f32.mxu0 %v644
        %3739 = vmatmul.mubr.f32.gmra.mxu0 %v643
        %v3740 = vpop.f32.mrf.mxu0
        %v3741 = vadd.f32 %v3292, %v3740
        %v3742 = vpop.f32.mrf.mxu0
        %v3743 = vadd.f32 %v3294, %v3742
        %3744 = vmatprep.mubr.f32.mxu0 %v650
        %3745 = vmatmul.mubr.f32.gmra.mxu0 %v649
        %v3746 = vpop.f32.mrf.mxu0
        %v3747 = vadd.f32 %v3298, %v3746
        %v3748 = vpop.f32.mrf.mxu0
        %v3749 = vadd.f32 %v3300, %v3748
        %3750 = vmatprep.mubr.f32.mxu0 %v656
        %3751 = vmatmul.mubr.f32.gmra.mxu0 %v655
        %v3752 = vpop.f32.mrf.mxu0
        %v3753 = vadd.f32 %v3304, %v3752
        %v3754 = vpop.f32.mrf.mxu0
        %v3755 = vadd.f32 %v3306, %v3754
        %3756 = vmatprep.mubr.f32.mxu0 %v662
        %3757 = vmatmul.mubr.f32.gmra.mxu0 %v661
        %v3758 = vpop.f32.mrf.mxu0
        %v3759 = vadd.f32 %v3310, %v3758
        %v3760 = vpop.f32.mrf.mxu0
        %v3761 = vadd.f32 %v3312, %v3760
        %3762 = vmatprep.mubr.f32.mxu0 %v668
        %3763 = vmatmul.mubr.f32.gmra.mxu0 %v667
        %v3764 = vpop.f32.mrf.mxu0
        %v3765 = vadd.f32 %v3316, %v3764
        %v3766 = vpop.f32.mrf.mxu0
        %v3767 = vadd.f32 %v3318, %v3766
        %3768 = vmatprep.mubr.f32.mxu0 %v674
        %3769 = vmatmul.mubr.f32.gmra.mxu0 %v673
        %v3770 = vpop.f32.mrf.mxu0
        %v3771 = vadd.f32 %v3322, %v3770
        %v3772 = vpop.f32.mrf.mxu0
        %v3773 = vadd.f32 %v3324, %v3772
        %3774 = vmatprep.mubr.f32.mxu0 %v680
        %3775 = vmatmul.mubr.f32.gmra.mxu0 %v679
        %v3776 = vpop.f32.mrf.mxu0
        %v3777 = vadd.f32 %v3328, %v3776
        %v3778 = vpop.f32.mrf.mxu0
        %v3779 = vadd.f32 %v3330, %v3778
        %3780 = vmatprep.mubr.f32.mxu0 %v686
        %3781 = vmatmul.mubr.f32.gmra.mxu0 %v685
        %v3782 = vpop.f32.mrf.mxu0
        %v3783 = vadd.f32 %v3334, %v3782
        %v3784 = vpop.f32.mrf.mxu0
        %v3785 = vadd.f32 %v3336, %v3784
        %3786 = vmatprep.mubr.f32.mxu0 %v692
        %3787 = vmatmul.mubr.f32.gmra.mxu0 %v691
        %v3788 = vpop.f32.mrf.mxu0
        %v3789 = vadd.f32 %v3340, %v3788
        %v3790 = vpop.f32.mrf.mxu0
        %v3791 = vadd.f32 %v3342, %v3790
        %3792 = vmatprep.mubr.f32.mxu0 %v698
        %3793 = vmatmul.mubr.f32.gmra.mxu0 %v697
        %v3794 = vpop.f32.mrf.mxu0
        %v3795 = vadd.f32 %v3346, %v3794
        %v3796 = vpop.f32.mrf.mxu0
        %v3797 = vadd.f32 %v3348, %v3796
        %3798 = vmatprep.mubr.f32.mxu0 %v704
        %3799 = vmatmul.mubr.f32.gmra.mxu0 %v703
        %v3800 = vpop.f32.mrf.mxu0
        %v3801 = vadd.f32 %v3352, %v3800
        %v3802 = vpop.f32.mrf.mxu0
        %v3803 = vadd.f32 %v3354, %v3802
        %3804 = vmatprep.mubr.f32.mxu0 %v710
        %3805 = vmatmul.mubr.f32.gmra.mxu0 %v709
        %v3806 = vpop.f32.mrf.mxu0
        %v3807 = vadd.f32 %v3358, %v3806
        %v3808 = vpop.f32.mrf.mxu0
        %v3809 = vadd.f32 %v3360, %v3808
        %3810 = vmatprep.mubr.f32.mxu0 %v716
        %3811 = vmatmul.mubr.f32.gmra.mxu0 %v715
        %v3812 = vpop.f32.mrf.mxu0
        %v3813 = vadd.f32 %v3364, %v3812
        %v3814 = vpop.f32.mrf.mxu0
        %v3815 = vadd.f32 %v3366, %v3814
        %3816 = vmatprep.mubr.f32.mxu0 %v722
        %3817 = vmatmul.mubr.f32.gmra.mxu0 %v721
        %v3818 = vpop.f32.mrf.mxu0
        %v3819 = vadd.f32 %v3370, %v3818
        %v3820 = vpop.f32.mrf.mxu0
        %v3821 = vadd.f32 %v3372, %v3820
        %3822 = vmatprep.mubr.f32.mxu0 %v728
        %3823 = vmatmul.mubr.f32.gmra.mxu0 %v727
        %v3824 = vpop.f32.mrf.mxu0
        %v3825 = vadd.f32 %v3376, %v3824
        %v3826 = vpop.f32.mrf.mxu0
        %v3827 = vadd.f32 %v3378, %v3826
        %3828 = vdwg.mxu0
        %v3829 = vtanh.pop %v2100
        %v3830 = vtanh.pop %v2102
        %v3831 = vtanh.pop %v3447
        %v3832 = vtanh.pop %v3449
        %v3833 = vtanh.pop %v2106
        %v3834 = vtanh.pop %v2108
        %v3835 = vtanh.pop %v3453
        %v3836 = vtanh.pop %v3455
        %v3837 = vtanh.pop %v2112
        %v3838 = vtanh.pop %v2114
        %v3839 = vtanh.pop %v3459
        %v3840 = vtanh.pop %v3461
        %v3841 = vtanh.pop %v2118
        %v3842 = vtanh.pop %v2120
        %v3843 = vtanh.pop %v3465
        %v3844 = vtanh.pop %v3467
        %v3845 = vtanh.pop %v2124
        %v3846 = vtanh.pop %v2126
        %v3847 = vtanh.pop %v3471
        %v3848 = vtanh.pop %v3473
        %v3849 = vtanh.pop %v2130
        %v3850 = vtanh.pop %v2132
        %v3851 = vtanh.pop %v3477
        %v3852 = vtanh.pop %v3479
        %v3853 = vtanh.pop %v2136
        %v3854 = vtanh.pop %v2138
        %v3855 = vtanh.pop %v3483
        %v3856 = vtanh.pop %v3485
        %v3857 = vtanh.pop %v2142
        %v3858 = vtanh.pop %v2144
        %v3859 = vtanh.pop %v3489
        %v3860 = vtanh.pop %v3491
        %v3861 = vtanh.pop %v2148
        %v3862 = vtanh.pop %v2150
        %v3863 = vtanh.pop %v3495
        %v3864 = vtanh.pop %v3497
        %v3865 = vtanh.pop %v2154
        %v3866 = vtanh.pop %v2156
        %v3867 = vtanh.pop %v3501
        %v3868 = vtanh.pop %v3503
        %v3869 = vtanh.pop %v2160
        %v3870 = vtanh.pop %v2162
        %v3871 = vtanh.pop %v3507
        %v3872 = vtanh.pop %v3509
        %v3873 = vtanh.pop %v2166
        %v3874 = vtanh.pop %v2168
        %v3875 = vtanh.pop %v3513
        %v3876 = vtanh.pop %v3515
        %v3877 = vtanh.pop %v2172
        %v3878 = vtanh.pop %v2174
        %v3879 = vtanh.pop %v3519
        %v3880 = vtanh.pop %v3521
        %v3881 = vtanh.pop %v2178
        %v3882 = vtanh.pop %v2180
        %v3883 = vtanh.pop %v3525
        %v3884 = vtanh.pop %v3527
        %v3885 = vtanh.pop %v2184
        %v3886 = vtanh.pop %v2186
        %v3887 = vtanh.pop %v3531
        %v3888 = vtanh.pop %v3533
        %v3889 = vtanh.pop %v2190
        %v3890 = vtanh.pop %v2192
        %v3891 = vtanh.pop %v3537
        %v3892 = vtanh.pop %v3539
        %v3893 = vtanh.pop %v2196
        %v3894 = vtanh.pop %v2198
        %v3895 = vtanh.pop %v3543
        %v3896 = vtanh.pop %v3545
        %v3897 = vtanh.pop %v2202
        %v3898 = vtanh.pop %v2204
        %v3899 = vtanh.pop %v3549
        %v3900 = vtanh.pop %v3551
        %v3901 = vtanh.pop %v2208
        %v3902 = vtanh.pop %v2210
        %v3903 = vtanh.pop %v3555
        %v3904 = vtanh.pop %v3557
        %v3905 = vtanh.pop %v2214
        %v3906 = vtanh.pop %v2216
        %v3907 = vtanh.pop %v3561
        %v3908 = vtanh.pop %v3563
        %v3909 = vtanh.pop %v2220
        %v3910 = vtanh.pop %v2222
        %v3911 = vtanh.pop %v3567
        %v3912 = vtanh.pop %v3569
        %v3913 = vtanh.pop %v2226
        %v3914 = vtanh.pop %v2228
        %v3915 = vtanh.pop %v3573
        %v3916 = vtanh.pop %v3575
        %v3917 = vtanh.pop %v2232
        %v3918 = vtanh.pop %v2234
        %v3919 = vtanh.pop %v3579
        %v3920 = vtanh.pop %v3581
        %v3921 = vtanh.pop %v2238
        %v3922 = vtanh.pop %v2240
        %v3923 = vtanh.pop %v3585
        %v3924 = vtanh.pop %v3587
        %v3925 = vtanh.pop %v2244
        %v3926 = vtanh.pop %v2246
        %v3927 = vtanh.pop %v3591
        %v3928 = vtanh.pop %v3593
        %v3929 = vtanh.pop %v2250
        %v3930 = vtanh.pop %v2252
        %v3931 = vtanh.pop %v3597
        %v3932 = vtanh.pop %v3599
        %v3933 = vtanh.pop %v2256
        %v3934 = vtanh.pop %v2258
        %v3935 = vtanh.pop %v3603
        %v3936 = vtanh.pop %v3605
        %v3937 = vtanh.pop %v2262
        %v3938 = vtanh.pop %v2264
        %v3939 = vtanh.pop %v3609
        %v3940 = vtanh.pop %v3611
        %v3941 = vtanh.pop %v2268
        %v3942 = vtanh.pop %v2270
        %v3943 = vtanh.pop %v3615
        %v3944 = vtanh.pop %v3617
        %v3945 = vtanh.pop %v2274
        %v3946 = vtanh.pop %v2276
        %v3947 = vtanh.pop %v3621
        %v3948 = vtanh.pop %v3623
        %v3949 = vtanh.pop %v2280
        %v3950 = vtanh.pop %v2282
        %v3951 = vtanh.pop %v3627
        %v3952 = vtanh.pop %v3629
        %v3953 = vtanh.pop %v2286
        %v3954 = vtanh.pop %v2288
        %v3955 = vtanh.pop %v3633
        %v3956 = vtanh.pop %v3635
        %v3957 = vtanh.pop %v2292
        %v3958 = vtanh.pop %v2294
        %v3959 = vtanh.pop %v3639
        %v3960 = vtanh.pop %v3641
        %v3961 = vtanh.pop %v2298
        %v3962 = vtanh.pop %v2300
        %v3963 = vtanh.pop %v3645
        %v3964 = vtanh.pop %v3647
        %v3965 = vtanh.pop %v2304
        %v3966 = vtanh.pop %v2306
        %v3967 = vtanh.pop %v3651
        %v3968 = vtanh.pop %v3653
        %v3969 = vtanh.pop %v2310
        %v3970 = vtanh.pop %v2312
        %v3971 = vtanh.pop %v3657
        %v3972 = vtanh.pop %v3659
        %v3973 = vtanh.pop %v2316
        %v3974 = vtanh.pop %v2318
        %v3975 = vtanh.pop %v3663
        %v3976 = vtanh.pop %v3665
        %v3977 = vtanh.pop %v2322
        %v3978 = vtanh.pop %v2324
        %v3979 = vtanh.pop %v3669
        %v3980 = vtanh.pop %v3671
        %v3981 = vtanh.pop %v2328
        %v3982 = vtanh.pop %v2330
        %v3983 = vtanh.pop %v3675
        %v3984 = vtanh.pop %v3677
        %v3985 = vtanh.pop %v2334
        %v3986 = vtanh.pop %v2336
        %v3987 = vtanh.pop %v3681
        %v3988 = vtanh.pop %v3683
        %v3989 = vtanh.pop %v2340
        %v3990 = vtanh.pop %v2342
        %v3991 = vtanh.pop %v3687
        %v3992 = vtanh.pop %v3689
        %v3993 = vtanh.pop %v2346
        %v3994 = vtanh.pop %v2348
        %v3995 = vtanh.pop %v3693
        %v3996 = vtanh.pop %v3695
        %v3997 = vtanh.pop %v2352
        %v3998 = vtanh.pop %v2354
        %v3999 = vtanh.pop %v3699
        %v4000 = vtanh.pop %v3701
        %v4001 = vtanh.pop %v2358
        %v4002 = vtanh.pop %v2360
        %v4003 = vtanh.pop %v3705
        %v4004 = vtanh.pop %v3707
        %v4005 = vtanh.pop %v2364
        %v4006 = vtanh.pop %v2366
        %v4007 = vtanh.pop %v3711
        %v4008 = vtanh.pop %v3713
        %v4009 = vtanh.pop %v2370
        %v4010 = vtanh.pop %v2372
        %v4011 = vtanh.pop %v3717
        %v4012 = vtanh.pop %v3719
        %v4013 = vtanh.pop %v2376
        %v4014 = vtanh.pop %v2378
        %v4015 = vtanh.pop %v3723
        %v4016 = vtanh.pop %v3725
        %v4017 = vtanh.pop %v2382
        %v4018 = vtanh.pop %v2384
        %v4019 = vtanh.pop %v3729
        %v4020 = vtanh.pop %v3731
        %v4021 = vtanh.pop %v2388
        %v4022 = vtanh.pop %v2390
        %v4023 = vtanh.pop %v3735
        %v4024 = vtanh.pop %v3737
        %v4025 = vtanh.pop %v2394
        %v4026 = vtanh.pop %v2396
        %v4027 = vtanh.pop %v3741
        %v4028 = vtanh.pop %v3743
        %v4029 = vtanh.pop %v2400
        %v4030 = vtanh.pop %v2402
        %v4031 = vtanh.pop %v3747
        %v4032 = vtanh.pop %v3749
        %v4033 = vtanh.pop %v2406
        %v4034 = vtanh.pop %v2408
        %v4035 = vtanh.pop %v3753
        %v4036 = vtanh.pop %v3755
        %v4037 = vtanh.pop %v2412
        %v4038 = vtanh.pop %v2414
        %v4039 = vtanh.pop %v3759
        %v4040 = vtanh.pop %v3761
        %v4041 = vtanh.pop %v2418
        %v4042 = vtanh.pop %v2420
        %v4043 = vtanh.pop %v3765
        %v4044 = vtanh.pop %v3767
        %v4045 = vtanh.pop %v2424
        %v4046 = vtanh.pop %v2426
        %v4047 = vtanh.pop %v3771
        %v4048 = vtanh.pop %v3773
        %v4049 = vtanh.pop %v2430
        %v4050 = vtanh.pop %v2432
        %v4051 = vtanh.pop %v3777
        %v4052 = vtanh.pop %v3779
        %v4053 = vtanh.pop %v2436
        %v4054 = vtanh.pop %v2438
        %v4055 = vtanh.pop %v3783
        %v4056 = vtanh.pop %v3785
        %v4057 = vtanh.pop %v2442
        %v4058 = vtanh.pop %v2444
        %v4059 = vtanh.pop %v3789
        %v4060 = vtanh.pop %v3791
        %v4061 = vtanh.pop %v2448
        %v4062 = vtanh.pop %v2450
        %v4063 = vtanh.pop %v3795
        %v4064 = vtanh.pop %v3797
        %v4065 = vtanh.pop %v2454
        %v4066 = vtanh.pop %v2456
        %v4067 = vtanh.pop %v3801
        %v4068 = vtanh.pop %v3803
        %v4069 = vtanh.pop %v2460
        %v4070 = vtanh.pop %v2462
        %v4071 = vtanh.pop %v3807
        %v4072 = vtanh.pop %v3809
        %v4073 = vtanh.pop %v2466
        %v4074 = vtanh.pop %v2468
        %v4075 = vtanh.pop %v3813
        %v4076 = vtanh.pop %v3815
        %v4077 = vtanh.pop %v2472
        %v4078 = vtanh.pop %v2474
        %v4079 = vtanh.pop %v3819
        %v4080 = vtanh.pop %v3821
        %v4081 = vtanh.pop %v2478
        %v4082 = vtanh.pop %v2480
        %v4083 = vtanh.pop %v3825
        %v4084 = vtanh.pop %v3827
        %v4085 = vld [vmem:[#allocation12] sm:$0xf]
        %v4086 = vld [vmem:[#allocation12 + $0x4] sm:$0xf]
        %v4087 = vld [vmem:[#allocation12 + $0x8] sm:$0xf]
        %v4088 = vld [vmem:[#allocation12 + $0xc] sm:$0xf]
        %s4089 = sld [smem:[#allocation5]]
        %v4090 = vstv %s4089
        %v4092 = vlaneseq
        %v4093 = vshrl.u32 %v4092, 7
        %v4094 = vsub.s32 0, %v4093
        %v4095 = vrot.slane %v4085, %v4094
        %v4096 = vlaneseq
        %v4097 = vshrl.u32 %v4096, 7
        %v4098 = vsub.s32 1, %v4097
        %v4099 = vrot.slane %v4085, %v4098
        %v4100 = vlaneseq
        %v4101 = vshrl.u32 %v4100, 7
        %v4102 = vsub.s32 2, %v4101
        %v4103 = vrot.slane %v4085, %v4102
        %v4104 = vlaneseq
        %v4105 = vshrl.u32 %v4104, 7
        %v4106 = vsub.s32 3, %v4105
        %v4107 = vrot.slane %v4085, %v4106
        %4112 = vmatprep.subr.mxu0 %v3890
        %4113 = vmatpush1.xpose.msra.mxu0 %v3889
        %4114 = vmatprep.subr.mxu0 %v3886
        %4115 = vmatpush1.xpose.msra.mxu0 %v3885
        %4116 = vmatprep.subr.mxu0 %v3882
        %4117 = vmatpush1.xpose.msra.mxu0 %v3881
        %4118 = vmatprep.subr.mxu0 %v3878
        %4119 = vmatpush1.xpose.msra.mxu0 %v3877
        %4120 = vmatprep.subr.mxu0 %v3874
        %4121 = vmatpush1.xpose.msra.mxu0 %v3873
        %4122 = vmatprep.subr.mxu0 %v3870
        %4123 = vmatpush1.xpose.msra.mxu0 %v3869
        %4124 = vmatprep.subr.mxu0 %v3866
        %4125 = vmatpush1.xpose.msra.mxu0 %v3865
        %4126 = vmatprep.subr.mxu0 %v3862
        %4127 = vmatpush1.xpose.msra.mxu0 %v3861
        %4128 = vmatprep.subr.mxu0 %v3858
        %4129 = vmatpush1.xpose.msra.mxu0 %v3857
        %4130 = vmatprep.subr.mxu0 %v3854
        %4131 = vmatpush1.xpose.msra.mxu0 %v3853
        %4132 = vmatprep.subr.mxu0 %v3850
        %4133 = vmatpush1.xpose.msra.mxu0 %v3849
        %4134 = vmatprep.subr.mxu0 %v3846
        %4135 = vmatpush1.xpose.msra.mxu0 %v3845
        %4136 = vmatprep.subr.mxu0 %v3842
        %4137 = vmatpush1.xpose.msra.mxu0 %v3841
        %4138 = vmatprep.subr.mxu0 %v3838
        %4139 = vmatpush1.xpose.msra.mxu0 %v3837
        %4140 = vmatprep.subr.mxu0 %v3834
        %4141 = vmatpush1.xpose.msra.mxu0 %v3833
        %4142 = vmatprep.subr.mxu0 %v3830
        %4143 = vmatpush1.xpose.msra.mxu0 %v3829
        %4144 = vmatprep.subr.mxu0 0.0
        %4145 = vmatpush2.xpose.msra.mxu0 0.0
        %4146 = vmatprep.subr.mxu0 0.0
        %4147 = vmatpush2.xpose.msra.mxu0 0.0
        %4148 = vmatprep.subr.mxu0 0.0
        %4149 = vmatpush2.xpose.msra.mxu0 0.0
        %4150 = vmatprep.subr.mxu0 0.0
        %4151 = vmatpush2.xpose.msra.mxu0 0.0
        %4152 = vmatprep.subr.mxu0 0.0
        %4153 = vmatpush2.xpose.msra.mxu0 0.0
        %4154 = vmatprep.subr.mxu0 0.0
        %4155 = vmatpush2.xpose.msra.mxu0 0.0
        %4156 = vmatprep.subr.mxu0 0.0
        %4157 = vmatpush2.xpose.msra.mxu0 0.0
        %4158 = vmatprep.subr.mxu0 0.0
        %4159 = vmatpush2.xpose.msra.mxu0 0.0
        %4160 = vmatprep.subr.mxu0 0.0
        %4161 = vmatpush2.xpose.msra.mxu0 0.0
        %4162 = vmatprep.subr.mxu0 0.0
        %4163 = vmatpush2.xpose.msra.mxu0 0.0
        %4164 = vmatprep.subr.mxu0 0.0
        %4165 = vmatpush2.xpose.msra.mxu0 0.0
        %4166 = vmatprep.subr.mxu0 0.0
        %4167 = vmatpush2.xpose.msra.mxu0 0.0
        %4168 = vmatprep.subr.mxu0 0.0
        %4169 = vmatpush2.xpose.msra.mxu0 0.0
        %4170 = vmatprep.subr.mxu0 0.0
        %4171 = vmatpush2.xpose.msra.mxu0 0.0
        %4172 = vmatprep.subr.mxu0 0.0
        %4173 = vmatpush2.xpose.msra.mxu0 0.0
        %4174 = vmatprep.subr.mxu0 0.0
        %4175 = vmatpush2.xpose.msra.mxu0 0.0
        %4176 = vmatprep.mubr.f32.mxu0 %v4099
        %4177 = vmatmul.mubr.f32.gmra.mxu0 %v4095
        %v4178 = vpop.f32.mrf.mxu0
        %v4179 = vadd.f32 %v4090, %v4178
        %v4180 = vpop.f32.mrf.mxu0
        %4181 = vdwg.mxu0
        %4182 = vmatprep.subr.mxu0 %v3892
        %4183 = vmatpush1.xpose.msra.mxu0 %v3891
        %4184 = vmatprep.subr.mxu0 %v3888
        %4185 = vmatpush1.xpose.msra.mxu0 %v3887
        %4186 = vmatprep.subr.mxu0 %v3884
        %4187 = vmatpush1.xpose.msra.mxu0 %v3883
        %4188 = vmatprep.subr.mxu0 %v3880
        %4189 = vmatpush1.xpose.msra.mxu0 %v3879
        %4190 = vmatprep.subr.mxu0 %v3876
        %4191 = vmatpush1.xpose.msra.mxu0 %v3875
        %4192 = vmatprep.subr.mxu0 %v3872
        %4193 = vmatpush1.xpose.msra.mxu0 %v3871
        %4194 = vmatprep.subr.mxu0 %v3868
        %4195 = vmatpush1.xpose.msra.mxu0 %v3867
        %4196 = vmatprep.subr.mxu0 %v3864
        %4197 = vmatpush1.xpose.msra.mxu0 %v3863
        %4198 = vmatprep.subr.mxu0 %v3860
        %4199 = vmatpush1.xpose.msra.mxu0 %v3859
        %4200 = vmatprep.subr.mxu0 %v3856
        %4201 = vmatpush1.xpose.msra.mxu0 %v3855
        %4202 = vmatprep.subr.mxu0 %v3852
        %4203 = vmatpush1.xpose.msra.mxu0 %v3851
        %4204 = vmatprep.subr.mxu0 %v3848
        %4205 = vmatpush1.xpose.msra.mxu0 %v3847
        %4206 = vmatprep.subr.mxu0 %v3844
        %4207 = vmatpush1.xpose.msra.mxu0 %v3843
        %4208 = vmatprep.subr.mxu0 %v3840
        %4209 = vmatpush1.xpose.msra.mxu0 %v3839
        %4210 = vmatprep.subr.mxu0 %v3836
        %4211 = vmatpush1.xpose.msra.mxu0 %v3835
        %4212 = vmatprep.subr.mxu0 %v3832
        %4213 = vmatpush1.xpose.msra.mxu0 %v3831
        %4214 = vmatprep.subr.mxu0 0.0
        %4215 = vmatpush2.xpose.msra.mxu0 0.0
        %4216 = vmatprep.subr.mxu0 0.0
        %4217 = vmatpush2.xpose.msra.mxu0 0.0
        %4218 = vmatprep.subr.mxu0 0.0
        %4219 = vmatpush2.xpose.msra.mxu0 0.0
        %4220 = vmatprep.subr.mxu0 0.0
        %4221 = vmatpush2.xpose.msra.mxu0 0.0
        %4222 = vmatprep.subr.mxu0 0.0
        %4223 = vmatpush2.xpose.msra.mxu0 0.0
        %4224 = vmatprep.subr.mxu0 0.0
        %4225 = vmatpush2.xpose.msra.mxu0 0.0
        %4226 = vmatprep.subr.mxu0 0.0
        %4227 = vmatpush2.xpose.msra.mxu0 0.0
        %4228 = vmatprep.subr.mxu0 0.0
        %4229 = vmatpush2.xpose.msra.mxu0 0.0
        %4230 = vmatprep.subr.mxu0 0.0
        %4231 = vmatpush2.xpose.msra.mxu0 0.0
        %4232 = vmatprep.subr.mxu0 0.0
        %4233 = vmatpush2.xpose.msra.mxu0 0.0
        %4234 = vmatprep.subr.mxu0 0.0
        %4235 = vmatpush2.xpose.msra.mxu0 0.0
        %4236 = vmatprep.subr.mxu0 0.0
        %4237 = vmatpush2.xpose.msra.mxu0 0.0
        %4238 = vmatprep.subr.mxu0 0.0
        %4239 = vmatpush2.xpose.msra.mxu0 0.0
        %4240 = vmatprep.subr.mxu0 0.0
        %4241 = vmatpush2.xpose.msra.mxu0 0.0
        %4242 = vmatprep.subr.mxu0 0.0
        %4243 = vmatpush2.xpose.msra.mxu0 0.0
        %4244 = vmatprep.subr.mxu0 0.0
        %4245 = vmatpush2.xpose.msra.mxu0 0.0
        %4246 = vmatprep.mubr.f32.mxu0 %v4107
        %4247 = vmatmul.mubr.f32.gmra.mxu0 %v4103
        %v4248 = vpop.f32.mrf.mxu0
        %v4249 = vadd.f32 %v4179, %v4248
        %v4250 = vpop.f32.mrf.mxu0
        %4251 = vdwg.mxu0
        %v4253 = vlaneseq
        %v4254 = vshrl.u32 %v4253, 7
        %v4255 = vsub.s32 0, %v4254
        %v4256 = vrot.slane %v4086, %v4255
        %v4257 = vlaneseq
        %v4258 = vshrl.u32 %v4257, 7
        %v4259 = vsub.s32 1, %v4258
        %v4260 = vrot.slane %v4086, %v4259
        %v4261 = vlaneseq
        %v4262 = vshrl.u32 %v4261, 7
        %v4263 = vsub.s32 2, %v4262
        %v4264 = vrot.slane %v4086, %v4263
        %v4265 = vlaneseq
        %v4266 = vshrl.u32 %v4265, 7
        %v4267 = vsub.s32 3, %v4266
        %v4268 = vrot.slane %v4086, %v4267
        %4273 = vmatprep.subr.mxu0 %v3954
        %4274 = vmatpush1.xpose.msra.mxu0 %v3953
        %4275 = vmatprep.subr.mxu0 %v3950
        %4276 = vmatpush1.xpose.msra.mxu0 %v3949
        %4277 = vmatprep.subr.mxu0 %v3946
        %4278 = vmatpush1.xpose.msra.mxu0 %v3945
        %4279 = vmatprep.subr.mxu0 %v3942
        %4280 = vmatpush1.xpose.msra.mxu0 %v3941
        %4281 = vmatprep.subr.mxu0 %v3938
        %4282 = vmatpush1.xpose.msra.mxu0 %v3937
        %4283 = vmatprep.subr.mxu0 %v3934
        %4284 = vmatpush1.xpose.msra.mxu0 %v3933
        %4285 = vmatprep.subr.mxu0 %v3930
        %4286 = vmatpush1.xpose.msra.mxu0 %v3929
        %4287 = vmatprep.subr.mxu0 %v3926
        %4288 = vmatpush1.xpose.msra.mxu0 %v3925
        %4289 = vmatprep.subr.mxu0 %v3922
        %4290 = vmatpush1.xpose.msra.mxu0 %v3921
        %4291 = vmatprep.subr.mxu0 %v3918
        %4292 = vmatpush1.xpose.msra.mxu0 %v3917
        %4293 = vmatprep.subr.mxu0 %v3914
        %4294 = vmatpush1.xpose.msra.mxu0 %v3913
        %4295 = vmatprep.subr.mxu0 %v3910
        %4296 = vmatpush1.xpose.msra.mxu0 %v3909
        %4297 = vmatprep.subr.mxu0 %v3906
        %4298 = vmatpush1.xpose.msra.mxu0 %v3905
        %4299 = vmatprep.subr.mxu0 %v3902
        %4300 = vmatpush1.xpose.msra.mxu0 %v3901
        %4301 = vmatprep.subr.mxu0 %v3898
        %4302 = vmatpush1.xpose.msra.mxu0 %v3897
        %4303 = vmatprep.subr.mxu0 %v3894
        %4304 = vmatpush1.xpose.msra.mxu0 %v3893
        %4305 = vmatprep.subr.mxu0 0.0
        %4306 = vmatpush2.xpose.msra.mxu0 0.0
        %4307 = vmatprep.subr.mxu0 0.0
        %4308 = vmatpush2.xpose.msra.mxu0 0.0
        %4309 = vmatprep.subr.mxu0 0.0
        %4310 = vmatpush2.xpose.msra.mxu0 0.0
        %4311 = vmatprep.subr.mxu0 0.0
        %4312 = vmatpush2.xpose.msra.mxu0 0.0
        %4313 = vmatprep.subr.mxu0 0.0
        %4314 = vmatpush2.xpose.msra.mxu0 0.0
        %4315 = vmatprep.subr.mxu0 0.0
        %4316 = vmatpush2.xpose.msra.mxu0 0.0
        %4317 = vmatprep.subr.mxu0 0.0
        %4318 = vmatpush2.xpose.msra.mxu0 0.0
        %4319 = vmatprep.subr.mxu0 0.0
        %4320 = vmatpush2.xpose.msra.mxu0 0.0
        %4321 = vmatprep.subr.mxu0 0.0
        %4322 = vmatpush2.xpose.msra.mxu0 0.0
        %4323 = vmatprep.subr.mxu0 0.0
        %4324 = vmatpush2.xpose.msra.mxu0 0.0
        %4325 = vmatprep.subr.mxu0 0.0
        %4326 = vmatpush2.xpose.msra.mxu0 0.0
        %4327 = vmatprep.subr.mxu0 0.0
        %4328 = vmatpush2.xpose.msra.mxu0 0.0
        %4329 = vmatprep.subr.mxu0 0.0
        %4330 = vmatpush2.xpose.msra.mxu0 0.0
        %4331 = vmatprep.subr.mxu0 0.0
        %4332 = vmatpush2.xpose.msra.mxu0 0.0
        %4333 = vmatprep.subr.mxu0 0.0
        %4334 = vmatpush2.xpose.msra.mxu0 0.0
        %4335 = vmatprep.subr.mxu0 0.0
        %4336 = vmatpush2.xpose.msra.mxu0 0.0
        %4337 = vmatprep.mubr.f32.mxu0 %v4260
        %4338 = vmatmul.mubr.f32.gmra.mxu0 %v4256
        %v4339 = vpop.f32.mrf.mxu0
        %v4340 = vadd.f32 %v4090, %v4339
        %v4341 = vpop.f32.mrf.mxu0
        %4342 = vdwg.mxu0
        %4343 = vmatprep.subr.mxu0 %v3956
        %4344 = vmatpush1.xpose.msra.mxu0 %v3955
        %4345 = vmatprep.subr.mxu0 %v3952
        %4346 = vmatpush1.xpose.msra.mxu0 %v3951
        %4347 = vmatprep.subr.mxu0 %v3948
        %4348 = vmatpush1.xpose.msra.mxu0 %v3947
        %4349 = vmatprep.subr.mxu0 %v3944
        %4350 = vmatpush1.xpose.msra.mxu0 %v3943
        %4351 = vmatprep.subr.mxu0 %v3940
        %4352 = vmatpush1.xpose.msra.mxu0 %v3939
        %4353 = vmatprep.subr.mxu0 %v3936
        %4354 = vmatpush1.xpose.msra.mxu0 %v3935
        %4355 = vmatprep.subr.mxu0 %v3932
        %4356 = vmatpush1.xpose.msra.mxu0 %v3931
        %4357 = vmatprep.subr.mxu0 %v3928
        %4358 = vmatpush1.xpose.msra.mxu0 %v3927
        %4359 = vmatprep.subr.mxu0 %v3924
        %4360 = vmatpush1.xpose.msra.mxu0 %v3923
        %4361 = vmatprep.subr.mxu0 %v3920
        %4362 = vmatpush1.xpose.msra.mxu0 %v3919
        %4363 = vmatprep.subr.mxu0 %v3916
        %4364 = vmatpush1.xpose.msra.mxu0 %v3915
        %4365 = vmatprep.subr.mxu0 %v3912
        %4366 = vmatpush1.xpose.msra.mxu0 %v3911
        %4367 = vmatprep.subr.mxu0 %v3908
        %4368 = vmatpush1.xpose.msra.mxu0 %v3907
        %4369 = vmatprep.subr.mxu0 %v3904
        %4370 = vmatpush1.xpose.msra.mxu0 %v3903
        %4371 = vmatprep.subr.mxu0 %v3900
        %4372 = vmatpush1.xpose.msra.mxu0 %v3899
        %4373 = vmatprep.subr.mxu0 %v3896
        %4374 = vmatpush1.xpose.msra.mxu0 %v3895
        %4375 = vmatprep.subr.mxu0 0.0
        %4376 = vmatpush2.xpose.msra.mxu0 0.0
        %4377 = vmatprep.subr.mxu0 0.0
        %4378 = vmatpush2.xpose.msra.mxu0 0.0
        %4379 = vmatprep.subr.mxu0 0.0
        %4380 = vmatpush2.xpose.msra.mxu0 0.0
        %4381 = vmatprep.subr.mxu0 0.0
        %4382 = vmatpush2.xpose.msra.mxu0 0.0
        %4383 = vmatprep.subr.mxu0 0.0
        %4384 = vmatpush2.xpose.msra.mxu0 0.0
        %4385 = vmatprep.subr.mxu0 0.0
        %4386 = vmatpush2.xpose.msra.mxu0 0.0
        %4387 = vmatprep.subr.mxu0 0.0
        %4388 = vmatpush2.xpose.msra.mxu0 0.0
        %4389 = vmatprep.subr.mxu0 0.0
        %4390 = vmatpush2.xpose.msra.mxu0 0.0
        %4391 = vmatprep.subr.mxu0 0.0
        %4392 = vmatpush2.xpose.msra.mxu0 0.0
        %4393 = vmatprep.subr.mxu0 0.0
        %4394 = vmatpush2.xpose.msra.mxu0 0.0
        %4395 = vmatprep.subr.mxu0 0.0
        %4396 = vmatpush2.xpose.msra.mxu0 0.0
        %4397 = vmatprep.subr.mxu0 0.0
        %4398 = vmatpush2.xpose.msra.mxu0 0.0
        %4399 = vmatprep.subr.mxu0 0.0
        %4400 = vmatpush2.xpose.msra.mxu0 0.0
        %4401 = vmatprep.subr.mxu0 0.0
        %4402 = vmatpush2.xpose.msra.mxu0 0.0
        %4403 = vmatprep.subr.mxu0 0.0
        %4404 = vmatpush2.xpose.msra.mxu0 0.0
        %4405 = vmatprep.subr.mxu0 0.0
        %4406 = vmatpush2.xpose.msra.mxu0 0.0
        %4407 = vmatprep.mubr.f32.mxu0 %v4268
        %4408 = vmatmul.mubr.f32.gmra.mxu0 %v4264
        %v4409 = vpop.f32.mrf.mxu0
        %v4410 = vadd.f32 %v4340, %v4409
        %v4411 = vpop.f32.mrf.mxu0
        %4412 = vdwg.mxu0
        %v4414 = vlaneseq
        %v4415 = vshrl.u32 %v4414, 7
        %v4416 = vsub.s32 0, %v4415
        %v4417 = vrot.slane %v4087, %v4416
        %v4418 = vlaneseq
        %v4419 = vshrl.u32 %v4418, 7
        %v4420 = vsub.s32 1, %v4419
        %v4421 = vrot.slane %v4087, %v4420
        %v4422 = vlaneseq
        %v4423 = vshrl.u32 %v4422, 7
        %v4424 = vsub.s32 2, %v4423
        %v4425 = vrot.slane %v4087, %v4424
        %v4426 = vlaneseq
        %v4427 = vshrl.u32 %v4426, 7
        %v4428 = vsub.s32 3, %v4427
        %v4429 = vrot.slane %v4087, %v4428
        %4434 = vmatprep.subr.mxu0 %v4018
        %4435 = vmatpush1.xpose.msra.mxu0 %v4017
        %4436 = vmatprep.subr.mxu0 %v4014
        %4437 = vmatpush1.xpose.msra.mxu0 %v4013
        %4438 = vmatprep.subr.mxu0 %v4010
        %4439 = vmatpush1.xpose.msra.mxu0 %v4009
        %4440 = vmatprep.subr.mxu0 %v4006
        %4441 = vmatpush1.xpose.msra.mxu0 %v4005
        %4442 = vmatprep.subr.mxu0 %v4002
        %4443 = vmatpush1.xpose.msra.mxu0 %v4001
        %4444 = vmatprep.subr.mxu0 %v3998
        %4445 = vmatpush1.xpose.msra.mxu0 %v3997
        %4446 = vmatprep.subr.mxu0 %v3994
        %4447 = vmatpush1.xpose.msra.mxu0 %v3993
        %4448 = vmatprep.subr.mxu0 %v3990
        %4449 = vmatpush1.xpose.msra.mxu0 %v3989
        %4450 = vmatprep.subr.mxu0 %v3986
        %4451 = vmatpush1.xpose.msra.mxu0 %v3985
        %4452 = vmatprep.subr.mxu0 %v3982
        %4453 = vmatpush1.xpose.msra.mxu0 %v3981
        %4454 = vmatprep.subr.mxu0 %v3978
        %4455 = vmatpush1.xpose.msra.mxu0 %v3977
        %4456 = vmatprep.subr.mxu0 %v3974
        %4457 = vmatpush1.xpose.msra.mxu0 %v3973
        %4458 = vmatprep.subr.mxu0 %v3970
        %4459 = vmatpush1.xpose.msra.mxu0 %v3969
        %4460 = vmatprep.subr.mxu0 %v3966
        %4461 = vmatpush1.xpose.msra.mxu0 %v3965
        %4462 = vmatprep.subr.mxu0 %v3962
        %4463 = vmatpush1.xpose.msra.mxu0 %v3961
        %4464 = vmatprep.subr.mxu0 %v3958
        %4465 = vmatpush1.xpose.msra.mxu0 %v3957
        %4466 = vmatprep.subr.mxu0 0.0
        %4467 = vmatpush2.xpose.msra.mxu0 0.0
        %4468 = vmatprep.subr.mxu0 0.0
        %4469 = vmatpush2.xpose.msra.mxu0 0.0
        %4470 = vmatprep.subr.mxu0 0.0
        %4471 = vmatpush2.xpose.msra.mxu0 0.0
        %4472 = vmatprep.subr.mxu0 0.0
        %4473 = vmatpush2.xpose.msra.mxu0 0.0
        %4474 = vmatprep.subr.mxu0 0.0
        %4475 = vmatpush2.xpose.msra.mxu0 0.0
        %4476 = vmatprep.subr.mxu0 0.0
        %4477 = vmatpush2.xpose.msra.mxu0 0.0
        %4478 = vmatprep.subr.mxu0 0.0
        %4479 = vmatpush2.xpose.msra.mxu0 0.0
        %4480 = vmatprep.subr.mxu0 0.0
        %4481 = vmatpush2.xpose.msra.mxu0 0.0
        %4482 = vmatprep.subr.mxu0 0.0
        %4483 = vmatpush2.xpose.msra.mxu0 0.0
        %4484 = vmatprep.subr.mxu0 0.0
        %4485 = vmatpush2.xpose.msra.mxu0 0.0
        %4486 = vmatprep.subr.mxu0 0.0
        %4487 = vmatpush2.xpose.msra.mxu0 0.0
        %4488 = vmatprep.subr.mxu0 0.0
        %4489 = vmatpush2.xpose.msra.mxu0 0.0
        %4490 = vmatprep.subr.mxu0 0.0
        %4491 = vmatpush2.xpose.msra.mxu0 0.0
        %4492 = vmatprep.subr.mxu0 0.0
        %4493 = vmatpush2.xpose.msra.mxu0 0.0
        %4494 = vmatprep.subr.mxu0 0.0
        %4495 = vmatpush2.xpose.msra.mxu0 0.0
        %4496 = vmatprep.subr.mxu0 0.0
        %4497 = vmatpush2.xpose.msra.mxu0 0.0
        %4498 = vmatprep.mubr.f32.mxu0 %v4421
        %4499 = vmatmul.mubr.f32.gmra.mxu0 %v4417
        %v4500 = vpop.f32.mrf.mxu0
        %v4501 = vadd.f32 %v4090, %v4500
        %v4502 = vpop.f32.mrf.mxu0
        %4503 = vdwg.mxu0
        %4504 = vmatprep.subr.mxu0 %v4020
        %4505 = vmatpush1.xpose.msra.mxu0 %v4019
        %4506 = vmatprep.subr.mxu0 %v4016
        %4507 = vmatpush1.xpose.msra.mxu0 %v4015
        %4508 = vmatprep.subr.mxu0 %v4012
        %4509 = vmatpush1.xpose.msra.mxu0 %v4011
        %4510 = vmatprep.subr.mxu0 %v4008
        %4511 = vmatpush1.xpose.msra.mxu0 %v4007
        %4512 = vmatprep.subr.mxu0 %v4004
        %4513 = vmatpush1.xpose.msra.mxu0 %v4003
        %4514 = vmatprep.subr.mxu0 %v4000
        %4515 = vmatpush1.xpose.msra.mxu0 %v3999
        %4516 = vmatprep.subr.mxu0 %v3996
        %4517 = vmatpush1.xpose.msra.mxu0 %v3995
        %4518 = vmatprep.subr.mxu0 %v3992
        %4519 = vmatpush1.xpose.msra.mxu0 %v3991
        %4520 = vmatprep.subr.mxu0 %v3988
        %4521 = vmatpush1.xpose.msra.mxu0 %v3987
        %4522 = vmatprep.subr.mxu0 %v3984
        %4523 = vmatpush1.xpose.msra.mxu0 %v3983
        %4524 = vmatprep.subr.mxu0 %v3980
        %4525 = vmatpush1.xpose.msra.mxu0 %v3979
        %4526 = vmatprep.subr.mxu0 %v3976
        %4527 = vmatpush1.xpose.msra.mxu0 %v3975
        %4528 = vmatprep.subr.mxu0 %v3972
        %4529 = vmatpush1.xpose.msra.mxu0 %v3971
        %4530 = vmatprep.subr.mxu0 %v3968
        %4531 = vmatpush1.xpose.msra.mxu0 %v3967
        %4532 = vmatprep.subr.mxu0 %v3964
        %4533 = vmatpush1.xpose.msra.mxu0 %v3963
        %4534 = vmatprep.subr.mxu0 %v3960
        %4535 = vmatpush1.xpose.msra.mxu0 %v3959
        %4536 = vmatprep.subr.mxu0 0.0
        %4537 = vmatpush2.xpose.msra.mxu0 0.0
        %4538 = vmatprep.subr.mxu0 0.0
        %4539 = vmatpush2.xpose.msra.mxu0 0.0
        %4540 = vmatprep.subr.mxu0 0.0
        %4541 = vmatpush2.xpose.msra.mxu0 0.0
        %4542 = vmatprep.subr.mxu0 0.0
        %4543 = vmatpush2.xpose.msra.mxu0 0.0
        %4544 = vmatprep.subr.mxu0 0.0
        %4545 = vmatpush2.xpose.msra.mxu0 0.0
        %4546 = vmatprep.subr.mxu0 0.0
        %4547 = vmatpush2.xpose.msra.mxu0 0.0
        %4548 = vmatprep.subr.mxu0 0.0
        %4549 = vmatpush2.xpose.msra.mxu0 0.0
        %4550 = vmatprep.subr.mxu0 0.0
        %4551 = vmatpush2.xpose.msra.mxu0 0.0
        %4552 = vmatprep.subr.mxu0 0.0
        %4553 = vmatpush2.xpose.msra.mxu0 0.0
        %4554 = vmatprep.subr.mxu0 0.0
        %4555 = vmatpush2.xpose.msra.mxu0 0.0
        %4556 = vmatprep.subr.mxu0 0.0
        %4557 = vmatpush2.xpose.msra.mxu0 0.0
        %4558 = vmatprep.subr.mxu0 0.0
        %4559 = vmatpush2.xpose.msra.mxu0 0.0
        %4560 = vmatprep.subr.mxu0 0.0
        %4561 = vmatpush2.xpose.msra.mxu0 0.0
        %4562 = vmatprep.subr.mxu0 0.0
        %4563 = vmatpush2.xpose.msra.mxu0 0.0
        %4564 = vmatprep.subr.mxu0 0.0
        %4565 = vmatpush2.xpose.msra.mxu0 0.0
        %4566 = vmatprep.subr.mxu0 0.0
        %4567 = vmatpush2.xpose.msra.mxu0 0.0
        %4568 = vmatprep.mubr.f32.mxu0 %v4429
        %4569 = vmatmul.mubr.f32.gmra.mxu0 %v4425
        %v4570 = vpop.f32.mrf.mxu0
        %v4571 = vadd.f32 %v4501, %v4570
        %v4572 = vpop.f32.mrf.mxu0
        %4573 = vdwg.mxu0
        %v4575 = vlaneseq
        %v4576 = vshrl.u32 %v4575, 7
        %v4577 = vsub.s32 0, %v4576
        %v4578 = vrot.slane %v4088, %v4577
        %v4579 = vlaneseq
        %v4580 = vshrl.u32 %v4579, 7
        %v4581 = vsub.s32 1, %v4580
        %v4582 = vrot.slane %v4088, %v4581
        %v4583 = vlaneseq
        %v4584 = vshrl.u32 %v4583, 7
        %v4585 = vsub.s32 2, %v4584
        %v4586 = vrot.slane %v4088, %v4585
        %v4587 = vlaneseq
        %v4588 = vshrl.u32 %v4587, 7
        %v4589 = vsub.s32 3, %v4588
        %v4590 = vrot.slane %v4088, %v4589
        %4595 = vmatprep.subr.mxu0 %v4082
        %4596 = vmatpush1.xpose.msra.mxu0 %v4081
        %4597 = vmatprep.subr.mxu0 %v4078
        %4598 = vmatpush1.xpose.msra.mxu0 %v4077
        %4599 = vmatprep.subr.mxu0 %v4074
        %4600 = vmatpush1.xpose.msra.mxu0 %v4073
        %4601 = vmatprep.subr.mxu0 %v4070
        %4602 = vmatpush1.xpose.msra.mxu0 %v4069
        %4603 = vmatprep.subr.mxu0 %v4066
        %4604 = vmatpush1.xpose.msra.mxu0 %v4065
        %4605 = vmatprep.subr.mxu0 %v4062
        %4606 = vmatpush1.xpose.msra.mxu0 %v4061
        %4607 = vmatprep.subr.mxu0 %v4058
        %4608 = vmatpush1.xpose.msra.mxu0 %v4057
        %4609 = vmatprep.subr.mxu0 %v4054
        %4610 = vmatpush1.xpose.msra.mxu0 %v4053
        %4611 = vmatprep.subr.mxu0 %v4050
        %4612 = vmatpush1.xpose.msra.mxu0 %v4049
        %4613 = vmatprep.subr.mxu0 %v4046
        %4614 = vmatpush1.xpose.msra.mxu0 %v4045
        %4615 = vmatprep.subr.mxu0 %v4042
        %4616 = vmatpush1.xpose.msra.mxu0 %v4041
        %4617 = vmatprep.subr.mxu0 %v4038
        %4618 = vmatpush1.xpose.msra.mxu0 %v4037
        %4619 = vmatprep.subr.mxu0 %v4034
        %4620 = vmatpush1.xpose.msra.mxu0 %v4033
        %4621 = vmatprep.subr.mxu0 %v4030
        %4622 = vmatpush1.xpose.msra.mxu0 %v4029
        %4623 = vmatprep.subr.mxu0 %v4026
        %4624 = vmatpush1.xpose.msra.mxu0 %v4025
        %4625 = vmatprep.subr.mxu0 %v4022
        %4626 = vmatpush1.xpose.msra.mxu0 %v4021
        %4627 = vmatprep.subr.mxu0 0.0
        %4628 = vmatpush2.xpose.msra.mxu0 0.0
        %4629 = vmatprep.subr.mxu0 0.0
        %4630 = vmatpush2.xpose.msra.mxu0 0.0
        %4631 = vmatprep.subr.mxu0 0.0
        %4632 = vmatpush2.xpose.msra.mxu0 0.0
        %4633 = vmatprep.subr.mxu0 0.0
        %4634 = vmatpush2.xpose.msra.mxu0 0.0
        %4635 = vmatprep.subr.mxu0 0.0
        %4636 = vmatpush2.xpose.msra.mxu0 0.0
        %4637 = vmatprep.subr.mxu0 0.0
        %4638 = vmatpush2.xpose.msra.mxu0 0.0
        %4639 = vmatprep.subr.mxu0 0.0
        %4640 = vmatpush2.xpose.msra.mxu0 0.0
        %4641 = vmatprep.subr.mxu0 0.0
        %4642 = vmatpush2.xpose.msra.mxu0 0.0
        %4643 = vmatprep.subr.mxu0 0.0
        %4644 = vmatpush2.xpose.msra.mxu0 0.0
        %4645 = vmatprep.subr.mxu0 0.0
        %4646 = vmatpush2.xpose.msra.mxu0 0.0
        %4647 = vmatprep.subr.mxu0 0.0
        %4648 = vmatpush2.xpose.msra.mxu0 0.0
        %4649 = vmatprep.subr.mxu0 0.0
        %4650 = vmatpush2.xpose.msra.mxu0 0.0
        %4651 = vmatprep.subr.mxu0 0.0
        %4652 = vmatpush2.xpose.msra.mxu0 0.0
        %4653 = vmatprep.subr.mxu0 0.0
        %4654 = vmatpush2.xpose.msra.mxu0 0.0
        %4655 = vmatprep.subr.mxu0 0.0
        %4656 = vmatpush2.xpose.msra.mxu0 0.0
        %4657 = vmatprep.subr.mxu0 0.0
        %4658 = vmatpush2.xpose.msra.mxu0 0.0
        %4659 = vmatprep.mubr.f32.mxu0 %v4582
        %4660 = vmatmul.mubr.f32.gmra.mxu0 %v4578
        %v4661 = vpop.f32.mrf.mxu0
        %v4662 = vadd.f32 %v4090, %v4661
        %v4663 = vpop.f32.mrf.mxu0
        %4664 = vdwg.mxu0
        %4665 = vmatprep.subr.mxu0 %v4084
        %4666 = vmatpush1.xpose.msra.mxu0 %v4083
        %4667 = vmatprep.subr.mxu0 %v4080
        %4668 = vmatpush1.xpose.msra.mxu0 %v4079
        %4669 = vmatprep.subr.mxu0 %v4076
        %4670 = vmatpush1.xpose.msra.mxu0 %v4075
        %4671 = vmatprep.subr.mxu0 %v4072
        %4672 = vmatpush1.xpose.msra.mxu0 %v4071
        %4673 = vmatprep.subr.mxu0 %v4068
        %4674 = vmatpush1.xpose.msra.mxu0 %v4067
        %4675 = vmatprep.subr.mxu0 %v4064
        %4676 = vmatpush1.xpose.msra.mxu0 %v4063
        %4677 = vmatprep.subr.mxu0 %v4060
        %4678 = vmatpush1.xpose.msra.mxu0 %v4059
        %4679 = vmatprep.subr.mxu0 %v4056
        %4680 = vmatpush1.xpose.msra.mxu0 %v4055
        %4681 = vmatprep.subr.mxu0 %v4052
        %4682 = vmatpush1.xpose.msra.mxu0 %v4051
        %4683 = vmatprep.subr.mxu0 %v4048
        %4684 = vmatpush1.xpose.msra.mxu0 %v4047
        %4685 = vmatprep.subr.mxu0 %v4044
        %4686 = vmatpush1.xpose.msra.mxu0 %v4043
        %4687 = vmatprep.subr.mxu0 %v4040
        %4688 = vmatpush1.xpose.msra.mxu0 %v4039
        %4689 = vmatprep.subr.mxu0 %v4036
        %4690 = vmatpush1.xpose.msra.mxu0 %v4035
        %4691 = vmatprep.subr.mxu0 %v4032
        %4692 = vmatpush1.xpose.msra.mxu0 %v4031
        %4693 = vmatprep.subr.mxu0 %v4028
        %4694 = vmatpush1.xpose.msra.mxu0 %v4027
        %4695 = vmatprep.subr.mxu0 %v4024
        %4696 = vmatpush1.xpose.msra.mxu0 %v4023
        %4697 = vmatprep.subr.mxu0 0.0
        %4698 = vmatpush2.xpose.msra.mxu0 0.0
        %4699 = vmatprep.subr.mxu0 0.0
        %4700 = vmatpush2.xpose.msra.mxu0 0.0
        %4701 = vmatprep.subr.mxu0 0.0
        %4702 = vmatpush2.xpose.msra.mxu0 0.0
        %4703 = vmatprep.subr.mxu0 0.0
        %4704 = vmatpush2.xpose.msra.mxu0 0.0
        %4705 = vmatprep.subr.mxu0 0.0
        %4706 = vmatpush2.xpose.msra.mxu0 0.0
        %4707 = vmatprep.subr.mxu0 0.0
        %4708 = vmatpush2.xpose.msra.mxu0 0.0
        %4709 = vmatprep.subr.mxu0 0.0
        %4710 = vmatpush2.xpose.msra.mxu0 0.0
        %4711 = vmatprep.subr.mxu0 0.0
        %4712 = vmatpush2.xpose.msra.mxu0 0.0
        %4713 = vmatprep.subr.mxu0 0.0
        %4714 = vmatpush2.xpose.msra.mxu0 0.0
        %4715 = vmatprep.subr.mxu0 0.0
        %4716 = vmatpush2.xpose.msra.mxu0 0.0
        %4717 = vmatprep.subr.mxu0 0.0
        %4718 = vmatpush2.xpose.msra.mxu0 0.0
        %4719 = vmatprep.subr.mxu0 0.0
        %4720 = vmatpush2.xpose.msra.mxu0 0.0
        %4721 = vmatprep.subr.mxu0 0.0
        %4722 = vmatpush2.xpose.msra.mxu0 0.0
        %4723 = vmatprep.subr.mxu0 0.0
        %4724 = vmatpush2.xpose.msra.mxu0 0.0
        %4725 = vmatprep.subr.mxu0 0.0
        %4726 = vmatpush2.xpose.msra.mxu0 0.0
        %4727 = vmatprep.subr.mxu0 0.0
        %4728 = vmatpush2.xpose.msra.mxu0 0.0
        %4729 = vmatprep.mubr.f32.mxu0 %v4590
        %4730 = vmatmul.mubr.f32.gmra.mxu0 %v4586
        %v4731 = vpop.f32.mrf.mxu0
        %v4732 = vadd.f32 %v4662, %v4731
        %v4733 = vpop.f32.mrf.mxu0
        %4734 = vdwg.mxu0
        %v4735 = vlaneseq
        %v4736 = vand.u32 %v4735, 127
        %s4737 = smul.u32 %s28, 128
        %v4738 = vstv %s4737
        %v4739 = vadd.s32 %v4736, %v4738
        %vm4740 = vcmp.lt.s32.totalorder %v4739, 256
        %v4741 = vsel %vm4740, %v4249, -inf
        %v4742 = vsel %vm4740, %v4410, -inf
        %v4743 = vsel %vm4740, %v4571, -inf
        %v4744 = vsel %vm4740, %v4732, -inf
        %v4745 = vld [vmem:[#allocation2] sm:$0x1]
        %v4746 = vld [vmem:[#allocation2 + $0x1] sm:$0x1]
        %v4747 = vld [vmem:[#allocation2 + $0x2] sm:$0x1]
        %v4748 = vld [vmem:[#allocation2 + $0x3] sm:$0x1]
        %vm4749 = vcmask 1040384
        %v4750 = vsel %vm4749, %v4741, -inf
        %4751 = vmax.xlane.f32.xlu0 %v4750
        %v4752 = vpop.xlane.xlu0 %4751
        %v4753 = vsel %vm4749, %v4742, -inf
        %4754 = vmax.xlane.f32.xlu0 %v4753
        %v4755 = vpop.xlane.xlu0 %4754
        %v4756 = vsel %vm4749, %v4743, -inf
        %4757 = vmax.xlane.f32.xlu0 %v4756
        %v4758 = vpop.xlane.xlu0 %4757
        %v4759 = vsel %vm4749, %v4744, -inf
        %4760 = vmax.xlane.f32.xlu0 %v4759
        %v4761 = vpop.xlane.xlu0 %4760
        %v4762 = vmax.f32 %v4745, %v4752
        %v4763 = vmax.f32 %v4746, %v4755
        %v4764 = vmax.f32 %v4747, %v4758
        %v4765 = vmax.f32 %v4748, %v4761
        %v4766 = vsub.f32 %v4745, %v4762
        %v4767 = vsub.f32 %v4746, %v4763
        %v4768 = vsub.f32 %v4747, %v4764
        %v4769 = vsub.f32 %v4748, %v4765
        %v4770 = vmul.f32 %v4766, 1.442695
        %v4771 = vpow.pop %v4770
        %v4772 = vmul.f32 %v4767, 1.442695
        %v4773 = vpow.pop %v4772
        %v4774 = vmul.f32 %v4768, 1.442695
        %v4775 = vpow.pop %v4774
        %v4776 = vmul.f32 %v4769, 1.442695
        %v4777 = vpow.pop %v4776
        %4779 = vset.pattern.permute.xlu0 0
        %4780 = vperm.xlu0 %4779, %v4762
        %v4781 = vpop.permute.xlu0 %4780
        %v4783 = vlaneseq
        %v4784 = vshrl.u32 %v4783, 7
        %v4785 = vsub.s32 0, %v4784
        %v4786 = vrot.slane %v4781, %v4785
        %4788 = vset.pattern.permute.xlu0 0
        %4789 = vperm.xlu0 %4788, %v4763
        %v4790 = vpop.permute.xlu0 %4789
        %v4792 = vlaneseq
        %v4793 = vshrl.u32 %v4792, 7
        %v4794 = vsub.s32 0, %v4793
        %v4795 = vrot.slane %v4790, %v4794
        %4797 = vset.pattern.permute.xlu0 0
        %4798 = vperm.xlu0 %4797, %v4764
        %v4799 = vpop.permute.xlu0 %4798
        %v4801 = vlaneseq
        %v4802 = vshrl.u32 %v4801, 7
        %v4803 = vsub.s32 0, %v4802
        %v4804 = vrot.slane %v4799, %v4803
        %4806 = vset.pattern.permute.xlu0 0
        %4807 = vperm.xlu0 %4806, %v4765
        %v4808 = vpop.permute.xlu0 %4807
        %v4810 = vlaneseq
        %v4811 = vshrl.u32 %v4810, 7
        %v4812 = vsub.s32 0, %v4811
        %v4813 = vrot.slane %v4808, %v4812
        %v4814 = vsub.f32 %v4741, %v4786
        %v4815 = vsub.f32 %v4742, %v4795
        %v4816 = vsub.f32 %v4743, %v4804
        %v4817 = vsub.f32 %v4744, %v4813
        %v4818 = vmul.f32 %v4814, 1.442695
        %v4819 = vpow.pop %v4818
        %v4820 = vmul.f32 %v4815, 1.442695
        %v4821 = vpow.pop %v4820
        %v4822 = vmul.f32 %v4816, 1.442695
        %v4823 = vpow.pop %v4822
        %v4824 = vmul.f32 %v4817, 1.442695
        %v4825 = vpow.pop %v4824
        %v4826 = vld [vmem:[#allocation3] sm:$0x1]
        %v4827 = vld [vmem:[#allocation3 + $0x1] sm:$0x1]
        %v4828 = vld [vmem:[#allocation3 + $0x2] sm:$0x1]
        %v4829 = vld [vmem:[#allocation3 + $0x3] sm:$0x1]
        %v4830 = vmul.f32 %v4771, %v4826
        %v4831 = vmul.f32 %v4773, %v4827
        %v4832 = vmul.f32 %v4775, %v4828
        %v4833 = vmul.f32 %v4777, %v4829
        %v4834 = vsel %vm4749, %v4819, 0.0
        %4835 = vadd.xlane.f32.xlu0 %v4834
        %v4836 = vpop.xlane.xlu0 %4835
        %v4837 = vsel %vm4749, %v4821, 0.0
        %4838 = vadd.xlane.f32.xlu0 %v4837
        %v4839 = vpop.xlane.xlu0 %4838
        %v4840 = vsel %vm4749, %v4823, 0.0
        %4841 = vadd.xlane.f32.xlu0 %v4840
        %v4842 = vpop.xlane.xlu0 %4841
        %v4843 = vsel %vm4749, %v4825, 0.0
        %4844 = vadd.xlane.f32.xlu0 %v4843
        %v4845 = vpop.xlane.xlu0 %4844
        %v4846 = vadd.f32 %v4830, %v4836
        %v4847 = vadd.f32 %v4831, %v4839
        %v4848 = vadd.f32 %v4832, %v4842
        %v4849 = vadd.f32 %v4833, %v4845
        %vm4850 = vcmask 0
        %4851 = vst.msk [vmem:[#allocation3] sm:$0x1] %vm4850, %v4846
        %4852 = vst.msk [vmem:[#allocation3 + $0x1] sm:$0x1] %vm4850, %v4847
        %4853 = vst.msk [vmem:[#allocation3 + $0x2] sm:$0x1] %vm4850, %v4848
        %4854 = vst.msk [vmem:[#allocation3 + $0x3] sm:$0x1] %vm4850, %v4849
        %v4855 = vld [vmem:[#allocation4] sm:$0x3f]
        %v4856 = vld [vmem:[#allocation4 + $0x6] sm:$0x3f]
        %v4857 = vld [vmem:[#allocation4 + $0xc] sm:$0x3f]
        %v4858 = vld [vmem:[#allocation4 + $0x12] sm:$0x3f]
        %4860 = vset.pattern.permute.xlu0 0
        %4861 = vperm.xlu0 %4860, %v4771
        %v4862 = vpop.permute.xlu0 %4861
        %v4864 = vlaneseq
        %v4865 = vshrl.u32 %v4864, 7
        %v4866 = vsub.s32 0, %v4865
        %v4867 = vrot.slane %v4862, %v4866
        %4869 = vset.pattern.permute.xlu0 0
        %4870 = vperm.xlu0 %4869, %v4773
        %v4871 = vpop.permute.xlu0 %4870
        %v4873 = vlaneseq
        %v4874 = vshrl.u32 %v4873, 7
        %v4875 = vsub.s32 0, %v4874
        %v4876 = vrot.slane %v4871, %v4875
        %4878 = vset.pattern.permute.xlu0 0
        %4879 = vperm.xlu0 %4878, %v4775
        %v4880 = vpop.permute.xlu0 %4879
        %v4882 = vlaneseq
        %v4883 = vshrl.u32 %v4882, 7
        %v4884 = vsub.s32 0, %v4883
        %v4885 = vrot.slane %v4880, %v4884
        %4887 = vset.pattern.permute.xlu0 0
        %4888 = vperm.xlu0 %4887, %v4777
        %v4889 = vpop.permute.xlu0 %4888
        %v4891 = vlaneseq
        %v4892 = vshrl.u32 %v4891, 7
        %v4893 = vsub.s32 0, %v4892
        %v4894 = vrot.slane %v4889, %v4893
        %v4895 = vmul.f32 %v4867, %v4855
        %v4896 = vmul.f32 %v4876, %v4856
        %v4897 = vmul.f32 %v4885, %v4857
        %v4898 = vmul.f32 %v4894, %v4858
        %4899 = vmatprep.subr.mxu0 %v436
        %4900 = vmatpush1.msra.mxu0 %v435
        %4901 = vmatprep.subr.mxu0 %v430
        %4902 = vmatpush1.msra.mxu0 %v429
        %4903 = vmatprep.subr.mxu0 %v424
        %4904 = vmatpush1.msra.mxu0 %v423
        %4905 = vmatprep.subr.mxu0 %v418
        %4906 = vmatpush1.msra.mxu0 %v417
        %4907 = vmatprep.subr.mxu0 %v412
        %4908 = vmatpush1.msra.mxu0 %v411
        %4909 = vmatprep.subr.mxu0 %v406
        %4910 = vmatpush1.msra.mxu0 %v405
        %4911 = vmatprep.subr.mxu0 %v400
        %4912 = vmatpush1.msra.mxu0 %v399
        %4913 = vmatprep.subr.mxu0 %v394
        %4914 = vmatpush1.msra.mxu0 %v393
        %4915 = vmatprep.subr.mxu0 %v388
        %4916 = vmatpush1.msra.mxu0 %v387
        %4917 = vmatprep.subr.mxu0 %v382
        %4918 = vmatpush1.msra.mxu0 %v381
        %4919 = vmatprep.subr.mxu0 %v376
        %4920 = vmatpush1.msra.mxu0 %v375
        %4921 = vmatprep.subr.mxu0 %v370
        %4922 = vmatpush1.msra.mxu0 %v369
        %4923 = vmatprep.subr.mxu0 %v364
        %4924 = vmatpush1.msra.mxu0 %v363
        %4925 = vmatprep.subr.mxu0 %v358
        %4926 = vmatpush1.msra.mxu0 %v357
        %4927 = vmatprep.subr.mxu0 %v352
        %4928 = vmatpush1.msra.mxu0 %v351
        %4929 = vmatprep.subr.mxu0 %v346
        %4930 = vmatpush1.msra.mxu0 %v345
        %4931 = vmatprep.subr.mxu0 0.0
        %4932 = vmatpush2.msra.mxu0 0.0
        %4933 = vmatprep.subr.mxu0 0.0
        %4934 = vmatpush2.msra.mxu0 0.0
        %4935 = vmatprep.subr.mxu0 0.0
        %4936 = vmatpush2.msra.mxu0 0.0
        %4937 = vmatprep.subr.mxu0 0.0
        %4938 = vmatpush2.msra.mxu0 0.0
        %4939 = vmatprep.subr.mxu0 0.0
        %4940 = vmatpush2.msra.mxu0 0.0
        %4941 = vmatprep.subr.mxu0 0.0
        %4942 = vmatpush2.msra.mxu0 0.0
        %4943 = vmatprep.subr.mxu0 0.0
        %4944 = vmatpush2.msra.mxu0 0.0
        %4945 = vmatprep.subr.mxu0 0.0
        %4946 = vmatpush2.msra.mxu0 0.0
        %4947 = vmatprep.subr.mxu0 0.0
        %4948 = vmatpush2.msra.mxu0 0.0
        %4949 = vmatprep.subr.mxu0 0.0
        %4950 = vmatpush2.msra.mxu0 0.0
        %4951 = vmatprep.subr.mxu0 0.0
        %4952 = vmatpush2.msra.mxu0 0.0
        %4953 = vmatprep.subr.mxu0 0.0
        %4954 = vmatpush2.msra.mxu0 0.0
        %4955 = vmatprep.subr.mxu0 0.0
        %4956 = vmatpush2.msra.mxu0 0.0
        %4957 = vmatprep.subr.mxu0 0.0
        %4958 = vmatpush2.msra.mxu0 0.0
        %4959 = vmatprep.subr.mxu0 0.0
        %4960 = vmatpush2.msra.mxu0 0.0
        %4961 = vmatprep.subr.mxu0 0.0
        %4962 = vmatpush2.msra.mxu0 0.0
        %4963 = vmatprep.mubr.f32.mxu0 0.0
        %4964 = vmatmul.mubr.f32.gmra.mxu0 %v4819
        %v4965 = vpop.f32.mrf.mxu0
        %v4966 = vadd.f32 0.0, %v4965
        %v4967 = vpop.f32.mrf.mxu0
        %v4968 = vadd.f32 0.0, %v4967
        %4969 = vdwg.mxu0
        %4970 = vmatprep.subr.mxu0 %v438
        %4971 = vmatpush1.msra.mxu0 %v437
        %4972 = vmatprep.subr.mxu0 %v432
        %4973 = vmatpush1.msra.mxu0 %v431
        %4974 = vmatprep.subr.mxu0 %v426
        %4975 = vmatpush1.msra.mxu0 %v425
        %4976 = vmatprep.subr.mxu0 %v420
        %4977 = vmatpush1.msra.mxu0 %v419
        %4978 = vmatprep.subr.mxu0 %v414
        %4979 = vmatpush1.msra.mxu0 %v413
        %4980 = vmatprep.subr.mxu0 %v408
        %4981 = vmatpush1.msra.mxu0 %v407
        %4982 = vmatprep.subr.mxu0 %v402
        %4983 = vmatpush1.msra.mxu0 %v401
        %4984 = vmatprep.subr.mxu0 %v396
        %4985 = vmatpush1.msra.mxu0 %v395
        %4986 = vmatprep.subr.mxu0 %v390
        %4987 = vmatpush1.msra.mxu0 %v389
        %4988 = vmatprep.subr.mxu0 %v384
        %4989 = vmatpush1.msra.mxu0 %v383
        %4990 = vmatprep.subr.mxu0 %v378
        %4991 = vmatpush1.msra.mxu0 %v377
        %4992 = vmatprep.subr.mxu0 %v372
        %4993 = vmatpush1.msra.mxu0 %v371
        %4994 = vmatprep.subr.mxu0 %v366
        %4995 = vmatpush1.msra.mxu0 %v365
        %4996 = vmatprep.subr.mxu0 %v360
        %4997 = vmatpush1.msra.mxu0 %v359
        %4998 = vmatprep.subr.mxu0 %v354
        %4999 = vmatpush1.msra.mxu0 %v353
        %5000 = vmatprep.subr.mxu0 %v348
        %5001 = vmatpush1.msra.mxu0 %v347
        %5002 = vmatprep.subr.mxu0 0.0
        %5003 = vmatpush2.msra.mxu0 0.0
        %5004 = vmatprep.subr.mxu0 0.0
        %5005 = vmatpush2.msra.mxu0 0.0
        %5006 = vmatprep.subr.mxu0 0.0
        %5007 = vmatpush2.msra.mxu0 0.0
        %5008 = vmatprep.subr.mxu0 0.0
        %5009 = vmatpush2.msra.mxu0 0.0
        %5010 = vmatprep.subr.mxu0 0.0
        %5011 = vmatpush2.msra.mxu0 0.0
        %5012 = vmatprep.subr.mxu0 0.0
        %5013 = vmatpush2.msra.mxu0 0.0
        %5014 = vmatprep.subr.mxu0 0.0
        %5015 = vmatpush2.msra.mxu0 0.0
        %5016 = vmatprep.subr.mxu0 0.0
        %5017 = vmatpush2.msra.mxu0 0.0
        %5018 = vmatprep.subr.mxu0 0.0
        %5019 = vmatpush2.msra.mxu0 0.0
        %5020 = vmatprep.subr.mxu0 0.0
        %5021 = vmatpush2.msra.mxu0 0.0
        %5022 = vmatprep.subr.mxu0 0.0
        %5023 = vmatpush2.msra.mxu0 0.0
        %5024 = vmatprep.subr.mxu0 0.0
        %5025 = vmatpush2.msra.mxu0 0.0
        %5026 = vmatprep.subr.mxu0 0.0
        %5027 = vmatpush2.msra.mxu0 0.0
        %5028 = vmatprep.subr.mxu0 0.0
        %5029 = vmatpush2.msra.mxu0 0.0
        %5030 = vmatprep.subr.mxu0 0.0
        %5031 = vmatpush2.msra.mxu0 0.0
        %5032 = vmatprep.subr.mxu0 0.0
        %5033 = vmatpush2.msra.mxu0 0.0
        %5034 = vmatprep.mubr.f32.mxu0 0.0
        %5035 = vmatmul.mubr.f32.gmra.mxu0 %v4819
        %v5036 = vpop.f32.mrf.mxu0
        %v5037 = vadd.f32 0.0, %v5036
        %v5038 = vpop.f32.mrf.mxu0
        %v5039 = vadd.f32 0.0, %v5038
        %5040 = vdwg.mxu0
        %5041 = vmatprep.subr.mxu0 %v440
        %5042 = vmatpush1.msra.mxu0 %v439
        %5043 = vmatprep.subr.mxu0 %v434
        %5044 = vmatpush1.msra.mxu0 %v433
        %5045 = vmatprep.subr.mxu0 %v428
        %5046 = vmatpush1.msra.mxu0 %v427
        %5047 = vmatprep.subr.mxu0 %v422
        %5048 = vmatpush1.msra.mxu0 %v421
        %5049 = vmatprep.subr.mxu0 %v416
        %5050 = vmatpush1.msra.mxu0 %v415
        %5051 = vmatprep.subr.mxu0 %v410
        %5052 = vmatpush1.msra.mxu0 %v409
        %5053 = vmatprep.subr.mxu0 %v404
        %5054 = vmatpush1.msra.mxu0 %v403
        %5055 = vmatprep.subr.mxu0 %v398
        %5056 = vmatpush1.msra.mxu0 %v397
        %5057 = vmatprep.subr.mxu0 %v392
        %5058 = vmatpush1.msra.mxu0 %v391
        %5059 = vmatprep.subr.mxu0 %v386
        %5060 = vmatpush1.msra.mxu0 %v385
        %5061 = vmatprep.subr.mxu0 %v380
        %5062 = vmatpush1.msra.mxu0 %v379
        %5063 = vmatprep.subr.mxu0 %v374
        %5064 = vmatpush1.msra.mxu0 %v373
        %5065 = vmatprep.subr.mxu0 %v368
        %5066 = vmatpush1.msra.mxu0 %v367
        %5067 = vmatprep.subr.mxu0 %v362
        %5068 = vmatpush1.msra.mxu0 %v361
        %5069 = vmatprep.subr.mxu0 %v356
        %5070 = vmatpush1.msra.mxu0 %v355
        %5071 = vmatprep.subr.mxu0 %v350
        %5072 = vmatpush1.msra.mxu0 %v349
        %5073 = vmatprep.subr.mxu0 0.0
        %5074 = vmatpush2.msra.mxu0 0.0
        %5075 = vmatprep.subr.mxu0 0.0
        %5076 = vmatpush2.msra.mxu0 0.0
        %5077 = vmatprep.subr.mxu0 0.0
        %5078 = vmatpush2.msra.mxu0 0.0
        %5079 = vmatprep.subr.mxu0 0.0
        %5080 = vmatpush2.msra.mxu0 0.0
        %5081 = vmatprep.subr.mxu0 0.0
        %5082 = vmatpush2.msra.mxu0 0.0
        %5083 = vmatprep.subr.mxu0 0.0
        %5084 = vmatpush2.msra.mxu0 0.0
        %5085 = vmatprep.subr.mxu0 0.0
        %5086 = vmatpush2.msra.mxu0 0.0
        %5087 = vmatprep.subr.mxu0 0.0
        %5088 = vmatpush2.msra.mxu0 0.0
        %5089 = vmatprep.subr.mxu0 0.0
        %5090 = vmatpush2.msra.mxu0 0.0
        %5091 = vmatprep.subr.mxu0 0.0
        %5092 = vmatpush2.msra.mxu0 0.0
        %5093 = vmatprep.subr.mxu0 0.0
        %5094 = vmatpush2.msra.mxu0 0.0
        %5095 = vmatprep.subr.mxu0 0.0
        %5096 = vmatpush2.msra.mxu0 0.0
        %5097 = vmatprep.subr.mxu0 0.0
        %5098 = vmatpush2.msra.mxu0 0.0
        %5099 = vmatprep.subr.mxu0 0.0
        %5100 = vmatpush2.msra.mxu0 0.0
        %5101 = vmatprep.subr.mxu0 0.0
        %5102 = vmatpush2.msra.mxu0 0.0
        %5103 = vmatprep.subr.mxu0 0.0
        %5104 = vmatpush2.msra.mxu0 0.0
        %5105 = vmatprep.mubr.f32.mxu0 0.0
        %5106 = vmatmul.mubr.f32.gmra.mxu0 %v4819
        %v5107 = vpop.f32.mrf.mxu0
        %v5108 = vadd.f32 0.0, %v5107
        %v5109 = vpop.f32.mrf.mxu0
        %v5110 = vadd.f32 0.0, %v5109
        %5111 = vdwg.mxu0
        %5112 = vmatprep.subr.mxu0 %v532
        %5113 = vmatpush1.msra.mxu0 %v531
        %5114 = vmatprep.subr.mxu0 %v526
        %5115 = vmatpush1.msra.mxu0 %v525
        %5116 = vmatprep.subr.mxu0 %v520
        %5117 = vmatpush1.msra.mxu0 %v519
        %5118 = vmatprep.subr.mxu0 %v514
        %5119 = vmatpush1.msra.mxu0 %v513
        %5120 = vmatprep.subr.mxu0 %v508
        %5121 = vmatpush1.msra.mxu0 %v507
        %5122 = vmatprep.subr.mxu0 %v502
        %5123 = vmatpush1.msra.mxu0 %v501
        %5124 = vmatprep.subr.mxu0 %v496
        %5125 = vmatpush1.msra.mxu0 %v495
        %5126 = vmatprep.subr.mxu0 %v490
        %5127 = vmatpush1.msra.mxu0 %v489
        %5128 = vmatprep.subr.mxu0 %v484
        %5129 = vmatpush1.msra.mxu0 %v483
        %5130 = vmatprep.subr.mxu0 %v478
        %5131 = vmatpush1.msra.mxu0 %v477
        %5132 = vmatprep.subr.mxu0 %v472
        %5133 = vmatpush1.msra.mxu0 %v471
        %5134 = vmatprep.subr.mxu0 %v466
        %5135 = vmatpush1.msra.mxu0 %v465
        %5136 = vmatprep.subr.mxu0 %v460
        %5137 = vmatpush1.msra.mxu0 %v459
        %5138 = vmatprep.subr.mxu0 %v454
        %5139 = vmatpush1.msra.mxu0 %v453
        %5140 = vmatprep.subr.mxu0 %v448
        %5141 = vmatpush1.msra.mxu0 %v447
        %5142 = vmatprep.subr.mxu0 %v442
        %5143 = vmatpush1.msra.mxu0 %v441
        %5144 = vmatprep.subr.mxu0 0.0
        %5145 = vmatpush2.msra.mxu0 0.0
        %5146 = vmatprep.subr.mxu0 0.0
        %5147 = vmatpush2.msra.mxu0 0.0
        %5148 = vmatprep.subr.mxu0 0.0
        %5149 = vmatpush2.msra.mxu0 0.0
        %5150 = vmatprep.subr.mxu0 0.0
        %5151 = vmatpush2.msra.mxu0 0.0
        %5152 = vmatprep.subr.mxu0 0.0
        %5153 = vmatpush2.msra.mxu0 0.0
        %5154 = vmatprep.subr.mxu0 0.0
        %5155 = vmatpush2.msra.mxu0 0.0
        %5156 = vmatprep.subr.mxu0 0.0
        %5157 = vmatpush2.msra.mxu0 0.0
        %5158 = vmatprep.subr.mxu0 0.0
        %5159 = vmatpush2.msra.mxu0 0.0
        %5160 = vmatprep.subr.mxu0 0.0
        %5161 = vmatpush2.msra.mxu0 0.0
        %5162 = vmatprep.subr.mxu0 0.0
        %5163 = vmatpush2.msra.mxu0 0.0
        %5164 = vmatprep.subr.mxu0 0.0
        %5165 = vmatpush2.msra.mxu0 0.0
        %5166 = vmatprep.subr.mxu0 0.0
        %5167 = vmatpush2.msra.mxu0 0.0
        %5168 = vmatprep.subr.mxu0 0.0
        %5169 = vmatpush2.msra.mxu0 0.0
        %5170 = vmatprep.subr.mxu0 0.0
        %5171 = vmatpush2.msra.mxu0 0.0
        %5172 = vmatprep.subr.mxu0 0.0
        %5173 = vmatpush2.msra.mxu0 0.0
        %5174 = vmatprep.subr.mxu0 0.0
        %5175 = vmatpush2.msra.mxu0 0.0
        %5176 = vmatprep.mubr.f32.mxu0 0.0
        %5177 = vmatmul.mubr.f32.gmra.mxu0 %v4821
        %v5178 = vpop.f32.mrf.mxu0
        %v5179 = vadd.f32 0.0, %v5178
        %v5180 = vpop.f32.mrf.mxu0
        %v5181 = vadd.f32 0.0, %v5180
        %5182 = vdwg.mxu0
        %5183 = vmatprep.subr.mxu0 %v534
        %5184 = vmatpush1.msra.mxu0 %v533
        %5185 = vmatprep.subr.mxu0 %v528
        %5186 = vmatpush1.msra.mxu0 %v527
        %5187 = vmatprep.subr.mxu0 %v522
        %5188 = vmatpush1.msra.mxu0 %v521
        %5189 = vmatprep.subr.mxu0 %v516
        %5190 = vmatpush1.msra.mxu0 %v515
        %5191 = vmatprep.subr.mxu0 %v510
        %5192 = vmatpush1.msra.mxu0 %v509
        %5193 = vmatprep.subr.mxu0 %v504
        %5194 = vmatpush1.msra.mxu0 %v503
        %5195 = vmatprep.subr.mxu0 %v498
        %5196 = vmatpush1.msra.mxu0 %v497
        %5197 = vmatprep.subr.mxu0 %v492
        %5198 = vmatpush1.msra.mxu0 %v491
        %5199 = vmatprep.subr.mxu0 %v486
        %5200 = vmatpush1.msra.mxu0 %v485
        %5201 = vmatprep.subr.mxu0 %v480
        %5202 = vmatpush1.msra.mxu0 %v479
        %5203 = vmatprep.subr.mxu0 %v474
        %5204 = vmatpush1.msra.mxu0 %v473
        %5205 = vmatprep.subr.mxu0 %v468
        %5206 = vmatpush1.msra.mxu0 %v467
        %5207 = vmatprep.subr.mxu0 %v462
        %5208 = vmatpush1.msra.mxu0 %v461
        %5209 = vmatprep.subr.mxu0 %v456
        %5210 = vmatpush1.msra.mxu0 %v455
        %5211 = vmatprep.subr.mxu0 %v450
        %5212 = vmatpush1.msra.mxu0 %v449
        %5213 = vmatprep.subr.mxu0 %v444
        %5214 = vmatpush1.msra.mxu0 %v443
        %5215 = vmatprep.subr.mxu0 0.0
        %5216 = vmatpush2.msra.mxu0 0.0
        %5217 = vmatprep.subr.mxu0 0.0
        %5218 = vmatpush2.msra.mxu0 0.0
        %5219 = vmatprep.subr.mxu0 0.0
        %5220 = vmatpush2.msra.mxu0 0.0
        %5221 = vmatprep.subr.mxu0 0.0
        %5222 = vmatpush2.msra.mxu0 0.0
        %5223 = vmatprep.subr.mxu0 0.0
        %5224 = vmatpush2.msra.mxu0 0.0
        %5225 = vmatprep.subr.mxu0 0.0
        %5226 = vmatpush2.msra.mxu0 0.0
        %5227 = vmatprep.subr.mxu0 0.0
        %5228 = vmatpush2.msra.mxu0 0.0
        %5229 = vmatprep.subr.mxu0 0.0
        %5230 = vmatpush2.msra.mxu0 0.0
        %5231 = vmatprep.subr.mxu0 0.0
        %5232 = vmatpush2.msra.mxu0 0.0
        %5233 = vmatprep.subr.mxu0 0.0
        %5234 = vmatpush2.msra.mxu0 0.0
        %5235 = vmatprep.subr.mxu0 0.0
        %5236 = vmatpush2.msra.mxu0 0.0
        %5237 = vmatprep.subr.mxu0 0.0
        %5238 = vmatpush2.msra.mxu0 0.0
        %5239 = vmatprep.subr.mxu0 0.0
        %5240 = vmatpush2.msra.mxu0 0.0
        %5241 = vmatprep.subr.mxu0 0.0
        %5242 = vmatpush2.msra.mxu0 0.0
        %5243 = vmatprep.subr.mxu0 0.0
        %5244 = vmatpush2.msra.mxu0 0.0
        %5245 = vmatprep.subr.mxu0 0.0
        %5246 = vmatpush2.msra.mxu0 0.0
        %5247 = vmatprep.mubr.f32.mxu0 0.0
        %5248 = vmatmul.mubr.f32.gmra.mxu0 %v4821
        %v5249 = vpop.f32.mrf.mxu0
        %v5250 = vadd.f32 0.0, %v5249
        %v5251 = vpop.f32.mrf.mxu0
        %v5252 = vadd.f32 0.0, %v5251
        %5253 = vdwg.mxu0
        %5254 = vmatprep.subr.mxu0 %v536
        %5255 = vmatpush1.msra.mxu0 %v535
        %5256 = vmatprep.subr.mxu0 %v530
        %5257 = vmatpush1.msra.mxu0 %v529
        %5258 = vmatprep.subr.mxu0 %v524
        %5259 = vmatpush1.msra.mxu0 %v523
        %5260 = vmatprep.subr.mxu0 %v518
        %5261 = vmatpush1.msra.mxu0 %v517
        %5262 = vmatprep.subr.mxu0 %v512
        %5263 = vmatpush1.msra.mxu0 %v511
        %5264 = vmatprep.subr.mxu0 %v506
        %5265 = vmatpush1.msra.mxu0 %v505
        %5266 = vmatprep.subr.mxu0 %v500
        %5267 = vmatpush1.msra.mxu0 %v499
        %5268 = vmatprep.subr.mxu0 %v494
        %5269 = vmatpush1.msra.mxu0 %v493
        %5270 = vmatprep.subr.mxu0 %v488
        %5271 = vmatpush1.msra.mxu0 %v487
        %5272 = vmatprep.subr.mxu0 %v482
        %5273 = vmatpush1.msra.mxu0 %v481
        %5274 = vmatprep.subr.mxu0 %v476
        %5275 = vmatpush1.msra.mxu0 %v475
        %5276 = vmatprep.subr.mxu0 %v470
        %5277 = vmatpush1.msra.mxu0 %v469
        %5278 = vmatprep.subr.mxu0 %v464
        %5279 = vmatpush1.msra.mxu0 %v463
        %5280 = vmatprep.subr.mxu0 %v458
        %5281 = vmatpush1.msra.mxu0 %v457
        %5282 = vmatprep.subr.mxu0 %v452
        %5283 = vmatpush1.msra.mxu0 %v451
        %5284 = vmatprep.subr.mxu0 %v446
        %5285 = vmatpush1.msra.mxu0 %v445
        %5286 = vmatprep.subr.mxu0 0.0
        %5287 = vmatpush2.msra.mxu0 0.0
        %5288 = vmatprep.subr.mxu0 0.0
        %5289 = vmatpush2.msra.mxu0 0.0
        %5290 = vmatprep.subr.mxu0 0.0
        %5291 = vmatpush2.msra.mxu0 0.0
        %5292 = vmatprep.subr.mxu0 0.0
        %5293 = vmatpush2.msra.mxu0 0.0
        %5294 = vmatprep.subr.mxu0 0.0
        %5295 = vmatpush2.msra.mxu0 0.0
        %5296 = vmatprep.subr.mxu0 0.0
        %5297 = vmatpush2.msra.mxu0 0.0
        %5298 = vmatprep.subr.mxu0 0.0
        %5299 = vmatpush2.msra.mxu0 0.0
        %5300 = vmatprep.subr.mxu0 0.0
        %5301 = vmatpush2.msra.mxu0 0.0
        %5302 = vmatprep.subr.mxu0 0.0
        %5303 = vmatpush2.msra.mxu0 0.0
        %5304 = vmatprep.subr.mxu0 0.0
        %5305 = vmatpush2.msra.mxu0 0.0
        %5306 = vmatprep.subr.mxu0 0.0
        %5307 = vmatpush2.msra.mxu0 0.0
        %5308 = vmatprep.subr.mxu0 0.0
        %5309 = vmatpush2.msra.mxu0 0.0
        %5310 = vmatprep.subr.mxu0 0.0
        %5311 = vmatpush2.msra.mxu0 0.0
        %5312 = vmatprep.subr.mxu0 0.0
        %5313 = vmatpush2.msra.mxu0 0.0
        %5314 = vmatprep.subr.mxu0 0.0
        %5315 = vmatpush2.msra.mxu0 0.0
        %5316 = vmatprep.subr.mxu0 0.0
        %5317 = vmatpush2.msra.mxu0 0.0
        %5318 = vmatprep.mubr.f32.mxu0 0.0
        %5319 = vmatmul.mubr.f32.gmra.mxu0 %v4821
        %v5320 = vpop.f32.mrf.mxu0
        %v5321 = vadd.f32 0.0, %v5320
        %v5322 = vpop.f32.mrf.mxu0
        %v5323 = vadd.f32 0.0, %v5322
        %5324 = vdwg.mxu0
        %5325 = vmatprep.subr.mxu0 %v628
        %5326 = vmatpush1.msra.mxu0 %v627
        %5327 = vmatprep.subr.mxu0 %v622
        %5328 = vmatpush1.msra.mxu0 %v621
        %5329 = vmatprep.subr.mxu0 %v616
        %5330 = vmatpush1.msra.mxu0 %v615
        %5331 = vmatprep.subr.mxu0 %v610
        %5332 = vmatpush1.msra.mxu0 %v609
        %5333 = vmatprep.subr.mxu0 %v604
        %5334 = vmatpush1.msra.mxu0 %v603
        %5335 = vmatprep.subr.mxu0 %v598
        %5336 = vmatpush1.msra.mxu0 %v597
        %5337 = vmatprep.subr.mxu0 %v592
        %5338 = vmatpush1.msra.mxu0 %v591
        %5339 = vmatprep.subr.mxu0 %v586
        %5340 = vmatpush1.msra.mxu0 %v585
        %5341 = vmatprep.subr.mxu0 %v580
        %5342 = vmatpush1.msra.mxu0 %v579
        %5343 = vmatprep.subr.mxu0 %v574
        %5344 = vmatpush1.msra.mxu0 %v573
        %5345 = vmatprep.subr.mxu0 %v568
        %5346 = vmatpush1.msra.mxu0 %v567
        %5347 = vmatprep.subr.mxu0 %v562
        %5348 = vmatpush1.msra.mxu0 %v561
        %5349 = vmatprep.subr.mxu0 %v556
        %5350 = vmatpush1.msra.mxu0 %v555
        %5351 = vmatprep.subr.mxu0 %v550
        %5352 = vmatpush1.msra.mxu0 %v549
        %5353 = vmatprep.subr.mxu0 %v544
        %5354 = vmatpush1.msra.mxu0 %v543
        %5355 = vmatprep.subr.mxu0 %v538
        %5356 = vmatpush1.msra.mxu0 %v537
        %5357 = vmatprep.subr.mxu0 0.0
        %5358 = vmatpush2.msra.mxu0 0.0
        %5359 = vmatprep.subr.mxu0 0.0
        %5360 = vmatpush2.msra.mxu0 0.0
        %5361 = vmatprep.subr.mxu0 0.0
        %5362 = vmatpush2.msra.mxu0 0.0
        %5363 = vmatprep.subr.mxu0 0.0
        %5364 = vmatpush2.msra.mxu0 0.0
        %5365 = vmatprep.subr.mxu0 0.0
        %5366 = vmatpush2.msra.mxu0 0.0
        %5367 = vmatprep.subr.mxu0 0.0
        %5368 = vmatpush2.msra.mxu0 0.0
        %5369 = vmatprep.subr.mxu0 0.0
        %5370 = vmatpush2.msra.mxu0 0.0
        %5371 = vmatprep.subr.mxu0 0.0
        %5372 = vmatpush2.msra.mxu0 0.0
        %5373 = vmatprep.subr.mxu0 0.0
        %5374 = vmatpush2.msra.mxu0 0.0
        %5375 = vmatprep.subr.mxu0 0.0
        %5376 = vmatpush2.msra.mxu0 0.0
        %5377 = vmatprep.subr.mxu0 0.0
        %5378 = vmatpush2.msra.mxu0 0.0
        %5379 = vmatprep.subr.mxu0 0.0
        %5380 = vmatpush2.msra.mxu0 0.0
        %5381 = vmatprep.subr.mxu0 0.0
        %5382 = vmatpush2.msra.mxu0 0.0
        %5383 = vmatprep.subr.mxu0 0.0
        %5384 = vmatpush2.msra.mxu0 0.0
        %5385 = vmatprep.subr.mxu0 0.0
        %5386 = vmatpush2.msra.mxu0 0.0
        %5387 = vmatprep.subr.mxu0 0.0
        %5388 = vmatpush2.msra.mxu0 0.0
        %5389 = vmatprep.mubr.f32.mxu0 0.0
        %5390 = vmatmul.mubr.f32.gmra.mxu0 %v4823
        %v5391 = vpop.f32.mrf.mxu0
        %v5392 = vadd.f32 0.0, %v5391
        %v5393 = vpop.f32.mrf.mxu0
        %v5394 = vadd.f32 0.0, %v5393
        %5395 = vdwg.mxu0
        %5396 = vmatprep.subr.mxu0 %v630
        %5397 = vmatpush1.msra.mxu0 %v629
        %5398 = vmatprep.subr.mxu0 %v624
        %5399 = vmatpush1.msra.mxu0 %v623
        %5400 = vmatprep.subr.mxu0 %v618
        %5401 = vmatpush1.msra.mxu0 %v617
        %5402 = vmatprep.subr.mxu0 %v612
        %5403 = vmatpush1.msra.mxu0 %v611
        %5404 = vmatprep.subr.mxu0 %v606
        %5405 = vmatpush1.msra.mxu0 %v605
        %5406 = vmatprep.subr.mxu0 %v600
        %5407 = vmatpush1.msra.mxu0 %v599
        %5408 = vmatprep.subr.mxu0 %v594
        %5409 = vmatpush1.msra.mxu0 %v593
        %5410 = vmatprep.subr.mxu0 %v588
        %5411 = vmatpush1.msra.mxu0 %v587
        %5412 = vmatprep.subr.mxu0 %v582
        %5413 = vmatpush1.msra.mxu0 %v581
        %5414 = vmatprep.subr.mxu0 %v576
        %5415 = vmatpush1.msra.mxu0 %v575
        %5416 = vmatprep.subr.mxu0 %v570
        %5417 = vmatpush1.msra.mxu0 %v569
        %5418 = vmatprep.subr.mxu0 %v564
        %5419 = vmatpush1.msra.mxu0 %v563
        %5420 = vmatprep.subr.mxu0 %v558
        %5421 = vmatpush1.msra.mxu0 %v557
        %5422 = vmatprep.subr.mxu0 %v552
        %5423 = vmatpush1.msra.mxu0 %v551
        %5424 = vmatprep.subr.mxu0 %v546
        %5425 = vmatpush1.msra.mxu0 %v545
        %5426 = vmatprep.subr.mxu0 %v540
        %5427 = vmatpush1.msra.mxu0 %v539
        %5428 = vmatprep.subr.mxu0 0.0
        %5429 = vmatpush2.msra.mxu0 0.0
        %5430 = vmatprep.subr.mxu0 0.0
        %5431 = vmatpush2.msra.mxu0 0.0
        %5432 = vmatprep.subr.mxu0 0.0
        %5433 = vmatpush2.msra.mxu0 0.0
        %5434 = vmatprep.subr.mxu0 0.0
        %5435 = vmatpush2.msra.mxu0 0.0
        %5436 = vmatprep.subr.mxu0 0.0
        %5437 = vmatpush2.msra.mxu0 0.0
        %5438 = vmatprep.subr.mxu0 0.0
        %5439 = vmatpush2.msra.mxu0 0.0
        %5440 = vmatprep.subr.mxu0 0.0
        %5441 = vmatpush2.msra.mxu0 0.0
        %5442 = vmatprep.subr.mxu0 0.0
        %5443 = vmatpush2.msra.mxu0 0.0
        %5444 = vmatprep.subr.mxu0 0.0
        %5445 = vmatpush2.msra.mxu0 0.0
        %5446 = vmatprep.subr.mxu0 0.0
        %5447 = vmatpush2.msra.mxu0 0.0
        %5448 = vmatprep.subr.mxu0 0.0
        %5449 = vmatpush2.msra.mxu0 0.0
        %5450 = vmatprep.subr.mxu0 0.0
        %5451 = vmatpush2.msra.mxu0 0.0
        %5452 = vmatprep.subr.mxu0 0.0
        %5453 = vmatpush2.msra.mxu0 0.0
        %5454 = vmatprep.subr.mxu0 0.0
        %5455 = vmatpush2.msra.mxu0 0.0
        %5456 = vmatprep.subr.mxu0 0.0
        %5457 = vmatpush2.msra.mxu0 0.0
        %5458 = vmatprep.subr.mxu0 0.0
        %5459 = vmatpush2.msra.mxu0 0.0
        %5460 = vmatprep.mubr.f32.mxu0 0.0
        %5461 = vmatmul.mubr.f32.gmra.mxu0 %v4823
        %v5462 = vpop.f32.mrf.mxu0
        %v5463 = vadd.f32 0.0, %v5462
        %v5464 = vpop.f32.mrf.mxu0
        %v5465 = vadd.f32 0.0, %v5464
        %5466 = vdwg.mxu0
        %5467 = vmatprep.subr.mxu0 %v632
        %5468 = vmatpush1.msra.mxu0 %v631
        %5469 = vmatprep.subr.mxu0 %v626
        %5470 = vmatpush1.msra.mxu0 %v625
        %5471 = vmatprep.subr.mxu0 %v620
        %5472 = vmatpush1.msra.mxu0 %v619
        %5473 = vmatprep.subr.mxu0 %v614
        %5474 = vmatpush1.msra.mxu0 %v613
        %5475 = vmatprep.subr.mxu0 %v608
        %5476 = vmatpush1.msra.mxu0 %v607
        %5477 = vmatprep.subr.mxu0 %v602
        %5478 = vmatpush1.msra.mxu0 %v601
        %5479 = vmatprep.subr.mxu0 %v596
        %5480 = vmatpush1.msra.mxu0 %v595
        %5481 = vmatprep.subr.mxu0 %v590
        %5482 = vmatpush1.msra.mxu0 %v589
        %5483 = vmatprep.subr.mxu0 %v584
        %5484 = vmatpush1.msra.mxu0 %v583
        %5485 = vmatprep.subr.mxu0 %v578
        %5486 = vmatpush1.msra.mxu0 %v577
        %5487 = vmatprep.subr.mxu0 %v572
        %5488 = vmatpush1.msra.mxu0 %v571
        %5489 = vmatprep.subr.mxu0 %v566
        %5490 = vmatpush1.msra.mxu0 %v565
        %5491 = vmatprep.subr.mxu0 %v560
        %5492 = vmatpush1.msra.mxu0 %v559
        %5493 = vmatprep.subr.mxu0 %v554
        %5494 = vmatpush1.msra.mxu0 %v553
        %5495 = vmatprep.subr.mxu0 %v548
        %5496 = vmatpush1.msra.mxu0 %v547
        %5497 = vmatprep.subr.mxu0 %v542
        %5498 = vmatpush1.msra.mxu0 %v541
        %5499 = vmatprep.subr.mxu0 0.0
        %5500 = vmatpush2.msra.mxu0 0.0
        %5501 = vmatprep.subr.mxu0 0.0
        %5502 = vmatpush2.msra.mxu0 0.0
        %5503 = vmatprep.subr.mxu0 0.0
        %5504 = vmatpush2.msra.mxu0 0.0
        %5505 = vmatprep.subr.mxu0 0.0
        %5506 = vmatpush2.msra.mxu0 0.0
        %5507 = vmatprep.subr.mxu0 0.0
        %5508 = vmatpush2.msra.mxu0 0.0
        %5509 = vmatprep.subr.mxu0 0.0
        %5510 = vmatpush2.msra.mxu0 0.0
        %5511 = vmatprep.subr.mxu0 0.0
        %5512 = vmatpush2.msra.mxu0 0.0
        %5513 = vmatprep.subr.mxu0 0.0
        %5514 = vmatpush2.msra.mxu0 0.0
        %5515 = vmatprep.subr.mxu0 0.0
        %5516 = vmatpush2.msra.mxu0 0.0
        %5517 = vmatprep.subr.mxu0 0.0
        %5518 = vmatpush2.msra.mxu0 0.0
        %5519 = vmatprep.subr.mxu0 0.0
        %5520 = vmatpush2.msra.mxu0 0.0
        %5521 = vmatprep.subr.mxu0 0.0
        %5522 = vmatpush2.msra.mxu0 0.0
        %5523 = vmatprep.subr.mxu0 0.0
        %5524 = vmatpush2.msra.mxu0 0.0
        %5525 = vmatprep.subr.mxu0 0.0
        %5526 = vmatpush2.msra.mxu0 0.0
        %5527 = vmatprep.subr.mxu0 0.0
        %5528 = vmatpush2.msra.mxu0 0.0
        %5529 = vmatprep.subr.mxu0 0.0
        %5530 = vmatpush2.msra.mxu0 0.0
        %5531 = vmatprep.mubr.f32.mxu0 0.0
        %5532 = vmatmul.mubr.f32.gmra.mxu0 %v4823
        %v5533 = vpop.f32.mrf.mxu0
        %v5534 = vadd.f32 0.0, %v5533
        %v5535 = vpop.f32.mrf.mxu0
        %v5536 = vadd.f32 0.0, %v5535
        %5537 = vdwg.mxu0
        %5538 = vmatprep.subr.mxu0 %v724
        %5539 = vmatpush1.msra.mxu0 %v723
        %5540 = vmatprep.subr.mxu0 %v718
        %5541 = vmatpush1.msra.mxu0 %v717
        %5542 = vmatprep.subr.mxu0 %v712
        %5543 = vmatpush1.msra.mxu0 %v711
        %5544 = vmatprep.subr.mxu0 %v706
        %5545 = vmatpush1.msra.mxu0 %v705
        %5546 = vmatprep.subr.mxu0 %v700
        %5547 = vmatpush1.msra.mxu0 %v699
        %5548 = vmatprep.subr.mxu0 %v694
        %5549 = vmatpush1.msra.mxu0 %v693
        %5550 = vmatprep.subr.mxu0 %v688
        %5551 = vmatpush1.msra.mxu0 %v687
        %5552 = vmatprep.subr.mxu0 %v682
        %5553 = vmatpush1.msra.mxu0 %v681
        %5554 = vmatprep.subr.mxu0 %v676
        %5555 = vmatpush1.msra.mxu0 %v675
        %5556 = vmatprep.subr.mxu0 %v670
        %5557 = vmatpush1.msra.mxu0 %v669
        %5558 = vmatprep.subr.mxu0 %v664
        %5559 = vmatpush1.msra.mxu0 %v663
        %5560 = vmatprep.subr.mxu0 %v658
        %5561 = vmatpush1.msra.mxu0 %v657
        %5562 = vmatprep.subr.mxu0 %v652
        %5563 = vmatpush1.msra.mxu0 %v651
        %5564 = vmatprep.subr.mxu0 %v646
        %5565 = vmatpush1.msra.mxu0 %v645
        %5566 = vmatprep.subr.mxu0 %v640
        %5567 = vmatpush1.msra.mxu0 %v639
        %5568 = vmatprep.subr.mxu0 %v634
        %5569 = vmatpush1.msra.mxu0 %v633
        %5570 = vmatprep.subr.mxu0 0.0
        %5571 = vmatpush2.msra.mxu0 0.0
        %5572 = vmatprep.subr.mxu0 0.0
        %5573 = vmatpush2.msra.mxu0 0.0
        %5574 = vmatprep.subr.mxu0 0.0
        %5575 = vmatpush2.msra.mxu0 0.0
        %5576 = vmatprep.subr.mxu0 0.0
        %5577 = vmatpush2.msra.mxu0 0.0
        %5578 = vmatprep.subr.mxu0 0.0
        %5579 = vmatpush2.msra.mxu0 0.0
        %5580 = vmatprep.subr.mxu0 0.0
        %5581 = vmatpush2.msra.mxu0 0.0
        %5582 = vmatprep.subr.mxu0 0.0
        %5583 = vmatpush2.msra.mxu0 0.0
        %5584 = vmatprep.subr.mxu0 0.0
        %5585 = vmatpush2.msra.mxu0 0.0
        %5586 = vmatprep.subr.mxu0 0.0
        %5587 = vmatpush2.msra.mxu0 0.0
        %5588 = vmatprep.subr.mxu0 0.0
        %5589 = vmatpush2.msra.mxu0 0.0
        %5590 = vmatprep.subr.mxu0 0.0
        %5591 = vmatpush2.msra.mxu0 0.0
        %5592 = vmatprep.subr.mxu0 0.0
        %5593 = vmatpush2.msra.mxu0 0.0
        %5594 = vmatprep.subr.mxu0 0.0
        %5595 = vmatpush2.msra.mxu0 0.0
        %5596 = vmatprep.subr.mxu0 0.0
        %5597 = vmatpush2.msra.mxu0 0.0
        %5598 = vmatprep.subr.mxu0 0.0
        %5599 = vmatpush2.msra.mxu0 0.0
        %5600 = vmatprep.subr.mxu0 0.0
        %5601 = vmatpush2.msra.mxu0 0.0
        %5602 = vmatprep.mubr.f32.mxu0 0.0
        %5603 = vmatmul.mubr.f32.gmra.mxu0 %v4825
        %v5604 = vpop.f32.mrf.mxu0
        %v5605 = vadd.f32 0.0, %v5604
        %v5606 = vpop.f32.mrf.mxu0
        %v5607 = vadd.f32 0.0, %v5606
        %5608 = vdwg.mxu0
        %5609 = vmatprep.subr.mxu0 %v726
        %5610 = vmatpush1.msra.mxu0 %v725
        %5611 = vmatprep.subr.mxu0 %v720
        %5612 = vmatpush1.msra.mxu0 %v719
        %5613 = vmatprep.subr.mxu0 %v714
        %5614 = vmatpush1.msra.mxu0 %v713
        %5615 = vmatprep.subr.mxu0 %v708
        %5616 = vmatpush1.msra.mxu0 %v707
        %5617 = vmatprep.subr.mxu0 %v702
        %5618 = vmatpush1.msra.mxu0 %v701
        %5619 = vmatprep.subr.mxu0 %v696
        %5620 = vmatpush1.msra.mxu0 %v695
        %5621 = vmatprep.subr.mxu0 %v690
        %5622 = vmatpush1.msra.mxu0 %v689
        %5623 = vmatprep.subr.mxu0 %v684
        %5624 = vmatpush1.msra.mxu0 %v683
        %5625 = vmatprep.subr.mxu0 %v678
        %5626 = vmatpush1.msra.mxu0 %v677
        %5627 = vmatprep.subr.mxu0 %v672
        %5628 = vmatpush1.msra.mxu0 %v671
        %5629 = vmatprep.subr.mxu0 %v666
        %5630 = vmatpush1.msra.mxu0 %v665
        %5631 = vmatprep.subr.mxu0 %v660
        %5632 = vmatpush1.msra.mxu0 %v659
        %5633 = vmatprep.subr.mxu0 %v654
        %5634 = vmatpush1.msra.mxu0 %v653
        %5635 = vmatprep.subr.mxu0 %v648
        %5636 = vmatpush1.msra.mxu0 %v647
        %5637 = vmatprep.subr.mxu0 %v642
        %5638 = vmatpush1.msra.mxu0 %v641
        %5639 = vmatprep.subr.mxu0 %v636
        %5640 = vmatpush1.msra.mxu0 %v635
        %5641 = vmatprep.subr.mxu0 0.0
        %5642 = vmatpush2.msra.mxu0 0.0
        %5643 = vmatprep.subr.mxu0 0.0
        %5644 = vmatpush2.msra.mxu0 0.0
        %5645 = vmatprep.subr.mxu0 0.0
        %5646 = vmatpush2.msra.mxu0 0.0
        %5647 = vmatprep.subr.mxu0 0.0
        %5648 = vmatpush2.msra.mxu0 0.0
        %5649 = vmatprep.subr.mxu0 0.0
        %5650 = vmatpush2.msra.mxu0 0.0
        %5651 = vmatprep.subr.mxu0 0.0
        %5652 = vmatpush2.msra.mxu0 0.0
        %5653 = vmatprep.subr.mxu0 0.0
        %5654 = vmatpush2.msra.mxu0 0.0
        %5655 = vmatprep.subr.mxu0 0.0
        %5656 = vmatpush2.msra.mxu0 0.0
        %5657 = vmatprep.subr.mxu0 0.0
        %5658 = vmatpush2.msra.mxu0 0.0
        %5659 = vmatprep.subr.mxu0 0.0
        %5660 = vmatpush2.msra.mxu0 0.0
        %5661 = vmatprep.subr.mxu0 0.0
        %5662 = vmatpush2.msra.mxu0 0.0
        %5663 = vmatprep.subr.mxu0 0.0
        %5664 = vmatpush2.msra.mxu0 0.0
        %5665 = vmatprep.subr.mxu0 0.0
        %5666 = vmatpush2.msra.mxu0 0.0
        %5667 = vmatprep.subr.mxu0 0.0
        %5668 = vmatpush2.msra.mxu0 0.0
        %5669 = vmatprep.subr.mxu0 0.0
        %5670 = vmatpush2.msra.mxu0 0.0
        %5671 = vmatprep.subr.mxu0 0.0
        %5672 = vmatpush2.msra.mxu0 0.0
        %5673 = vmatprep.mubr.f32.mxu0 0.0
        %5674 = vmatmul.mubr.f32.gmra.mxu0 %v4825
        %v5675 = vpop.f32.mrf.mxu0
        %v5676 = vadd.f32 0.0, %v5675
        %v5677 = vpop.f32.mrf.mxu0
        %v5678 = vadd.f32 0.0, %v5677
        %5679 = vdwg.mxu0
        %5680 = vmatprep.subr.mxu0 %v728
        %5681 = vmatpush1.msra.mxu0 %v727
        %5682 = vmatprep.subr.mxu0 %v722
        %5683 = vmatpush1.msra.mxu0 %v721
        %5684 = vmatprep.subr.mxu0 %v716
        %5685 = vmatpush1.msra.mxu0 %v715
        %5686 = vmatprep.subr.mxu0 %v710
        %5687 = vmatpush1.msra.mxu0 %v709
        %5688 = vmatprep.subr.mxu0 %v704
        %5689 = vmatpush1.msra.mxu0 %v703
        %5690 = vmatprep.subr.mxu0 %v698
        %5691 = vmatpush1.msra.mxu0 %v697
        %5692 = vmatprep.subr.mxu0 %v692
        %5693 = vmatpush1.msra.mxu0 %v691
        %5694 = vmatprep.subr.mxu0 %v686
        %5695 = vmatpush1.msra.mxu0 %v685
        %5696 = vmatprep.subr.mxu0 %v680
        %5697 = vmatpush1.msra.mxu0 %v679
        %5698 = vmatprep.subr.mxu0 %v674
        %5699 = vmatpush1.msra.mxu0 %v673
        %5700 = vmatprep.subr.mxu0 %v668
        %5701 = vmatpush1.msra.mxu0 %v667
        %5702 = vmatprep.subr.mxu0 %v662
        %5703 = vmatpush1.msra.mxu0 %v661
        %5704 = vmatprep.subr.mxu0 %v656
        %5705 = vmatpush1.msra.mxu0 %v655
        %5706 = vmatprep.subr.mxu0 %v650
        %5707 = vmatpush1.msra.mxu0 %v649
        %5708 = vmatprep.subr.mxu0 %v644
        %5709 = vmatpush1.msra.mxu0 %v643
        %5710 = vmatprep.subr.mxu0 %v638
        %5711 = vmatpush1.msra.mxu0 %v637
        %5712 = vmatprep.subr.mxu0 0.0
        %5713 = vmatpush2.msra.mxu0 0.0
        %5714 = vmatprep.subr.mxu0 0.0
        %5715 = vmatpush2.msra.mxu0 0.0
        %5716 = vmatprep.subr.mxu0 0.0
        %5717 = vmatpush2.msra.mxu0 0.0
        %5718 = vmatprep.subr.mxu0 0.0
        %5719 = vmatpush2.msra.mxu0 0.0
        %5720 = vmatprep.subr.mxu0 0.0
        %5721 = vmatpush2.msra.mxu0 0.0
        %5722 = vmatprep.subr.mxu0 0.0
        %5723 = vmatpush2.msra.mxu0 0.0
        %5724 = vmatprep.subr.mxu0 0.0
        %5725 = vmatpush2.msra.mxu0 0.0
        %5726 = vmatprep.subr.mxu0 0.0
        %5727 = vmatpush2.msra.mxu0 0.0
        %5728 = vmatprep.subr.mxu0 0.0
        %5729 = vmatpush2.msra.mxu0 0.0
        %5730 = vmatprep.subr.mxu0 0.0
        %5731 = vmatpush2.msra.mxu0 0.0
        %5732 = vmatprep.subr.mxu0 0.0
        %5733 = vmatpush2.msra.mxu0 0.0
        %5734 = vmatprep.subr.mxu0 0.0
        %5735 = vmatpush2.msra.mxu0 0.0
        %5736 = vmatprep.subr.mxu0 0.0
        %5737 = vmatpush2.msra.mxu0 0.0
        %5738 = vmatprep.subr.mxu0 0.0
        %5739 = vmatpush2.msra.mxu0 0.0
        %5740 = vmatprep.subr.mxu0 0.0
        %5741 = vmatpush2.msra.mxu0 0.0
        %5742 = vmatprep.subr.mxu0 0.0
        %5743 = vmatpush2.msra.mxu0 0.0
        %5744 = vmatprep.mubr.f32.mxu0 0.0
        %5745 = vmatmul.mubr.f32.gmra.mxu0 %v4825
        %v5746 = vpop.f32.mrf.mxu0
        %v5747 = vadd.f32 0.0, %v5746
        %v5748 = vpop.f32.mrf.mxu0
        %v5749 = vadd.f32 0.0, %v5748
        %5750 = vdwg.mxu0
        %v5775 = vcombine.low %v4966, %v4968
        %v5776 = vcombine.low %v5037, %v5039
        %v5777 = vcombine.low %v5108, %v5110
        %v5779 = vunpack.c.l.s4 1966171168
        %v5780 = vunpack.c.0.s8 %v5779
        %v5781 = vlaneseq
        %v5782 = vshrl.u32 %v5781, 7
        %v5783 = vsub.s32 %v5780, %v5782
        %v5784 = vrot.slane %v5775, %v5783
        %v5786 = vunpack.c.l.s4 1966171168
        %v5787 = vunpack.c.0.s8 %v5786
        %v5788 = vlaneseq
        %v5789 = vshrl.u32 %v5788, 7
        %v5790 = vsub.s32 %v5787, %v5789
        %v5791 = vrot.slane %v5776, %v5790
        %v5793 = vunpack.c.l.s4 1966171168
        %v5794 = vunpack.c.0.s8 %v5793
        %v5795 = vlaneseq
        %v5796 = vshrl.u32 %v5795, 7
        %v5797 = vsub.s32 %v5794, %v5796
        %v5798 = vrot.slane %v5777, %v5797
        %v5799 = vcombine.low %v5784, %v5791
        %v5801 = vunpack.c.l.s4 1966171168
        %v5802 = vunpack.c.0.s8 %v5801
        %v5803 = vlaneseq
        %v5804 = vshrl.u32 %v5803, 7
        %v5805 = vsub.s32 %v5802, %v5804
        %v5806 = vrot.slane %v5799, %v5805
        %v5808 = vunpack.c.l.s4 1966171168
        %v5809 = vunpack.c.0.s8 %v5808
        %v5810 = vlaneseq
        %v5811 = vshrl.u32 %v5810, 7
        %v5812 = vsub.s32 %v5809, %v5811
        %v5813 = vrot.slane %v5798, %v5812
        %v5814 = vcombine.low %v5806, %v5813
        %v5815 = vcombine.low %v5179, %v5181
        %v5816 = vcombine.low %v5250, %v5252
        %v5817 = vcombine.low %v5321, %v5323
        %v5819 = vunpack.c.l.s4 1966171168
        %v5820 = vunpack.c.0.s8 %v5819
        %v5821 = vlaneseq
        %v5822 = vshrl.u32 %v5821, 7
        %v5823 = vsub.s32 %v5820, %v5822
        %v5824 = vrot.slane %v5815, %v5823
        %v5826 = vunpack.c.l.s4 1966171168
        %v5827 = vunpack.c.0.s8 %v5826
        %v5828 = vlaneseq
        %v5829 = vshrl.u32 %v5828, 7
        %v5830 = vsub.s32 %v5827, %v5829
        %v5831 = vrot.slane %v5816, %v5830
        %v5833 = vunpack.c.l.s4 1966171168
        %v5834 = vunpack.c.0.s8 %v5833
        %v5835 = vlaneseq
        %v5836 = vshrl.u32 %v5835, 7
        %v5837 = vsub.s32 %v5834, %v5836
        %v5838 = vrot.slane %v5817, %v5837
        %v5839 = vcombine.low %v5824, %v5831
        %v5841 = vunpack.c.l.s4 1966171168
        %v5842 = vunpack.c.0.s8 %v5841
        %v5843 = vlaneseq
        %v5844 = vshrl.u32 %v5843, 7
        %v5845 = vsub.s32 %v5842, %v5844
        %v5846 = vrot.slane %v5839, %v5845
        %v5848 = vunpack.c.l.s4 1966171168
        %v5849 = vunpack.c.0.s8 %v5848
        %v5850 = vlaneseq
        %v5851 = vshrl.u32 %v5850, 7
        %v5852 = vsub.s32 %v5849, %v5851
        %v5853 = vrot.slane %v5838, %v5852
        %v5854 = vcombine.low %v5846, %v5853
        %v5855 = vcombine.low %v5392, %v5394
        %v5856 = vcombine.low %v5463, %v5465
        %v5857 = vcombine.low %v5534, %v5536
        %v5859 = vunpack.c.l.s4 1966171168
        %v5860 = vunpack.c.0.s8 %v5859
        %v5861 = vlaneseq
        %v5862 = vshrl.u32 %v5861, 7
        %v5863 = vsub.s32 %v5860, %v5862
        %v5864 = vrot.slane %v5855, %v5863
        %v5866 = vunpack.c.l.s4 1966171168
        %v5867 = vunpack.c.0.s8 %v5866
        %v5868 = vlaneseq
        %v5869 = vshrl.u32 %v5868, 7
        %v5870 = vsub.s32 %v5867, %v5869
        %v5871 = vrot.slane %v5856, %v5870
        %v5873 = vunpack.c.l.s4 1966171168
        %v5874 = vunpack.c.0.s8 %v5873
        %v5875 = vlaneseq
        %v5876 = vshrl.u32 %v5875, 7
        %v5877 = vsub.s32 %v5874, %v5876
        %v5878 = vrot.slane %v5857, %v5877
        %v5879 = vcombine.low %v5864, %v5871
        %v5881 = vunpack.c.l.s4 1966171168
        %v5882 = vunpack.c.0.s8 %v5881
        %v5883 = vlaneseq
        %v5884 = vshrl.u32 %v5883, 7
        %v5885 = vsub.s32 %v5882, %v5884
        %v5886 = vrot.slane %v5879, %v5885
        %v5888 = vunpack.c.l.s4 1966171168
        %v5889 = vunpack.c.0.s8 %v5888
        %v5890 = vlaneseq
        %v5891 = vshrl.u32 %v5890, 7
        %v5892 = vsub.s32 %v5889, %v5891
        %v5893 = vrot.slane %v5878, %v5892
        %v5894 = vcombine.low %v5886, %v5893
        %v5895 = vcombine.low %v5605, %v5607
        %v5896 = vcombine.low %v5676, %v5678
        %v5897 = vcombine.low %v5747, %v5749
        %v5899 = vunpack.c.l.s4 1966171168
        %v5900 = vunpack.c.0.s8 %v5899
        %v5901 = vlaneseq
        %v5902 = vshrl.u32 %v5901, 7
        %v5903 = vsub.s32 %v5900, %v5902
        %v5904 = vrot.slane %v5895, %v5903
        %v5906 = vunpack.c.l.s4 1966171168
        %v5907 = vunpack.c.0.s8 %v5906
        %v5908 = vlaneseq
        %v5909 = vshrl.u32 %v5908, 7
        %v5910 = vsub.s32 %v5907, %v5909
        %v5911 = vrot.slane %v5896, %v5910
        %v5913 = vunpack.c.l.s4 1966171168
        %v5914 = vunpack.c.0.s8 %v5913
        %v5915 = vlaneseq
        %v5916 = vshrl.u32 %v5915, 7
        %v5917 = vsub.s32 %v5914, %v5916
        %v5918 = vrot.slane %v5897, %v5917
        %v5919 = vcombine.low %v5904, %v5911
        %v5921 = vunpack.c.l.s4 1966171168
        %v5922 = vunpack.c.0.s8 %v5921
        %v5923 = vlaneseq
        %v5924 = vshrl.u32 %v5923, 7
        %v5925 = vsub.s32 %v5922, %v5924
        %v5926 = vrot.slane %v5919, %v5925
        %v5928 = vunpack.c.l.s4 1966171168
        %v5929 = vunpack.c.0.s8 %v5928
        %v5930 = vlaneseq
        %v5931 = vshrl.u32 %v5930, 7
        %v5932 = vsub.s32 %v5929, %v5931
        %v5933 = vrot.slane %v5918, %v5932
        %v5934 = vcombine.low %v5926, %v5933
        %v5939 = vadd.f32 %v4895, %v5814
        %v5940 = vadd.f32 %v4896, %v5854
        %v5941 = vadd.f32 %v4897, %v5894
        %v5942 = vadd.f32 %v4898, %v5934
        %v5943 = vlaneseq
        %vm5944 = vcmp.ge.s32.totalorder %v5943, 0
        %vm5945 = vcmp.lt.s32.totalorder %v5943, 768
        %vm5946 = vmand %vm5944, %vm5945
        %5947 = vst.msk [vmem:[#allocation4] sm:$0x3f] %vm5946, %v5939
        %5948 = vst.msk [vmem:[#allocation4 + $0x6] sm:$0x3f] %vm5946, %v5940
        %5949 = vst.msk [vmem:[#allocation4 + $0xc] sm:$0x3f] %vm5946, %v5941
        %5950 = vst.msk [vmem:[#allocation4 + $0x12] sm:$0x3f] %vm5946, %v5942
        %5951 = vst.msk [vmem:[#allocation2] sm:$0x1] %vm4850, %v4762
        %5952 = vst.msk [vmem:[#allocation2 + $0x1] sm:$0x1] %vm4850, %v4763
        %5953 = vst.msk [vmem:[#allocation2 + $0x2] sm:$0x1] %vm4850, %v4764
        %5954 = vst.msk [vmem:[#allocation2 + $0x3] sm:$0x1] %vm4850, %v4765
        %p5955 = scmp.eq.s32.totalorder %s28, 1
        // Predicated region
        $region61: #{tpu_custom_call.1} parent=39 // pred_check
          %p5956 = pneg %p5955
        $region62: #{tpu_custom_call.1} parent=39 // pred_check_branch
          %5958 = sbr.rel (%p5956) target = $region64
        $region63: #{tpu_custom_call.1} parent=39 // pred_region
          %v5959 = vld [vmem:[#allocation3] sm:$0x1]
          %v5960 = vld [vmem:[#allocation3 + $0x1] sm:$0x1]
          %v5961 = vld [vmem:[#allocation3 + $0x2] sm:$0x1]
          %v5962 = vld [vmem:[#allocation3 + $0x3] sm:$0x1]
          %v5963 = vrcp.pop %v5959
          %v5964 = vrcp.pop %v5960
          %v5965 = vrcp.pop %v5961
          %v5966 = vrcp.pop %v5962
          %v5967 = vld [vmem:[#allocation4] sm:$0x3f]
          %v5968 = vld [vmem:[#allocation4 + $0x6] sm:$0x3f]
          %v5969 = vld [vmem:[#allocation4 + $0xc] sm:$0x3f]
          %v5970 = vld [vmem:[#allocation4 + $0x12] sm:$0x3f]
          %5972 = vset.pattern.permute.xlu0 0
          %5973 = vperm.xlu0 %5972, %v5963
          %v5974 = vpop.permute.xlu0 %5973
          %v5976 = vlaneseq
          %v5977 = vshrl.u32 %v5976, 7
          %v5978 = vsub.s32 0, %v5977
          %v5979 = vrot.slane %v5974, %v5978
          %5981 = vset.pattern.permute.xlu0 0
          %5982 = vperm.xlu0 %5981, %v5964
          %v5983 = vpop.permute.xlu0 %5982
          %v5985 = vlaneseq
          %v5986 = vshrl.u32 %v5985, 7
          %v5987 = vsub.s32 0, %v5986
          %v5988 = vrot.slane %v5983, %v5987
          %5990 = vset.pattern.permute.xlu0 0
          %5991 = vperm.xlu0 %5990, %v5965
          %v5992 = vpop.permute.xlu0 %5991
          %v5994 = vlaneseq
          %v5995 = vshrl.u32 %v5994, 7
          %v5996 = vsub.s32 0, %v5995
          %v5997 = vrot.slane %v5992, %v5996
          %5999 = vset.pattern.permute.xlu0 0
          %6000 = vperm.xlu0 %5999, %v5966
          %v6001 = vpop.permute.xlu0 %6000
          %v6003 = vlaneseq
          %v6004 = vshrl.u32 %v6003, 7
          %v6005 = vsub.s32 0, %v6004
          %v6006 = vrot.slane %v6001, %v6005
          %v6007 = vmul.f32 %v5967, %v5979
          %v6008 = vmul.f32 %v5968, %v5988
          %v6009 = vmul.f32 %v5969, %v5997
          %v6010 = vmul.f32 %v5970, %v6006
          %v6015 = vcombine.low %v6007, %v6009
          %v6016 = vcombine.high %v6007, %v6009
          %v6017 = vcombine.low %v6008, %v6010
          %v6018 = vcombine.high %v6008, %v6010
          %v6020 = vunpack.c.l.s4 1935823168
          %v6021 = vunpack.c.0.s8 %v6020
          %v6022 = vlaneseq
          %v6023 = vshrl.u32 %v6022, 7
          %v6024 = vsub.s32 %v6021, %v6023
          %v6025 = vrot.slane %v6015, %v6024
          %v6027 = vunpack.c.l.s4 1935823168
          %v6028 = vunpack.c.0.s8 %v6027
          %v6029 = vlaneseq
          %v6030 = vshrl.u32 %v6029, 7
          %v6031 = vsub.s32 %v6028, %v6030
          %v6032 = vrot.slane %v6017, %v6031
          %v6034 = vunpack.c.l.s4 1935823168
          %v6035 = vunpack.c.0.s8 %v6034
          %v6036 = vlaneseq
          %v6037 = vshrl.u32 %v6036, 7
          %v6038 = vsub.s32 %v6035, %v6037
          %v6039 = vrot.slane %v6016, %v6038
          %v6041 = vunpack.c.l.s4 1935823168
          %v6042 = vunpack.c.0.s8 %v6041
          %v6043 = vlaneseq
          %v6044 = vshrl.u32 %v6043, 7
          %v6045 = vsub.s32 %v6042, %v6044
          %v6046 = vrot.slane %v6018, %v6045
          %v6047 = vcombine.low %v6025, %v6032
          %v6048 = vcombine.high %v6025, %v6032
          %v6049 = vcombine.low %v6039, %v6046
          %v6051 = vunpack.c.l.s4 1935823168
          %v6052 = vunpack.c.0.s8 %v6051
          %v6053 = vlaneseq
          %v6054 = vshrl.u32 %v6053, 7
          %v6055 = vsub.s32 %v6052, %v6054
          %v6056 = vrot.slane %v6047, %v6055
          %v6058 = vunpack.c.l.s4 1935823168
          %v6059 = vunpack.c.0.s8 %v6058
          %v6060 = vlaneseq
          %v6061 = vshrl.u32 %v6060, 7
          %v6062 = vsub.s32 %v6059, %v6061
          %v6063 = vrot.slane %v6048, %v6062
          %v6065 = vunpack.c.l.s4 1935823168
          %v6066 = vunpack.c.0.s8 %v6065
          %v6067 = vlaneseq
          %v6068 = vshrl.u32 %v6067, 7
          %v6069 = vsub.s32 %v6066, %v6068
          %v6070 = vrot.slane %v6049, %v6069
          %6074 = vst [vmem:[#allocation14] sm:$0xff] %v6056
          %6075 = vst [vmem:[#allocation14 + $0x8] sm:$0xff] %v6063
          %6076 = vst [vmem:[#allocation14 + $0x10] sm:$0xff] %v6070
        $region64: #{tpu_custom_call.1} parent=39 // pred_fallthru
          _
        // Predicated region
        $region65: #{tpu_custom_call.1} parent=39 // pred_check
          %p6077 = pneg %p165
        $region66: #{tpu_custom_call.1} parent=39 // pred_check_branch
          %6079 = sbr.rel (%p6077) target = $region68
        $region67: #{tpu_custom_call.1} parent=39 // pred_region
          %s6081 = ssub.s32 384, 384
          %6082 = vsyncadd [#allocation8], %s6081
          %s6083 = smul.addr %s27, 6
          %s6084 = smul.addr %s6083, 64
          %s6085 = scalar_lea.hbm %s5, %s6084
          %s6087 = sshll.u32 [#allocation14], 4
          %s6088 = int_to_ptr.vmem [resolvable:$true] %s6087
          %6090 = dma.vmem_to_hbm [thread:$0]  %s6088, 384, %s6085, [#allocation8]
        $region68: #{tpu_custom_call.1} parent=39 // pred_fallthru
          _
        // Predicated region
        $region69: #{tpu_custom_call.1} parent=39 // pred_check
          %p6091 = pneg %p165
        $region70: #{tpu_custom_call.1} parent=39 // pred_check_branch
          %6093 = sbr.rel (%p6091) target = $region72
        $region71: #{tpu_custom_call.1} parent=39 // pred_region
          %6094 = dma.done [#allocation8], 384
        $region72: #{tpu_custom_call.1} parent=39 // pred_fallthru
          _
      $region40: #{tpu_custom_call.1} parent=5 // pred_fallthru
        _
      %p6095 = scmp.le.s32.totalorder 2, %s18
      // Predicated region
      $region73: #{tpu_custom_call.1} parent=5 // pred_check
        %p6096 = pneg %p6095
      $region74: #{tpu_custom_call.1} parent=5 // pred_check_branch
        %6098 = sbr.rel (%p6096) target = $region76
      $region75: #{tpu_custom_call.1} parent=5 // pred_region
        %s6099 = ssub.s32 %s18, 2
      $region76: #{tpu_custom_call.1} parent=5 // pred_fallthru
        _
    $region6: #{tpu_custom_call.1} parent=1 // loop_footer
      %s22 = sadd.s32 1, %s18
    $region7: #{tpu_custom_call.1} parent=1 // loop_footer_branch
      %17 = sbr.rel target = $region3
    $region8: #{tpu_custom_call.1} parent=1 // loop_exit
      _
    %6100 = vsyncpa [#allocation7], 1
    %s6101 = scalar_lea.sflag [#allocation7], 1
    %6102 = vsyncpa %s6101, 1
    %6103 = vsyncpa [#allocation10], 1
    %6104 = vsyncpa [#allocation13], 1
    %6105 = vsyncpa [#allocation8], 1
    %s6106 = scalar_lea.sflag [#allocation8], 1
    %6107 = vsyncpa %s6106, 1

</llo_original>
